<compile_context>
chip_gen: v7x
topology: tpu7x:2x2x1
jax: 0.10.0
libtpu: 0.0.40
codegen_flags: <defaults>
</compile_context>

<pallas_src>
import numpy as np
import jax
import jax.numpy as jnp
from jax import lax
from jax.experimental import pallas as pl
from jax.experimental.pallas import tpu as pltpu


# -----------------------------------------------------------------------------
# Architecture constants (matches the nn.Sequential in Discriminator_Rational).
# 3x3 convs: CHANNELS[i] -> CHANNELS[i+1], stride STRIDES[i], pad 1, each
# followed by a Rational activation; then a final 1x1 conv 128 -> 1.
# -----------------------------------------------------------------------------
CHANNELS = (1, 32, 32, 64, 64, 128, 128)
STRIDES = (2, 1, 2, 1, 2, 1)
FINAL_COUT = 1
FINAL_COUT_PAD = 128      # lane-padded so the kernel's only HBM store is dense

# Rational (PAU) coefficients, version 'A', degrees (5, 4), leaky_relu init.
_R_NUM = (0.0298, 0.6184, 2.3235, 3.0520, 1.4855, 0.2510)
_R_DEN = (2.3831, 0.0000, 3.0000, 0.0000)


def _round8(x):
    return ((x + 7) // 8) * 8


def _rational_pallas(z):
    """R(z) = P(z) / Q(|z|) (version 'A'), f32, inside the kernel."""
    p = _R_NUM[5] * z + _R_NUM[4]
    p = p * z + _R_NUM[3]
    p = p * z + _R_NUM[2]
    p = p * z + _R_NUM[1]
    p = p * z + _R_NUM[0]
    az = jnp.abs(z)
    d = tuple(abs(v) for v in _R_DEN)
    q = d[3] * az
    q = (q + d[2]) * az
    q = (q + d[1]) * az
    q = (q + d[0]) * az
    q = q + 1.0
    # Q >= 1, so the EUP approximate reciprocal is numerically safe here.
    return p * pl.reciprocal(q, approx=True)


def _rational_ref(z):
    p = _R_NUM[5] * z + _R_NUM[4]
    p = p * z + _R_NUM[3]
    p = p * z + _R_NUM[2]
    p = p * z + _R_NUM[1]
    p = p * z + _R_NUM[0]
    az = jnp.abs(z)
    d = tuple(abs(v) for v in _R_DEN)
    q = (((d[3] * az + d[2]) * az + d[1]) * az + d[0]) * az + 1.0
    return p / q


def spectral_normalize(w, key, n_iter=20):
    """Init-time emulation of torch spectral_norm (power iteration)."""
    cout = w.shape[0]
    w2d = w.reshape(cout, -1)
    u = jax.random.normal(key, (cout,), jnp.float32)
    u = u / (jnp.linalg.norm(u) + 1e-12)
    v = None
    for _ in range(n_iter):
        v = w2d.T @ u
        v = v / (jnp.linalg.norm(v) + 1e-12)
        u = w2d @ v
        u = u / (jnp.linalg.norm(u) + 1e-12)
    sigma = u @ (w2d @ v)
    return w / sigma


# -----------------------------------------------------------------------------
# Model builder: geometry is compile-time static (derived from the input size).
# -----------------------------------------------------------------------------
def build_model(h_in, w_in):
    assert h_in % 8 == 0 and w_in % 8 == 0, "needs three clean stride-2 halvings"

    geoms = []
    h, w = h_in, w_in
    for s in STRIDES:
        ho = (h + 2 - 3) // s + 1
        wo = (w + 2 - 3) // s + 1
        geoms.append(dict(hi=h, wi=w, ho=ho, wo=wo, s=s))
        h, w = ho, wo
    h_out, w_out = h, w

    Hp = [g["hi"] + 2 for g in geoms]            # padded input height, layer i
    Wp = [g["wi"] + 2 for g in geoms]            # padded input width,  layer i
    pitch = [Hp[i] * Wp[i] for i in range(6)]    # rows of each padded buffer

    # Stride-1 layers preserve the spatial size, so their pitched GEMM output
    # can be written into the next layer's padded buffer with a constant shift.
    assert pitch[2] == pitch[1] and Wp[2] == Wp[1]
    assert pitch[4] == pitch[3] and Wp[4] == Wp[3]

    C = CHANNELS

    # Scratch activation buffers A1..A5 = padded input of layers 1..5 (+ slack
    # rows so pitched shift-reads / shift-writes never run out of the buffer).
    rows = {}
    for k in range(1, 6):
        read_slack = (2 * Wp[k] + 2) if STRIDES[k] == 1 else 0
        write_slack = 0 if k == 1 else ((Wp[k] + 1) if STRIDES[k - 1] == 1 else 0)
        rows[k] = _round8(pitch[k] + max(read_slack, write_slack))

    # -------------------------------------------------------------------------
    # The fused kernel (one grid step == one image).
    # -------------------------------------------------------------------------
    def kernel(p0, w0, w1, w2, w3, w4, w5, w6,
               b0, b1, b2, b3, b4, b5, b6,
               m0, m1, m3, out,
               a1, a2, a3, a4, a5, pb1, pb3, pb5, st2, st4):
        f32 = jnp.float32
        bf16 = jnp.bfloat16

        # Padded activation buffers: borders / slack rows must stay zero.
        for buf in (a1, a2, a3, a4, a5):
            buf[...] = jnp.zeros(buf.shape, f32)

        def s1_patches_gemm(a_src, pbuf, w_ref, b_ref, cin, wp, pit):
            # 3x3 / stride 1 / pad 1: patch column block (kh, kw) for every
            # (junk-included) pitched output row is the input buffer shifted by
            # kh*wp + kw -> 9 VMEM block copies + one GEMM.
            for kh in range(3):
                for kw in range(3):
                    col = (kh * 3 + kw) * cin
                    off = kh * wp + kw
                    pbuf[0:pit, col:col + cin] = a_src[off:off + pit, 0:cin]
            z = jnp.dot(pbuf[...].astype(bf16), w_ref[...],
                        preferred_element_type=f32)
            return _rational_pallas(z + b_ref[...])

        def s2_layer(a_src, a_dst, sbuf, w_ref, b_ref, cin, cout,
                     wp_in, ho, wo, wp_out):
            # 3x3 / stride 2 / pad 1: gather one output-row strip at a time.
            for oh in range(ho):
                for kh in range(3):
                    for kw in range(3):
                        col = (kh * 3 + kw) * cin
                        for ow in range(wo):
                            src = (2 * oh + kh) * wp_in + (2 * ow + kw)
                            sbuf[ow:ow + 1, col:col + cin] = (
                                a_src[src:src + 1, 0:cin])
                z = jnp.dot(sbuf[...].astype(bf16), w_ref[...],
                            preferred_element_type=f32)
                z = _rational_pallas(z + b_ref[...])
                dst = (oh + 1) * wp_out + 1
                a_dst[dst:dst + wo, 0:cout] = z

        # layer 0 : 1 -> 32, stride 2 (patches arrive pitched from the host).
        z = jnp.dot(p0[...], w0[...], preferred_element_type=f32)
        a1[0:pitch[1], 0:C[1]] = _rational_pallas(z + b0[...]) * m0[...]

        # layer 1 : 32 -> 32, stride 1.
        z = s1_patches_gemm(a1, pb1, w1, b1, C[1], Wp[1], pitch[1]) * m1[...]
        a2[Wp[2] + 1:Wp[2] + 1 + pitch[1], 0:C[2]] = z

        # layer 2 : 32 -> 64, stride 2.
        s2_layer(a2, a3, st2, w2, b2, C[2], C[3], Wp[2],
                 geoms[2]["ho"], geoms[2]["wo"], Wp[3])

        # layer 3 : 64 -> 64, stride 1.
        z = s1_patches_gemm(a3, pb3, w3, b3, C[3], Wp[3], pitch[3]) * m3[...]
        a4[Wp[4] + 1:Wp[4] + 1 + pitch[3], 0:C[4]] = z

        # layer 4 : 64 -> 128, stride 2.
        s2_layer(a4, a5, st4, w4, b4, C[4], C[5], Wp[4],
                 geoms[4]["ho"], geoms[4]["wo"], Wp[5])

        # layer 5 : 128 -> 128, stride 1 (result stays in registers).
        z5 = s1_patches_gemm(a5, pb5, w5, b5, C[5], Wp[5], pitch[5])

        # layer 6 : 1x1 conv 128 -> 1 (lane-padded to 128), no activation.
        # Junk (border) rows flow through and are sliced off on the host.
        out[...] = jnp.dot(z5.astype(bf16), w6[...],
                           preferred_element_type=f32) + b6[...]

    # -------------------------------------------------------------------------
    # Parameters (weights packed once at init into the GEMM layout).
    # -------------------------------------------------------------------------
    def init_params(key):
        layer_specs = [(C[i], C[i + 1], 3, True) for i in range(6)]
        layer_specs.append((C[6], FINAL_COUT, 1, False))
        w_mats, biases, raw = [], [], []
        for (cin, cout, k, use_sn) in layer_specs:
            key, k_w, k_u = jax.random.split(key, 3)
            # utils.init_weights style: N(0, 0.02) conv weights, zero bias.
            w = 0.02 * jax.random.normal(k_w, (cout, cin, k, k), jnp.float32)
            b = jnp.zeros((cout,), jnp.float32)
            if use_sn:
                w = spectral_normalize(w, k_u)
            raw.append((w, b))
            # (Cout,Cin,KH,KW) -> (KH,KW,Cin,Cout) -> (KH*KW*Cin, Cout):
            # matches the (kh, kw, cin) patch-column order used in the kernel.
            wm = jnp.transpose(w, (2, 3, 1, 0)).reshape(k * k * cin, cout)
            bm = b
            if k == 1:   # final 1x1: pad Cout to 128 lanes for a dense store
                wm = jnp.pad(wm, ((0, 0), (0, FINAL_COUT_PAD - cout)))
                bm = jnp.pad(b, (0, FINAL_COUT_PAD - cout))
            w_mats.append(wm.astype(jnp.bfloat16))
            biases.append(bm.reshape(1, -1).astype(jnp.float32))

        def border_mask(hp, wp, hv, wv, off):
            idx = np.arange(hp * wp)
            hh, ww = idx // wp, idx % wp
            m = ((hh >= off) & (hh < off + hv) & (ww >= off) & (ww < off + wv))
            return jnp.asarray(m.astype(np.float32).reshape(-1, 1))

        masks = (
            border_mask(Hp[1], Wp[1], geoms[0]["ho"], geoms[0]["wo"], 1),  # m0
            border_mask(Hp[1], Wp[1], geoms[1]["ho"], geoms[1]["wo"], 0),  # m1
            border_mask(Hp[3], Wp[3], geoms[3]["ho"], geoms[3]["wo"], 0),  # m3
        )
        return (tuple(w_mats), tuple(biases), masks), raw

    # -------------------------------------------------------------------------
    # Forward (single pallas_call; everything else is tiny layout glue).
    # -------------------------------------------------------------------------
    def _resident_spec(arr):
        nd = arr.ndim

        def idx(i):
            return (0,) * nd

        return pl.BlockSpec(arr.shape, idx)

    # Advisory cost estimate (per image).
    fl = 2 * pitch[1] * (9 * C[0]) * C[1]
    fl += 2 * pitch[1] * (9 * C[1]) * C[2]
    fl += 2 * geoms[2]["ho"] * geoms[2]["wo"] * (9 * C[2]) * C[3]
    fl += 2 * pitch[3] * (9 * C[3]) * C[4]
    fl += 2 * geoms[4]["ho"] * geoms[4]["wo"] * (9 * C[4]) * C[5]
    fl += 2 * pitch[5] * (9 * C[5]) * C[6]
    fl += 2 * pitch[5] * C[6] * FINAL_COUT_PAD
    trans = (pitch[1] * (C[1] + C[2]) + pitch[3] * C[4] + pitch[5] * C[6]
             + geoms[2]["ho"] * geoms[2]["wo"] * C[3]
             + geoms[4]["ho"] * geoms[4]["wo"] * C[5])

    @jax.jit
    def forward(x_nchw, params):
        w_mats, biases, masks = params
        n = x_nchw.shape[0]
        x = x_nchw[:, 0, :, :].astype(jnp.float32)
        xp = jnp.pad(x, ((0, 0), (1, 1), (1, 1)))

        # Layer-0 im2col (single input channel, 100x9 per image), laid out with
        # the pitch of layer 1's padded buffer so the kernel writes layer 0's
        # output with one masked store.
        ho0, wo0 = geoms[0]["ho"], geoms[0]["wo"]
        cols = []
        for kh in range(3):
            for kw in range(3):
                cols.append(xp[:, kh:kh + 2 * ho0:2, kw:kw + 2 * wo0:2])
        pat = jnp.stack(cols, axis=-1)                       # (n, ho0, wo0, 9)
        p0 = jnp.zeros((n, Hp[1], Wp[1], 9), jnp.float32)
        p0 = p0.at[:, 1:1 + ho0, 1:1 + wo0, :].set(pat)
        p0 = p0.reshape(n, pitch[1], 9).astype(jnp.bfloat16)

        in_specs = [pl.BlockSpec((None, pitch[1], 9), lambda i: (i, 0, 0))]
        in_specs += [_resident_spec(a) for a in w_mats]
        in_specs += [_resident_spec(a) for a in biases]
        in_specs += [_resident_spec(a) for a in masks]

        bytes_accessed = int(
            p0.size * 2 + sum(a.size * 2 for a in w_mats)
            + sum(a.size * 4 for a in biases) + sum(a.size * 4 for a in masks)
            + n * pitch[5] * FINAL_COUT_PAD * 4)

        out = pl.pallas_call(
            kernel,
            out_shape=jax.ShapeDtypeStruct((n, pitch[5], FINAL_COUT_PAD),
                                           jnp.float32),
            grid=(n,),
            in_specs=in_specs,
            out_specs=pl.BlockSpec((None, pitch[5], FINAL_COUT_PAD),
                                   lambda i: (i, 0, 0)),
            scratch_shapes=[
                pltpu.VMEM((rows[1], C[1]), jnp.float32),          # a1
                pltpu.VMEM((rows[2], C[2]), jnp.float32),          # a2
                pltpu.VMEM((rows[3], C[3]), jnp.float32),          # a3
                pltpu.VMEM((rows[4], C[4]), jnp.float32),          # a4
                pltpu.VMEM((rows[5], C[5]), jnp.float32),          # a5
                pltpu.VMEM((pitch[1], 9 * C[1]), jnp.float32),     # pb1
                pltpu.VMEM((pitch[3], 9 * C[3]), jnp.float32),     # pb3
                pltpu.VMEM((pitch[5], 9 * C[5]), jnp.float32),     # pb5
                pltpu.VMEM((geoms[2]["wo"], 9 * C[2]), jnp.float32),  # st2
                pltpu.VMEM((geoms[4]["wo"], 9 * C[4]), jnp.float32),  # st4
            ],
            compiler_params=pltpu.CompilerParams(
                dimension_semantics=("parallel",)),
            cost_estimate=pl.CostEstimate(flops=int(fl * n),
                                          transcendentals=int(trans * n),
                                          bytes_accessed=bytes_accessed),
        )(p0, *w_mats, *biases, *masks)

        y = out[:, :, 0].reshape(n, Hp[5], Wp[5])[:, :h_out, :w_out]
        return y[:, None, :, :]

    return forward, init_params


# -----------------------------------------------------------------------------
# Pure-JAX reference (matches the PyTorch module in f32).
# -----------------------------------------------------------------------------
def reference_forward(x_nchw, raw_params):
    act = x_nchw.astype(jnp.float32)
    for i, (w, b) in enumerate(raw_params):
        stride, padc = (STRIDES[i], 1) if i < 6 else (1, 0)
        act = lax.conv_general_dilated(
            act, w, (stride, stride), ((padc, padc), (padc, padc)),
            dimension_numbers=("NCHW", "OIHW", "NCHW"))
        act = act + b.reshape(1, -1, 1, 1)
        if i < 6:
            act = _rational_ref(act)
    return act


if __name__ == "__main__":
    key = jax.random.PRNGKey(0)
    k_params, k_x = jax.random.split(key)

    H = W = 16
    forward, init_params = build_model(H, W)
    params, raw_params = init_params(k_params)

    # Grayscale NCHW input, batch 2.
    x = jax.random.normal(k_x, (2, 1, H, W), jnp.float32)

    y = jax.block_until_ready(forward(x, params))

    assert y.shape == (2, 1, 2, 2), y.shape
    assert bool(jnp.all(jnp.isfinite(y)))

    # Loose sanity check vs. a pure-JAX/XLA reference (bf16 MXU inputs and the
    # approximate reciprocal introduce ~1e-3 relative error).
    ref = jax.block_until_ready(reference_forward(x, raw_params))
    max_err = float(jnp.max(jnp.abs(y - ref)))
    tol = 5e-2 * (1.0 + float(jnp.max(jnp.abs(ref))))
    assert max_err < tol, (max_err, tol)

    print("KERNEL_OK")
</pallas_src>

<mosaic_0001>
module attributes {stable_mosaic.version = 11 : i64} {
  func.func @kernel(%arg0: i32, %arg1: memref<1x100x9xbf16, #tpu.memory_space<vmem>>, %arg2: memref<9x32xbf16, #tpu.memory_space<vmem>>, %arg3: memref<288x32xbf16, #tpu.memory_space<vmem>>, %arg4: memref<288x64xbf16, #tpu.memory_space<vmem>>, %arg5: memref<576x64xbf16, #tpu.memory_space<vmem>>, %arg6: memref<576x128xbf16, #tpu.memory_space<vmem>>, %arg7: memref<1152x128xbf16, #tpu.memory_space<vmem>>, %arg8: memref<128x128xbf16, #tpu.memory_space<vmem>>, %arg9: memref<1x32xf32, #tpu.memory_space<vmem>>, %arg10: memref<1x32xf32, #tpu.memory_space<vmem>>, %arg11: memref<1x64xf32, #tpu.memory_space<vmem>>, %arg12: memref<1x64xf32, #tpu.memory_space<vmem>>, %arg13: memref<1x128xf32, #tpu.memory_space<vmem>>, %arg14: memref<1x128xf32, #tpu.memory_space<vmem>>, %arg15: memref<1x128xf32, #tpu.memory_space<vmem>>, %arg16: memref<100x1xf32, #tpu.memory_space<vmem>>, %arg17: memref<100x1xf32, #tpu.memory_space<vmem>>, %arg18: memref<36x1xf32, #tpu.memory_space<vmem>>, %arg19: memref<1x16x128xf32, #tpu.memory_space<vmem>>, %arg20: memref<128x32xf32, #tpu.memory_space<vmem>>, %arg21: memref<112x32xf32, #tpu.memory_space<vmem>>, %arg22: memref<56x64xf32, #tpu.memory_space<vmem>>, %arg23: memref<48x64xf32, #tpu.memory_space<vmem>>, %arg24: memref<32x128xf32, #tpu.memory_space<vmem>>, %arg25: memref<100x288xf32, #tpu.memory_space<vmem>>, %arg26: memref<36x576xf32, #tpu.memory_space<vmem>>, %arg27: memref<16x1152xf32, #tpu.memory_space<vmem>>, %arg28: memref<4x288xf32, #tpu.memory_space<vmem>>, %arg29: memref<2x576xf32, #tpu.memory_space<vmem>>) attributes {dimension_semantics = [#tpu.dimension_semantics<parallel>], iteration_bounds = array<i64: 2>, scalar_prefetch = 0 : i64, scratch_operands = 10 : i64, tpu.core_type = #tpu.core_type<tc>, window_params = [{transform_indices = @transform_0, window_bounds = array<i64: 1, 100, 9>}, {pipeline_mode = #tpu.pipeline_mode<synchronous>, transform_indices = @transform_1, window_bounds = array<i64: 9, 32>}, {pipeline_mode = #tpu.pipeline_mode<synchronous>, transform_indices = @transform_2, window_bounds = array<i64: 288, 32>}, {pipeline_mode = #tpu.pipeline_mode<synchronous>, transform_indices = @transform_3, window_bounds = array<i64: 288, 64>}, {pipeline_mode = #tpu.pipeline_mode<synchronous>, transform_indices = @transform_4, window_bounds = array<i64: 576, 64>}, {pipeline_mode = #tpu.pipeline_mode<synchronous>, transform_indices = @transform_5, window_bounds = array<i64: 576, 128>}, {pipeline_mode = #tpu.pipeline_mode<synchronous>, transform_indices = @transform_6, window_bounds = array<i64: 1152, 128>}, {pipeline_mode = #tpu.pipeline_mode<synchronous>, transform_indices = @transform_7, window_bounds = array<i64: 128, 128>}, {pipeline_mode = #tpu.pipeline_mode<synchronous>, transform_indices = @transform_8, window_bounds = array<i64: 1, 32>}, {pipeline_mode = #tpu.pipeline_mode<synchronous>, transform_indices = @transform_9, window_bounds = array<i64: 1, 32>}, {pipeline_mode = #tpu.pipeline_mode<synchronous>, transform_indices = @transform_10, window_bounds = array<i64: 1, 64>}, {pipeline_mode = #tpu.pipeline_mode<synchronous>, transform_indices = @transform_11, window_bounds = array<i64: 1, 64>}, {pipeline_mode = #tpu.pipeline_mode<synchronous>, transform_indices = @transform_12, window_bounds = array<i64: 1, 128>}, {pipeline_mode = #tpu.pipeline_mode<synchronous>, transform_indices = @transform_13, window_bounds = array<i64: 1, 128>}, {pipeline_mode = #tpu.pipeline_mode<synchronous>, transform_indices = @transform_14, window_bounds = array<i64: 1, 128>}, {pipeline_mode = #tpu.pipeline_mode<synchronous>, transform_indices = @transform_15, window_bounds = array<i64: 100, 1>}, {pipeline_mode = #tpu.pipeline_mode<synchronous>, transform_indices = @transform_16, window_bounds = array<i64: 100, 1>}, {pipeline_mode = #tpu.pipeline_mode<synchronous>, transform_indices = @transform_17, window_bounds = array<i64: 36, 1>}, {transform_indices = @transform_18, window_bounds = array<i64: 1, 16, 128>}]} {
    %cst = arith.constant 0.000000e+00 : f32
    %0 = vector.broadcast %cst : f32 to vector<128x32xf32>
    %c0 = arith.constant 0 : index
    %c0_0 = arith.constant 0 : index
    %1 = vector.load %arg20[%c0, %c0_0] : memref<128x32xf32, #tpu.memory_space<vmem>>, vector<128x32xf32>
    tpu.vector_store %arg20[%c0, %c0_0], %0 {strides = array<i32>} : memref<128x32xf32, #tpu.memory_space<vmem>>, vector<128x32xf32>,
    %cst_1 = arith.constant 0.000000e+00 : f32
    %2 = vector.broadcast %cst_1 : f32 to vector<112x32xf32>
    %c0_2 = arith.constant 0 : index
    %c0_3 = arith.constant 0 : index
    %3 = vector.load %arg21[%c0_2, %c0_3] : memref<112x32xf32, #tpu.memory_space<vmem>>, vector<112x32xf32>
    tpu.vector_store %arg21[%c0_2, %c0_3], %2 {strides = array<i32>} : memref<112x32xf32, #tpu.memory_space<vmem>>, vector<112x32xf32>,
    %cst_4 = arith.constant 0.000000e+00 : f32
    %4 = vector.broadcast %cst_4 : f32 to vector<56x64xf32>
    %c0_5 = arith.constant 0 : index
    %c0_6 = arith.constant 0 : index
    %5 = vector.load %arg22[%c0_5, %c0_6] : memref<56x64xf32, #tpu.memory_space<vmem>>, vector<56x64xf32>
    tpu.vector_store %arg22[%c0_5, %c0_6], %4 {strides = array<i32>} : memref<56x64xf32, #tpu.memory_space<vmem>>, vector<56x64xf32>,
    %cst_7 = arith.constant 0.000000e+00 : f32
    %6 = vector.broadcast %cst_7 : f32 to vector<48x64xf32>
    %c0_8 = arith.constant 0 : index
    %c0_9 = arith.constant 0 : index
    %7 = vector.load %arg23[%c0_8, %c0_9] : memref<48x64xf32, #tpu.memory_space<vmem>>, vector<48x64xf32>
    tpu.vector_store %arg23[%c0_8, %c0_9], %6 {strides = array<i32>} : memref<48x64xf32, #tpu.memory_space<vmem>>, vector<48x64xf32>,
    %cst_10 = arith.constant 0.000000e+00 : f32
    %8 = vector.broadcast %cst_10 : f32 to vector<32x128xf32>
    %c0_11 = arith.constant 0 : index
    %c0_12 = arith.constant 0 : index
    %9 = vector.load %arg24[%c0_11, %c0_12] : memref<32x128xf32, #tpu.memory_space<vmem>>, vector<32x128xf32>
    tpu.vector_store %arg24[%c0_11, %c0_12], %8 {strides = array<i32>} : memref<32x128xf32, #tpu.memory_space<vmem>>, vector<32x128xf32>,
    %c0_13 = arith.constant 0 : index
    %c0_14 = arith.constant 0 : index
    %c0_15 = arith.constant 0 : index
    %10 = vector.load %arg1[%c0_13, %c0_14, %c0_15] : memref<1x100x9xbf16, #tpu.memory_space<vmem>>, vector<1x100x9xbf16>
    %11 = vector.shape_cast %10 : vector<1x100x9xbf16> to vector<100x9xbf16>
    %c0_16 = arith.constant 0 : index
    %c0_17 = arith.constant 0 : index
    %12 = vector.load %arg2[%c0_16, %c0_17] : memref<9x32xbf16, #tpu.memory_space<vmem>>, vector<9x32xbf16>
    %cst_18 = arith.constant dense<0.000000e+00> : vector<100x32xf32>
    %13 = tpu.matmul %11, %12, %cst_18 {dimension_numbers = #tpu.dot_dimension_numbers<[1], [0], [0], [1], [0, 0, 1, 1], [], []>} : vector<100x9xbf16>, vector<9x32xbf16>, vector<100x32xf32> -> vector<100x32xf32>
    %c0_19 = arith.constant 0 : index
    %c0_20 = arith.constant 0 : index
    %14 = vector.load %arg9[%c0_19, %c0_20] : memref<1x32xf32, #tpu.memory_space<vmem>>, vector<1x32xf32>
    %15 = vector.broadcast %14 : vector<1x32xf32> to vector<100x32xf32>
    %16 = arith.addf %13, %15 : vector<100x32xf32>
    %cst_21 = arith.constant 2.510000e-01 : f32
    %17 = vector.broadcast %cst_21 : f32 to vector<100x32xf32>
    %18 = arith.mulf %17, %16 : vector<100x32xf32>
    %cst_22 = arith.constant 1.485500e+00 : f32
    %19 = vector.broadcast %cst_22 : f32 to vector<100x32xf32>
    %20 = arith.addf %18, %19 : vector<100x32xf32>
    %21 = arith.mulf %20, %16 : vector<100x32xf32>
    %cst_23 = arith.constant 3.052000e+00 : f32
    %22 = vector.broadcast %cst_23 : f32 to vector<100x32xf32>
    %23 = arith.addf %21, %22 : vector<100x32xf32>
    %24 = arith.mulf %23, %16 : vector<100x32xf32>
    %cst_24 = arith.constant 2.323500e+00 : f32
    %25 = vector.broadcast %cst_24 : f32 to vector<100x32xf32>
    %26 = arith.addf %24, %25 : vector<100x32xf32>
    %27 = arith.mulf %26, %16 : vector<100x32xf32>
    %cst_25 = arith.constant 6.184000e-01 : f32
    %28 = vector.broadcast %cst_25 : f32 to vector<100x32xf32>
    %29 = arith.addf %27, %28 : vector<100x32xf32>
    %30 = arith.mulf %29, %16 : vector<100x32xf32>
    %cst_26 = arith.constant 2.980000e-02 : f32
    %31 = vector.broadcast %cst_26 : f32 to vector<100x32xf32>
    %32 = arith.addf %30, %31 : vector<100x32xf32>
    %33 = math.absf %16 : vector<100x32xf32>
    %cst_27 = arith.constant 0.000000e+00 : f32
    %34 = vector.broadcast %cst_27 : f32 to vector<100x32xf32>
    %35 = arith.mulf %34, %33 : vector<100x32xf32>
    %cst_28 = arith.constant 3.000000e+00 : f32
    %36 = vector.broadcast %cst_28 : f32 to vector<100x32xf32>
    %37 = arith.addf %35, %36 : vector<100x32xf32>
    %38 = arith.mulf %37, %33 : vector<100x32xf32>
    %cst_29 = arith.constant 0.000000e+00 : f32
    %39 = vector.broadcast %cst_29 : f32 to vector<100x32xf32>
    %40 = arith.addf %38, %39 : vector<100x32xf32>
    %41 = arith.mulf %40, %33 : vector<100x32xf32>
    %cst_30 = arith.constant 2.383100e+00 : f32
    %42 = vector.broadcast %cst_30 : f32 to vector<100x32xf32>
    %43 = arith.addf %41, %42 : vector<100x32xf32>
    %44 = arith.mulf %43, %33 : vector<100x32xf32>
    %cst_31 = arith.constant 1.000000e+00 : f32
    %45 = vector.broadcast %cst_31 : f32 to vector<100x32xf32>
    %46 = arith.addf %44, %45 : vector<100x32xf32>
    %47 = tpu.reciprocal %46 {approx = true} : vector<100x32xf32> -> vector<100x32xf32>
    %48 = arith.mulf %32, %47 : vector<100x32xf32>
    %c0_32 = arith.constant 0 : index
    %c0_33 = arith.constant 0 : index
    %49 = vector.load %arg16[%c0_32, %c0_33] : memref<100x1xf32, #tpu.memory_space<vmem>>, vector<100x1xf32>
    %50 = vector.broadcast %49 : vector<100x1xf32> to vector<100x32xf32>
    %51 = arith.mulf %48, %50 : vector<100x32xf32>
    %c0_34 = arith.constant 0 : index
    %c0_35 = arith.constant 0 : index
    %52 = vector.load %arg20[%c0_34, %c0_35] : memref<128x32xf32, #tpu.memory_space<vmem>>, vector<100x32xf32>
    tpu.vector_store %arg20[%c0_34, %c0_35], %51 {strides = array<i32>} : memref<128x32xf32, #tpu.memory_space<vmem>>, vector<100x32xf32>,
    %c0_36 = arith.constant 0 : index
    %c0_37 = arith.constant 0 : index
    %53 = vector.load %arg20[%c0_36, %c0_37] : memref<128x32xf32, #tpu.memory_space<vmem>>, vector<100x32xf32>
    %c0_38 = arith.constant 0 : index
    %c0_39 = arith.constant 0 : index
    %54 = vector.load %arg25[%c0_38, %c0_39] : memref<100x288xf32, #tpu.memory_space<vmem>>, vector<100x32xf32>
    tpu.vector_store %arg25[%c0_38, %c0_39], %53 {strides = array<i32>} : memref<100x288xf32, #tpu.memory_space<vmem>>, vector<100x32xf32>,
    %c1 = arith.constant 1 : index
    %c0_40 = arith.constant 0 : index
    %55 = vector.load %arg20[%c1, %c0_40] : memref<128x32xf32, #tpu.memory_space<vmem>>, vector<100x32xf32>
    %c0_41 = arith.constant 0 : index
    %c32 = arith.constant 32 : index
    %56 = vector.load %arg25[%c0_41, %c32] : memref<100x288xf32, #tpu.memory_space<vmem>>, vector<100x32xf32>
    tpu.vector_store %arg25[%c0_41, %c32], %55 {strides = array<i32>} : memref<100x288xf32, #tpu.memory_space<vmem>>, vector<100x32xf32>,
    %c2 = arith.constant 2 : index
    %c0_42 = arith.constant 0 : index
    %57 = vector.load %arg20[%c2, %c0_42] : memref<128x32xf32, #tpu.memory_space<vmem>>, vector<100x32xf32>
    %c0_43 = arith.constant 0 : index
    %c64 = arith.constant 64 : index
    %58 = vector.load %arg25[%c0_43, %c64] : memref<100x288xf32, #tpu.memory_space<vmem>>, vector<100x32xf32>
    tpu.vector_store %arg25[%c0_43, %c64], %57 {strides = array<i32>} : memref<100x288xf32, #tpu.memory_space<vmem>>, vector<100x32xf32>,
    %c10 = arith.constant 10 : index
    %c0_44 = arith.constant 0 : index
    %59 = vector.load %arg20[%c10, %c0_44] : memref<128x32xf32, #tpu.memory_space<vmem>>, vector<100x32xf32>
    %c0_45 = arith.constant 0 : index
    %c96 = arith.constant 96 : index
    %60 = vector.load %arg25[%c0_45, %c96] : memref<100x288xf32, #tpu.memory_space<vmem>>, vector<100x32xf32>
    tpu.vector_store %arg25[%c0_45, %c96], %59 {strides = array<i32>} : memref<100x288xf32, #tpu.memory_space<vmem>>, vector<100x32xf32>,
    %c11 = arith.constant 11 : index
    %c0_46 = arith.constant 0 : index
    %61 = vector.load %arg20[%c11, %c0_46] : memref<128x32xf32, #tpu.memory_space<vmem>>, vector<100x32xf32>
    %c0_47 = arith.constant 0 : index
    %c128 = arith.constant 128 : index
    %62 = vector.load %arg25[%c0_47, %c128] : memref<100x288xf32, #tpu.memory_space<vmem>>, vector<100x32xf32>
    tpu.vector_store %arg25[%c0_47, %c128], %61 {strides = array<i32>} : memref<100x288xf32, #tpu.memory_space<vmem>>, vector<100x32xf32>,
    %c12 = arith.constant 12 : index
    %c0_48 = arith.constant 0 : index
    %63 = vector.load %arg20[%c12, %c0_48] : memref<128x32xf32, #tpu.memory_space<vmem>>, vector<100x32xf32>
    %c0_49 = arith.constant 0 : index
    %c160 = arith.constant 160 : index
    %64 = vector.load %arg25[%c0_49, %c160] : memref<100x288xf32, #tpu.memory_space<vmem>>, vector<100x32xf32>
    tpu.vector_store %arg25[%c0_49, %c160], %63 {strides = array<i32>} : memref<100x288xf32, #tpu.memory_space<vmem>>, vector<100x32xf32>,
    %c20 = arith.constant 20 : index
    %c0_50 = arith.constant 0 : index
    %65 = vector.load %arg20[%c20, %c0_50] : memref<128x32xf32, #tpu.memory_space<vmem>>, vector<100x32xf32>
    %c0_51 = arith.constant 0 : index
    %c192 = arith.constant 192 : index
    %66 = vector.load %arg25[%c0_51, %c192] : memref<100x288xf32, #tpu.memory_space<vmem>>, vector<100x32xf32>
    tpu.vector_store %arg25[%c0_51, %c192], %65 {strides = array<i32>} : memref<100x288xf32, #tpu.memory_space<vmem>>, vector<100x32xf32>,
    %c21 = arith.constant 21 : index
    %c0_52 = arith.constant 0 : index
    %67 = vector.load %arg20[%c21, %c0_52] : memref<128x32xf32, #tpu.memory_space<vmem>>, vector<100x32xf32>
    %c0_53 = arith.constant 0 : index
    %c224 = arith.constant 224 : index
    %68 = vector.load %arg25[%c0_53, %c224] : memref<100x288xf32, #tpu.memory_space<vmem>>, vector<100x32xf32>
    tpu.vector_store %arg25[%c0_53, %c224], %67 {strides = array<i32>} : memref<100x288xf32, #tpu.memory_space<vmem>>, vector<100x32xf32>,
    %c22 = arith.constant 22 : index
    %c0_54 = arith.constant 0 : index
    %69 = vector.load %arg20[%c22, %c0_54] : memref<128x32xf32, #tpu.memory_space<vmem>>, vector<100x32xf32>
    %c0_55 = arith.constant 0 : index
    %c256 = arith.constant 256 : index
    %70 = vector.load %arg25[%c0_55, %c256] : memref<100x288xf32, #tpu.memory_space<vmem>>, vector<100x32xf32>
    tpu.vector_store %arg25[%c0_55, %c256], %69 {strides = array<i32>} : memref<100x288xf32, #tpu.memory_space<vmem>>, vector<100x32xf32>,
    %c0_56 = arith.constant 0 : index
    %c0_57 = arith.constant 0 : index
    %71 = vector.load %arg25[%c0_56, %c0_57] : memref<100x288xf32, #tpu.memory_space<vmem>>, vector<100x288xf32>
    %72 = arith.truncf %71 : vector<100x288xf32> to vector<100x288xbf16>
    %c0_58 = arith.constant 0 : index
    %c0_59 = arith.constant 0 : index
    %73 = vector.load %arg3[%c0_58, %c0_59] : memref<288x32xbf16, #tpu.memory_space<vmem>>, vector<288x32xbf16>
    %cst_60 = arith.constant dense<0.000000e+00> : vector<100x32xf32>
    %74 = tpu.matmul %72, %73, %cst_60 {dimension_numbers = #tpu.dot_dimension_numbers<[1], [0], [0], [1], [0, 0, 1, 1], [], []>} : vector<100x288xbf16>, vector<288x32xbf16>, vector<100x32xf32> -> vector<100x32xf32>
    %c0_61 = arith.constant 0 : index
    %c0_62 = arith.constant 0 : index
    %75 = vector.load %arg10[%c0_61, %c0_62] : memref<1x32xf32, #tpu.memory_space<vmem>>, vector<1x32xf32>
    %76 = vector.broadcast %75 : vector<1x32xf32> to vector<100x32xf32>
    %77 = arith.addf %74, %76 : vector<100x32xf32>
    %cst_63 = arith.constant 2.510000e-01 : f32
    %78 = vector.broadcast %cst_63 : f32 to vector<100x32xf32>
    %79 = arith.mulf %78, %77 : vector<100x32xf32>
    %cst_64 = arith.constant 1.485500e+00 : f32
    %80 = vector.broadcast %cst_64 : f32 to vector<100x32xf32>
    %81 = arith.addf %79, %80 : vector<100x32xf32>
    %82 = arith.mulf %81, %77 : vector<100x32xf32>
    %cst_65 = arith.constant 3.052000e+00 : f32
    %83 = vector.broadcast %cst_65 : f32 to vector<100x32xf32>
    %84 = arith.addf %82, %83 : vector<100x32xf32>
    %85 = arith.mulf %84, %77 : vector<100x32xf32>
    %cst_66 = arith.constant 2.323500e+00 : f32
    %86 = vector.broadcast %cst_66 : f32 to vector<100x32xf32>
    %87 = arith.addf %85, %86 : vector<100x32xf32>
    %88 = arith.mulf %87, %77 : vector<100x32xf32>
    %cst_67 = arith.constant 6.184000e-01 : f32
    %89 = vector.broadcast %cst_67 : f32 to vector<100x32xf32>
    %90 = arith.addf %88, %89 : vector<100x32xf32>
    %91 = arith.mulf %90, %77 : vector<100x32xf32>
    %cst_68 = arith.constant 2.980000e-02 : f32
    %92 = vector.broadcast %cst_68 : f32 to vector<100x32xf32>
    %93 = arith.addf %91, %92 : vector<100x32xf32>
    %94 = math.absf %77 : vector<100x32xf32>
    %cst_69 = arith.constant 0.000000e+00 : f32
    %95 = vector.broadcast %cst_69 : f32 to vector<100x32xf32>
    %96 = arith.mulf %95, %94 : vector<100x32xf32>
    %cst_70 = arith.constant 3.000000e+00 : f32
    %97 = vector.broadcast %cst_70 : f32 to vector<100x32xf32>
    %98 = arith.addf %96, %97 : vector<100x32xf32>
    %99 = arith.mulf %98, %94 : vector<100x32xf32>
    %cst_71 = arith.constant 0.000000e+00 : f32
    %100 = vector.broadcast %cst_71 : f32 to vector<100x32xf32>
    %101 = arith.addf %99, %100 : vector<100x32xf32>
    %102 = arith.mulf %101, %94 : vector<100x32xf32>
    %cst_72 = arith.constant 2.383100e+00 : f32
    %103 = vector.broadcast %cst_72 : f32 to vector<100x32xf32>
    %104 = arith.addf %102, %103 : vector<100x32xf32>
    %105 = arith.mulf %104, %94 : vector<100x32xf32>
    %cst_73 = arith.constant 1.000000e+00 : f32
    %106 = vector.broadcast %cst_73 : f32 to vector<100x32xf32>
    %107 = arith.addf %105, %106 : vector<100x32xf32>
    %108 = tpu.reciprocal %107 {approx = true} : vector<100x32xf32> -> vector<100x32xf32>
    %109 = arith.mulf %93, %108 : vector<100x32xf32>
    %c0_74 = arith.constant 0 : index
    %c0_75 = arith.constant 0 : index
    %110 = vector.load %arg17[%c0_74, %c0_75] : memref<100x1xf32, #tpu.memory_space<vmem>>, vector<100x1xf32>
    %111 = vector.broadcast %110 : vector<100x1xf32> to vector<100x32xf32>
    %112 = arith.mulf %109, %111 : vector<100x32xf32>
    %c11_76 = arith.constant 11 : index
    %c0_77 = arith.constant 0 : index
    %113 = vector.load %arg21[%c11_76, %c0_77] : memref<112x32xf32, #tpu.memory_space<vmem>>, vector<100x32xf32>
    tpu.vector_store %arg21[%c11_76, %c0_77], %112 {strides = array<i32>} : memref<112x32xf32, #tpu.memory_space<vmem>>, vector<100x32xf32>,
    %c0_78 = arith.constant 0 : index
    %c0_79 = arith.constant 0 : index
    %114 = vector.load %arg21[%c0_78, %c0_79] : memref<112x32xf32, #tpu.memory_space<vmem>>, vector<1x32xf32>
    %c0_80 = arith.constant 0 : index
    %c0_81 = arith.constant 0 : index
    %115 = vector.load %arg28[%c0_80, %c0_81] : memref<4x288xf32, #tpu.memory_space<vmem>>, vector<1x32xf32>
    tpu.vector_store %arg28[%c0_80, %c0_81], %114 {strides = array<i32>} : memref<4x288xf32, #tpu.memory_space<vmem>>, vector<1x32xf32>,
    %c2_82 = arith.constant 2 : index
    %c0_83 = arith.constant 0 : index
    %116 = vector.load %arg21[%c2_82, %c0_83] : memref<112x32xf32, #tpu.memory_space<vmem>>, vector<1x32xf32>
    %c1_84 = arith.constant 1 : index
    %c0_85 = arith.constant 0 : index
    %117 = vector.load %arg28[%c1_84, %c0_85] : memref<4x288xf32, #tpu.memory_space<vmem>>, vector<1x32xf32>
    tpu.vector_store %arg28[%c1_84, %c0_85], %116 {strides = array<i32>} : memref<4x288xf32, #tpu.memory_space<vmem>>, vector<1x32xf32>,
    %c4 = arith.constant 4 : index
    %c0_86 = arith.constant 0 : index
    %118 = vector.load %arg21[%c4, %c0_86] : memref<112x32xf32, #tpu.memory_space<vmem>>, vector<1x32xf32>
    %c2_87 = arith.constant 2 : index
    %c0_88 = arith.constant 0 : index
    %119 = vector.load %arg28[%c2_87, %c0_88] : memref<4x288xf32, #tpu.memory_space<vmem>>, vector<1x32xf32>
    tpu.vector_store %arg28[%c2_87, %c0_88], %118 {strides = array<i32>} : memref<4x288xf32, #tpu.memory_space<vmem>>, vector<1x32xf32>,
    %c6 = arith.constant 6 : index
    %c0_89 = arith.constant 0 : index
    %120 = vector.load %arg21[%c6, %c0_89] : memref<112x32xf32, #tpu.memory_space<vmem>>, vector<1x32xf32>
    %c3 = arith.constant 3 : index
    %c0_90 = arith.constant 0 : index
    %121 = vector.load %arg28[%c3, %c0_90] : memref<4x288xf32, #tpu.memory_space<vmem>>, vector<1x32xf32>
    tpu.vector_store %arg28[%c3, %c0_90], %120 {strides = array<i32>} : memref<4x288xf32, #tpu.memory_space<vmem>>, vector<1x32xf32>,
    %c1_91 = arith.constant 1 : index
    %c0_92 = arith.constant 0 : index
    %122 = vector.load %arg21[%c1_91, %c0_92] : memref<112x32xf32, #tpu.memory_space<vmem>>, vector<1x32xf32>
    %c0_93 = arith.constant 0 : index
    %c32_94 = arith.constant 32 : index
    %123 = vector.load %arg28[%c0_93, %c32_94] : memref<4x288xf32, #tpu.memory_space<vmem>>, vector<1x32xf32>
    tpu.vector_store %arg28[%c0_93, %c32_94], %122 {strides = array<i32>} : memref<4x288xf32, #tpu.memory_space<vmem>>, vector<1x32xf32>,
    %c3_95 = arith.constant 3 : index
    %c0_96 = arith.constant 0 : index
    %124 = vector.load %arg21[%c3_95, %c0_96] : memref<112x32xf32, #tpu.memory_space<vmem>>, vector<1x32xf32>
    %c1_97 = arith.constant 1 : index
    %c32_98 = arith.constant 32 : index
    %125 = vector.load %arg28[%c1_97, %c32_98] : memref<4x288xf32, #tpu.memory_space<vmem>>, vector<1x32xf32>
    tpu.vector_store %arg28[%c1_97, %c32_98], %124 {strides = array<i32>} : memref<4x288xf32, #tpu.memory_space<vmem>>, vector<1x32xf32>,
    %c5 = arith.constant 5 : index
    %c0_99 = arith.constant 0 : index
    %126 = vector.load %arg21[%c5, %c0_99] : memref<112x32xf32, #tpu.memory_space<vmem>>, vector<1x32xf32>
    %c2_100 = arith.constant 2 : index
    %c32_101 = arith.constant 32 : index
    %127 = vector.load %arg28[%c2_100, %c32_101] : memref<4x288xf32, #tpu.memory_space<vmem>>, vector<1x32xf32>
    tpu.vector_store %arg28[%c2_100, %c32_101], %126 {strides = array<i32>} : memref<4x288xf32, #tpu.memory_space<vmem>>, vector<1x32xf32>,
    %c7 = arith.constant 7 : index
    %c0_102 = arith.constant 0 : index
    %128 = vector.load %arg21[%c7, %c0_102] : memref<112x32xf32, #tpu.memory_space<vmem>>, vector<1x32xf32>
    %c3_103 = arith.constant 3 : index
    %c32_104 = arith.constant 32 : index
    %129 = vector.load %arg28[%c3_103, %c32_104] : memref<4x288xf32, #tpu.memory_space<vmem>>, vector<1x32xf32>
    tpu.vector_store %arg28[%c3_103, %c32_104], %128 {strides = array<i32>} : memref<4x288xf32, #tpu.memory_space<vmem>>, vector<1x32xf32>,
    %c2_105 = arith.constant 2 : index
    %c0_106 = arith.constant 0 : index
    %130 = vector.load %arg21[%c2_105, %c0_106] : memref<112x32xf32, #tpu.memory_space<vmem>>, vector<1x32xf32>
    %c0_107 = arith.constant 0 : index
    %c64_108 = arith.constant 64 : index
    %131 = vector.load %arg28[%c0_107, %c64_108] : memref<4x288xf32, #tpu.memory_space<vmem>>, vector<1x32xf32>
    tpu.vector_store %arg28[%c0_107, %c64_108], %130 {strides = array<i32>} : memref<4x288xf32, #tpu.memory_space<vmem>>, vector<1x32xf32>,
    %c4_109 = arith.constant 4 : index
    %c0_110 = arith.constant 0 : index
    %132 = vector.load %arg21[%c4_109, %c0_110] : memref<112x32xf32, #tpu.memory_space<vmem>>, vector<1x32xf32>
    %c1_111 = arith.constant 1 : index
    %c64_112 = arith.constant 64 : index
    %133 = vector.load %arg28[%c1_111, %c64_112] : memref<4x288xf32, #tpu.memory_space<vmem>>, vector<1x32xf32>
    tpu.vector_store %arg28[%c1_111, %c64_112], %132 {strides = array<i32>} : memref<4x288xf32, #tpu.memory_space<vmem>>, vector<1x32xf32>,
    %c6_113 = arith.constant 6 : index
    %c0_114 = arith.constant 0 : index
    %134 = vector.load %arg21[%c6_113, %c0_114] : memref<112x32xf32, #tpu.memory_space<vmem>>, vector<1x32xf32>
    %c2_115 = arith.constant 2 : index
    %c64_116 = arith.constant 64 : index
    %135 = vector.load %arg28[%c2_115, %c64_116] : memref<4x288xf32, #tpu.memory_space<vmem>>, vector<1x32xf32>
    tpu.vector_store %arg28[%c2_115, %c64_116], %134 {strides = array<i32>} : memref<4x288xf32, #tpu.memory_space<vmem>>, vector<1x32xf32>,
    %c8 = arith.constant 8 : index
    %c0_117 = arith.constant 0 : index
    %136 = vector.load %arg21[%c8, %c0_117] : memref<112x32xf32, #tpu.memory_space<vmem>>, vector<1x32xf32>
    %c3_118 = arith.constant 3 : index
    %c64_119 = arith.constant 64 : index
    %137 = vector.load %arg28[%c3_118, %c64_119] : memref<4x288xf32, #tpu.memory_space<vmem>>, vector<1x32xf32>
    tpu.vector_store %arg28[%c3_118, %c64_119], %136 {strides = array<i32>} : memref<4x288xf32, #tpu.memory_space<vmem>>, vector<1x32xf32>,
    %c10_120 = arith.constant 10 : index
    %c0_121 = arith.constant 0 : index
    %138 = vector.load %arg21[%c10_120, %c0_121] : memref<112x32xf32, #tpu.memory_space<vmem>>, vector<1x32xf32>
    %c0_122 = arith.constant 0 : index
    %c96_123 = arith.constant 96 : index
    %139 = vector.load %arg28[%c0_122, %c96_123] : memref<4x288xf32, #tpu.memory_space<vmem>>, vector<1x32xf32>
    tpu.vector_store %arg28[%c0_122, %c96_123], %138 {strides = array<i32>} : memref<4x288xf32, #tpu.memory_space<vmem>>, vector<1x32xf32>,
    %c12_124 = arith.constant 12 : index
    %c0_125 = arith.constant 0 : index
    %140 = vector.load %arg21[%c12_124, %c0_125] : memref<112x32xf32, #tpu.memory_space<vmem>>, vector<1x32xf32>
    %c1_126 = arith.constant 1 : index
    %c96_127 = arith.constant 96 : index
    %141 = vector.load %arg28[%c1_126, %c96_127] : memref<4x288xf32, #tpu.memory_space<vmem>>, vector<1x32xf32>
    tpu.vector_store %arg28[%c1_126, %c96_127], %140 {strides = array<i32>} : memref<4x288xf32, #tpu.memory_space<vmem>>, vector<1x32xf32>,
    %c14 = arith.constant 14 : index
    %c0_128 = arith.constant 0 : index
    %142 = vector.load %arg21[%c14, %c0_128] : memref<112x32xf32, #tpu.memory_space<vmem>>, vector<1x32xf32>
    %c2_129 = arith.constant 2 : index
    %c96_130 = arith.constant 96 : index
    %143 = vector.load %arg28[%c2_129, %c96_130] : memref<4x288xf32, #tpu.memory_space<vmem>>, vector<1x32xf32>
    tpu.vector_store %arg28[%c2_129, %c96_130], %142 {strides = array<i32>} : memref<4x288xf32, #tpu.memory_space<vmem>>, vector<1x32xf32>,
    %c16 = arith.constant 16 : index
    %c0_131 = arith.constant 0 : index
    %144 = vector.load %arg21[%c16, %c0_131] : memref<112x32xf32, #tpu.memory_space<vmem>>, vector<1x32xf32>
    %c3_132 = arith.constant 3 : index
    %c96_133 = arith.constant 96 : index
    %145 = vector.load %arg28[%c3_132, %c96_133] : memref<4x288xf32, #tpu.memory_space<vmem>>, vector<1x32xf32>
    tpu.vector_store %arg28[%c3_132, %c96_133], %144 {strides = array<i32>} : memref<4x288xf32, #tpu.memory_space<vmem>>, vector<1x32xf32>,
    %c11_134 = arith.constant 11 : index
    %c0_135 = arith.constant 0 : index
    %146 = vector.load %arg21[%c11_134, %c0_135] : memref<112x32xf32, #tpu.memory_space<vmem>>, vector<1x32xf32>
    %c0_136 = arith.constant 0 : index
    %c128_137 = arith.constant 128 : index
    %147 = vector.load %arg28[%c0_136, %c128_137] : memref<4x288xf32, #tpu.memory_space<vmem>>, vector<1x32xf32>
    tpu.vector_store %arg28[%c0_136, %c128_137], %146 {strides = array<i32>} : memref<4x288xf32, #tpu.memory_space<vmem>>, vector<1x32xf32>,
    %c13 = arith.constant 13 : index
    %c0_138 = arith.constant 0 : index
    %148 = vector.load %arg21[%c13, %c0_138] : memref<112x32xf32, #tpu.memory_space<vmem>>, vector<1x32xf32>
    %c1_139 = arith.constant 1 : index
    %c128_140 = arith.constant 128 : index
    %149 = vector.load %arg28[%c1_139, %c128_140] : memref<4x288xf32, #tpu.memory_space<vmem>>, vector<1x32xf32>
    tpu.vector_store %arg28[%c1_139, %c128_140], %148 {strides = array<i32>} : memref<4x288xf32, #tpu.memory_space<vmem>>, vector<1x32xf32>,
    %c15 = arith.constant 15 : index
    %c0_141 = arith.constant 0 : index
    %150 = vector.load %arg21[%c15, %c0_141] : memref<112x32xf32, #tpu.memory_space<vmem>>, vector<1x32xf32>
    %c2_142 = arith.constant 2 : index
    %c128_143 = arith.constant 128 : index
    %151 = vector.load %arg28[%c2_142, %c128_143] : memref<4x288xf32, #tpu.memory_space<vmem>>, vector<1x32xf32>
    tpu.vector_store %arg28[%c2_142, %c128_143], %150 {strides = array<i32>} : memref<4x288xf32, #tpu.memory_space<vmem>>, vector<1x32xf32>,
    %c17 = arith.constant 17 : index
    %c0_144 = arith.constant 0 : index
    %152 = vector.load %arg21[%c17, %c0_144] : memref<112x32xf32, #tpu.memory_space<vmem>>, vector<1x32xf32>
    %c3_145 = arith.constant 3 : index
    %c128_146 = arith.constant 128 : index
    %153 = vector.load %arg28[%c3_145, %c128_146] : memref<4x288xf32, #tpu.memory_space<vmem>>, vector<1x32xf32>
    tpu.vector_store %arg28[%c3_145, %c128_146], %152 {strides = array<i32>} : memref<4x288xf32, #tpu.memory_space<vmem>>, vector<1x32xf32>,
    %c12_147 = arith.constant 12 : index
    %c0_148 = arith.constant 0 : index
    %154 = vector.load %arg21[%c12_147, %c0_148] : memref<112x32xf32, #tpu.memory_space<vmem>>, vector<1x32xf32>
    %c0_149 = arith.constant 0 : index
    %c160_150 = arith.constant 160 : index
    %155 = vector.load %arg28[%c0_149, %c160_150] : memref<4x288xf32, #tpu.memory_space<vmem>>, vector<1x32xf32>
    tpu.vector_store %arg28[%c0_149, %c160_150], %154 {strides = array<i32>} : memref<4x288xf32, #tpu.memory_space<vmem>>, vector<1x32xf32>,
    %c14_151 = arith.constant 14 : index
    %c0_152 = arith.constant 0 : index
    %156 = vector.load %arg21[%c14_151, %c0_152] : memref<112x32xf32, #tpu.memory_space<vmem>>, vector<1x32xf32>
    %c1_153 = arith.constant 1 : index
    %c160_154 = arith.constant 160 : index
    %157 = vector.load %arg28[%c1_153, %c160_154] : memref<4x288xf32, #tpu.memory_space<vmem>>, vector<1x32xf32>
    tpu.vector_store %arg28[%c1_153, %c160_154], %156 {strides = array<i32>} : memref<4x288xf32, #tpu.memory_space<vmem>>, vector<1x32xf32>,
    %c16_155 = arith.constant 16 : index
    %c0_156 = arith.constant 0 : index
    %158 = vector.load %arg21[%c16_155, %c0_156] : memref<112x32xf32, #tpu.memory_space<vmem>>, vector<1x32xf32>
    %c2_157 = arith.constant 2 : index
    %c160_158 = arith.constant 160 : index
    %159 = vector.load %arg28[%c2_157, %c160_158] : memref<4x288xf32, #tpu.memory_space<vmem>>, vector<1x32xf32>
    tpu.vector_store %arg28[%c2_157, %c160_158], %158 {strides = array<i32>} : memref<4x288xf32, #tpu.memory_space<vmem>>, vector<1x32xf32>,
    %c18 = arith.constant 18 : index
    %c0_159 = arith.constant 0 : index
    %160 = vector.load %arg21[%c18, %c0_159] : memref<112x32xf32, #tpu.memory_space<vmem>>, vector<1x32xf32>
    %c3_160 = arith.constant 3 : index
    %c160_161 = arith.constant 160 : index
    %161 = vector.load %arg28[%c3_160, %c160_161] : memref<4x288xf32, #tpu.memory_space<vmem>>, vector<1x32xf32>
    tpu.vector_store %arg28[%c3_160, %c160_161], %160 {strides = array<i32>} : memref<4x288xf32, #tpu.memory_space<vmem>>, vector<1x32xf32>,
    %c20_162 = arith.constant 20 : index
    %c0_163 = arith.constant 0 : index
    %162 = vector.load %arg21[%c20_162, %c0_163] : memref<112x32xf32, #tpu.memory_space<vmem>>, vector<1x32xf32>
    %c0_164 = arith.constant 0 : index
    %c192_165 = arith.constant 192 : index
    %163 = vector.load %arg28[%c0_164, %c192_165] : memref<4x288xf32, #tpu.memory_space<vmem>>, vector<1x32xf32>
    tpu.vector_store %arg28[%c0_164, %c192_165], %162 {strides = array<i32>} : memref<4x288xf32, #tpu.memory_space<vmem>>, vector<1x32xf32>,
    %c22_166 = arith.constant 22 : index
    %c0_167 = arith.constant 0 : index
    %164 = vector.load %arg21[%c22_166, %c0_167] : memref<112x32xf32, #tpu.memory_space<vmem>>, vector<1x32xf32>
    %c1_168 = arith.constant 1 : index
    %c192_169 = arith.constant 192 : index
    %165 = vector.load %arg28[%c1_168, %c192_169] : memref<4x288xf32, #tpu.memory_space<vmem>>, vector<1x32xf32>
    tpu.vector_store %arg28[%c1_168, %c192_169], %164 {strides = array<i32>} : memref<4x288xf32, #tpu.memory_space<vmem>>, vector<1x32xf32>,
    %c24 = arith.constant 24 : index
    %c0_170 = arith.constant 0 : index
    %166 = vector.load %arg21[%c24, %c0_170] : memref<112x32xf32, #tpu.memory_space<vmem>>, vector<1x32xf32>
    %c2_171 = arith.constant 2 : index
    %c192_172 = arith.constant 192 : index
    %167 = vector.load %arg28[%c2_171, %c192_172] : memref<4x288xf32, #tpu.memory_space<vmem>>, vector<1x32xf32>
    tpu.vector_store %arg28[%c2_171, %c192_172], %166 {strides = array<i32>} : memref<4x288xf32, #tpu.memory_space<vmem>>, vector<1x32xf32>,
    %c26 = arith.constant 26 : index
    %c0_173 = arith.constant 0 : index
    %168 = vector.load %arg21[%c26, %c0_173] : memref<112x32xf32, #tpu.memory_space<vmem>>, vector<1x32xf32>
    %c3_174 = arith.constant 3 : index
    %c192_175 = arith.constant 192 : index
    %169 = vector.load %arg28[%c3_174, %c192_175] : memref<4x288xf32, #tpu.memory_space<vmem>>, vector<1x32xf32>
    tpu.vector_store %arg28[%c3_174, %c192_175], %168 {strides = array<i32>} : memref<4x288xf32, #tpu.memory_space<vmem>>, vector<1x32xf32>,
    %c21_176 = arith.constant 21 : index
    %c0_177 = arith.constant 0 : index
    %170 = vector.load %arg21[%c21_176, %c0_177] : memref<112x32xf32, #tpu.memory_space<vmem>>, vector<1x32xf32>
    %c0_178 = arith.constant 0 : index
    %c224_179 = arith.constant 224 : index
    %171 = vector.load %arg28[%c0_178, %c224_179] : memref<4x288xf32, #tpu.memory_space<vmem>>, vector<1x32xf32>
    tpu.vector_store %arg28[%c0_178, %c224_179], %170 {strides = array<i32>} : memref<4x288xf32, #tpu.memory_space<vmem>>, vector<1x32xf32>,
    %c23 = arith.constant 23 : index
    %c0_180 = arith.constant 0 : index
    %172 = vector.load %arg21[%c23, %c0_180] : memref<112x32xf32, #tpu.memory_space<vmem>>, vector<1x32xf32>
    %c1_181 = arith.constant 1 : index
    %c224_182 = arith.constant 224 : index
    %173 = vector.load %arg28[%c1_181, %c224_182] : memref<4x288xf32, #tpu.memory_space<vmem>>, vector<1x32xf32>
    tpu.vector_store %arg28[%c1_181, %c224_182], %172 {strides = array<i32>} : memref<4x288xf32, #tpu.memory_space<vmem>>, vector<1x32xf32>,
    %c25 = arith.constant 25 : index
    %c0_183 = arith.constant 0 : index
    %174 = vector.load %arg21[%c25, %c0_183] : memref<112x32xf32, #tpu.memory_space<vmem>>, vector<1x32xf32>
    %c2_184 = arith.constant 2 : index
    %c224_185 = arith.constant 224 : index
    %175 = vector.load %arg28[%c2_184, %c224_185] : memref<4x288xf32, #tpu.memory_space<vmem>>, vector<1x32xf32>
    tpu.vector_store %arg28[%c2_184, %c224_185], %174 {strides = array<i32>} : memref<4x288xf32, #tpu.memory_space<vmem>>, vector<1x32xf32>,
    %c27 = arith.constant 27 : index
    %c0_186 = arith.constant 0 : index
    %176 = vector.load %arg21[%c27, %c0_186] : memref<112x32xf32, #tpu.memory_space<vmem>>, vector<1x32xf32>
    %c3_187 = arith.constant 3 : index
    %c224_188 = arith.constant 224 : index
    %177 = vector.load %arg28[%c3_187, %c224_188] : memref<4x288xf32, #tpu.memory_space<vmem>>, vector<1x32xf32>
    tpu.vector_store %arg28[%c3_187, %c224_188], %176 {strides = array<i32>} : memref<4x288xf32, #tpu.memory_space<vmem>>, vector<1x32xf32>,
    %c22_189 = arith.constant 22 : index
    %c0_190 = arith.constant 0 : index
    %178 = vector.load %arg21[%c22_189, %c0_190] : memref<112x32xf32, #tpu.memory_space<vmem>>, vector<1x32xf32>
    %c0_191 = arith.constant 0 : index
    %c256_192 = arith.constant 256 : index
    %179 = vector.load %arg28[%c0_191, %c256_192] : memref<4x288xf32, #tpu.memory_space<vmem>>, vector<1x32xf32>
    tpu.vector_store %arg28[%c0_191, %c256_192], %178 {strides = array<i32>} : memref<4x288xf32, #tpu.memory_space<vmem>>, vector<1x32xf32>,
    %c24_193 = arith.constant 24 : index
    %c0_194 = arith.constant 0 : index
    %180 = vector.load %arg21[%c24_193, %c0_194] : memref<112x32xf32, #tpu.memory_space<vmem>>, vector<1x32xf32>
    %c1_195 = arith.constant 1 : index
    %c256_196 = arith.constant 256 : index
    %181 = vector.load %arg28[%c1_195, %c256_196] : memref<4x288xf32, #tpu.memory_space<vmem>>, vector<1x32xf32>
    tpu.vector_store %arg28[%c1_195, %c256_196], %180 {strides = array<i32>} : memref<4x288xf32, #tpu.memory_space<vmem>>, vector<1x32xf32>,
    %c26_197 = arith.constant 26 : index
    %c0_198 = arith.constant 0 : index
    %182 = vector.load %arg21[%c26_197, %c0_198] : memref<112x32xf32, #tpu.memory_space<vmem>>, vector<1x32xf32>
    %c2_199 = arith.constant 2 : index
    %c256_200 = arith.constant 256 : index
    %183 = vector.load %arg28[%c2_199, %c256_200] : memref<4x288xf32, #tpu.memory_space<vmem>>, vector<1x32xf32>
    tpu.vector_store %arg28[%c2_199, %c256_200], %182 {strides = array<i32>} : memref<4x288xf32, #tpu.memory_space<vmem>>, vector<1x32xf32>,
    %c28 = arith.constant 28 : index
    %c0_201 = arith.constant 0 : index
    %184 = vector.load %arg21[%c28, %c0_201] : memref<112x32xf32, #tpu.memory_space<vmem>>, vector<1x32xf32>
    %c3_202 = arith.constant 3 : index
    %c256_203 = arith.constant 256 : index
    %185 = vector.load %arg28[%c3_202, %c256_203] : memref<4x288xf32, #tpu.memory_space<vmem>>, vector<1x32xf32>
    tpu.vector_store %arg28[%c3_202, %c256_203], %184 {strides = array<i32>} : memref<4x288xf32, #tpu.memory_space<vmem>>, vector<1x32xf32>,
    %c0_204 = arith.constant 0 : index
    %c0_205 = arith.constant 0 : index
    %186 = vector.load %arg28[%c0_204, %c0_205] : memref<4x288xf32, #tpu.memory_space<vmem>>, vector<4x288xf32>
    %187 = arith.truncf %186 : vector<4x288xf32> to vector<4x288xbf16>
    %c0_206 = arith.constant 0 : index
    %c0_207 = arith.constant 0 : index
    %188 = vector.load %arg4[%c0_206, %c0_207] : memref<288x64xbf16, #tpu.memory_space<vmem>>, vector<288x64xbf16>
    %cst_208 = arith.constant dense<0.000000e+00> : vector<4x64xf32>
    %189 = tpu.matmul %187, %188, %cst_208 {dimension_numbers = #tpu.dot_dimension_numbers<[1], [0], [0], [1], [0, 0, 1, 1], [], []>} : vector<4x288xbf16>, vector<288x64xbf16>, vector<4x64xf32> -> vector<4x64xf32>
    %c0_209 = arith.constant 0 : index
    %c0_210 = arith.constant 0 : index
    %190 = vector.load %arg11[%c0_209, %c0_210] : memref<1x64xf32, #tpu.memory_space<vmem>>, vector<1x64xf32>
    %191 = vector.broadcast %190 : vector<1x64xf32> to vector<4x64xf32>
    %192 = arith.addf %189, %191 : vector<4x64xf32>
    %cst_211 = arith.constant 2.510000e-01 : f32
    %193 = vector.broadcast %cst_211 : f32 to vector<4x64xf32>
    %194 = arith.mulf %193, %192 : vector<4x64xf32>
    %cst_212 = arith.constant 1.485500e+00 : f32
    %195 = vector.broadcast %cst_212 : f32 to vector<4x64xf32>
    %196 = arith.addf %194, %195 : vector<4x64xf32>
    %197 = arith.mulf %196, %192 : vector<4x64xf32>
    %cst_213 = arith.constant 3.052000e+00 : f32
    %198 = vector.broadcast %cst_213 : f32 to vector<4x64xf32>
    %199 = arith.addf %197, %198 : vector<4x64xf32>
    %200 = arith.mulf %199, %192 : vector<4x64xf32>
    %cst_214 = arith.constant 2.323500e+00 : f32
    %201 = vector.broadcast %cst_214 : f32 to vector<4x64xf32>
    %202 = arith.addf %200, %201 : vector<4x64xf32>
    %203 = arith.mulf %202, %192 : vector<4x64xf32>
    %cst_215 = arith.constant 6.184000e-01 : f32
    %204 = vector.broadcast %cst_215 : f32 to vector<4x64xf32>
    %205 = arith.addf %203, %204 : vector<4x64xf32>
    %206 = arith.mulf %205, %192 : vector<4x64xf32>
    %cst_216 = arith.constant 2.980000e-02 : f32
    %207 = vector.broadcast %cst_216 : f32 to vector<4x64xf32>
    %208 = arith.addf %206, %207 : vector<4x64xf32>
    %209 = math.absf %192 : vector<4x64xf32>
    %cst_217 = arith.constant 0.000000e+00 : f32
    %210 = vector.broadcast %cst_217 : f32 to vector<4x64xf32>
    %211 = arith.mulf %210, %209 : vector<4x64xf32>
    %cst_218 = arith.constant 3.000000e+00 : f32
    %212 = vector.broadcast %cst_218 : f32 to vector<4x64xf32>
    %213 = arith.addf %211, %212 : vector<4x64xf32>
    %214 = arith.mulf %213, %209 : vector<4x64xf32>
    %cst_219 = arith.constant 0.000000e+00 : f32
    %215 = vector.broadcast %cst_219 : f32 to vector<4x64xf32>
    %216 = arith.addf %214, %215 : vector<4x64xf32>
    %217 = arith.mulf %216, %209 : vector<4x64xf32>
    %cst_220 = arith.constant 2.383100e+00 : f32
    %218 = vector.broadcast %cst_220 : f32 to vector<4x64xf32>
    %219 = arith.addf %217, %218 : vector<4x64xf32>
    %220 = arith.mulf %219, %209 : vector<4x64xf32>
    %cst_221 = arith.constant 1.000000e+00 : f32
    %221 = vector.broadcast %cst_221 : f32 to vector<4x64xf32>
    %222 = arith.addf %220, %221 : vector<4x64xf32>
    %223 = tpu.reciprocal %222 {approx = true} : vector<4x64xf32> -> vector<4x64xf32>
    %224 = arith.mulf %208, %223 : vector<4x64xf32>
    %c7_222 = arith.constant 7 : index
    %c0_223 = arith.constant 0 : index
    %225 = vector.load %arg22[%c7_222, %c0_223] : memref<56x64xf32, #tpu.memory_space<vmem>>, vector<4x64xf32>
    tpu.vector_store %arg22[%c7_222, %c0_223], %224 {strides = array<i32>} : memref<56x64xf32, #tpu.memory_space<vmem>>, vector<4x64xf32>,
    %c20_224 = arith.constant 20 : index
    %c0_225 = arith.constant 0 : index
    %226 = vector.load %arg21[%c20_224, %c0_225] : memref<112x32xf32, #tpu.memory_space<vmem>>, vector<1x32xf32>
    %c0_226 = arith.constant 0 : index
    %c0_227 = arith.constant 0 : index
    %227 = vector.load %arg28[%c0_226, %c0_227] : memref<4x288xf32, #tpu.memory_space<vmem>>, vector<1x32xf32>
    tpu.vector_store %arg28[%c0_226, %c0_227], %226 {strides = array<i32>} : memref<4x288xf32, #tpu.memory_space<vmem>>, vector<1x32xf32>,
    %c22_228 = arith.constant 22 : index
    %c0_229 = arith.constant 0 : index
    %228 = vector.load %arg21[%c22_228, %c0_229] : memref<112x32xf32, #tpu.memory_space<vmem>>, vector<1x32xf32>
    %c1_230 = arith.constant 1 : index
    %c0_231 = arith.constant 0 : index
    %229 = vector.load %arg28[%c1_230, %c0_231] : memref<4x288xf32, #tpu.memory_space<vmem>>, vector<1x32xf32>
    tpu.vector_store %arg28[%c1_230, %c0_231], %228 {strides = array<i32>} : memref<4x288xf32, #tpu.memory_space<vmem>>, vector<1x32xf32>,
    %c24_232 = arith.constant 24 : index
    %c0_233 = arith.constant 0 : index
    %230 = vector.load %arg21[%c24_232, %c0_233] : memref<112x32xf32, #tpu.memory_space<vmem>>, vector<1x32xf32>
    %c2_234 = arith.constant 2 : index
    %c0_235 = arith.constant 0 : index
    %231 = vector.load %arg28[%c2_234, %c0_235] : memref<4x288xf32, #tpu.memory_space<vmem>>, vector<1x32xf32>
    tpu.vector_store %arg28[%c2_234, %c0_235], %230 {strides = array<i32>} : memref<4x288xf32, #tpu.memory_space<vmem>>, vector<1x32xf32>,
    %c26_236 = arith.constant 26 : index
    %c0_237 = arith.constant 0 : index
    %232 = vector.load %arg21[%c26_236, %c0_237] : memref<112x32xf32, #tpu.memory_space<vmem>>, vector<1x32xf32>
    %c3_238 = arith.constant 3 : index
    %c0_239 = arith.constant 0 : index
    %233 = vector.load %arg28[%c3_238, %c0_239] : memref<4x288xf32, #tpu.memory_space<vmem>>, vector<1x32xf32>
    tpu.vector_store %arg28[%c3_238, %c0_239], %232 {strides = array<i32>} : memref<4x288xf32, #tpu.memory_space<vmem>>, vector<1x32xf32>,
    %c21_240 = arith.constant 21 : index
    %c0_241 = arith.constant 0 : index
    %234 = vector.load %arg21[%c21_240, %c0_241] : memref<112x32xf32, #tpu.memory_space<vmem>>, vector<1x32xf32>
    %c0_242 = arith.constant 0 : index
    %c32_243 = arith.constant 32 : index
    %235 = vector.load %arg28[%c0_242, %c32_243] : memref<4x288xf32, #tpu.memory_space<vmem>>, vector<1x32xf32>
    tpu.vector_store %arg28[%c0_242, %c32_243], %234 {strides = array<i32>} : memref<4x288xf32, #tpu.memory_space<vmem>>, vector<1x32xf32>,
    %c23_244 = arith.constant 23 : index
    %c0_245 = arith.constant 0 : index
    %236 = vector.load %arg21[%c23_244, %c0_245] : memref<112x32xf32, #tpu.memory_space<vmem>>, vector<1x32xf32>
    %c1_246 = arith.constant 1 : index
    %c32_247 = arith.constant 32 : index
    %237 = vector.load %arg28[%c1_246, %c32_247] : memref<4x288xf32, #tpu.memory_space<vmem>>, vector<1x32xf32>
    tpu.vector_store %arg28[%c1_246, %c32_247], %236 {strides = array<i32>} : memref<4x288xf32, #tpu.memory_space<vmem>>, vector<1x32xf32>,
    %c25_248 = arith.constant 25 : index
    %c0_249 = arith.constant 0 : index
    %238 = vector.load %arg21[%c25_248, %c0_249] : memref<112x32xf32, #tpu.memory_space<vmem>>, vector<1x32xf32>
    %c2_250 = arith.constant 2 : index
    %c32_251 = arith.constant 32 : index
    %239 = vector.load %arg28[%c2_250, %c32_251] : memref<4x288xf32, #tpu.memory_space<vmem>>, vector<1x32xf32>
    tpu.vector_store %arg28[%c2_250, %c32_251], %238 {strides = array<i32>} : memref<4x288xf32, #tpu.memory_space<vmem>>, vector<1x32xf32>,
    %c27_252 = arith.constant 27 : index
    %c0_253 = arith.constant 0 : index
    %240 = vector.load %arg21[%c27_252, %c0_253] : memref<112x32xf32, #tpu.memory_space<vmem>>, vector<1x32xf32>
    %c3_254 = arith.constant 3 : index
    %c32_255 = arith.constant 32 : index
    %241 = vector.load %arg28[%c3_254, %c32_255] : memref<4x288xf32, #tpu.memory_space<vmem>>, vector<1x32xf32>
    tpu.vector_store %arg28[%c3_254, %c32_255], %240 {strides = array<i32>} : memref<4x288xf32, #tpu.memory_space<vmem>>, vector<1x32xf32>,
    %c22_256 = arith.constant 22 : index
    %c0_257 = arith.constant 0 : index
    %242 = vector.load %arg21[%c22_256, %c0_257] : memref<112x32xf32, #tpu.memory_space<vmem>>, vector<1x32xf32>
    %c0_258 = arith.constant 0 : index
    %c64_259 = arith.constant 64 : index
    %243 = vector.load %arg28[%c0_258, %c64_259] : memref<4x288xf32, #tpu.memory_space<vmem>>, vector<1x32xf32>
    tpu.vector_store %arg28[%c0_258, %c64_259], %242 {strides = array<i32>} : memref<4x288xf32, #tpu.memory_space<vmem>>, vector<1x32xf32>,
    %c24_260 = arith.constant 24 : index
    %c0_261 = arith.constant 0 : index
    %244 = vector.load %arg21[%c24_260, %c0_261] : memref<112x32xf32, #tpu.memory_space<vmem>>, vector<1x32xf32>
    %c1_262 = arith.constant 1 : index
    %c64_263 = arith.constant 64 : index
    %245 = vector.load %arg28[%c1_262, %c64_263] : memref<4x288xf32, #tpu.memory_space<vmem>>, vector<1x32xf32>
    tpu.vector_store %arg28[%c1_262, %c64_263], %244 {strides = array<i32>} : memref<4x288xf32, #tpu.memory_space<vmem>>, vector<1x32xf32>,
    %c26_264 = arith.constant 26 : index
    %c0_265 = arith.constant 0 : index
    %246 = vector.load %arg21[%c26_264, %c0_265] : memref<112x32xf32, #tpu.memory_space<vmem>>, vector<1x32xf32>
    %c2_266 = arith.constant 2 : index
    %c64_267 = arith.constant 64 : index
    %247 = vector.load %arg28[%c2_266, %c64_267] : memref<4x288xf32, #tpu.memory_space<vmem>>, vector<1x32xf32>
    tpu.vector_store %arg28[%c2_266, %c64_267], %246 {strides = array<i32>} : memref<4x288xf32, #tpu.memory_space<vmem>>, vector<1x32xf32>,
    %c28_268 = arith.constant 28 : index
    %c0_269 = arith.constant 0 : index
    %248 = vector.load %arg21[%c28_268, %c0_269] : memref<112x32xf32, #tpu.memory_space<vmem>>, vector<1x32xf32>
    %c3_270 = arith.constant 3 : index
    %c64_271 = arith.constant 64 : index
    %249 = vector.load %arg28[%c3_270, %c64_271] : memref<4x288xf32, #tpu.memory_space<vmem>>, vector<1x32xf32>
    tpu.vector_store %arg28[%c3_270, %c64_271], %248 {strides = array<i32>} : memref<4x288xf32, #tpu.memory_space<vmem>>, vector<1x32xf32>,
    %c30 = arith.constant 30 : index
    %c0_272 = arith.constant 0 : index
    %250 = vector.load %arg21[%c30, %c0_272] : memref<112x32xf32, #tpu.memory_space<vmem>>, vector<1x32xf32>
    %c0_273 = arith.constant 0 : index
    %c96_274 = arith.constant 96 : index
    %251 = vector.load %arg28[%c0_273, %c96_274] : memref<4x288xf32, #tpu.memory_space<vmem>>, vector<1x32xf32>
    tpu.vector_store %arg28[%c0_273, %c96_274], %250 {strides = array<i32>} : memref<4x288xf32, #tpu.memory_space<vmem>>, vector<1x32xf32>,
    %c32_275 = arith.constant 32 : index
    %c0_276 = arith.constant 0 : index
    %252 = vector.load %arg21[%c32_275, %c0_276] : memref<112x32xf32, #tpu.memory_space<vmem>>, vector<1x32xf32>
    %c1_277 = arith.constant 1 : index
    %c96_278 = arith.constant 96 : index
    %253 = vector.load %arg28[%c1_277, %c96_278] : memref<4x288xf32, #tpu.memory_space<vmem>>, vector<1x32xf32>
    tpu.vector_store %arg28[%c1_277, %c96_278], %252 {strides = array<i32>} : memref<4x288xf32, #tpu.memory_space<vmem>>, vector<1x32xf32>,
    %c34 = arith.constant 34 : index
    %c0_279 = arith.constant 0 : index
    %254 = vector.load %arg21[%c34, %c0_279] : memref<112x32xf32, #tpu.memory_space<vmem>>, vector<1x32xf32>
    %c2_280 = arith.constant 2 : index
    %c96_281 = arith.constant 96 : index
    %255 = vector.load %arg28[%c2_280, %c96_281] : memref<4x288xf32, #tpu.memory_space<vmem>>, vector<1x32xf32>
    tpu.vector_store %arg28[%c2_280, %c96_281], %254 {strides = array<i32>} : memref<4x288xf32, #tpu.memory_space<vmem>>, vector<1x32xf32>,
    %c36 = arith.constant 36 : index
    %c0_282 = arith.constant 0 : index
    %256 = vector.load %arg21[%c36, %c0_282] : memref<112x32xf32, #tpu.memory_space<vmem>>, vector<1x32xf32>
    %c3_283 = arith.constant 3 : index
    %c96_284 = arith.constant 96 : index
    %257 = vector.load %arg28[%c3_283, %c96_284] : memref<4x288xf32, #tpu.memory_space<vmem>>, vector<1x32xf32>
    tpu.vector_store %arg28[%c3_283, %c96_284], %256 {strides = array<i32>} : memref<4x288xf32, #tpu.memory_space<vmem>>, vector<1x32xf32>,
    %c31 = arith.constant 31 : index
    %c0_285 = arith.constant 0 : index
    %258 = vector.load %arg21[%c31, %c0_285] : memref<112x32xf32, #tpu.memory_space<vmem>>, vector<1x32xf32>
    %c0_286 = arith.constant 0 : index
    %c128_287 = arith.constant 128 : index
    %259 = vector.load %arg28[%c0_286, %c128_287] : memref<4x288xf32, #tpu.memory_space<vmem>>, vector<1x32xf32>
    tpu.vector_store %arg28[%c0_286, %c128_287], %258 {strides = array<i32>} : memref<4x288xf32, #tpu.memory_space<vmem>>, vector<1x32xf32>,
    %c33 = arith.constant 33 : index
    %c0_288 = arith.constant 0 : index
    %260 = vector.load %arg21[%c33, %c0_288] : memref<112x32xf32, #tpu.memory_space<vmem>>, vector<1x32xf32>
    %c1_289 = arith.constant 1 : index
    %c128_290 = arith.constant 128 : index
    %261 = vector.load %arg28[%c1_289, %c128_290] : memref<4x288xf32, #tpu.memory_space<vmem>>, vector<1x32xf32>
    tpu.vector_store %arg28[%c1_289, %c128_290], %260 {strides = array<i32>} : memref<4x288xf32, #tpu.memory_space<vmem>>, vector<1x32xf32>,
    %c35 = arith.constant 35 : index
    %c0_291 = arith.constant 0 : index
    %262 = vector.load %arg21[%c35, %c0_291] : memref<112x32xf32, #tpu.memory_space<vmem>>, vector<1x32xf32>
    %c2_292 = arith.constant 2 : index
    %c128_293 = arith.constant 128 : index
    %263 = vector.load %arg28[%c2_292, %c128_293] : memref<4x288xf32, #tpu.memory_space<vmem>>, vector<1x32xf32>
    tpu.vector_store %arg28[%c2_292, %c128_293], %262 {strides = array<i32>} : memref<4x288xf32, #tpu.memory_space<vmem>>, vector<1x32xf32>,
    %c37 = arith.constant 37 : index
    %c0_294 = arith.constant 0 : index
    %264 = vector.load %arg21[%c37, %c0_294] : memref<112x32xf32, #tpu.memory_space<vmem>>, vector<1x32xf32>
    %c3_295 = arith.constant 3 : index
    %c128_296 = arith.constant 128 : index
    %265 = vector.load %arg28[%c3_295, %c128_296] : memref<4x288xf32, #tpu.memory_space<vmem>>, vector<1x32xf32>
    tpu.vector_store %arg28[%c3_295, %c128_296], %264 {strides = array<i32>} : memref<4x288xf32, #tpu.memory_space<vmem>>, vector<1x32xf32>,
    %c32_297 = arith.constant 32 : index
    %c0_298 = arith.constant 0 : index
    %266 = vector.load %arg21[%c32_297, %c0_298] : memref<112x32xf32, #tpu.memory_space<vmem>>, vector<1x32xf32>
    %c0_299 = arith.constant 0 : index
    %c160_300 = arith.constant 160 : index
    %267 = vector.load %arg28[%c0_299, %c160_300] : memref<4x288xf32, #tpu.memory_space<vmem>>, vector<1x32xf32>
    tpu.vector_store %arg28[%c0_299, %c160_300], %266 {strides = array<i32>} : memref<4x288xf32, #tpu.memory_space<vmem>>, vector<1x32xf32>,
    %c34_301 = arith.constant 34 : index
    %c0_302 = arith.constant 0 : index
    %268 = vector.load %arg21[%c34_301, %c0_302] : memref<112x32xf32, #tpu.memory_space<vmem>>, vector<1x32xf32>
    %c1_303 = arith.constant 1 : index
    %c160_304 = arith.constant 160 : index
    %269 = vector.load %arg28[%c1_303, %c160_304] : memref<4x288xf32, #tpu.memory_space<vmem>>, vector<1x32xf32>
    tpu.vector_store %arg28[%c1_303, %c160_304], %268 {strides = array<i32>} : memref<4x288xf32, #tpu.memory_space<vmem>>, vector<1x32xf32>,
    %c36_305 = arith.constant 36 : index
    %c0_306 = arith.constant 0 : index
    %270 = vector.load %arg21[%c36_305, %c0_306] : memref<112x32xf32, #tpu.memory_space<vmem>>, vector<1x32xf32>
    %c2_307 = arith.constant 2 : index
    %c160_308 = arith.constant 160 : index
    %271 = vector.load %arg28[%c2_307, %c160_308] : memref<4x288xf32, #tpu.memory_space<vmem>>, vector<1x32xf32>
    tpu.vector_store %arg28[%c2_307, %c160_308], %270 {strides = array<i32>} : memref<4x288xf32, #tpu.memory_space<vmem>>, vector<1x32xf32>,
    %c38 = arith.constant 38 : index
    %c0_309 = arith.constant 0 : index
    %272 = vector.load %arg21[%c38, %c0_309] : memref<112x32xf32, #tpu.memory_space<vmem>>, vector<1x32xf32>
    %c3_310 = arith.constant 3 : index
    %c160_311 = arith.constant 160 : index
    %273 = vector.load %arg28[%c3_310, %c160_311] : memref<4x288xf32, #tpu.memory_space<vmem>>, vector<1x32xf32>
    tpu.vector_store %arg28[%c3_310, %c160_311], %272 {strides = array<i32>} : memref<4x288xf32, #tpu.memory_space<vmem>>, vector<1x32xf32>,
    %c40 = arith.constant 40 : index
    %c0_312 = arith.constant 0 : index
    %274 = vector.load %arg21[%c40, %c0_312] : memref<112x32xf32, #tpu.memory_space<vmem>>, vector<1x32xf32>
    %c0_313 = arith.constant 0 : index
    %c192_314 = arith.constant 192 : index
    %275 = vector.load %arg28[%c0_313, %c192_314] : memref<4x288xf32, #tpu.memory_space<vmem>>, vector<1x32xf32>
    tpu.vector_store %arg28[%c0_313, %c192_314], %274 {strides = array<i32>} : memref<4x288xf32, #tpu.memory_space<vmem>>, vector<1x32xf32>,
    %c42 = arith.constant 42 : index
    %c0_315 = arith.constant 0 : index
    %276 = vector.load %arg21[%c42, %c0_315] : memref<112x32xf32, #tpu.memory_space<vmem>>, vector<1x32xf32>
    %c1_316 = arith.constant 1 : index
    %c192_317 = arith.constant 192 : index
    %277 = vector.load %arg28[%c1_316, %c192_317] : memref<4x288xf32, #tpu.memory_space<vmem>>, vector<1x32xf32>
    tpu.vector_store %arg28[%c1_316, %c192_317], %276 {strides = array<i32>} : memref<4x288xf32, #tpu.memory_space<vmem>>, vector<1x32xf32>,
    %c44 = arith.constant 44 : index
    %c0_318 = arith.constant 0 : index
    %278 = vector.load %arg21[%c44, %c0_318] : memref<112x32xf32, #tpu.memory_space<vmem>>, vector<1x32xf32>
    %c2_319 = arith.constant 2 : index
    %c192_320 = arith.constant 192 : index
    %279 = vector.load %arg28[%c2_319, %c192_320] : memref<4x288xf32, #tpu.memory_space<vmem>>, vector<1x32xf32>
    tpu.vector_store %arg28[%c2_319, %c192_320], %278 {strides = array<i32>} : memref<4x288xf32, #tpu.memory_space<vmem>>, vector<1x32xf32>,
    %c46 = arith.constant 46 : index
    %c0_321 = arith.constant 0 : index
    %280 = vector.load %arg21[%c46, %c0_321] : memref<112x32xf32, #tpu.memory_space<vmem>>, vector<1x32xf32>
    %c3_322 = arith.constant 3 : index
    %c192_323 = arith.constant 192 : index
    %281 = vector.load %arg28[%c3_322, %c192_323] : memref<4x288xf32, #tpu.memory_space<vmem>>, vector<1x32xf32>
    tpu.vector_store %arg28[%c3_322, %c192_323], %280 {strides = array<i32>} : memref<4x288xf32, #tpu.memory_space<vmem>>, vector<1x32xf32>,
    %c41 = arith.constant 41 : index
    %c0_324 = arith.constant 0 : index
    %282 = vector.load %arg21[%c41, %c0_324] : memref<112x32xf32, #tpu.memory_space<vmem>>, vector<1x32xf32>
    %c0_325 = arith.constant 0 : index
    %c224_326 = arith.constant 224 : index
    %283 = vector.load %arg28[%c0_325, %c224_326] : memref<4x288xf32, #tpu.memory_space<vmem>>, vector<1x32xf32>
    tpu.vector_store %arg28[%c0_325, %c224_326], %282 {strides = array<i32>} : memref<4x288xf32, #tpu.memory_space<vmem>>, vector<1x32xf32>,
    %c43 = arith.constant 43 : index
    %c0_327 = arith.constant 0 : index
    %284 = vector.load %arg21[%c43, %c0_327] : memref<112x32xf32, #tpu.memory_space<vmem>>, vector<1x32xf32>
    %c1_328 = arith.constant 1 : index
    %c224_329 = arith.constant 224 : index
    %285 = vector.load %arg28[%c1_328, %c224_329] : memref<4x288xf32, #tpu.memory_space<vmem>>, vector<1x32xf32>
    tpu.vector_store %arg28[%c1_328, %c224_329], %284 {strides = array<i32>} : memref<4x288xf32, #tpu.memory_space<vmem>>, vector<1x32xf32>,
    %c45 = arith.constant 45 : index
    %c0_330 = arith.constant 0 : index
    %286 = vector.load %arg21[%c45, %c0_330] : memref<112x32xf32, #tpu.memory_space<vmem>>, vector<1x32xf32>
    %c2_331 = arith.constant 2 : index
    %c224_332 = arith.constant 224 : index
    %287 = vector.load %arg28[%c2_331, %c224_332] : memref<4x288xf32, #tpu.memory_space<vmem>>, vector<1x32xf32>
    tpu.vector_store %arg28[%c2_331, %c224_332], %286 {strides = array<i32>} : memref<4x288xf32, #tpu.memory_space<vmem>>, vector<1x32xf32>,
    %c47 = arith.constant 47 : index
    %c0_333 = arith.constant 0 : index
    %288 = vector.load %arg21[%c47, %c0_333] : memref<112x32xf32, #tpu.memory_space<vmem>>, vector<1x32xf32>
    %c3_334 = arith.constant 3 : index
    %c224_335 = arith.constant 224 : index
    %289 = vector.load %arg28[%c3_334, %c224_335] : memref<4x288xf32, #tpu.memory_space<vmem>>, vector<1x32xf32>
    tpu.vector_store %arg28[%c3_334, %c224_335], %288 {strides = array<i32>} : memref<4x288xf32, #tpu.memory_space<vmem>>, vector<1x32xf32>,
    %c42_336 = arith.constant 42 : index
    %c0_337 = arith.constant 0 : index
    %290 = vector.load %arg21[%c42_336, %c0_337] : memref<112x32xf32, #tpu.memory_space<vmem>>, vector<1x32xf32>
    %c0_338 = arith.constant 0 : index
    %c256_339 = arith.constant 256 : index
    %291 = vector.load %arg28[%c0_338, %c256_339] : memref<4x288xf32, #tpu.memory_space<vmem>>, vector<1x32xf32>
    tpu.vector_store %arg28[%c0_338, %c256_339], %290 {strides = array<i32>} : memref<4x288xf32, #tpu.memory_space<vmem>>, vector<1x32xf32>,
    %c44_340 = arith.constant 44 : index
    %c0_341 = arith.constant 0 : index
    %292 = vector.load %arg21[%c44_340, %c0_341] : memref<112x32xf32, #tpu.memory_space<vmem>>, vector<1x32xf32>
    %c1_342 = arith.constant 1 : index
    %c256_343 = arith.constant 256 : index
    %293 = vector.load %arg28[%c1_342, %c256_343] : memref<4x288xf32, #tpu.memory_space<vmem>>, vector<1x32xf32>
    tpu.vector_store %arg28[%c1_342, %c256_343], %292 {strides = array<i32>} : memref<4x288xf32, #tpu.memory_space<vmem>>, vector<1x32xf32>,
    %c46_344 = arith.constant 46 : index
    %c0_345 = arith.constant 0 : index
    %294 = vector.load %arg21[%c46_344, %c0_345] : memref<112x32xf32, #tpu.memory_space<vmem>>, vector<1x32xf32>
    %c2_346 = arith.constant 2 : index
    %c256_347 = arith.constant 256 : index
    %295 = vector.load %arg28[%c2_346, %c256_347] : memref<4x288xf32, #tpu.memory_space<vmem>>, vector<1x32xf32>
    tpu.vector_store %arg28[%c2_346, %c256_347], %294 {strides = array<i32>} : memref<4x288xf32, #tpu.memory_space<vmem>>, vector<1x32xf32>,
    %c48 = arith.constant 48 : index
    %c0_348 = arith.constant 0 : index
    %296 = vector.load %arg21[%c48, %c0_348] : memref<112x32xf32, #tpu.memory_space<vmem>>, vector<1x32xf32>
    %c3_349 = arith.constant 3 : index
    %c256_350 = arith.constant 256 : index
    %297 = vector.load %arg28[%c3_349, %c256_350] : memref<4x288xf32, #tpu.memory_space<vmem>>, vector<1x32xf32>
    tpu.vector_store %arg28[%c3_349, %c256_350], %296 {strides = array<i32>} : memref<4x288xf32, #tpu.memory_space<vmem>>, vector<1x32xf32>,
    %c0_351 = arith.constant 0 : index
    %c0_352 = arith.constant 0 : index
    %298 = vector.load %arg28[%c0_351, %c0_352] : memref<4x288xf32, #tpu.memory_space<vmem>>, vector<4x288xf32>
    %299 = arith.truncf %298 : vector<4x288xf32> to vector<4x288xbf16>
    %c0_353 = arith.constant 0 : index
    %c0_354 = arith.constant 0 : index
    %300 = vector.load %arg4[%c0_353, %c0_354] : memref<288x64xbf16, #tpu.memory_space<vmem>>, vector<288x64xbf16>
    %cst_355 = arith.constant dense<0.000000e+00> : vector<4x64xf32>
    %301 = tpu.matmul %299, %300, %cst_355 {dimension_numbers = #tpu.dot_dimension_numbers<[1], [0], [0], [1], [0, 0, 1, 1], [], []>} : vector<4x288xbf16>, vector<288x64xbf16>, vector<4x64xf32> -> vector<4x64xf32>
    %c0_356 = arith.constant 0 : index
    %c0_357 = arith.constant 0 : index
    %302 = vector.load %arg11[%c0_356, %c0_357] : memref<1x64xf32, #tpu.memory_space<vmem>>, vector<1x64xf32>
    %303 = vector.broadcast %302 : vector<1x64xf32> to vector<4x64xf32>
    %304 = arith.addf %301, %303 : vector<4x64xf32>
    %cst_358 = arith.constant 2.510000e-01 : f32
    %305 = vector.broadcast %cst_358 : f32 to vector<4x64xf32>
    %306 = arith.mulf %305, %304 : vector<4x64xf32>
    %cst_359 = arith.constant 1.485500e+00 : f32
    %307 = vector.broadcast %cst_359 : f32 to vector<4x64xf32>
    %308 = arith.addf %306, %307 : vector<4x64xf32>
    %309 = arith.mulf %308, %304 : vector<4x64xf32>
    %cst_360 = arith.constant 3.052000e+00 : f32
    %310 = vector.broadcast %cst_360 : f32 to vector<4x64xf32>
    %311 = arith.addf %309, %310 : vector<4x64xf32>
    %312 = arith.mulf %311, %304 : vector<4x64xf32>
    %cst_361 = arith.constant 2.323500e+00 : f32
    %313 = vector.broadcast %cst_361 : f32 to vector<4x64xf32>
    %314 = arith.addf %312, %313 : vector<4x64xf32>
    %315 = arith.mulf %314, %304 : vector<4x64xf32>
    %cst_362 = arith.constant 6.184000e-01 : f32
    %316 = vector.broadcast %cst_362 : f32 to vector<4x64xf32>
    %317 = arith.addf %315, %316 : vector<4x64xf32>
    %318 = arith.mulf %317, %304 : vector<4x64xf32>
    %cst_363 = arith.constant 2.980000e-02 : f32
    %319 = vector.broadcast %cst_363 : f32 to vector<4x64xf32>
    %320 = arith.addf %318, %319 : vector<4x64xf32>
    %321 = math.absf %304 : vector<4x64xf32>
    %cst_364 = arith.constant 0.000000e+00 : f32
    %322 = vector.broadcast %cst_364 : f32 to vector<4x64xf32>
    %323 = arith.mulf %322, %321 : vector<4x64xf32>
    %cst_365 = arith.constant 3.000000e+00 : f32
    %324 = vector.broadcast %cst_365 : f32 to vector<4x64xf32>
    %325 = arith.addf %323, %324 : vector<4x64xf32>
    %326 = arith.mulf %325, %321 : vector<4x64xf32>
    %cst_366 = arith.constant 0.000000e+00 : f32
    %327 = vector.broadcast %cst_366 : f32 to vector<4x64xf32>
    %328 = arith.addf %326, %327 : vector<4x64xf32>
    %329 = arith.mulf %328, %321 : vector<4x64xf32>
    %cst_367 = arith.constant 2.383100e+00 : f32
    %330 = vector.broadcast %cst_367 : f32 to vector<4x64xf32>
    %331 = arith.addf %329, %330 : vector<4x64xf32>
    %332 = arith.mulf %331, %321 : vector<4x64xf32>
    %cst_368 = arith.constant 1.000000e+00 : f32
    %333 = vector.broadcast %cst_368 : f32 to vector<4x64xf32>
    %334 = arith.addf %332, %333 : vector<4x64xf32>
    %335 = tpu.reciprocal %334 {approx = true} : vector<4x64xf32> -> vector<4x64xf32>
    %336 = arith.mulf %320, %335 : vector<4x64xf32>
    %c13_369 = arith.constant 13 : index
    %c0_370 = arith.constant 0 : index
    %337 = vector.load %arg22[%c13_369, %c0_370] : memref<56x64xf32, #tpu.memory_space<vmem>>, vector<4x64xf32>
    tpu.vector_store %arg22[%c13_369, %c0_370], %336 {strides = array<i32>} : memref<56x64xf32, #tpu.memory_space<vmem>>, vector<4x64xf32>,
    %c40_371 = arith.constant 40 : index
    %c0_372 = arith.constant 0 : index
    %338 = vector.load %arg21[%c40_371, %c0_372] : memref<112x32xf32, #tpu.memory_space<vmem>>, vector<1x32xf32>
    %c0_373 = arith.constant 0 : index
    %c0_374 = arith.constant 0 : index
    %339 = vector.load %arg28[%c0_373, %c0_374] : memref<4x288xf32, #tpu.memory_space<vmem>>, vector<1x32xf32>
    tpu.vector_store %arg28[%c0_373, %c0_374], %338 {strides = array<i32>} : memref<4x288xf32, #tpu.memory_space<vmem>>, vector<1x32xf32>,
    %c42_375 = arith.constant 42 : index
    %c0_376 = arith.constant 0 : index
    %340 = vector.load %arg21[%c42_375, %c0_376] : memref<112x32xf32, #tpu.memory_space<vmem>>, vector<1x32xf32>
    %c1_377 = arith.constant 1 : index
    %c0_378 = arith.constant 0 : index
    %341 = vector.load %arg28[%c1_377, %c0_378] : memref<4x288xf32, #tpu.memory_space<vmem>>, vector<1x32xf32>
    tpu.vector_store %arg28[%c1_377, %c0_378], %340 {strides = array<i32>} : memref<4x288xf32, #tpu.memory_space<vmem>>, vector<1x32xf32>,
    %c44_379 = arith.constant 44 : index
    %c0_380 = arith.constant 0 : index
    %342 = vector.load %arg21[%c44_379, %c0_380] : memref<112x32xf32, #tpu.memory_space<vmem>>, vector<1x32xf32>
    %c2_381 = arith.constant 2 : index
    %c0_382 = arith.constant 0 : index
    %343 = vector.load %arg28[%c2_381, %c0_382] : memref<4x288xf32, #tpu.memory_space<vmem>>, vector<1x32xf32>
    tpu.vector_store %arg28[%c2_381, %c0_382], %342 {strides = array<i32>} : memref<4x288xf32, #tpu.memory_space<vmem>>, vector<1x32xf32>,
    %c46_383 = arith.constant 46 : index
    %c0_384 = arith.constant 0 : index
    %344 = vector.load %arg21[%c46_383, %c0_384] : memref<112x32xf32, #tpu.memory_space<vmem>>, vector<1x32xf32>
    %c3_385 = arith.constant 3 : index
    %c0_386 = arith.constant 0 : index
    %345 = vector.load %arg28[%c3_385, %c0_386] : memref<4x288xf32, #tpu.memory_space<vmem>>, vector<1x32xf32>
    tpu.vector_store %arg28[%c3_385, %c0_386], %344 {strides = array<i32>} : memref<4x288xf32, #tpu.memory_space<vmem>>, vector<1x32xf32>,
    %c41_387 = arith.constant 41 : index
    %c0_388 = arith.constant 0 : index
    %346 = vector.load %arg21[%c41_387, %c0_388] : memref<112x32xf32, #tpu.memory_space<vmem>>, vector<1x32xf32>
    %c0_389 = arith.constant 0 : index
    %c32_390 = arith.constant 32 : index
    %347 = vector.load %arg28[%c0_389, %c32_390] : memref<4x288xf32, #tpu.memory_space<vmem>>, vector<1x32xf32>
    tpu.vector_store %arg28[%c0_389, %c32_390], %346 {strides = array<i32>} : memref<4x288xf32, #tpu.memory_space<vmem>>, vector<1x32xf32>,
    %c43_391 = arith.constant 43 : index
    %c0_392 = arith.constant 0 : index
    %348 = vector.load %arg21[%c43_391, %c0_392] : memref<112x32xf32, #tpu.memory_space<vmem>>, vector<1x32xf32>
    %c1_393 = arith.constant 1 : index
    %c32_394 = arith.constant 32 : index
    %349 = vector.load %arg28[%c1_393, %c32_394] : memref<4x288xf32, #tpu.memory_space<vmem>>, vector<1x32xf32>
    tpu.vector_store %arg28[%c1_393, %c32_394], %348 {strides = array<i32>} : memref<4x288xf32, #tpu.memory_space<vmem>>, vector<1x32xf32>,
    %c45_395 = arith.constant 45 : index
    %c0_396 = arith.constant 0 : index
    %350 = vector.load %arg21[%c45_395, %c0_396] : memref<112x32xf32, #tpu.memory_space<vmem>>, vector<1x32xf32>
    %c2_397 = arith.constant 2 : index
    %c32_398 = arith.constant 32 : index
    %351 = vector.load %arg28[%c2_397, %c32_398] : memref<4x288xf32, #tpu.memory_space<vmem>>, vector<1x32xf32>
    tpu.vector_store %arg28[%c2_397, %c32_398], %350 {strides = array<i32>} : memref<4x288xf32, #tpu.memory_space<vmem>>, vector<1x32xf32>,
    %c47_399 = arith.constant 47 : index
    %c0_400 = arith.constant 0 : index
    %352 = vector.load %arg21[%c47_399, %c0_400] : memref<112x32xf32, #tpu.memory_space<vmem>>, vector<1x32xf32>
    %c3_401 = arith.constant 3 : index
    %c32_402 = arith.constant 32 : index
    %353 = vector.load %arg28[%c3_401, %c32_402] : memref<4x288xf32, #tpu.memory_space<vmem>>, vector<1x32xf32>
    tpu.vector_store %arg28[%c3_401, %c32_402], %352 {strides = array<i32>} : memref<4x288xf32, #tpu.memory_space<vmem>>, vector<1x32xf32>,
    %c42_403 = arith.constant 42 : index
    %c0_404 = arith.constant 0 : index
    %354 = vector.load %arg21[%c42_403, %c0_404] : memref<112x32xf32, #tpu.memory_space<vmem>>, vector<1x32xf32>
    %c0_405 = arith.constant 0 : index
    %c64_406 = arith.constant 64 : index
    %355 = vector.load %arg28[%c0_405, %c64_406] : memref<4x288xf32, #tpu.memory_space<vmem>>, vector<1x32xf32>
    tpu.vector_store %arg28[%c0_405, %c64_406], %354 {strides = array<i32>} : memref<4x288xf32, #tpu.memory_space<vmem>>, vector<1x32xf32>,
    %c44_407 = arith.constant 44 : index
    %c0_408 = arith.constant 0 : index
    %356 = vector.load %arg21[%c44_407, %c0_408] : memref<112x32xf32, #tpu.memory_space<vmem>>, vector<1x32xf32>
    %c1_409 = arith.constant 1 : index
    %c64_410 = arith.constant 64 : index
    %357 = vector.load %arg28[%c1_409, %c64_410] : memref<4x288xf32, #tpu.memory_space<vmem>>, vector<1x32xf32>
    tpu.vector_store %arg28[%c1_409, %c64_410], %356 {strides = array<i32>} : memref<4x288xf32, #tpu.memory_space<vmem>>, vector<1x32xf32>,
    %c46_411 = arith.constant 46 : index
    %c0_412 = arith.constant 0 : index
    %358 = vector.load %arg21[%c46_411, %c0_412] : memref<112x32xf32, #tpu.memory_space<vmem>>, vector<1x32xf32>
    %c2_413 = arith.constant 2 : index
    %c64_414 = arith.constant 64 : index
    %359 = vector.load %arg28[%c2_413, %c64_414] : memref<4x288xf32, #tpu.memory_space<vmem>>, vector<1x32xf32>
    tpu.vector_store %arg28[%c2_413, %c64_414], %358 {strides = array<i32>} : memref<4x288xf32, #tpu.memory_space<vmem>>, vector<1x32xf32>,
    %c48_415 = arith.constant 48 : index
    %c0_416 = arith.constant 0 : index
    %360 = vector.load %arg21[%c48_415, %c0_416] : memref<112x32xf32, #tpu.memory_space<vmem>>, vector<1x32xf32>
    %c3_417 = arith.constant 3 : index
    %c64_418 = arith.constant 64 : index
    %361 = vector.load %arg28[%c3_417, %c64_418] : memref<4x288xf32, #tpu.memory_space<vmem>>, vector<1x32xf32>
    tpu.vector_store %arg28[%c3_417, %c64_418], %360 {strides = array<i32>} : memref<4x288xf32, #tpu.memory_space<vmem>>, vector<1x32xf32>,
    %c50 = arith.constant 50 : index
    %c0_419 = arith.constant 0 : index
    %362 = vector.load %arg21[%c50, %c0_419] : memref<112x32xf32, #tpu.memory_space<vmem>>, vector<1x32xf32>
    %c0_420 = arith.constant 0 : index
    %c96_421 = arith.constant 96 : index
    %363 = vector.load %arg28[%c0_420, %c96_421] : memref<4x288xf32, #tpu.memory_space<vmem>>, vector<1x32xf32>
    tpu.vector_store %arg28[%c0_420, %c96_421], %362 {strides = array<i32>} : memref<4x288xf32, #tpu.memory_space<vmem>>, vector<1x32xf32>,
    %c52 = arith.constant 52 : index
    %c0_422 = arith.constant 0 : index
    %364 = vector.load %arg21[%c52, %c0_422] : memref<112x32xf32, #tpu.memory_space<vmem>>, vector<1x32xf32>
    %c1_423 = arith.constant 1 : index
    %c96_424 = arith.constant 96 : index
    %365 = vector.load %arg28[%c1_423, %c96_424] : memref<4x288xf32, #tpu.memory_space<vmem>>, vector<1x32xf32>
    tpu.vector_store %arg28[%c1_423, %c96_424], %364 {strides = array<i32>} : memref<4x288xf32, #tpu.memory_space<vmem>>, vector<1x32xf32>,
    %c54 = arith.constant 54 : index
    %c0_425 = arith.constant 0 : index
    %366 = vector.load %arg21[%c54, %c0_425] : memref<112x32xf32, #tpu.memory_space<vmem>>, vector<1x32xf32>
    %c2_426 = arith.constant 2 : index
    %c96_427 = arith.constant 96 : index
    %367 = vector.load %arg28[%c2_426, %c96_427] : memref<4x288xf32, #tpu.memory_space<vmem>>, vector<1x32xf32>
    tpu.vector_store %arg28[%c2_426, %c96_427], %366 {strides = array<i32>} : memref<4x288xf32, #tpu.memory_space<vmem>>, vector<1x32xf32>,
    %c56 = arith.constant 56 : index
    %c0_428 = arith.constant 0 : index
    %368 = vector.load %arg21[%c56, %c0_428] : memref<112x32xf32, #tpu.memory_space<vmem>>, vector<1x32xf32>
    %c3_429 = arith.constant 3 : index
    %c96_430 = arith.constant 96 : index
    %369 = vector.load %arg28[%c3_429, %c96_430] : memref<4x288xf32, #tpu.memory_space<vmem>>, vector<1x32xf32>
    tpu.vector_store %arg28[%c3_429, %c96_430], %368 {strides = array<i32>} : memref<4x288xf32, #tpu.memory_space<vmem>>, vector<1x32xf32>,
    %c51 = arith.constant 51 : index
    %c0_431 = arith.constant 0 : index
    %370 = vector.load %arg21[%c51, %c0_431] : memref<112x32xf32, #tpu.memory_space<vmem>>, vector<1x32xf32>
    %c0_432 = arith.constant 0 : index
    %c128_433 = arith.constant 128 : index
    %371 = vector.load %arg28[%c0_432, %c128_433] : memref<4x288xf32, #tpu.memory_space<vmem>>, vector<1x32xf32>
    tpu.vector_store %arg28[%c0_432, %c128_433], %370 {strides = array<i32>} : memref<4x288xf32, #tpu.memory_space<vmem>>, vector<1x32xf32>,
    %c53 = arith.constant 53 : index
    %c0_434 = arith.constant 0 : index
    %372 = vector.load %arg21[%c53, %c0_434] : memref<112x32xf32, #tpu.memory_space<vmem>>, vector<1x32xf32>
    %c1_435 = arith.constant 1 : index
    %c128_436 = arith.constant 128 : index
    %373 = vector.load %arg28[%c1_435, %c128_436] : memref<4x288xf32, #tpu.memory_space<vmem>>, vector<1x32xf32>
    tpu.vector_store %arg28[%c1_435, %c128_436], %372 {strides = array<i32>} : memref<4x288xf32, #tpu.memory_space<vmem>>, vector<1x32xf32>,
    %c55 = arith.constant 55 : index
    %c0_437 = arith.constant 0 : index
    %374 = vector.load %arg21[%c55, %c0_437] : memref<112x32xf32, #tpu.memory_space<vmem>>, vector<1x32xf32>
    %c2_438 = arith.constant 2 : index
    %c128_439 = arith.constant 128 : index
    %375 = vector.load %arg28[%c2_438, %c128_439] : memref<4x288xf32, #tpu.memory_space<vmem>>, vector<1x32xf32>
    tpu.vector_store %arg28[%c2_438, %c128_439], %374 {strides = array<i32>} : memref<4x288xf32, #tpu.memory_space<vmem>>, vector<1x32xf32>,
    %c57 = arith.constant 57 : index
    %c0_440 = arith.constant 0 : index
    %376 = vector.load %arg21[%c57, %c0_440] : memref<112x32xf32, #tpu.memory_space<vmem>>, vector<1x32xf32>
    %c3_441 = arith.constant 3 : index
    %c128_442 = arith.constant 128 : index
    %377 = vector.load %arg28[%c3_441, %c128_442] : memref<4x288xf32, #tpu.memory_space<vmem>>, vector<1x32xf32>
    tpu.vector_store %arg28[%c3_441, %c128_442], %376 {strides = array<i32>} : memref<4x288xf32, #tpu.memory_space<vmem>>, vector<1x32xf32>,
    %c52_443 = arith.constant 52 : index
    %c0_444 = arith.constant 0 : index
    %378 = vector.load %arg21[%c52_443, %c0_444] : memref<112x32xf32, #tpu.memory_space<vmem>>, vector<1x32xf32>
    %c0_445 = arith.constant 0 : index
    %c160_446 = arith.constant 160 : index
    %379 = vector.load %arg28[%c0_445, %c160_446] : memref<4x288xf32, #tpu.memory_space<vmem>>, vector<1x32xf32>
    tpu.vector_store %arg28[%c0_445, %c160_446], %378 {strides = array<i32>} : memref<4x288xf32, #tpu.memory_space<vmem>>, vector<1x32xf32>,
    %c54_447 = arith.constant 54 : index
    %c0_448 = arith.constant 0 : index
    %380 = vector.load %arg21[%c54_447, %c0_448] : memref<112x32xf32, #tpu.memory_space<vmem>>, vector<1x32xf32>
    %c1_449 = arith.constant 1 : index
    %c160_450 = arith.constant 160 : index
    %381 = vector.load %arg28[%c1_449, %c160_450] : memref<4x288xf32, #tpu.memory_space<vmem>>, vector<1x32xf32>
    tpu.vector_store %arg28[%c1_449, %c160_450], %380 {strides = array<i32>} : memref<4x288xf32, #tpu.memory_space<vmem>>, vector<1x32xf32>,
    %c56_451 = arith.constant 56 : index
    %c0_452 = arith.constant 0 : index
    %382 = vector.load %arg21[%c56_451, %c0_452] : memref<112x32xf32, #tpu.memory_space<vmem>>, vector<1x32xf32>
    %c2_453 = arith.constant 2 : index
    %c160_454 = arith.constant 160 : index
    %383 = vector.load %arg28[%c2_453, %c160_454] : memref<4x288xf32, #tpu.memory_space<vmem>>, vector<1x32xf32>
    tpu.vector_store %arg28[%c2_453, %c160_454], %382 {strides = array<i32>} : memref<4x288xf32, #tpu.memory_space<vmem>>, vector<1x32xf32>,
    %c58 = arith.constant 58 : index
    %c0_455 = arith.constant 0 : index
    %384 = vector.load %arg21[%c58, %c0_455] : memref<112x32xf32, #tpu.memory_space<vmem>>, vector<1x32xf32>
    %c3_456 = arith.constant 3 : index
    %c160_457 = arith.constant 160 : index
    %385 = vector.load %arg28[%c3_456, %c160_457] : memref<4x288xf32, #tpu.memory_space<vmem>>, vector<1x32xf32>
    tpu.vector_store %arg28[%c3_456, %c160_457], %384 {strides = array<i32>} : memref<4x288xf32, #tpu.memory_space<vmem>>, vector<1x32xf32>,
    %c60 = arith.constant 60 : index
    %c0_458 = arith.constant 0 : index
    %386 = vector.load %arg21[%c60, %c0_458] : memref<112x32xf32, #tpu.memory_space<vmem>>, vector<1x32xf32>
    %c0_459 = arith.constant 0 : index
    %c192_460 = arith.constant 192 : index
    %387 = vector.load %arg28[%c0_459, %c192_460] : memref<4x288xf32, #tpu.memory_space<vmem>>, vector<1x32xf32>
    tpu.vector_store %arg28[%c0_459, %c192_460], %386 {strides = array<i32>} : memref<4x288xf32, #tpu.memory_space<vmem>>, vector<1x32xf32>,
    %c62 = arith.constant 62 : index
    %c0_461 = arith.constant 0 : index
    %388 = vector.load %arg21[%c62, %c0_461] : memref<112x32xf32, #tpu.memory_space<vmem>>, vector<1x32xf32>
    %c1_462 = arith.constant 1 : index
    %c192_463 = arith.constant 192 : index
    %389 = vector.load %arg28[%c1_462, %c192_463] : memref<4x288xf32, #tpu.memory_space<vmem>>, vector<1x32xf32>
    tpu.vector_store %arg28[%c1_462, %c192_463], %388 {strides = array<i32>} : memref<4x288xf32, #tpu.memory_space<vmem>>, vector<1x32xf32>,
    %c64_464 = arith.constant 64 : index
    %c0_465 = arith.constant 0 : index
    %390 = vector.load %arg21[%c64_464, %c0_465] : memref<112x32xf32, #tpu.memory_space<vmem>>, vector<1x32xf32>
    %c2_466 = arith.constant 2 : index
    %c192_467 = arith.constant 192 : index
    %391 = vector.load %arg28[%c2_466, %c192_467] : memref<4x288xf32, #tpu.memory_space<vmem>>, vector<1x32xf32>
    tpu.vector_store %arg28[%c2_466, %c192_467], %390 {strides = array<i32>} : memref<4x288xf32, #tpu.memory_space<vmem>>, vector<1x32xf32>,
    %c66 = arith.constant 66 : index
    %c0_468 = arith.constant 0 : index
    %392 = vector.load %arg21[%c66, %c0_468] : memref<112x32xf32, #tpu.memory_space<vmem>>, vector<1x32xf32>
    %c3_469 = arith.constant 3 : index
    %c192_470 = arith.constant 192 : index
    %393 = vector.load %arg28[%c3_469, %c192_470] : memref<4x288xf32, #tpu.memory_space<vmem>>, vector<1x32xf32>
    tpu.vector_store %arg28[%c3_469, %c192_470], %392 {strides = array<i32>} : memref<4x288xf32, #tpu.memory_space<vmem>>, vector<1x32xf32>,
    %c61 = arith.constant 61 : index
    %c0_471 = arith.constant 0 : index
    %394 = vector.load %arg21[%c61, %c0_471] : memref<112x32xf32, #tpu.memory_space<vmem>>, vector<1x32xf32>
    %c0_472 = arith.constant 0 : index
    %c224_473 = arith.constant 224 : index
    %395 = vector.load %arg28[%c0_472, %c224_473] : memref<4x288xf32, #tpu.memory_space<vmem>>, vector<1x32xf32>
    tpu.vector_store %arg28[%c0_472, %c224_473], %394 {strides = array<i32>} : memref<4x288xf32, #tpu.memory_space<vmem>>, vector<1x32xf32>,
    %c63 = arith.constant 63 : index
    %c0_474 = arith.constant 0 : index
    %396 = vector.load %arg21[%c63, %c0_474] : memref<112x32xf32, #tpu.memory_space<vmem>>, vector<1x32xf32>
    %c1_475 = arith.constant 1 : index
    %c224_476 = arith.constant 224 : index
    %397 = vector.load %arg28[%c1_475, %c224_476] : memref<4x288xf32, #tpu.memory_space<vmem>>, vector<1x32xf32>
    tpu.vector_store %arg28[%c1_475, %c224_476], %396 {strides = array<i32>} : memref<4x288xf32, #tpu.memory_space<vmem>>, vector<1x32xf32>,
    %c65 = arith.constant 65 : index
    %c0_477 = arith.constant 0 : index
    %398 = vector.load %arg21[%c65, %c0_477] : memref<112x32xf32, #tpu.memory_space<vmem>>, vector<1x32xf32>
    %c2_478 = arith.constant 2 : index
    %c224_479 = arith.constant 224 : index
    %399 = vector.load %arg28[%c2_478, %c224_479] : memref<4x288xf32, #tpu.memory_space<vmem>>, vector<1x32xf32>
    tpu.vector_store %arg28[%c2_478, %c224_479], %398 {strides = array<i32>} : memref<4x288xf32, #tpu.memory_space<vmem>>, vector<1x32xf32>,
    %c67 = arith.constant 67 : index
    %c0_480 = arith.constant 0 : index
    %400 = vector.load %arg21[%c67, %c0_480] : memref<112x32xf32, #tpu.memory_space<vmem>>, vector<1x32xf32>
    %c3_481 = arith.constant 3 : index
    %c224_482 = arith.constant 224 : index
    %401 = vector.load %arg28[%c3_481, %c224_482] : memref<4x288xf32, #tpu.memory_space<vmem>>, vector<1x32xf32>
    tpu.vector_store %arg28[%c3_481, %c224_482], %400 {strides = array<i32>} : memref<4x288xf32, #tpu.memory_space<vmem>>, vector<1x32xf32>,
    %c62_483 = arith.constant 62 : index
    %c0_484 = arith.constant 0 : index
    %402 = vector.load %arg21[%c62_483, %c0_484] : memref<112x32xf32, #tpu.memory_space<vmem>>, vector<1x32xf32>
    %c0_485 = arith.constant 0 : index
    %c256_486 = arith.constant 256 : index
    %403 = vector.load %arg28[%c0_485, %c256_486] : memref<4x288xf32, #tpu.memory_space<vmem>>, vector<1x32xf32>
    tpu.vector_store %arg28[%c0_485, %c256_486], %402 {strides = array<i32>} : memref<4x288xf32, #tpu.memory_space<vmem>>, vector<1x32xf32>,
    %c64_487 = arith.constant 64 : index
    %c0_488 = arith.constant 0 : index
    %404 = vector.load %arg21[%c64_487, %c0_488] : memref<112x32xf32, #tpu.memory_space<vmem>>, vector<1x32xf32>
    %c1_489 = arith.constant 1 : index
    %c256_490 = arith.constant 256 : index
    %405 = vector.load %arg28[%c1_489, %c256_490] : memref<4x288xf32, #tpu.memory_space<vmem>>, vector<1x32xf32>
    tpu.vector_store %arg28[%c1_489, %c256_490], %404 {strides = array<i32>} : memref<4x288xf32, #tpu.memory_space<vmem>>, vector<1x32xf32>,
    %c66_491 = arith.constant 66 : index
    %c0_492 = arith.constant 0 : index
    %406 = vector.load %arg21[%c66_491, %c0_492] : memref<112x32xf32, #tpu.memory_space<vmem>>, vector<1x32xf32>
    %c2_493 = arith.constant 2 : index
    %c256_494 = arith.constant 256 : index
    %407 = vector.load %arg28[%c2_493, %c256_494] : memref<4x288xf32, #tpu.memory_space<vmem>>, vector<1x32xf32>
    tpu.vector_store %arg28[%c2_493, %c256_494], %406 {strides = array<i32>} : memref<4x288xf32, #tpu.memory_space<vmem>>, vector<1x32xf32>,
    %c68 = arith.constant 68 : index
    %c0_495 = arith.constant 0 : index
    %408 = vector.load %arg21[%c68, %c0_495] : memref<112x32xf32, #tpu.memory_space<vmem>>, vector<1x32xf32>
    %c3_496 = arith.constant 3 : index
    %c256_497 = arith.constant 256 : index
    %409 = vector.load %arg28[%c3_496, %c256_497] : memref<4x288xf32, #tpu.memory_space<vmem>>, vector<1x32xf32>
    tpu.vector_store %arg28[%c3_496, %c256_497], %408 {strides = array<i32>} : memref<4x288xf32, #tpu.memory_space<vmem>>, vector<1x32xf32>,
    %c0_498 = arith.constant 0 : index
    %c0_499 = arith.constant 0 : index
    %410 = vector.load %arg28[%c0_498, %c0_499] : memref<4x288xf32, #tpu.memory_space<vmem>>, vector<4x288xf32>
    %411 = arith.truncf %410 : vector<4x288xf32> to vector<4x288xbf16>
    %c0_500 = arith.constant 0 : index
    %c0_501 = arith.constant 0 : index
    %412 = vector.load %arg4[%c0_500, %c0_501] : memref<288x64xbf16, #tpu.memory_space<vmem>>, vector<288x64xbf16>
    %cst_502 = arith.constant dense<0.000000e+00> : vector<4x64xf32>
    %413 = tpu.matmul %411, %412, %cst_502 {dimension_numbers = #tpu.dot_dimension_numbers<[1], [0], [0], [1], [0, 0, 1, 1], [], []>} : vector<4x288xbf16>, vector<288x64xbf16>, vector<4x64xf32> -> vector<4x64xf32>
    %c0_503 = arith.constant 0 : index
    %c0_504 = arith.constant 0 : index
    %414 = vector.load %arg11[%c0_503, %c0_504] : memref<1x64xf32, #tpu.memory_space<vmem>>, vector<1x64xf32>
    %415 = vector.broadcast %414 : vector<1x64xf32> to vector<4x64xf32>
    %416 = arith.addf %413, %415 : vector<4x64xf32>
    %cst_505 = arith.constant 2.510000e-01 : f32
    %417 = vector.broadcast %cst_505 : f32 to vector<4x64xf32>
    %418 = arith.mulf %417, %416 : vector<4x64xf32>
    %cst_506 = arith.constant 1.485500e+00 : f32
    %419 = vector.broadcast %cst_506 : f32 to vector<4x64xf32>
    %420 = arith.addf %418, %419 : vector<4x64xf32>
    %421 = arith.mulf %420, %416 : vector<4x64xf32>
    %cst_507 = arith.constant 3.052000e+00 : f32
    %422 = vector.broadcast %cst_507 : f32 to vector<4x64xf32>
    %423 = arith.addf %421, %422 : vector<4x64xf32>
    %424 = arith.mulf %423, %416 : vector<4x64xf32>
    %cst_508 = arith.constant 2.323500e+00 : f32
    %425 = vector.broadcast %cst_508 : f32 to vector<4x64xf32>
    %426 = arith.addf %424, %425 : vector<4x64xf32>
    %427 = arith.mulf %426, %416 : vector<4x64xf32>
    %cst_509 = arith.constant 6.184000e-01 : f32
    %428 = vector.broadcast %cst_509 : f32 to vector<4x64xf32>
    %429 = arith.addf %427, %428 : vector<4x64xf32>
    %430 = arith.mulf %429, %416 : vector<4x64xf32>
    %cst_510 = arith.constant 2.980000e-02 : f32
    %431 = vector.broadcast %cst_510 : f32 to vector<4x64xf32>
    %432 = arith.addf %430, %431 : vector<4x64xf32>
    %433 = math.absf %416 : vector<4x64xf32>
    %cst_511 = arith.constant 0.000000e+00 : f32
    %434 = vector.broadcast %cst_511 : f32 to vector<4x64xf32>
    %435 = arith.mulf %434, %433 : vector<4x64xf32>
    %cst_512 = arith.constant 3.000000e+00 : f32
    %436 = vector.broadcast %cst_512 : f32 to vector<4x64xf32>
    %437 = arith.addf %435, %436 : vector<4x64xf32>
    %438 = arith.mulf %437, %433 : vector<4x64xf32>
    %cst_513 = arith.constant 0.000000e+00 : f32
    %439 = vector.broadcast %cst_513 : f32 to vector<4x64xf32>
    %440 = arith.addf %438, %439 : vector<4x64xf32>
    %441 = arith.mulf %440, %433 : vector<4x64xf32>
    %cst_514 = arith.constant 2.383100e+00 : f32
    %442 = vector.broadcast %cst_514 : f32 to vector<4x64xf32>
    %443 = arith.addf %441, %442 : vector<4x64xf32>
    %444 = arith.mulf %443, %433 : vector<4x64xf32>
    %cst_515 = arith.constant 1.000000e+00 : f32
    %445 = vector.broadcast %cst_515 : f32 to vector<4x64xf32>
    %446 = arith.addf %444, %445 : vector<4x64xf32>
    %447 = tpu.reciprocal %446 {approx = true} : vector<4x64xf32> -> vector<4x64xf32>
    %448 = arith.mulf %432, %447 : vector<4x64xf32>
    %c19 = arith.constant 19 : index
    %c0_516 = arith.constant 0 : index
    %449 = vector.load %arg22[%c19, %c0_516] : memref<56x64xf32, #tpu.memory_space<vmem>>, vector<4x64xf32>
    tpu.vector_store %arg22[%c19, %c0_516], %448 {strides = array<i32>} : memref<56x64xf32, #tpu.memory_space<vmem>>, vector<4x64xf32>,
    %c60_517 = arith.constant 60 : index
    %c0_518 = arith.constant 0 : index
    %450 = vector.load %arg21[%c60_517, %c0_518] : memref<112x32xf32, #tpu.memory_space<vmem>>, vector<1x32xf32>
    %c0_519 = arith.constant 0 : index
    %c0_520 = arith.constant 0 : index
    %451 = vector.load %arg28[%c0_519, %c0_520] : memref<4x288xf32, #tpu.memory_space<vmem>>, vector<1x32xf32>
    tpu.vector_store %arg28[%c0_519, %c0_520], %450 {strides = array<i32>} : memref<4x288xf32, #tpu.memory_space<vmem>>, vector<1x32xf32>,
    %c62_521 = arith.constant 62 : index
    %c0_522 = arith.constant 0 : index
    %452 = vector.load %arg21[%c62_521, %c0_522] : memref<112x32xf32, #tpu.memory_space<vmem>>, vector<1x32xf32>
    %c1_523 = arith.constant 1 : index
    %c0_524 = arith.constant 0 : index
    %453 = vector.load %arg28[%c1_523, %c0_524] : memref<4x288xf32, #tpu.memory_space<vmem>>, vector<1x32xf32>
    tpu.vector_store %arg28[%c1_523, %c0_524], %452 {strides = array<i32>} : memref<4x288xf32, #tpu.memory_space<vmem>>, vector<1x32xf32>,
    %c64_525 = arith.constant 64 : index
    %c0_526 = arith.constant 0 : index
    %454 = vector.load %arg21[%c64_525, %c0_526] : memref<112x32xf32, #tpu.memory_space<vmem>>, vector<1x32xf32>
    %c2_527 = arith.constant 2 : index
    %c0_528 = arith.constant 0 : index
    %455 = vector.load %arg28[%c2_527, %c0_528] : memref<4x288xf32, #tpu.memory_space<vmem>>, vector<1x32xf32>
    tpu.vector_store %arg28[%c2_527, %c0_528], %454 {strides = array<i32>} : memref<4x288xf32, #tpu.memory_space<vmem>>, vector<1x32xf32>,
    %c66_529 = arith.constant 66 : index
    %c0_530 = arith.constant 0 : index
    %456 = vector.load %arg21[%c66_529, %c0_530] : memref<112x32xf32, #tpu.memory_space<vmem>>, vector<1x32xf32>
    %c3_531 = arith.constant 3 : index
    %c0_532 = arith.constant 0 : index
    %457 = vector.load %arg28[%c3_531, %c0_532] : memref<4x288xf32, #tpu.memory_space<vmem>>, vector<1x32xf32>
    tpu.vector_store %arg28[%c3_531, %c0_532], %456 {strides = array<i32>} : memref<4x288xf32, #tpu.memory_space<vmem>>, vector<1x32xf32>,
    %c61_533 = arith.constant 61 : index
    %c0_534 = arith.constant 0 : index
    %458 = vector.load %arg21[%c61_533, %c0_534] : memref<112x32xf32, #tpu.memory_space<vmem>>, vector<1x32xf32>
    %c0_535 = arith.constant 0 : index
    %c32_536 = arith.constant 32 : index
    %459 = vector.load %arg28[%c0_535, %c32_536] : memref<4x288xf32, #tpu.memory_space<vmem>>, vector<1x32xf32>
    tpu.vector_store %arg28[%c0_535, %c32_536], %458 {strides = array<i32>} : memref<4x288xf32, #tpu.memory_space<vmem>>, vector<1x32xf32>,
    %c63_537 = arith.constant 63 : index
    %c0_538 = arith.constant 0 : index
    %460 = vector.load %arg21[%c63_537, %c0_538] : memref<112x32xf32, #tpu.memory_space<vmem>>, vector<1x32xf32>
    %c1_539 = arith.constant 1 : index
    %c32_540 = arith.constant 32 : index
    %461 = vector.load %arg28[%c1_539, %c32_540] : memref<4x288xf32, #tpu.memory_space<vmem>>, vector<1x32xf32>
    tpu.vector_store %arg28[%c1_539, %c32_540], %460 {strides = array<i32>} : memref<4x288xf32, #tpu.memory_space<vmem>>, vector<1x32xf32>,
    %c65_541 = arith.constant 65 : index
    %c0_542 = arith.constant 0 : index
    %462 = vector.load %arg21[%c65_541, %c0_542] : memref<112x32xf32, #tpu.memory_space<vmem>>, vector<1x32xf32>
    %c2_543 = arith.constant 2 : index
    %c32_544 = arith.constant 32 : index
    %463 = vector.load %arg28[%c2_543, %c32_544] : memref<4x288xf32, #tpu.memory_space<vmem>>, vector<1x32xf32>
    tpu.vector_store %arg28[%c2_543, %c32_544], %462 {strides = array<i32>} : memref<4x288xf32, #tpu.memory_space<vmem>>, vector<1x32xf32>,
    %c67_545 = arith.constant 67 : index
    %c0_546 = arith.constant 0 : index
    %464 = vector.load %arg21[%c67_545, %c0_546] : memref<112x32xf32, #tpu.memory_space<vmem>>, vector<1x32xf32>
    %c3_547 = arith.constant 3 : index
    %c32_548 = arith.constant 32 : index
    %465 = vector.load %arg28[%c3_547, %c32_548] : memref<4x288xf32, #tpu.memory_space<vmem>>, vector<1x32xf32>
    tpu.vector_store %arg28[%c3_547, %c32_548], %464 {strides = array<i32>} : memref<4x288xf32, #tpu.memory_space<vmem>>, vector<1x32xf32>,
    %c62_549 = arith.constant 62 : index
    %c0_550 = arith.constant 0 : index
    %466 = vector.load %arg21[%c62_549, %c0_550] : memref<112x32xf32, #tpu.memory_space<vmem>>, vector<1x32xf32>
    %c0_551 = arith.constant 0 : index
    %c64_552 = arith.constant 64 : index
    %467 = vector.load %arg28[%c0_551, %c64_552] : memref<4x288xf32, #tpu.memory_space<vmem>>, vector<1x32xf32>
    tpu.vector_store %arg28[%c0_551, %c64_552], %466 {strides = array<i32>} : memref<4x288xf32, #tpu.memory_space<vmem>>, vector<1x32xf32>,
    %c64_553 = arith.constant 64 : index
    %c0_554 = arith.constant 0 : index
    %468 = vector.load %arg21[%c64_553, %c0_554] : memref<112x32xf32, #tpu.memory_space<vmem>>, vector<1x32xf32>
    %c1_555 = arith.constant 1 : index
    %c64_556 = arith.constant 64 : index
    %469 = vector.load %arg28[%c1_555, %c64_556] : memref<4x288xf32, #tpu.memory_space<vmem>>, vector<1x32xf32>
    tpu.vector_store %arg28[%c1_555, %c64_556], %468 {strides = array<i32>} : memref<4x288xf32, #tpu.memory_space<vmem>>, vector<1x32xf32>,
    %c66_557 = arith.constant 66 : index
    %c0_558 = arith.constant 0 : index
    %470 = vector.load %arg21[%c66_557, %c0_558] : memref<112x32xf32, #tpu.memory_space<vmem>>, vector<1x32xf32>
    %c2_559 = arith.constant 2 : index
    %c64_560 = arith.constant 64 : index
    %471 = vector.load %arg28[%c2_559, %c64_560] : memref<4x288xf32, #tpu.memory_space<vmem>>, vector<1x32xf32>
    tpu.vector_store %arg28[%c2_559, %c64_560], %470 {strides = array<i32>} : memref<4x288xf32, #tpu.memory_space<vmem>>, vector<1x32xf32>,
    %c68_561 = arith.constant 68 : index
    %c0_562 = arith.constant 0 : index
    %472 = vector.load %arg21[%c68_561, %c0_562] : memref<112x32xf32, #tpu.memory_space<vmem>>, vector<1x32xf32>
    %c3_563 = arith.constant 3 : index
    %c64_564 = arith.constant 64 : index
    %473 = vector.load %arg28[%c3_563, %c64_564] : memref<4x288xf32, #tpu.memory_space<vmem>>, vector<1x32xf32>
    tpu.vector_store %arg28[%c3_563, %c64_564], %472 {strides = array<i32>} : memref<4x288xf32, #tpu.memory_space<vmem>>, vector<1x32xf32>,
    %c70 = arith.constant 70 : index
    %c0_565 = arith.constant 0 : index
    %474 = vector.load %arg21[%c70, %c0_565] : memref<112x32xf32, #tpu.memory_space<vmem>>, vector<1x32xf32>
    %c0_566 = arith.constant 0 : index
    %c96_567 = arith.constant 96 : index
    %475 = vector.load %arg28[%c0_566, %c96_567] : memref<4x288xf32, #tpu.memory_space<vmem>>, vector<1x32xf32>
    tpu.vector_store %arg28[%c0_566, %c96_567], %474 {strides = array<i32>} : memref<4x288xf32, #tpu.memory_space<vmem>>, vector<1x32xf32>,
    %c72 = arith.constant 72 : index
    %c0_568 = arith.constant 0 : index
    %476 = vector.load %arg21[%c72, %c0_568] : memref<112x32xf32, #tpu.memory_space<vmem>>, vector<1x32xf32>
    %c1_569 = arith.constant 1 : index
    %c96_570 = arith.constant 96 : index
    %477 = vector.load %arg28[%c1_569, %c96_570] : memref<4x288xf32, #tpu.memory_space<vmem>>, vector<1x32xf32>
    tpu.vector_store %arg28[%c1_569, %c96_570], %476 {strides = array<i32>} : memref<4x288xf32, #tpu.memory_space<vmem>>, vector<1x32xf32>,
    %c74 = arith.constant 74 : index
    %c0_571 = arith.constant 0 : index
    %478 = vector.load %arg21[%c74, %c0_571] : memref<112x32xf32, #tpu.memory_space<vmem>>, vector<1x32xf32>
    %c2_572 = arith.constant 2 : index
    %c96_573 = arith.constant 96 : index
    %479 = vector.load %arg28[%c2_572, %c96_573] : memref<4x288xf32, #tpu.memory_space<vmem>>, vector<1x32xf32>
    tpu.vector_store %arg28[%c2_572, %c96_573], %478 {strides = array<i32>} : memref<4x288xf32, #tpu.memory_space<vmem>>, vector<1x32xf32>,
    %c76 = arith.constant 76 : index
    %c0_574 = arith.constant 0 : index
    %480 = vector.load %arg21[%c76, %c0_574] : memref<112x32xf32, #tpu.memory_space<vmem>>, vector<1x32xf32>
    %c3_575 = arith.constant 3 : index
    %c96_576 = arith.constant 96 : index
    %481 = vector.load %arg28[%c3_575, %c96_576] : memref<4x288xf32, #tpu.memory_space<vmem>>, vector<1x32xf32>
    tpu.vector_store %arg28[%c3_575, %c96_576], %480 {strides = array<i32>} : memref<4x288xf32, #tpu.memory_space<vmem>>, vector<1x32xf32>,
    %c71 = arith.constant 71 : index
    %c0_577 = arith.constant 0 : index
    %482 = vector.load %arg21[%c71, %c0_577] : memref<112x32xf32, #tpu.memory_space<vmem>>, vector<1x32xf32>
    %c0_578 = arith.constant 0 : index
    %c128_579 = arith.constant 128 : index
    %483 = vector.load %arg28[%c0_578, %c128_579] : memref<4x288xf32, #tpu.memory_space<vmem>>, vector<1x32xf32>
    tpu.vector_store %arg28[%c0_578, %c128_579], %482 {strides = array<i32>} : memref<4x288xf32, #tpu.memory_space<vmem>>, vector<1x32xf32>,
    %c73 = arith.constant 73 : index
    %c0_580 = arith.constant 0 : index
    %484 = vector.load %arg21[%c73, %c0_580] : memref<112x32xf32, #tpu.memory_space<vmem>>, vector<1x32xf32>
    %c1_581 = arith.constant 1 : index
    %c128_582 = arith.constant 128 : index
    %485 = vector.load %arg28[%c1_581, %c128_582] : memref<4x288xf32, #tpu.memory_space<vmem>>, vector<1x32xf32>
    tpu.vector_store %arg28[%c1_581, %c128_582], %484 {strides = array<i32>} : memref<4x288xf32, #tpu.memory_space<vmem>>, vector<1x32xf32>,
    %c75 = arith.constant 75 : index
    %c0_583 = arith.constant 0 : index
    %486 = vector.load %arg21[%c75, %c0_583] : memref<112x32xf32, #tpu.memory_space<vmem>>, vector<1x32xf32>
    %c2_584 = arith.constant 2 : index
    %c128_585 = arith.constant 128 : index
    %487 = vector.load %arg28[%c2_584, %c128_585] : memref<4x288xf32, #tpu.memory_space<vmem>>, vector<1x32xf32>
    tpu.vector_store %arg28[%c2_584, %c128_585], %486 {strides = array<i32>} : memref<4x288xf32, #tpu.memory_space<vmem>>, vector<1x32xf32>,
    %c77 = arith.constant 77 : index
    %c0_586 = arith.constant 0 : index
    %488 = vector.load %arg21[%c77, %c0_586] : memref<112x32xf32, #tpu.memory_space<vmem>>, vector<1x32xf32>
    %c3_587 = arith.constant 3 : index
    %c128_588 = arith.constant 128 : index
    %489 = vector.load %arg28[%c3_587, %c128_588] : memref<4x288xf32, #tpu.memory_space<vmem>>, vector<1x32xf32>
    tpu.vector_store %arg28[%c3_587, %c128_588], %488 {strides = array<i32>} : memref<4x288xf32, #tpu.memory_space<vmem>>, vector<1x32xf32>,
    %c72_589 = arith.constant 72 : index
    %c0_590 = arith.constant 0 : index
    %490 = vector.load %arg21[%c72_589, %c0_590] : memref<112x32xf32, #tpu.memory_space<vmem>>, vector<1x32xf32>
    %c0_591 = arith.constant 0 : index
    %c160_592 = arith.constant 160 : index
    %491 = vector.load %arg28[%c0_591, %c160_592] : memref<4x288xf32, #tpu.memory_space<vmem>>, vector<1x32xf32>
    tpu.vector_store %arg28[%c0_591, %c160_592], %490 {strides = array<i32>} : memref<4x288xf32, #tpu.memory_space<vmem>>, vector<1x32xf32>,
    %c74_593 = arith.constant 74 : index
    %c0_594 = arith.constant 0 : index
    %492 = vector.load %arg21[%c74_593, %c0_594] : memref<112x32xf32, #tpu.memory_space<vmem>>, vector<1x32xf32>
    %c1_595 = arith.constant 1 : index
    %c160_596 = arith.constant 160 : index
    %493 = vector.load %arg28[%c1_595, %c160_596] : memref<4x288xf32, #tpu.memory_space<vmem>>, vector<1x32xf32>
    tpu.vector_store %arg28[%c1_595, %c160_596], %492 {strides = array<i32>} : memref<4x288xf32, #tpu.memory_space<vmem>>, vector<1x32xf32>,
    %c76_597 = arith.constant 76 : index
    %c0_598 = arith.constant 0 : index
    %494 = vector.load %arg21[%c76_597, %c0_598] : memref<112x32xf32, #tpu.memory_space<vmem>>, vector<1x32xf32>
    %c2_599 = arith.constant 2 : index
    %c160_600 = arith.constant 160 : index
    %495 = vector.load %arg28[%c2_599, %c160_600] : memref<4x288xf32, #tpu.memory_space<vmem>>, vector<1x32xf32>
    tpu.vector_store %arg28[%c2_599, %c160_600], %494 {strides = array<i32>} : memref<4x288xf32, #tpu.memory_space<vmem>>, vector<1x32xf32>,
    %c78 = arith.constant 78 : index
    %c0_601 = arith.constant 0 : index
    %496 = vector.load %arg21[%c78, %c0_601] : memref<112x32xf32, #tpu.memory_space<vmem>>, vector<1x32xf32>
    %c3_602 = arith.constant 3 : index
    %c160_603 = arith.constant 160 : index
    %497 = vector.load %arg28[%c3_602, %c160_603] : memref<4x288xf32, #tpu.memory_space<vmem>>, vector<1x32xf32>
    tpu.vector_store %arg28[%c3_602, %c160_603], %496 {strides = array<i32>} : memref<4x288xf32, #tpu.memory_space<vmem>>, vector<1x32xf32>,
    %c80 = arith.constant 80 : index
    %c0_604 = arith.constant 0 : index
    %498 = vector.load %arg21[%c80, %c0_604] : memref<112x32xf32, #tpu.memory_space<vmem>>, vector<1x32xf32>
    %c0_605 = arith.constant 0 : index
    %c192_606 = arith.constant 192 : index
    %499 = vector.load %arg28[%c0_605, %c192_606] : memref<4x288xf32, #tpu.memory_space<vmem>>, vector<1x32xf32>
    tpu.vector_store %arg28[%c0_605, %c192_606], %498 {strides = array<i32>} : memref<4x288xf32, #tpu.memory_space<vmem>>, vector<1x32xf32>,
    %c82 = arith.constant 82 : index
    %c0_607 = arith.constant 0 : index
    %500 = vector.load %arg21[%c82, %c0_607] : memref<112x32xf32, #tpu.memory_space<vmem>>, vector<1x32xf32>
    %c1_608 = arith.constant 1 : index
    %c192_609 = arith.constant 192 : index
    %501 = vector.load %arg28[%c1_608, %c192_609] : memref<4x288xf32, #tpu.memory_space<vmem>>, vector<1x32xf32>
    tpu.vector_store %arg28[%c1_608, %c192_609], %500 {strides = array<i32>} : memref<4x288xf32, #tpu.memory_space<vmem>>, vector<1x32xf32>,
    %c84 = arith.constant 84 : index
    %c0_610 = arith.constant 0 : index
    %502 = vector.load %arg21[%c84, %c0_610] : memref<112x32xf32, #tpu.memory_space<vmem>>, vector<1x32xf32>
    %c2_611 = arith.constant 2 : index
    %c192_612 = arith.constant 192 : index
    %503 = vector.load %arg28[%c2_611, %c192_612] : memref<4x288xf32, #tpu.memory_space<vmem>>, vector<1x32xf32>
    tpu.vector_store %arg28[%c2_611, %c192_612], %502 {strides = array<i32>} : memref<4x288xf32, #tpu.memory_space<vmem>>, vector<1x32xf32>,
    %c86 = arith.constant 86 : index
    %c0_613 = arith.constant 0 : index
    %504 = vector.load %arg21[%c86, %c0_613] : memref<112x32xf32, #tpu.memory_space<vmem>>, vector<1x32xf32>
    %c3_614 = arith.constant 3 : index
    %c192_615 = arith.constant 192 : index
    %505 = vector.load %arg28[%c3_614, %c192_615] : memref<4x288xf32, #tpu.memory_space<vmem>>, vector<1x32xf32>
    tpu.vector_store %arg28[%c3_614, %c192_615], %504 {strides = array<i32>} : memref<4x288xf32, #tpu.memory_space<vmem>>, vector<1x32xf32>,
    %c81 = arith.constant 81 : index
    %c0_616 = arith.constant 0 : index
    %506 = vector.load %arg21[%c81, %c0_616] : memref<112x32xf32, #tpu.memory_space<vmem>>, vector<1x32xf32>
    %c0_617 = arith.constant 0 : index
    %c224_618 = arith.constant 224 : index
    %507 = vector.load %arg28[%c0_617, %c224_618] : memref<4x288xf32, #tpu.memory_space<vmem>>, vector<1x32xf32>
    tpu.vector_store %arg28[%c0_617, %c224_618], %506 {strides = array<i32>} : memref<4x288xf32, #tpu.memory_space<vmem>>, vector<1x32xf32>,
    %c83 = arith.constant 83 : index
    %c0_619 = arith.constant 0 : index
    %508 = vector.load %arg21[%c83, %c0_619] : memref<112x32xf32, #tpu.memory_space<vmem>>, vector<1x32xf32>
    %c1_620 = arith.constant 1 : index
    %c224_621 = arith.constant 224 : index
    %509 = vector.load %arg28[%c1_620, %c224_621] : memref<4x288xf32, #tpu.memory_space<vmem>>, vector<1x32xf32>
    tpu.vector_store %arg28[%c1_620, %c224_621], %508 {strides = array<i32>} : memref<4x288xf32, #tpu.memory_space<vmem>>, vector<1x32xf32>,
    %c85 = arith.constant 85 : index
    %c0_622 = arith.constant 0 : index
    %510 = vector.load %arg21[%c85, %c0_622] : memref<112x32xf32, #tpu.memory_space<vmem>>, vector<1x32xf32>
    %c2_623 = arith.constant 2 : index
    %c224_624 = arith.constant 224 : index
    %511 = vector.load %arg28[%c2_623, %c224_624] : memref<4x288xf32, #tpu.memory_space<vmem>>, vector<1x32xf32>
    tpu.vector_store %arg28[%c2_623, %c224_624], %510 {strides = array<i32>} : memref<4x288xf32, #tpu.memory_space<vmem>>, vector<1x32xf32>,
    %c87 = arith.constant 87 : index
    %c0_625 = arith.constant 0 : index
    %512 = vector.load %arg21[%c87, %c0_625] : memref<112x32xf32, #tpu.memory_space<vmem>>, vector<1x32xf32>
    %c3_626 = arith.constant 3 : index
    %c224_627 = arith.constant 224 : index
    %513 = vector.load %arg28[%c3_626, %c224_627] : memref<4x288xf32, #tpu.memory_space<vmem>>, vector<1x32xf32>
    tpu.vector_store %arg28[%c3_626, %c224_627], %512 {strides = array<i32>} : memref<4x288xf32, #tpu.memory_space<vmem>>, vector<1x32xf32>,
    %c82_628 = arith.constant 82 : index
    %c0_629 = arith.constant 0 : index
    %514 = vector.load %arg21[%c82_628, %c0_629] : memref<112x32xf32, #tpu.memory_space<vmem>>, vector<1x32xf32>
    %c0_630 = arith.constant 0 : index
    %c256_631 = arith.constant 256 : index
    %515 = vector.load %arg28[%c0_630, %c256_631] : memref<4x288xf32, #tpu.memory_space<vmem>>, vector<1x32xf32>
    tpu.vector_store %arg28[%c0_630, %c256_631], %514 {strides = array<i32>} : memref<4x288xf32, #tpu.memory_space<vmem>>, vector<1x32xf32>,
    %c84_632 = arith.constant 84 : index
    %c0_633 = arith.constant 0 : index
    %516 = vector.load %arg21[%c84_632, %c0_633] : memref<112x32xf32, #tpu.memory_space<vmem>>, vector<1x32xf32>
    %c1_634 = arith.constant 1 : index
    %c256_635 = arith.constant 256 : index
    %517 = vector.load %arg28[%c1_634, %c256_635] : memref<4x288xf32, #tpu.memory_space<vmem>>, vector<1x32xf32>
    tpu.vector_store %arg28[%c1_634, %c256_635], %516 {strides = array<i32>} : memref<4x288xf32, #tpu.memory_space<vmem>>, vector<1x32xf32>,
    %c86_636 = arith.constant 86 : index
    %c0_637 = arith.constant 0 : index
    %518 = vector.load %arg21[%c86_636, %c0_637] : memref<112x32xf32, #tpu.memory_space<vmem>>, vector<1x32xf32>
    %c2_638 = arith.constant 2 : index
    %c256_639 = arith.constant 256 : index
    %519 = vector.load %arg28[%c2_638, %c256_639] : memref<4x288xf32, #tpu.memory_space<vmem>>, vector<1x32xf32>
    tpu.vector_store %arg28[%c2_638, %c256_639], %518 {strides = array<i32>} : memref<4x288xf32, #tpu.memory_space<vmem>>, vector<1x32xf32>,
    %c88 = arith.constant 88 : index
    %c0_640 = arith.constant 0 : index
    %520 = vector.load %arg21[%c88, %c0_640] : memref<112x32xf32, #tpu.memory_space<vmem>>, vector<1x32xf32>
    %c3_641 = arith.constant 3 : index
    %c256_642 = arith.constant 256 : index
    %521 = vector.load %arg28[%c3_641, %c256_642] : memref<4x288xf32, #tpu.memory_space<vmem>>, vector<1x32xf32>
    tpu.vector_store %arg28[%c3_641, %c256_642], %520 {strides = array<i32>} : memref<4x288xf32, #tpu.memory_space<vmem>>, vector<1x32xf32>,
    %c0_643 = arith.constant 0 : index
    %c0_644 = arith.constant 0 : index
    %522 = vector.load %arg28[%c0_643, %c0_644] : memref<4x288xf32, #tpu.memory_space<vmem>>, vector<4x288xf32>
    %523 = arith.truncf %522 : vector<4x288xf32> to vector<4x288xbf16>
    %c0_645 = arith.constant 0 : index
    %c0_646 = arith.constant 0 : index
    %524 = vector.load %arg4[%c0_645, %c0_646] : memref<288x64xbf16, #tpu.memory_space<vmem>>, vector<288x64xbf16>
    %cst_647 = arith.constant dense<0.000000e+00> : vector<4x64xf32>
    %525 = tpu.matmul %523, %524, %cst_647 {dimension_numbers = #tpu.dot_dimension_numbers<[1], [0], [0], [1], [0, 0, 1, 1], [], []>} : vector<4x288xbf16>, vector<288x64xbf16>, vector<4x64xf32> -> vector<4x64xf32>
    %c0_648 = arith.constant 0 : index
    %c0_649 = arith.constant 0 : index
    %526 = vector.load %arg11[%c0_648, %c0_649] : memref<1x64xf32, #tpu.memory_space<vmem>>, vector<1x64xf32>
    %527 = vector.broadcast %526 : vector<1x64xf32> to vector<4x64xf32>
    %528 = arith.addf %525, %527 : vector<4x64xf32>
    %cst_650 = arith.constant 2.510000e-01 : f32
    %529 = vector.broadcast %cst_650 : f32 to vector<4x64xf32>
    %530 = arith.mulf %529, %528 : vector<4x64xf32>
    %cst_651 = arith.constant 1.485500e+00 : f32
    %531 = vector.broadcast %cst_651 : f32 to vector<4x64xf32>
    %532 = arith.addf %530, %531 : vector<4x64xf32>
    %533 = arith.mulf %532, %528 : vector<4x64xf32>
    %cst_652 = arith.constant 3.052000e+00 : f32
    %534 = vector.broadcast %cst_652 : f32 to vector<4x64xf32>
    %535 = arith.addf %533, %534 : vector<4x64xf32>
    %536 = arith.mulf %535, %528 : vector<4x64xf32>
    %cst_653 = arith.constant 2.323500e+00 : f32
    %537 = vector.broadcast %cst_653 : f32 to vector<4x64xf32>
    %538 = arith.addf %536, %537 : vector<4x64xf32>
    %539 = arith.mulf %538, %528 : vector<4x64xf32>
    %cst_654 = arith.constant 6.184000e-01 : f32
    %540 = vector.broadcast %cst_654 : f32 to vector<4x64xf32>
    %541 = arith.addf %539, %540 : vector<4x64xf32>
    %542 = arith.mulf %541, %528 : vector<4x64xf32>
    %cst_655 = arith.constant 2.980000e-02 : f32
    %543 = vector.broadcast %cst_655 : f32 to vector<4x64xf32>
    %544 = arith.addf %542, %543 : vector<4x64xf32>
    %545 = math.absf %528 : vector<4x64xf32>
    %cst_656 = arith.constant 0.000000e+00 : f32
    %546 = vector.broadcast %cst_656 : f32 to vector<4x64xf32>
    %547 = arith.mulf %546, %545 : vector<4x64xf32>
    %cst_657 = arith.constant 3.000000e+00 : f32
    %548 = vector.broadcast %cst_657 : f32 to vector<4x64xf32>
    %549 = arith.addf %547, %548 : vector<4x64xf32>
    %550 = arith.mulf %549, %545 : vector<4x64xf32>
    %cst_658 = arith.constant 0.000000e+00 : f32
    %551 = vector.broadcast %cst_658 : f32 to vector<4x64xf32>
    %552 = arith.addf %550, %551 : vector<4x64xf32>
    %553 = arith.mulf %552, %545 : vector<4x64xf32>
    %cst_659 = arith.constant 2.383100e+00 : f32
    %554 = vector.broadcast %cst_659 : f32 to vector<4x64xf32>
    %555 = arith.addf %553, %554 : vector<4x64xf32>
    %556 = arith.mulf %555, %545 : vector<4x64xf32>
    %cst_660 = arith.constant 1.000000e+00 : f32
    %557 = vector.broadcast %cst_660 : f32 to vector<4x64xf32>
    %558 = arith.addf %556, %557 : vector<4x64xf32>
    %559 = tpu.reciprocal %558 {approx = true} : vector<4x64xf32> -> vector<4x64xf32>
    %560 = arith.mulf %544, %559 : vector<4x64xf32>
    %c25_661 = arith.constant 25 : index
    %c0_662 = arith.constant 0 : index
    %561 = vector.load %arg22[%c25_661, %c0_662] : memref<56x64xf32, #tpu.memory_space<vmem>>, vector<4x64xf32>
    tpu.vector_store %arg22[%c25_661, %c0_662], %560 {strides = array<i32>} : memref<56x64xf32, #tpu.memory_space<vmem>>, vector<4x64xf32>,
    %c0_663 = arith.constant 0 : index
    %c0_664 = arith.constant 0 : index
    %562 = vector.load %arg22[%c0_663, %c0_664] : memref<56x64xf32, #tpu.memory_space<vmem>>, vector<36x64xf32>
    %c0_665 = arith.constant 0 : index
    %c0_666 = arith.constant 0 : index
    %563 = vector.load %arg26[%c0_665, %c0_666] : memref<36x576xf32, #tpu.memory_space<vmem>>, vector<36x64xf32>
    tpu.vector_store %arg26[%c0_665, %c0_666], %562 {strides = array<i32>} : memref<36x576xf32, #tpu.memory_space<vmem>>, vector<36x64xf32>,
    %c1_667 = arith.constant 1 : index
    %c0_668 = arith.constant 0 : index
    %564 = vector.load %arg22[%c1_667, %c0_668] : memref<56x64xf32, #tpu.memory_space<vmem>>, vector<36x64xf32>
    %c0_669 = arith.constant 0 : index
    %c64_670 = arith.constant 64 : index
    %565 = vector.load %arg26[%c0_669, %c64_670] : memref<36x576xf32, #tpu.memory_space<vmem>>, vector<36x64xf32>
    tpu.vector_store %arg26[%c0_669, %c64_670], %564 {strides = array<i32>} : memref<36x576xf32, #tpu.memory_space<vmem>>, vector<36x64xf32>,
    %c2_671 = arith.constant 2 : index
    %c0_672 = arith.constant 0 : index
    %566 = vector.load %arg22[%c2_671, %c0_672] : memref<56x64xf32, #tpu.memory_space<vmem>>, vector<36x64xf32>
    %c0_673 = arith.constant 0 : index
    %c128_674 = arith.constant 128 : index
    %567 = vector.load %arg26[%c0_673, %c128_674] : memref<36x576xf32, #tpu.memory_space<vmem>>, vector<36x64xf32>
    tpu.vector_store %arg26[%c0_673, %c128_674], %566 {strides = array<i32>} : memref<36x576xf32, #tpu.memory_space<vmem>>, vector<36x64xf32>,
    %c6_675 = arith.constant 6 : index
    %c0_676 = arith.constant 0 : index
    %568 = vector.load %arg22[%c6_675, %c0_676] : memref<56x64xf32, #tpu.memory_space<vmem>>, vector<36x64xf32>
    %c0_677 = arith.constant 0 : index
    %c192_678 = arith.constant 192 : index
    %569 = vector.load %arg26[%c0_677, %c192_678] : memref<36x576xf32, #tpu.memory_space<vmem>>, vector<36x64xf32>
    tpu.vector_store %arg26[%c0_677, %c192_678], %568 {strides = array<i32>} : memref<36x576xf32, #tpu.memory_space<vmem>>, vector<36x64xf32>,
    %c7_679 = arith.constant 7 : index
    %c0_680 = arith.constant 0 : index
    %570 = vector.load %arg22[%c7_679, %c0_680] : memref<56x64xf32, #tpu.memory_space<vmem>>, vector<36x64xf32>
    %c0_681 = arith.constant 0 : index
    %c256_682 = arith.constant 256 : index
    %571 = vector.load %arg26[%c0_681, %c256_682] : memref<36x576xf32, #tpu.memory_space<vmem>>, vector<36x64xf32>
    tpu.vector_store %arg26[%c0_681, %c256_682], %570 {strides = array<i32>} : memref<36x576xf32, #tpu.memory_space<vmem>>, vector<36x64xf32>,
    %c8_683 = arith.constant 8 : index
    %c0_684 = arith.constant 0 : index
    %572 = vector.load %arg22[%c8_683, %c0_684] : memref<56x64xf32, #tpu.memory_space<vmem>>, vector<36x64xf32>
    %c0_685 = arith.constant 0 : index
    %c320 = arith.constant 320 : index
    %573 = vector.load %arg26[%c0_685, %c320] : memref<36x576xf32, #tpu.memory_space<vmem>>, vector<36x64xf32>
    tpu.vector_store %arg26[%c0_685, %c320], %572 {strides = array<i32>} : memref<36x576xf32, #tpu.memory_space<vmem>>, vector<36x64xf32>,
    %c12_686 = arith.constant 12 : index
    %c0_687 = arith.constant 0 : index
    %574 = vector.load %arg22[%c12_686, %c0_687] : memref<56x64xf32, #tpu.memory_space<vmem>>, vector<36x64xf32>
    %c0_688 = arith.constant 0 : index
    %c384 = arith.constant 384 : index
    %575 = vector.load %arg26[%c0_688, %c384] : memref<36x576xf32, #tpu.memory_space<vmem>>, vector<36x64xf32>
    tpu.vector_store %arg26[%c0_688, %c384], %574 {strides = array<i32>} : memref<36x576xf32, #tpu.memory_space<vmem>>, vector<36x64xf32>,
    %c13_689 = arith.constant 13 : index
    %c0_690 = arith.constant 0 : index
    %576 = vector.load %arg22[%c13_689, %c0_690] : memref<56x64xf32, #tpu.memory_space<vmem>>, vector<36x64xf32>
    %c0_691 = arith.constant 0 : index
    %c448 = arith.constant 448 : index
    %577 = vector.load %arg26[%c0_691, %c448] : memref<36x576xf32, #tpu.memory_space<vmem>>, vector<36x64xf32>
    tpu.vector_store %arg26[%c0_691, %c448], %576 {strides = array<i32>} : memref<36x576xf32, #tpu.memory_space<vmem>>, vector<36x64xf32>,
    %c14_692 = arith.constant 14 : index
    %c0_693 = arith.constant 0 : index
    %578 = vector.load %arg22[%c14_692, %c0_693] : memref<56x64xf32, #tpu.memory_space<vmem>>, vector<36x64xf32>
    %c0_694 = arith.constant 0 : index
    %c512 = arith.constant 512 : index
    %579 = vector.load %arg26[%c0_694, %c512] : memref<36x576xf32, #tpu.memory_space<vmem>>, vector<36x64xf32>
    tpu.vector_store %arg26[%c0_694, %c512], %578 {strides = array<i32>} : memref<36x576xf32, #tpu.memory_space<vmem>>, vector<36x64xf32>,
    %c0_695 = arith.constant 0 : index
    %c0_696 = arith.constant 0 : index
    %580 = vector.load %arg26[%c0_695, %c0_696] : memref<36x576xf32, #tpu.memory_space<vmem>>, vector<36x576xf32>
    %581 = arith.truncf %580 : vector<36x576xf32> to vector<36x576xbf16>
    %c0_697 = arith.constant 0 : index
    %c0_698 = arith.constant 0 : index
    %582 = vector.load %arg5[%c0_697, %c0_698] : memref<576x64xbf16, #tpu.memory_space<vmem>>, vector<576x64xbf16>
    %cst_699 = arith.constant dense<0.000000e+00> : vector<36x64xf32>
    %583 = tpu.matmul %581, %582, %cst_699 {dimension_numbers = #tpu.dot_dimension_numbers<[1], [0], [0], [1], [0, 0, 1, 1], [], []>} : vector<36x576xbf16>, vector<576x64xbf16>, vector<36x64xf32> -> vector<36x64xf32>
    %c0_700 = arith.constant 0 : index
    %c0_701 = arith.constant 0 : index
    %584 = vector.load %arg12[%c0_700, %c0_701] : memref<1x64xf32, #tpu.memory_space<vmem>>, vector<1x64xf32>
    %585 = vector.broadcast %584 : vector<1x64xf32> to vector<36x64xf32>
    %586 = arith.addf %583, %585 : vector<36x64xf32>
    %cst_702 = arith.constant 2.510000e-01 : f32
    %587 = vector.broadcast %cst_702 : f32 to vector<36x64xf32>
    %588 = arith.mulf %587, %586 : vector<36x64xf32>
    %cst_703 = arith.constant 1.485500e+00 : f32
    %589 = vector.broadcast %cst_703 : f32 to vector<36x64xf32>
    %590 = arith.addf %588, %589 : vector<36x64xf32>
    %591 = arith.mulf %590, %586 : vector<36x64xf32>
    %cst_704 = arith.constant 3.052000e+00 : f32
    %592 = vector.broadcast %cst_704 : f32 to vector<36x64xf32>
    %593 = arith.addf %591, %592 : vector<36x64xf32>
    %594 = arith.mulf %593, %586 : vector<36x64xf32>
    %cst_705 = arith.constant 2.323500e+00 : f32
    %595 = vector.broadcast %cst_705 : f32 to vector<36x64xf32>
    %596 = arith.addf %594, %595 : vector<36x64xf32>
    %597 = arith.mulf %596, %586 : vector<36x64xf32>
    %cst_706 = arith.constant 6.184000e-01 : f32
    %598 = vector.broadcast %cst_706 : f32 to vector<36x64xf32>
    %599 = arith.addf %597, %598 : vector<36x64xf32>
    %600 = arith.mulf %599, %586 : vector<36x64xf32>
    %cst_707 = arith.constant 2.980000e-02 : f32
    %601 = vector.broadcast %cst_707 : f32 to vector<36x64xf32>
    %602 = arith.addf %600, %601 : vector<36x64xf32>
    %603 = math.absf %586 : vector<36x64xf32>
    %cst_708 = arith.constant 0.000000e+00 : f32
    %604 = vector.broadcast %cst_708 : f32 to vector<36x64xf32>
    %605 = arith.mulf %604, %603 : vector<36x64xf32>
    %cst_709 = arith.constant 3.000000e+00 : f32
    %606 = vector.broadcast %cst_709 : f32 to vector<36x64xf32>
    %607 = arith.addf %605, %606 : vector<36x64xf32>
    %608 = arith.mulf %607, %603 : vector<36x64xf32>
    %cst_710 = arith.constant 0.000000e+00 : f32
    %609 = vector.broadcast %cst_710 : f32 to vector<36x64xf32>
    %610 = arith.addf %608, %609 : vector<36x64xf32>
    %611 = arith.mulf %610, %603 : vector<36x64xf32>
    %cst_711 = arith.constant 2.383100e+00 : f32
    %612 = vector.broadcast %cst_711 : f32 to vector<36x64xf32>
    %613 = arith.addf %611, %612 : vector<36x64xf32>
    %614 = arith.mulf %613, %603 : vector<36x64xf32>
    %cst_712 = arith.constant 1.000000e+00 : f32
    %615 = vector.broadcast %cst_712 : f32 to vector<36x64xf32>
    %616 = arith.addf %614, %615 : vector<36x64xf32>
    %617 = tpu.reciprocal %616 {approx = true} : vector<36x64xf32> -> vector<36x64xf32>
    %618 = arith.mulf %602, %617 : vector<36x64xf32>
    %c0_713 = arith.constant 0 : index
    %c0_714 = arith.constant 0 : index
    %619 = vector.load %arg18[%c0_713, %c0_714] : memref<36x1xf32, #tpu.memory_space<vmem>>, vector<36x1xf32>
    %620 = vector.broadcast %619 : vector<36x1xf32> to vector<36x64xf32>
    %621 = arith.mulf %618, %620 : vector<36x64xf32>
    %c7_715 = arith.constant 7 : index
    %c0_716 = arith.constant 0 : index
    %622 = vector.load %arg23[%c7_715, %c0_716] : memref<48x64xf32, #tpu.memory_space<vmem>>, vector<36x64xf32>
    tpu.vector_store %arg23[%c7_715, %c0_716], %621 {strides = array<i32>} : memref<48x64xf32, #tpu.memory_space<vmem>>, vector<36x64xf32>,
    %c0_717 = arith.constant 0 : index
    %c0_718 = arith.constant 0 : index
    %623 = vector.load %arg23[%c0_717, %c0_718] : memref<48x64xf32, #tpu.memory_space<vmem>>, vector<1x64xf32>
    %c0_719 = arith.constant 0 : index
    %c0_720 = arith.constant 0 : index
    %624 = vector.load %arg29[%c0_719, %c0_720] : memref<2x576xf32, #tpu.memory_space<vmem>>, vector<1x64xf32>
    tpu.vector_store %arg29[%c0_719, %c0_720], %623 {strides = array<i32>} : memref<2x576xf32, #tpu.memory_space<vmem>>, vector<1x64xf32>,
    %c2_721 = arith.constant 2 : index
    %c0_722 = arith.constant 0 : index
    %625 = vector.load %arg23[%c2_721, %c0_722] : memref<48x64xf32, #tpu.memory_space<vmem>>, vector<1x64xf32>
    %c1_723 = arith.constant 1 : index
    %c0_724 = arith.constant 0 : index
    %626 = vector.load %arg29[%c1_723, %c0_724] : memref<2x576xf32, #tpu.memory_space<vmem>>, vector<1x64xf32>
    tpu.vector_store %arg29[%c1_723, %c0_724], %625 {strides = array<i32>} : memref<2x576xf32, #tpu.memory_space<vmem>>, vector<1x64xf32>,
    %c1_725 = arith.constant 1 : index
    %c0_726 = arith.constant 0 : index
    %627 = vector.load %arg23[%c1_725, %c0_726] : memref<48x64xf32, #tpu.memory_space<vmem>>, vector<1x64xf32>
    %c0_727 = arith.constant 0 : index
    %c64_728 = arith.constant 64 : index
    %628 = vector.load %arg29[%c0_727, %c64_728] : memref<2x576xf32, #tpu.memory_space<vmem>>, vector<1x64xf32>
    tpu.vector_store %arg29[%c0_727, %c64_728], %627 {strides = array<i32>} : memref<2x576xf32, #tpu.memory_space<vmem>>, vector<1x64xf32>,
    %c3_729 = arith.constant 3 : index
    %c0_730 = arith.constant 0 : index
    %629 = vector.load %arg23[%c3_729, %c0_730] : memref<48x64xf32, #tpu.memory_space<vmem>>, vector<1x64xf32>
    %c1_731 = arith.constant 1 : index
    %c64_732 = arith.constant 64 : index
    %630 = vector.load %arg29[%c1_731, %c64_732] : memref<2x576xf32, #tpu.memory_space<vmem>>, vector<1x64xf32>
    tpu.vector_store %arg29[%c1_731, %c64_732], %629 {strides = array<i32>} : memref<2x576xf32, #tpu.memory_space<vmem>>, vector<1x64xf32>,
    %c2_733 = arith.constant 2 : index
    %c0_734 = arith.constant 0 : index
    %631 = vector.load %arg23[%c2_733, %c0_734] : memref<48x64xf32, #tpu.memory_space<vmem>>, vector<1x64xf32>
    %c0_735 = arith.constant 0 : index
    %c128_736 = arith.constant 128 : index
    %632 = vector.load %arg29[%c0_735, %c128_736] : memref<2x576xf32, #tpu.memory_space<vmem>>, vector<1x64xf32>
    tpu.vector_store %arg29[%c0_735, %c128_736], %631 {strides = array<i32>} : memref<2x576xf32, #tpu.memory_space<vmem>>, vector<1x64xf32>,
    %c4_737 = arith.constant 4 : index
    %c0_738 = arith.constant 0 : index
    %633 = vector.load %arg23[%c4_737, %c0_738] : memref<48x64xf32, #tpu.memory_space<vmem>>, vector<1x64xf32>
    %c1_739 = arith.constant 1 : index
    %c128_740 = arith.constant 128 : index
    %634 = vector.load %arg29[%c1_739, %c128_740] : memref<2x576xf32, #tpu.memory_space<vmem>>, vector<1x64xf32>
    tpu.vector_store %arg29[%c1_739, %c128_740], %633 {strides = array<i32>} : memref<2x576xf32, #tpu.memory_space<vmem>>, vector<1x64xf32>,
    %c6_741 = arith.constant 6 : index
    %c0_742 = arith.constant 0 : index
    %635 = vector.load %arg23[%c6_741, %c0_742] : memref<48x64xf32, #tpu.memory_space<vmem>>, vector<1x64xf32>
    %c0_743 = arith.constant 0 : index
    %c192_744 = arith.constant 192 : index
    %636 = vector.load %arg29[%c0_743, %c192_744] : memref<2x576xf32, #tpu.memory_space<vmem>>, vector<1x64xf32>
    tpu.vector_store %arg29[%c0_743, %c192_744], %635 {strides = array<i32>} : memref<2x576xf32, #tpu.memory_space<vmem>>, vector<1x64xf32>,
    %c8_745 = arith.constant 8 : index
    %c0_746 = arith.constant 0 : index
    %637 = vector.load %arg23[%c8_745, %c0_746] : memref<48x64xf32, #tpu.memory_space<vmem>>, vector<1x64xf32>
    %c1_747 = arith.constant 1 : index
    %c192_748 = arith.constant 192 : index
    %638 = vector.load %arg29[%c1_747, %c192_748] : memref<2x576xf32, #tpu.memory_space<vmem>>, vector<1x64xf32>
    tpu.vector_store %arg29[%c1_747, %c192_748], %637 {strides = array<i32>} : memref<2x576xf32, #tpu.memory_space<vmem>>, vector<1x64xf32>,
    %c7_749 = arith.constant 7 : index
    %c0_750 = arith.constant 0 : index
    %639 = vector.load %arg23[%c7_749, %c0_750] : memref<48x64xf32, #tpu.memory_space<vmem>>, vector<1x64xf32>
    %c0_751 = arith.constant 0 : index
    %c256_752 = arith.constant 256 : index
    %640 = vector.load %arg29[%c0_751, %c256_752] : memref<2x576xf32, #tpu.memory_space<vmem>>, vector<1x64xf32>
    tpu.vector_store %arg29[%c0_751, %c256_752], %639 {strides = array<i32>} : memref<2x576xf32, #tpu.memory_space<vmem>>, vector<1x64xf32>,
    %c9 = arith.constant 9 : index
    %c0_753 = arith.constant 0 : index
    %641 = vector.load %arg23[%c9, %c0_753] : memref<48x64xf32, #tpu.memory_space<vmem>>, vector<1x64xf32>
    %c1_754 = arith.constant 1 : index
    %c256_755 = arith.constant 256 : index
    %642 = vector.load %arg29[%c1_754, %c256_755] : memref<2x576xf32, #tpu.memory_space<vmem>>, vector<1x64xf32>
    tpu.vector_store %arg29[%c1_754, %c256_755], %641 {strides = array<i32>} : memref<2x576xf32, #tpu.memory_space<vmem>>, vector<1x64xf32>,
    %c8_756 = arith.constant 8 : index
    %c0_757 = arith.constant 0 : index
    %643 = vector.load %arg23[%c8_756, %c0_757] : memref<48x64xf32, #tpu.memory_space<vmem>>, vector<1x64xf32>
    %c0_758 = arith.constant 0 : index
    %c320_759 = arith.constant 320 : index
    %644 = vector.load %arg29[%c0_758, %c320_759] : memref<2x576xf32, #tpu.memory_space<vmem>>, vector<1x64xf32>
    tpu.vector_store %arg29[%c0_758, %c320_759], %643 {strides = array<i32>} : memref<2x576xf32, #tpu.memory_space<vmem>>, vector<1x64xf32>,
    %c10_760 = arith.constant 10 : index
    %c0_761 = arith.constant 0 : index
    %645 = vector.load %arg23[%c10_760, %c0_761] : memref<48x64xf32, #tpu.memory_space<vmem>>, vector<1x64xf32>
    %c1_762 = arith.constant 1 : index
    %c320_763 = arith.constant 320 : index
    %646 = vector.load %arg29[%c1_762, %c320_763] : memref<2x576xf32, #tpu.memory_space<vmem>>, vector<1x64xf32>
    tpu.vector_store %arg29[%c1_762, %c320_763], %645 {strides = array<i32>} : memref<2x576xf32, #tpu.memory_space<vmem>>, vector<1x64xf32>,
    %c12_764 = arith.constant 12 : index
    %c0_765 = arith.constant 0 : index
    %647 = vector.load %arg23[%c12_764, %c0_765] : memref<48x64xf32, #tpu.memory_space<vmem>>, vector<1x64xf32>
    %c0_766 = arith.constant 0 : index
    %c384_767 = arith.constant 384 : index
    %648 = vector.load %arg29[%c0_766, %c384_767] : memref<2x576xf32, #tpu.memory_space<vmem>>, vector<1x64xf32>
    tpu.vector_store %arg29[%c0_766, %c384_767], %647 {strides = array<i32>} : memref<2x576xf32, #tpu.memory_space<vmem>>, vector<1x64xf32>,
    %c14_768 = arith.constant 14 : index
    %c0_769 = arith.constant 0 : index
    %649 = vector.load %arg23[%c14_768, %c0_769] : memref<48x64xf32, #tpu.memory_space<vmem>>, vector<1x64xf32>
    %c1_770 = arith.constant 1 : index
    %c384_771 = arith.constant 384 : index
    %650 = vector.load %arg29[%c1_770, %c384_771] : memref<2x576xf32, #tpu.memory_space<vmem>>, vector<1x64xf32>
    tpu.vector_store %arg29[%c1_770, %c384_771], %649 {strides = array<i32>} : memref<2x576xf32, #tpu.memory_space<vmem>>, vector<1x64xf32>,
    %c13_772 = arith.constant 13 : index
    %c0_773 = arith.constant 0 : index
    %651 = vector.load %arg23[%c13_772, %c0_773] : memref<48x64xf32, #tpu.memory_space<vmem>>, vector<1x64xf32>
    %c0_774 = arith.constant 0 : index
    %c448_775 = arith.constant 448 : index
    %652 = vector.load %arg29[%c0_774, %c448_775] : memref<2x576xf32, #tpu.memory_space<vmem>>, vector<1x64xf32>
    tpu.vector_store %arg29[%c0_774, %c448_775], %651 {strides = array<i32>} : memref<2x576xf32, #tpu.memory_space<vmem>>, vector<1x64xf32>,
    %c15_776 = arith.constant 15 : index
    %c0_777 = arith.constant 0 : index
    %653 = vector.load %arg23[%c15_776, %c0_777] : memref<48x64xf32, #tpu.memory_space<vmem>>, vector<1x64xf32>
    %c1_778 = arith.constant 1 : index
    %c448_779 = arith.constant 448 : index
    %654 = vector.load %arg29[%c1_778, %c448_779] : memref<2x576xf32, #tpu.memory_space<vmem>>, vector<1x64xf32>
    tpu.vector_store %arg29[%c1_778, %c448_779], %653 {strides = array<i32>} : memref<2x576xf32, #tpu.memory_space<vmem>>, vector<1x64xf32>,
    %c14_780 = arith.constant 14 : index
    %c0_781 = arith.constant 0 : index
    %655 = vector.load %arg23[%c14_780, %c0_781] : memref<48x64xf32, #tpu.memory_space<vmem>>, vector<1x64xf32>
    %c0_782 = arith.constant 0 : index
    %c512_783 = arith.constant 512 : index
    %656 = vector.load %arg29[%c0_782, %c512_783] : memref<2x576xf32, #tpu.memory_space<vmem>>, vector<1x64xf32>
    tpu.vector_store %arg29[%c0_782, %c512_783], %655 {strides = array<i32>} : memref<2x576xf32, #tpu.memory_space<vmem>>, vector<1x64xf32>,
    %c16_784 = arith.constant 16 : index
    %c0_785 = arith.constant 0 : index
    %657 = vector.load %arg23[%c16_784, %c0_785] : memref<48x64xf32, #tpu.memory_space<vmem>>, vector<1x64xf32>
    %c1_786 = arith.constant 1 : index
    %c512_787 = arith.constant 512 : index
    %658 = vector.load %arg29[%c1_786, %c512_787] : memref<2x576xf32, #tpu.memory_space<vmem>>, vector<1x64xf32>
    tpu.vector_store %arg29[%c1_786, %c512_787], %657 {strides = array<i32>} : memref<2x576xf32, #tpu.memory_space<vmem>>, vector<1x64xf32>,
    %c0_788 = arith.constant 0 : index
    %c0_789 = arith.constant 0 : index
    %659 = vector.load %arg29[%c0_788, %c0_789] : memref<2x576xf32, #tpu.memory_space<vmem>>, vector<2x576xf32>
    %660 = arith.truncf %659 : vector<2x576xf32> to vector<2x576xbf16>
    %c0_790 = arith.constant 0 : index
    %c0_791 = arith.constant 0 : index
    %661 = vector.load %arg6[%c0_790, %c0_791] : memref<576x128xbf16, #tpu.memory_space<vmem>>, vector<576x128xbf16>
    %cst_792 = arith.constant dense<0.000000e+00> : vector<2x128xf32>
    %662 = tpu.matmul %660, %661, %cst_792 {dimension_numbers = #tpu.dot_dimension_numbers<[1], [0], [0], [1], [0, 0, 1, 1], [], []>} : vector<2x576xbf16>, vector<576x128xbf16>, vector<2x128xf32> -> vector<2x128xf32>
    %c0_793 = arith.constant 0 : index
    %c0_794 = arith.constant 0 : index
    %663 = vector.load %arg13[%c0_793, %c0_794] : memref<1x128xf32, #tpu.memory_space<vmem>>, vector<1x128xf32>
    %664 = vector.broadcast %663 : vector<1x128xf32> to vector<2x128xf32>
    %665 = arith.addf %662, %664 : vector<2x128xf32>
    %cst_795 = arith.constant 2.510000e-01 : f32
    %666 = vector.broadcast %cst_795 : f32 to vector<2x128xf32>
    %667 = arith.mulf %666, %665 : vector<2x128xf32>
    %cst_796 = arith.constant 1.485500e+00 : f32
    %668 = vector.broadcast %cst_796 : f32 to vector<2x128xf32>
    %669 = arith.addf %667, %668 : vector<2x128xf32>
    %670 = arith.mulf %669, %665 : vector<2x128xf32>
    %cst_797 = arith.constant 3.052000e+00 : f32
    %671 = vector.broadcast %cst_797 : f32 to vector<2x128xf32>
    %672 = arith.addf %670, %671 : vector<2x128xf32>
    %673 = arith.mulf %672, %665 : vector<2x128xf32>
    %cst_798 = arith.constant 2.323500e+00 : f32
    %674 = vector.broadcast %cst_798 : f32 to vector<2x128xf32>
    %675 = arith.addf %673, %674 : vector<2x128xf32>
    %676 = arith.mulf %675, %665 : vector<2x128xf32>
    %cst_799 = arith.constant 6.184000e-01 : f32
    %677 = vector.broadcast %cst_799 : f32 to vector<2x128xf32>
    %678 = arith.addf %676, %677 : vector<2x128xf32>
    %679 = arith.mulf %678, %665 : vector<2x128xf32>
    %cst_800 = arith.constant 2.980000e-02 : f32
    %680 = vector.broadcast %cst_800 : f32 to vector<2x128xf32>
    %681 = arith.addf %679, %680 : vector<2x128xf32>
    %682 = math.absf %665 : vector<2x128xf32>
    %cst_801 = arith.constant 0.000000e+00 : f32
    %683 = vector.broadcast %cst_801 : f32 to vector<2x128xf32>
    %684 = arith.mulf %683, %682 : vector<2x128xf32>
    %cst_802 = arith.constant 3.000000e+00 : f32
    %685 = vector.broadcast %cst_802 : f32 to vector<2x128xf32>
    %686 = arith.addf %684, %685 : vector<2x128xf32>
    %687 = arith.mulf %686, %682 : vector<2x128xf32>
    %cst_803 = arith.constant 0.000000e+00 : f32
    %688 = vector.broadcast %cst_803 : f32 to vector<2x128xf32>
    %689 = arith.addf %687, %688 : vector<2x128xf32>
    %690 = arith.mulf %689, %682 : vector<2x128xf32>
    %cst_804 = arith.constant 2.383100e+00 : f32
    %691 = vector.broadcast %cst_804 : f32 to vector<2x128xf32>
    %692 = arith.addf %690, %691 : vector<2x128xf32>
    %693 = arith.mulf %692, %682 : vector<2x128xf32>
    %cst_805 = arith.constant 1.000000e+00 : f32
    %694 = vector.broadcast %cst_805 : f32 to vector<2x128xf32>
    %695 = arith.addf %693, %694 : vector<2x128xf32>
    %696 = tpu.reciprocal %695 {approx = true} : vector<2x128xf32> -> vector<2x128xf32>
    %697 = arith.mulf %681, %696 : vector<2x128xf32>
    %c5_806 = arith.constant 5 : index
    %c0_807 = arith.constant 0 : index
    %698 = vector.load %arg24[%c5_806, %c0_807] : memref<32x128xf32, #tpu.memory_space<vmem>>, vector<2x128xf32>
    tpu.vector_store %arg24[%c5_806, %c0_807], %697 {strides = array<i32>} : memref<32x128xf32, #tpu.memory_space<vmem>>, vector<2x128xf32>,
    %c12_808 = arith.constant 12 : index
    %c0_809 = arith.constant 0 : index
    %699 = vector.load %arg23[%c12_808, %c0_809] : memref<48x64xf32, #tpu.memory_space<vmem>>, vector<1x64xf32>
    %c0_810 = arith.constant 0 : index
    %c0_811 = arith.constant 0 : index
    %700 = vector.load %arg29[%c0_810, %c0_811] : memref<2x576xf32, #tpu.memory_space<vmem>>, vector<1x64xf32>
    tpu.vector_store %arg29[%c0_810, %c0_811], %699 {strides = array<i32>} : memref<2x576xf32, #tpu.memory_space<vmem>>, vector<1x64xf32>,
    %c14_812 = arith.constant 14 : index
    %c0_813 = arith.constant 0 : index
    %701 = vector.load %arg23[%c14_812, %c0_813] : memref<48x64xf32, #tpu.memory_space<vmem>>, vector<1x64xf32>
    %c1_814 = arith.constant 1 : index
    %c0_815 = arith.constant 0 : index
    %702 = vector.load %arg29[%c1_814, %c0_815] : memref<2x576xf32, #tpu.memory_space<vmem>>, vector<1x64xf32>
    tpu.vector_store %arg29[%c1_814, %c0_815], %701 {strides = array<i32>} : memref<2x576xf32, #tpu.memory_space<vmem>>, vector<1x64xf32>,
    %c13_816 = arith.constant 13 : index
    %c0_817 = arith.constant 0 : index
    %703 = vector.load %arg23[%c13_816, %c0_817] : memref<48x64xf32, #tpu.memory_space<vmem>>, vector<1x64xf32>
    %c0_818 = arith.constant 0 : index
    %c64_819 = arith.constant 64 : index
    %704 = vector.load %arg29[%c0_818, %c64_819] : memref<2x576xf32, #tpu.memory_space<vmem>>, vector<1x64xf32>
    tpu.vector_store %arg29[%c0_818, %c64_819], %703 {strides = array<i32>} : memref<2x576xf32, #tpu.memory_space<vmem>>, vector<1x64xf32>,
    %c15_820 = arith.constant 15 : index
    %c0_821 = arith.constant 0 : index
    %705 = vector.load %arg23[%c15_820, %c0_821] : memref<48x64xf32, #tpu.memory_space<vmem>>, vector<1x64xf32>
    %c1_822 = arith.constant 1 : index
    %c64_823 = arith.constant 64 : index
    %706 = vector.load %arg29[%c1_822, %c64_823] : memref<2x576xf32, #tpu.memory_space<vmem>>, vector<1x64xf32>
    tpu.vector_store %arg29[%c1_822, %c64_823], %705 {strides = array<i32>} : memref<2x576xf32, #tpu.memory_space<vmem>>, vector<1x64xf32>,
    %c14_824 = arith.constant 14 : index
    %c0_825 = arith.constant 0 : index
    %707 = vector.load %arg23[%c14_824, %c0_825] : memref<48x64xf32, #tpu.memory_space<vmem>>, vector<1x64xf32>
    %c0_826 = arith.constant 0 : index
    %c128_827 = arith.constant 128 : index
    %708 = vector.load %arg29[%c0_826, %c128_827] : memref<2x576xf32, #tpu.memory_space<vmem>>, vector<1x64xf32>
    tpu.vector_store %arg29[%c0_826, %c128_827], %707 {strides = array<i32>} : memref<2x576xf32, #tpu.memory_space<vmem>>, vector<1x64xf32>,
    %c16_828 = arith.constant 16 : index
    %c0_829 = arith.constant 0 : index
    %709 = vector.load %arg23[%c16_828, %c0_829] : memref<48x64xf32, #tpu.memory_space<vmem>>, vector<1x64xf32>
    %c1_830 = arith.constant 1 : index
    %c128_831 = arith.constant 128 : index
    %710 = vector.load %arg29[%c1_830, %c128_831] : memref<2x576xf32, #tpu.memory_space<vmem>>, vector<1x64xf32>
    tpu.vector_store %arg29[%c1_830, %c128_831], %709 {strides = array<i32>} : memref<2x576xf32, #tpu.memory_space<vmem>>, vector<1x64xf32>,
    %c18_832 = arith.constant 18 : index
    %c0_833 = arith.constant 0 : index
    %711 = vector.load %arg23[%c18_832, %c0_833] : memref<48x64xf32, #tpu.memory_space<vmem>>, vector<1x64xf32>
    %c0_834 = arith.constant 0 : index
    %c192_835 = arith.constant 192 : index
    %712 = vector.load %arg29[%c0_834, %c192_835] : memref<2x576xf32, #tpu.memory_space<vmem>>, vector<1x64xf32>
    tpu.vector_store %arg29[%c0_834, %c192_835], %711 {strides = array<i32>} : memref<2x576xf32, #tpu.memory_space<vmem>>, vector<1x64xf32>,
    %c20_836 = arith.constant 20 : index
    %c0_837 = arith.constant 0 : index
    %713 = vector.load %arg23[%c20_836, %c0_837] : memref<48x64xf32, #tpu.memory_space<vmem>>, vector<1x64xf32>
    %c1_838 = arith.constant 1 : index
    %c192_839 = arith.constant 192 : index
    %714 = vector.load %arg29[%c1_838, %c192_839] : memref<2x576xf32, #tpu.memory_space<vmem>>, vector<1x64xf32>
    tpu.vector_store %arg29[%c1_838, %c192_839], %713 {strides = array<i32>} : memref<2x576xf32, #tpu.memory_space<vmem>>, vector<1x64xf32>,
    %c19_840 = arith.constant 19 : index
    %c0_841 = arith.constant 0 : index
    %715 = vector.load %arg23[%c19_840, %c0_841] : memref<48x64xf32, #tpu.memory_space<vmem>>, vector<1x64xf32>
    %c0_842 = arith.constant 0 : index
    %c256_843 = arith.constant 256 : index
    %716 = vector.load %arg29[%c0_842, %c256_843] : memref<2x576xf32, #tpu.memory_space<vmem>>, vector<1x64xf32>
    tpu.vector_store %arg29[%c0_842, %c256_843], %715 {strides = array<i32>} : memref<2x576xf32, #tpu.memory_space<vmem>>, vector<1x64xf32>,
    %c21_844 = arith.constant 21 : index
    %c0_845 = arith.constant 0 : index
    %717 = vector.load %arg23[%c21_844, %c0_845] : memref<48x64xf32, #tpu.memory_space<vmem>>, vector<1x64xf32>
    %c1_846 = arith.constant 1 : index
    %c256_847 = arith.constant 256 : index
    %718 = vector.load %arg29[%c1_846, %c256_847] : memref<2x576xf32, #tpu.memory_space<vmem>>, vector<1x64xf32>
    tpu.vector_store %arg29[%c1_846, %c256_847], %717 {strides = array<i32>} : memref<2x576xf32, #tpu.memory_space<vmem>>, vector<1x64xf32>,
    %c20_848 = arith.constant 20 : index
    %c0_849 = arith.constant 0 : index
    %719 = vector.load %arg23[%c20_848, %c0_849] : memref<48x64xf32, #tpu.memory_space<vmem>>, vector<1x64xf32>
    %c0_850 = arith.constant 0 : index
    %c320_851 = arith.constant 320 : index
    %720 = vector.load %arg29[%c0_850, %c320_851] : memref<2x576xf32, #tpu.memory_space<vmem>>, vector<1x64xf32>
    tpu.vector_store %arg29[%c0_850, %c320_851], %719 {strides = array<i32>} : memref<2x576xf32, #tpu.memory_space<vmem>>, vector<1x64xf32>,
    %c22_852 = arith.constant 22 : index
    %c0_853 = arith.constant 0 : index
    %721 = vector.load %arg23[%c22_852, %c0_853] : memref<48x64xf32, #tpu.memory_space<vmem>>, vector<1x64xf32>
    %c1_854 = arith.constant 1 : index
    %c320_855 = arith.constant 320 : index
    %722 = vector.load %arg29[%c1_854, %c320_855] : memref<2x576xf32, #tpu.memory_space<vmem>>, vector<1x64xf32>
    tpu.vector_store %arg29[%c1_854, %c320_855], %721 {strides = array<i32>} : memref<2x576xf32, #tpu.memory_space<vmem>>, vector<1x64xf32>,
    %c24_856 = arith.constant 24 : index
    %c0_857 = arith.constant 0 : index
    %723 = vector.load %arg23[%c24_856, %c0_857] : memref<48x64xf32, #tpu.memory_space<vmem>>, vector<1x64xf32>
    %c0_858 = arith.constant 0 : index
    %c384_859 = arith.constant 384 : index
    %724 = vector.load %arg29[%c0_858, %c384_859] : memref<2x576xf32, #tpu.memory_space<vmem>>, vector<1x64xf32>
    tpu.vector_store %arg29[%c0_858, %c384_859], %723 {strides = array<i32>} : memref<2x576xf32, #tpu.memory_space<vmem>>, vector<1x64xf32>,
    %c26_860 = arith.constant 26 : index
    %c0_861 = arith.constant 0 : index
    %725 = vector.load %arg23[%c26_860, %c0_861] : memref<48x64xf32, #tpu.memory_space<vmem>>, vector<1x64xf32>
    %c1_862 = arith.constant 1 : index
    %c384_863 = arith.constant 384 : index
    %726 = vector.load %arg29[%c1_862, %c384_863] : memref<2x576xf32, #tpu.memory_space<vmem>>, vector<1x64xf32>
    tpu.vector_store %arg29[%c1_862, %c384_863], %725 {strides = array<i32>} : memref<2x576xf32, #tpu.memory_space<vmem>>, vector<1x64xf32>,
    %c25_864 = arith.constant 25 : index
    %c0_865 = arith.constant 0 : index
    %727 = vector.load %arg23[%c25_864, %c0_865] : memref<48x64xf32, #tpu.memory_space<vmem>>, vector<1x64xf32>
    %c0_866 = arith.constant 0 : index
    %c448_867 = arith.constant 448 : index
    %728 = vector.load %arg29[%c0_866, %c448_867] : memref<2x576xf32, #tpu.memory_space<vmem>>, vector<1x64xf32>
    tpu.vector_store %arg29[%c0_866, %c448_867], %727 {strides = array<i32>} : memref<2x576xf32, #tpu.memory_space<vmem>>, vector<1x64xf32>,
    %c27_868 = arith.constant 27 : index
    %c0_869 = arith.constant 0 : index
    %729 = vector.load %arg23[%c27_868, %c0_869] : memref<48x64xf32, #tpu.memory_space<vmem>>, vector<1x64xf32>
    %c1_870 = arith.constant 1 : index
    %c448_871 = arith.constant 448 : index
    %730 = vector.load %arg29[%c1_870, %c448_871] : memref<2x576xf32, #tpu.memory_space<vmem>>, vector<1x64xf32>
    tpu.vector_store %arg29[%c1_870, %c448_871], %729 {strides = array<i32>} : memref<2x576xf32, #tpu.memory_space<vmem>>, vector<1x64xf32>,
    %c26_872 = arith.constant 26 : index
    %c0_873 = arith.constant 0 : index
    %731 = vector.load %arg23[%c26_872, %c0_873] : memref<48x64xf32, #tpu.memory_space<vmem>>, vector<1x64xf32>
    %c0_874 = arith.constant 0 : index
    %c512_875 = arith.constant 512 : index
    %732 = vector.load %arg29[%c0_874, %c512_875] : memref<2x576xf32, #tpu.memory_space<vmem>>, vector<1x64xf32>
    tpu.vector_store %arg29[%c0_874, %c512_875], %731 {strides = array<i32>} : memref<2x576xf32, #tpu.memory_space<vmem>>, vector<1x64xf32>,
    %c28_876 = arith.constant 28 : index
    %c0_877 = arith.constant 0 : index
    %733 = vector.load %arg23[%c28_876, %c0_877] : memref<48x64xf32, #tpu.memory_space<vmem>>, vector<1x64xf32>
    %c1_878 = arith.constant 1 : index
    %c512_879 = arith.constant 512 : index
    %734 = vector.load %arg29[%c1_878, %c512_879] : memref<2x576xf32, #tpu.memory_space<vmem>>, vector<1x64xf32>
    tpu.vector_store %arg29[%c1_878, %c512_879], %733 {strides = array<i32>} : memref<2x576xf32, #tpu.memory_space<vmem>>, vector<1x64xf32>,
    %c0_880 = arith.constant 0 : index
    %c0_881 = arith.constant 0 : index
    %735 = vector.load %arg29[%c0_880, %c0_881] : memref<2x576xf32, #tpu.memory_space<vmem>>, vector<2x576xf32>
    %736 = arith.truncf %735 : vector<2x576xf32> to vector<2x576xbf16>
    %c0_882 = arith.constant 0 : index
    %c0_883 = arith.constant 0 : index
    %737 = vector.load %arg6[%c0_882, %c0_883] : memref<576x128xbf16, #tpu.memory_space<vmem>>, vector<576x128xbf16>
    %cst_884 = arith.constant dense<0.000000e+00> : vector<2x128xf32>
    %738 = tpu.matmul %736, %737, %cst_884 {dimension_numbers = #tpu.dot_dimension_numbers<[1], [0], [0], [1], [0, 0, 1, 1], [], []>} : vector<2x576xbf16>, vector<576x128xbf16>, vector<2x128xf32> -> vector<2x128xf32>
    %c0_885 = arith.constant 0 : index
    %c0_886 = arith.constant 0 : index
    %739 = vector.load %arg13[%c0_885, %c0_886] : memref<1x128xf32, #tpu.memory_space<vmem>>, vector<1x128xf32>
    %740 = vector.broadcast %739 : vector<1x128xf32> to vector<2x128xf32>
    %741 = arith.addf %738, %740 : vector<2x128xf32>
    %cst_887 = arith.constant 2.510000e-01 : f32
    %742 = vector.broadcast %cst_887 : f32 to vector<2x128xf32>
    %743 = arith.mulf %742, %741 : vector<2x128xf32>
    %cst_888 = arith.constant 1.485500e+00 : f32
    %744 = vector.broadcast %cst_888 : f32 to vector<2x128xf32>
    %745 = arith.addf %743, %744 : vector<2x128xf32>
    %746 = arith.mulf %745, %741 : vector<2x128xf32>
    %cst_889 = arith.constant 3.052000e+00 : f32
    %747 = vector.broadcast %cst_889 : f32 to vector<2x128xf32>
    %748 = arith.addf %746, %747 : vector<2x128xf32>
    %749 = arith.mulf %748, %741 : vector<2x128xf32>
    %cst_890 = arith.constant 2.323500e+00 : f32
    %750 = vector.broadcast %cst_890 : f32 to vector<2x128xf32>
    %751 = arith.addf %749, %750 : vector<2x128xf32>
    %752 = arith.mulf %751, %741 : vector<2x128xf32>
    %cst_891 = arith.constant 6.184000e-01 : f32
    %753 = vector.broadcast %cst_891 : f32 to vector<2x128xf32>
    %754 = arith.addf %752, %753 : vector<2x128xf32>
    %755 = arith.mulf %754, %741 : vector<2x128xf32>
    %cst_892 = arith.constant 2.980000e-02 : f32
    %756 = vector.broadcast %cst_892 : f32 to vector<2x128xf32>
    %757 = arith.addf %755, %756 : vector<2x128xf32>
    %758 = math.absf %741 : vector<2x128xf32>
    %cst_893 = arith.constant 0.000000e+00 : f32
    %759 = vector.broadcast %cst_893 : f32 to vector<2x128xf32>
    %760 = arith.mulf %759, %758 : vector<2x128xf32>
    %cst_894 = arith.constant 3.000000e+00 : f32
    %761 = vector.broadcast %cst_894 : f32 to vector<2x128xf32>
    %762 = arith.addf %760, %761 : vector<2x128xf32>
    %763 = arith.mulf %762, %758 : vector<2x128xf32>
    %cst_895 = arith.constant 0.000000e+00 : f32
    %764 = vector.broadcast %cst_895 : f32 to vector<2x128xf32>
    %765 = arith.addf %763, %764 : vector<2x128xf32>
    %766 = arith.mulf %765, %758 : vector<2x128xf32>
    %cst_896 = arith.constant 2.383100e+00 : f32
    %767 = vector.broadcast %cst_896 : f32 to vector<2x128xf32>
    %768 = arith.addf %766, %767 : vector<2x128xf32>
    %769 = arith.mulf %768, %758 : vector<2x128xf32>
    %cst_897 = arith.constant 1.000000e+00 : f32
    %770 = vector.broadcast %cst_897 : f32 to vector<2x128xf32>
    %771 = arith.addf %769, %770 : vector<2x128xf32>
    %772 = tpu.reciprocal %771 {approx = true} : vector<2x128xf32> -> vector<2x128xf32>
    %773 = arith.mulf %757, %772 : vector<2x128xf32>
    %c9_898 = arith.constant 9 : index
    %c0_899 = arith.constant 0 : index
    %774 = vector.load %arg24[%c9_898, %c0_899] : memref<32x128xf32, #tpu.memory_space<vmem>>, vector<2x128xf32>
    tpu.vector_store %arg24[%c9_898, %c0_899], %773 {strides = array<i32>} : memref<32x128xf32, #tpu.memory_space<vmem>>, vector<2x128xf32>,
    %c0_900 = arith.constant 0 : index
    %c0_901 = arith.constant 0 : index
    %775 = vector.load %arg24[%c0_900, %c0_901] : memref<32x128xf32, #tpu.memory_space<vmem>>, vector<16x128xf32>
    %c0_902 = arith.constant 0 : index
    %c0_903 = arith.constant 0 : index
    %776 = vector.load %arg27[%c0_902, %c0_903] : memref<16x1152xf32, #tpu.memory_space<vmem>>, vector<16x128xf32>
    tpu.vector_store %arg27[%c0_902, %c0_903], %775 {strides = array<i32>} : memref<16x1152xf32, #tpu.memory_space<vmem>>, vector<16x128xf32>,
    %c1_904 = arith.constant 1 : index
    %c0_905 = arith.constant 0 : index
    %777 = vector.load %arg24[%c1_904, %c0_905] : memref<32x128xf32, #tpu.memory_space<vmem>>, vector<16x128xf32>
    %c0_906 = arith.constant 0 : index
    %c128_907 = arith.constant 128 : index
    %778 = vector.load %arg27[%c0_906, %c128_907] : memref<16x1152xf32, #tpu.memory_space<vmem>>, vector<16x128xf32>
    tpu.vector_store %arg27[%c0_906, %c128_907], %777 {strides = array<i32>} : memref<16x1152xf32, #tpu.memory_space<vmem>>, vector<16x128xf32>,
    %c2_908 = arith.constant 2 : index
    %c0_909 = arith.constant 0 : index
    %779 = vector.load %arg24[%c2_908, %c0_909] : memref<32x128xf32, #tpu.memory_space<vmem>>, vector<16x128xf32>
    %c0_910 = arith.constant 0 : index
    %c256_911 = arith.constant 256 : index
    %780 = vector.load %arg27[%c0_910, %c256_911] : memref<16x1152xf32, #tpu.memory_space<vmem>>, vector<16x128xf32>
    tpu.vector_store %arg27[%c0_910, %c256_911], %779 {strides = array<i32>} : memref<16x1152xf32, #tpu.memory_space<vmem>>, vector<16x128xf32>,
    %c4_912 = arith.constant 4 : index
    %c0_913 = arith.constant 0 : index
    %781 = vector.load %arg24[%c4_912, %c0_913] : memref<32x128xf32, #tpu.memory_space<vmem>>, vector<16x128xf32>
    %c0_914 = arith.constant 0 : index
    %c384_915 = arith.constant 384 : index
    %782 = vector.load %arg27[%c0_914, %c384_915] : memref<16x1152xf32, #tpu.memory_space<vmem>>, vector<16x128xf32>
    tpu.vector_store %arg27[%c0_914, %c384_915], %781 {strides = array<i32>} : memref<16x1152xf32, #tpu.memory_space<vmem>>, vector<16x128xf32>,
    %c5_916 = arith.constant 5 : index
    %c0_917 = arith.constant 0 : index
    %783 = vector.load %arg24[%c5_916, %c0_917] : memref<32x128xf32, #tpu.memory_space<vmem>>, vector<16x128xf32>
    %c0_918 = arith.constant 0 : index
    %c512_919 = arith.constant 512 : index
    %784 = vector.load %arg27[%c0_918, %c512_919] : memref<16x1152xf32, #tpu.memory_space<vmem>>, vector<16x128xf32>
    tpu.vector_store %arg27[%c0_918, %c512_919], %783 {strides = array<i32>} : memref<16x1152xf32, #tpu.memory_space<vmem>>, vector<16x128xf32>,
    %c6_920 = arith.constant 6 : index
    %c0_921 = arith.constant 0 : index
    %785 = vector.load %arg24[%c6_920, %c0_921] : memref<32x128xf32, #tpu.memory_space<vmem>>, vector<16x128xf32>
    %c0_922 = arith.constant 0 : index
    %c640 = arith.constant 640 : index
    %786 = vector.load %arg27[%c0_922, %c640] : memref<16x1152xf32, #tpu.memory_space<vmem>>, vector<16x128xf32>
    tpu.vector_store %arg27[%c0_922, %c640], %785 {strides = array<i32>} : memref<16x1152xf32, #tpu.memory_space<vmem>>, vector<16x128xf32>,
    %c8_923 = arith.constant 8 : index
    %c0_924 = arith.constant 0 : index
    %787 = vector.load %arg24[%c8_923, %c0_924] : memref<32x128xf32, #tpu.memory_space<vmem>>, vector<16x128xf32>
    %c0_925 = arith.constant 0 : index
    %c768 = arith.constant 768 : index
    %788 = vector.load %arg27[%c0_925, %c768] : memref<16x1152xf32, #tpu.memory_space<vmem>>, vector<16x128xf32>
    tpu.vector_store %arg27[%c0_925, %c768], %787 {strides = array<i32>} : memref<16x1152xf32, #tpu.memory_space<vmem>>, vector<16x128xf32>,
    %c9_926 = arith.constant 9 : index
    %c0_927 = arith.constant 0 : index
    %789 = vector.load %arg24[%c9_926, %c0_927] : memref<32x128xf32, #tpu.memory_space<vmem>>, vector<16x128xf32>
    %c0_928 = arith.constant 0 : index
    %c896 = arith.constant 896 : index
    %790 = vector.load %arg27[%c0_928, %c896] : memref<16x1152xf32, #tpu.memory_space<vmem>>, vector<16x128xf32>
    tpu.vector_store %arg27[%c0_928, %c896], %789 {strides = array<i32>} : memref<16x1152xf32, #tpu.memory_space<vmem>>, vector<16x128xf32>,
    %c10_929 = arith.constant 10 : index
    %c0_930 = arith.constant 0 : index
    %791 = vector.load %arg24[%c10_929, %c0_930] : memref<32x128xf32, #tpu.memory_space<vmem>>, vector<16x128xf32>
    %c0_931 = arith.constant 0 : index
    %c1024 = arith.constant 1024 : index
    %792 = vector.load %arg27[%c0_931, %c1024] : memref<16x1152xf32, #tpu.memory_space<vmem>>, vector<16x128xf32>
    tpu.vector_store %arg27[%c0_931, %c1024], %791 {strides = array<i32>} : memref<16x1152xf32, #tpu.memory_space<vmem>>, vector<16x128xf32>,
    %c0_932 = arith.constant 0 : index
    %c0_933 = arith.constant 0 : index
    %793 = vector.load %arg27[%c0_932, %c0_933] : memref<16x1152xf32, #tpu.memory_space<vmem>>, vector<16x1152xf32>
    %794 = arith.truncf %793 : vector<16x1152xf32> to vector<16x1152xbf16>
    %c0_934 = arith.constant 0 : index
    %c0_935 = arith.constant 0 : index
    %795 = vector.load %arg7[%c0_934, %c0_935] : memref<1152x128xbf16, #tpu.memory_space<vmem>>, vector<1152x128xbf16>
    %cst_936 = arith.constant dense<0.000000e+00> : vector<16x128xf32>
    %796 = tpu.matmul %794, %795, %cst_936 {dimension_numbers = #tpu.dot_dimension_numbers<[1], [0], [0], [1], [0, 0, 1, 1], [], []>} : vector<16x1152xbf16>, vector<1152x128xbf16>, vector<16x128xf32> -> vector<16x128xf32>
    %c0_937 = arith.constant 0 : index
    %c0_938 = arith.constant 0 : index
    %797 = vector.load %arg14[%c0_937, %c0_938] : memref<1x128xf32, #tpu.memory_space<vmem>>, vector<1x128xf32>
    %798 = vector.broadcast %797 : vector<1x128xf32> to vector<16x128xf32>
    %799 = arith.addf %796, %798 : vector<16x128xf32>
    %cst_939 = arith.constant 2.510000e-01 : f32
    %800 = vector.broadcast %cst_939 : f32 to vector<16x128xf32>
    %801 = arith.mulf %800, %799 : vector<16x128xf32>
    %cst_940 = arith.constant 1.485500e+00 : f32
    %802 = vector.broadcast %cst_940 : f32 to vector<16x128xf32>
    %803 = arith.addf %801, %802 : vector<16x128xf32>
    %804 = arith.mulf %803, %799 : vector<16x128xf32>
    %cst_941 = arith.constant 3.052000e+00 : f32
    %805 = vector.broadcast %cst_941 : f32 to vector<16x128xf32>
    %806 = arith.addf %804, %805 : vector<16x128xf32>
    %807 = arith.mulf %806, %799 : vector<16x128xf32>
    %cst_942 = arith.constant 2.323500e+00 : f32
    %808 = vector.broadcast %cst_942 : f32 to vector<16x128xf32>
    %809 = arith.addf %807, %808 : vector<16x128xf32>
    %810 = arith.mulf %809, %799 : vector<16x128xf32>
    %cst_943 = arith.constant 6.184000e-01 : f32
    %811 = vector.broadcast %cst_943 : f32 to vector<16x128xf32>
    %812 = arith.addf %810, %811 : vector<16x128xf32>
    %813 = arith.mulf %812, %799 : vector<16x128xf32>
    %cst_944 = arith.constant 2.980000e-02 : f32
    %814 = vector.broadcast %cst_944 : f32 to vector<16x128xf32>
    %815 = arith.addf %813, %814 : vector<16x128xf32>
    %816 = math.absf %799 : vector<16x128xf32>
    %cst_945 = arith.constant 0.000000e+00 : f32
    %817 = vector.broadcast %cst_945 : f32 to vector<16x128xf32>
    %818 = arith.mulf %817, %816 : vector<16x128xf32>
    %cst_946 = arith.constant 3.000000e+00 : f32
    %819 = vector.broadcast %cst_946 : f32 to vector<16x128xf32>
    %820 = arith.addf %818, %819 : vector<16x128xf32>
    %821 = arith.mulf %820, %816 : vector<16x128xf32>
    %cst_947 = arith.constant 0.000000e+00 : f32
    %822 = vector.broadcast %cst_947 : f32 to vector<16x128xf32>
    %823 = arith.addf %821, %822 : vector<16x128xf32>
    %824 = arith.mulf %823, %816 : vector<16x128xf32>
    %cst_948 = arith.constant 2.383100e+00 : f32
    %825 = vector.broadcast %cst_948 : f32 to vector<16x128xf32>
    %826 = arith.addf %824, %825 : vector<16x128xf32>
    %827 = arith.mulf %826, %816 : vector<16x128xf32>
    %cst_949 = arith.constant 1.000000e+00 : f32
    %828 = vector.broadcast %cst_949 : f32 to vector<16x128xf32>
    %829 = arith.addf %827, %828 : vector<16x128xf32>
    %830 = tpu.reciprocal %829 {approx = true} : vector<16x128xf32> -> vector<16x128xf32>
    %831 = arith.mulf %815, %830 : vector<16x128xf32>
    %832 = arith.truncf %831 : vector<16x128xf32> to vector<16x128xbf16>
    %c0_950 = arith.constant 0 : index
    %c0_951 = arith.constant 0 : index
    %833 = vector.load %arg8[%c0_950, %c0_951] : memref<128x128xbf16, #tpu.memory_space<vmem>>, vector<128x128xbf16>
    %cst_952 = arith.constant dense<0.000000e+00> : vector<16x128xf32>
    %834 = tpu.matmul %832, %833, %cst_952 {dimension_numbers = #tpu.dot_dimension_numbers<[1], [0], [0], [1], [0, 0, 1, 1], [], []>} : vector<16x128xbf16>, vector<128x128xbf16>, vector<16x128xf32> -> vector<16x128xf32>
    %c0_953 = arith.constant 0 : index
    %c0_954 = arith.constant 0 : index
    %835 = vector.load %arg15[%c0_953, %c0_954] : memref<1x128xf32, #tpu.memory_space<vmem>>, vector<1x128xf32>
    %836 = vector.broadcast %835 : vector<1x128xf32> to vector<16x128xf32>
    %837 = arith.addf %834, %836 : vector<16x128xf32>
    %c0_955 = arith.constant 0 : index
    %c0_956 = arith.constant 0 : index
    %c0_957 = arith.constant 0 : index
    %838 = vector.load %arg19[%c0_955, %c0_956, %c0_957] : memref<1x16x128xf32, #tpu.memory_space<vmem>>, vector<1x16x128xf32>
    %839 = vector.shape_cast %838 : vector<1x16x128xf32> to vector<16x128xf32>
    %840 = vector.shape_cast %837 : vector<16x128xf32> to vector<1x16x128xf32>
    tpu.vector_store %arg19[%c0_955, %c0_956, %c0_957], %840 {strides = array<i32>} : memref<1x16x128xf32, #tpu.memory_space<vmem>>, vector<1x16x128xf32>,
    return
  }
  func.func @transform_0(%arg0: i32) -> (i32, i32, i32) {
    %c0_i32 = arith.constant 0 : i32
    %c0_i32_0 = arith.constant 0 : i32
    %c0_i32_1 = arith.constant 0 : i32
    return %arg0, %c0_i32, %c0_i32_0 : i32, i32, i32
  }
  func.func @transform_1(%arg0: i32) -> (i32, i32) {
    %c0_i32 = arith.constant 0 : i32
    %c0_i32_0 = arith.constant 0 : i32
    %c0_i32_1 = arith.constant 0 : i32
    return %c0_i32, %c0_i32_0 : i32, i32
  }
  func.func @transform_2(%arg0: i32) -> (i32, i32) {
    %c0_i32 = arith.constant 0 : i32
    %c0_i32_0 = arith.constant 0 : i32
    %c0_i32_1 = arith.constant 0 : i32
    return %c0_i32, %c0_i32_0 : i32, i32
  }
  func.func @transform_3(%arg0: i32) -> (i32, i32) {
    %c0_i32 = arith.constant 0 : i32
    %c0_i32_0 = arith.constant 0 : i32
    %c0_i32_1 = arith.constant 0 : i32
    return %c0_i32, %c0_i32_0 : i32, i32
  }
  func.func @transform_4(%arg0: i32) -> (i32, i32) {
    %c0_i32 = arith.constant 0 : i32
    %c0_i32_0 = arith.constant 0 : i32
    %c0_i32_1 = arith.constant 0 : i32
    return %c0_i32, %c0_i32_0 : i32, i32
  }
  func.func @transform_5(%arg0: i32) -> (i32, i32) {
    %c0_i32 = arith.constant 0 : i32
    %c0_i32_0 = arith.constant 0 : i32
    %c0_i32_1 = arith.constant 0 : i32
    return %c0_i32, %c0_i32_0 : i32, i32
  }
  func.func @transform_6(%arg0: i32) -> (i32, i32) {
    %c0_i32 = arith.constant 0 : i32
    %c0_i32_0 = arith.constant 0 : i32
    %c0_i32_1 = arith.constant 0 : i32
    return %c0_i32, %c0_i32_0 : i32, i32
  }
  func.func @transform_7(%arg0: i32) -> (i32, i32) {
    %c0_i32 = arith.constant 0 : i32
    %c0_i32_0 = arith.constant 0 : i32
    %c0_i32_1 = arith.constant 0 : i32
    return %c0_i32, %c0_i32_0 : i32, i32
  }
  func.func @transform_8(%arg0: i32) -> (i32, i32) {
    %c0_i32 = arith.constant 0 : i32
    %c0_i32_0 = arith.constant 0 : i32
    %c0_i32_1 = arith.constant 0 : i32
    return %c0_i32, %c0_i32_0 : i32, i32
  }
  func.func @transform_9(%arg0: i32) -> (i32, i32) {
    %c0_i32 = arith.constant 0 : i32
    %c0_i32_0 = arith.constant 0 : i32
    %c0_i32_1 = arith.constant 0 : i32
    return %c0_i32, %c0_i32_0 : i32, i32
  }
  func.func @transform_10(%arg0: i32) -> (i32, i32) {
    %c0_i32 = arith.constant 0 : i32
    %c0_i32_0 = arith.constant 0 : i32
    %c0_i32_1 = arith.constant 0 : i32
    return %c0_i32, %c0_i32_0 : i32, i32
  }
  func.func @transform_11(%arg0: i32) -> (i32, i32) {
    %c0_i32 = arith.constant 0 : i32
    %c0_i32_0 = arith.constant 0 : i32
    %c0_i32_1 = arith.constant 0 : i32
    return %c0_i32, %c0_i32_0 : i32, i32
  }
  func.func @transform_12(%arg0: i32) -> (i32, i32) {
    %c0_i32 = arith.constant 0 : i32
    %c0_i32_0 = arith.constant 0 : i32
    %c0_i32_1 = arith.constant 0 : i32
    return %c0_i32, %c0_i32_0 : i32, i32
  }
  func.func @transform_13(%arg0: i32) -> (i32, i32) {
    %c0_i32 = arith.constant 0 : i32
    %c0_i32_0 = arith.constant 0 : i32
    %c0_i32_1 = arith.constant 0 : i32
    return %c0_i32, %c0_i32_0 : i32, i32
  }
  func.func @transform_14(%arg0: i32) -> (i32, i32) {
    %c0_i32 = arith.constant 0 : i32
    %c0_i32_0 = arith.constant 0 : i32
    %c0_i32_1 = arith.constant 0 : i32
    return %c0_i32, %c0_i32_0 : i32, i32
  }
  func.func @transform_15(%arg0: i32) -> (i32, i32) {
    %c0_i32 = arith.constant 0 : i32
    %c0_i32_0 = arith.constant 0 : i32
    %c0_i32_1 = arith.constant 0 : i32
    return %c0_i32, %c0_i32_0 : i32, i32
  }
  func.func @transform_16(%arg0: i32) -> (i32, i32) {
    %c0_i32 = arith.constant 0 : i32
    %c0_i32_0 = arith.constant 0 : i32
    %c0_i32_1 = arith.constant 0 : i32
    return %c0_i32, %c0_i32_0 : i32, i32
  }
  func.func @transform_17(%arg0: i32) -> (i32, i32) {
    %c0_i32 = arith.constant 0 : i32
    %c0_i32_0 = arith.constant 0 : i32
    %c0_i32_1 = arith.constant 0 : i32
    return %c0_i32, %c0_i32_0 : i32, i32
  }
  func.func @transform_18(%arg0: i32) -> (i32, i32, i32) {
    %c0_i32 = arith.constant 0 : i32
    %c0_i32_0 = arith.constant 0 : i32
    %c0_i32_1 = arith.constant 0 : i32
    return %arg0, %c0_i32, %c0_i32_0 : i32, i32, i32
  }
}

</mosaic_0001>

<llo_original>
// kernel: squeeze.3
$region0: #{squeeze.3}
  %s0 = inlined_call_operand.vmem [shape: f32[2,16], index: 0, kind: input, shape index: {}]
  %s1 = inlined_call_operand.vmem [shape: f32[2,4,4], index: 1, kind: output, shape index: {}]
  $region1: #{squeeze.3} parent=0
    #allocation0 [shape = 'u8[8192]{0}', space=vmem, size = 0x2000, scoped, tag = 'scoped mem for output reshape']
    #allocation1 [shape = 'u8[4096]{0}', space=vmem, size = 0x1000, scoped, tag = 'scoped mem for input reshape']
    %s3 = sshllo.u32 0, 2
    %v4 = vld [vmem:[%s0] sm:%s3]
    %5 = vst [vmem:[#allocation1] sm:%s3] %v4
    %v6 = vld [vmem:[#allocation1] sm:$0x3]
    %vm7 = vcmask 31744
    %8 = vst.msk [vmem:[#allocation0] ss:$8 sm:$0x3] %vm7, %v6
    %v9 = vld [vmem:[#allocation1] sm:$0x3]
    %10 = vrot.lane.b32.xlu0 %v9, 124
    %v11 = vpop.permute.xlu0 %10
    %vm12 = vcmask 31744
    %s13 = scalar_lea.vmem [#allocation0], 1
    %14 = vst.msk [vmem:[%s13] ss:$8 sm:$0x3] %vm12, %v11
    %v15 = vld [vmem:[#allocation1] sm:$0x3]
    %16 = vrot.lane.b32.xlu0 %v15, 120
    %v17 = vpop.permute.xlu0 %16
    %vm18 = vcmask 31744
    %s19 = scalar_lea.vmem [#allocation0], 2
    %20 = vst.msk [vmem:[%s19] ss:$8 sm:$0x3] %vm18, %v17
    %v21 = vld [vmem:[#allocation1] sm:$0x3]
    %22 = vrot.lane.b32.xlu0 %v21, 116
    %v23 = vpop.permute.xlu0 %22
    %vm24 = vcmask 31744
    %s25 = scalar_lea.vmem [#allocation0], 3
    %26 = vst.msk [vmem:[%s25] ss:$8 sm:$0x3] %vm24, %v23
    %s28 = sshllo.u32 0, 4
    %v30 = vld [vmem:[#allocation0] sm:%s28]
    %s31 = sshllo.u32 0, 4
    %32 = vst [vmem:[%s1] sm:%s31] %v30
    %s33 = scalar_lea.vmem [#allocation0], 8
    %v34 = vld [vmem:[%s33] sm:%s28]
    %s35 = sshllo.u32 0, 4
    %s36 = scalar_lea.vmem %s1, 4
    %37 = vst [vmem:[%s36] sm:%s35] %v34

// kernel: forward.1
$region0: #{forward.1}
  #allocation0 [shape = 'u32[]', space=smem, size = 0x4, offset = 0x4, fixed_abs, tag = 'smem constant byte address 0x4 - core index']
  #allocation1 [shape = 'u32[144,128]{1,0:T(1,128)}', space=vmem, size = 0x12000, scoped, tag = 'internal scratch']
  #allocation2 [shape = 'f32[128,32]{1,0:T(8,128)}', space=vmem, size = 0x10000, scoped, tag = 'scratch operand']
  #allocation3 [shape = 'f32[112,32]{1,0:T(8,128)}', space=vmem, size = 0xe000, scoped, tag = 'scratch operand']
  #allocation4 [shape = 'f32[56,64]{1,0:T(8,128)}', space=vmem, size = 0x7000, scoped, tag = 'scratch operand']
  #allocation5 [shape = 'f32[48,64]{1,0:T(8,128)}', space=vmem, size = 0x6000, scoped, tag = 'scratch operand']
  #allocation6 [shape = 'f32[32,128]{1,0:T(8,128)}', space=vmem, size = 0x4000, scoped, tag = 'scratch operand']
  #allocation7 [shape = 'f32[100,288]{1,0:T(8,128)}', space=vmem, size = 0x27000, scoped, tag = 'scratch operand']
  #allocation8 [shape = 'f32[36,576]{1,0:T(8,128)}', space=vmem, size = 0x19000, scoped, tag = 'scratch operand']
  #allocation9 [shape = 'f32[16,1152]{1,0:T(8,128)}', space=vmem, size = 0x12000, scoped, tag = 'scratch operand']
  #allocation10 [shape = 'f32[4,288]{1,0:T(4,128)}', space=vmem, size = 0x1800, scoped, tag = 'scratch operand']
  #allocation11 [shape = 'f32[2,576]{1,0:T(2,128)}', space=vmem, size = 0x1400, scoped, tag = 'scratch operand']
  %s0 = inlined_call_operand.vmem [shape: bf16[2,100,9], index: 0, kind: input, shape index: {}]
  %s1 = inlined_call_operand.vmem [shape: bf16[9,32], index: 1, kind: input, shape index: {}]
  %s2 = inlined_call_operand.vmem [shape: bf16[288,32], index: 2, kind: input, shape index: {}]
  %s3 = inlined_call_operand.vmem [shape: bf16[288,64], index: 3, kind: input, shape index: {}]
  %s4 = inlined_call_operand.vmem [shape: bf16[576,64], index: 4, kind: input, shape index: {}]
  %s5 = inlined_call_operand.vmem [shape: bf16[576,128], index: 5, kind: input, shape index: {}]
  %s6 = inlined_call_operand.vmem [shape: bf16[1152,128], index: 6, kind: input, shape index: {}]
  %s7 = inlined_call_operand.vmem [shape: bf16[128,128], index: 7, kind: input, shape index: {}]
  %s8 = inlined_call_operand.vmem [shape: f32[1,32], index: 8, kind: input, shape index: {}]
  %s9 = inlined_call_operand.vmem [shape: f32[1,32], index: 9, kind: input, shape index: {}]
  %s10 = inlined_call_operand.vmem [shape: f32[1,64], index: 10, kind: input, shape index: {}]
  %s11 = inlined_call_operand.vmem [shape: f32[1,64], index: 11, kind: input, shape index: {}]
  %s12 = inlined_call_operand.vmem [shape: f32[1,128], index: 12, kind: input, shape index: {}]
  %s13 = inlined_call_operand.vmem [shape: f32[1,128], index: 13, kind: input, shape index: {}]
  %s14 = inlined_call_operand.vmem [shape: f32[1,128], index: 14, kind: input, shape index: {}]
  %s15 = inlined_call_operand.vmem [shape: f32[100,1], index: 15, kind: input, shape index: {}]
  %s16 = inlined_call_operand.vmem [shape: f32[100,1], index: 16, kind: input, shape index: {}]
  %s17 = inlined_call_operand.vmem [shape: f32[36,1], index: 17, kind: input, shape index: {}]
  %s18 = inlined_call_operand.vmem [shape: f32[2,16,128], index: 18, kind: output, shape index: {}]
  %s19 = sld [smem:[#allocation0]]
  $region105: #{forward.1} parent=0
    _
  %s21 = ssub.s32 1, %s19
  %s22 = scalar_select 0, %s21, %s19
  loop: start=0, step=1, limit=4
  $region2: #{forward.1} parent=0 // loop_pre_header
    _
  $region3: #{forward.1} parent=0 // loop_header
    %s24 = sphi 0, %s28
    %p25 = scmp.ge.s32.totalorder %s24, 4
    %s34 = sphi 0, %s36
    %s37 = sphi 0, %s34
    %s38 = sphi 0, %s37
    %s54 = sphi 0, %s38
    %s58 = sphi 0, %s58
    %s60 = sphi 0, %s58
    %s61 = sphi 0, %s60
    %s75 = sphi 0, %s61
    %s79 = sphi 0, %s79
    %s81 = sphi 0, %s79
    %s82 = sphi 0, %s81
    %s96 = sphi 0, %s82
    %s100 = sphi 0, %s100
    %s102 = sphi 0, %s100
    %s103 = sphi 0, %s102
    %s117 = sphi 0, %s103
    %s121 = sphi 0, %s121
    %s123 = sphi 0, %s121
    %s124 = sphi 0, %s123
    %s138 = sphi 0, %s124
    %s142 = sphi 0, %s142
    %s144 = sphi 0, %s142
    %s145 = sphi 0, %s144
    %s159 = sphi 0, %s145
    %s163 = sphi 0, %s163
    %s165 = sphi 0, %s163
    %s166 = sphi 0, %s165
    %s180 = sphi 0, %s166
    %s184 = sphi 0, %s184
    %s186 = sphi 0, %s184
    %s187 = sphi 0, %s186
    %s201 = sphi 0, %s187
    %s205 = sphi 0, %s205
    %s207 = sphi 0, %s205
    %s208 = sphi 0, %s207
    %s222 = sphi 0, %s208
    %s226 = sphi 0, %s226
    %s228 = sphi 0, %s226
    %s229 = sphi 0, %s228
    %s243 = sphi 0, %s229
    %s247 = sphi 0, %s247
    %s249 = sphi 0, %s247
    %s250 = sphi 0, %s249
    %s264 = sphi 0, %s250
    %s268 = sphi 0, %s268
    %s270 = sphi 0, %s268
    %s271 = sphi 0, %s270
    %s285 = sphi 0, %s271
    %s289 = sphi 0, %s289
    %s291 = sphi 0, %s289
    %s292 = sphi 0, %s291
    %s306 = sphi 0, %s292
    %s310 = sphi 0, %s310
    %s312 = sphi 0, %s310
    %s313 = sphi 0, %s312
    %s327 = sphi 0, %s313
    %s331 = sphi 0, %s331
    %s333 = sphi 0, %s331
    %s334 = sphi 0, %s333
    %s348 = sphi 0, %s334
    %s352 = sphi 0, %s352
    %s354 = sphi 0, %s352
    %s355 = sphi 0, %s354
    %s369 = sphi 0, %s355
    %s373 = sphi 0, %s373
    %s375 = sphi 0, %s373
    %s376 = sphi 0, %s375
    %s390 = sphi 0, %s376
    %s394 = sphi 0, %s394
    %s396 = sphi 0, %s394
    %s397 = sphi 0, %s396
    %s411 = sphi 0, %s397
    %s417 = sphi 0, %s419
    %s420 = sphi 0, %s417
    %s421 = sphi 0, %s420
    %s437 = sphi 0, %s421
  $region4: #{forward.1} parent=0 // loop_header_branch
    %27 = sbr.rel (%p25) target = $region8
  $region5: #{forward.1} parent=0 // loop_body
    %s29 = ssub.s32 %s24, 1
    %s30 = ssub.s32 %s24, 2
    %s31 = sadd.s32 %s24, 1
    %s32 = ssub.s32 %s24, %s31
    %p33 = scmp.eq.s32.totalorder %s32, 0
    %s35 = sadd.s32 %s34, 1
    %s36 = scalar_select %p33, %s34, %s35
    %p39 = pneg %p33
    %p40 = scmp.eq.s32.totalorder %s24, 1
    %p41 = por %p39, %p40
    %p42 = scmp.ne.s32.totalorder %s34, %s37
    %p43 = scmp.eq.s32.totalorder %s24, 0
    %p44 = por %p42, %p43
    %p45 = scmp.ne.s32.totalorder %s34, %s37
    %p46 = scmp.eq.s32.totalorder %s29, 1
    %p47 = por %p45, %p46
    %p48 = scmp.ne.s32.totalorder %s37, %s38
    %p49 = scmp.eq.s32.totalorder %s29, 0
    %p50 = por %p48, %p49
    %p51 = scmp.ne.s32.totalorder %s37, %s38
    %p52 = scmp.eq.s32.totalorder %s30, 1
    %p53 = por %p51, %p52
    %p55 = scmp.ne.s32.totalorder %s38, %s54
    %p56 = scmp.eq.s32.totalorder %s30, 0
    %p57 = por %p55, %p56
    %s59 = sadd.s32 %s58, 1
    %p62 = scmp.eq.s32.totalorder %s24, 1
    %p63 = scmp.ne.s32.totalorder %s58, %s60
    %p64 = scmp.eq.s32.totalorder %s24, 0
    %p65 = por %p63, %p64
    %p66 = scmp.ne.s32.totalorder %s58, %s60
    %p67 = scmp.eq.s32.totalorder %s29, 1
    %p68 = por %p66, %p67
    %p69 = scmp.ne.s32.totalorder %s60, %s61
    %p70 = scmp.eq.s32.totalorder %s29, 0
    %p71 = por %p69, %p70
    %p72 = scmp.ne.s32.totalorder %s60, %s61
    %p73 = scmp.eq.s32.totalorder %s30, 1
    %p74 = por %p72, %p73
    %p76 = scmp.ne.s32.totalorder %s61, %s75
    %p77 = scmp.eq.s32.totalorder %s30, 0
    %p78 = por %p76, %p77
    %s80 = sadd.s32 %s79, 1
    %p83 = scmp.eq.s32.totalorder %s24, 1
    %p84 = scmp.ne.s32.totalorder %s79, %s81
    %p85 = scmp.eq.s32.totalorder %s24, 0
    %p86 = por %p84, %p85
    %p87 = scmp.ne.s32.totalorder %s79, %s81
    %p88 = scmp.eq.s32.totalorder %s29, 1
    %p89 = por %p87, %p88
    %p90 = scmp.ne.s32.totalorder %s81, %s82
    %p91 = scmp.eq.s32.totalorder %s29, 0
    %p92 = por %p90, %p91
    %p93 = scmp.ne.s32.totalorder %s81, %s82
    %p94 = scmp.eq.s32.totalorder %s30, 1
    %p95 = por %p93, %p94
    %p97 = scmp.ne.s32.totalorder %s82, %s96
    %p98 = scmp.eq.s32.totalorder %s30, 0
    %p99 = por %p97, %p98
    %s101 = sadd.s32 %s100, 1
    %p104 = scmp.eq.s32.totalorder %s24, 1
    %p105 = scmp.ne.s32.totalorder %s100, %s102
    %p106 = scmp.eq.s32.totalorder %s24, 0
    %p107 = por %p105, %p106
    %p108 = scmp.ne.s32.totalorder %s100, %s102
    %p109 = scmp.eq.s32.totalorder %s29, 1
    %p110 = por %p108, %p109
    %p111 = scmp.ne.s32.totalorder %s102, %s103
    %p112 = scmp.eq.s32.totalorder %s29, 0
    %p113 = por %p111, %p112
    %p114 = scmp.ne.s32.totalorder %s102, %s103
    %p115 = scmp.eq.s32.totalorder %s30, 1
    %p116 = por %p114, %p115
    %p118 = scmp.ne.s32.totalorder %s103, %s117
    %p119 = scmp.eq.s32.totalorder %s30, 0
    %p120 = por %p118, %p119
    %s122 = sadd.s32 %s121, 1
    %p125 = scmp.eq.s32.totalorder %s24, 1
    %p126 = scmp.ne.s32.totalorder %s121, %s123
    %p127 = scmp.eq.s32.totalorder %s24, 0
    %p128 = por %p126, %p127
    %p129 = scmp.ne.s32.totalorder %s121, %s123
    %p130 = scmp.eq.s32.totalorder %s29, 1
    %p131 = por %p129, %p130
    %p132 = scmp.ne.s32.totalorder %s123, %s124
    %p133 = scmp.eq.s32.totalorder %s29, 0
    %p134 = por %p132, %p133
    %p135 = scmp.ne.s32.totalorder %s123, %s124
    %p136 = scmp.eq.s32.totalorder %s30, 1
    %p137 = por %p135, %p136
    %p139 = scmp.ne.s32.totalorder %s124, %s138
    %p140 = scmp.eq.s32.totalorder %s30, 0
    %p141 = por %p139, %p140
    %s143 = sadd.s32 %s142, 1
    %p146 = scmp.eq.s32.totalorder %s24, 1
    %p147 = scmp.ne.s32.totalorder %s142, %s144
    %p148 = scmp.eq.s32.totalorder %s24, 0
    %p149 = por %p147, %p148
    %p150 = scmp.ne.s32.totalorder %s142, %s144
    %p151 = scmp.eq.s32.totalorder %s29, 1
    %p152 = por %p150, %p151
    %p153 = scmp.ne.s32.totalorder %s144, %s145
    %p154 = scmp.eq.s32.totalorder %s29, 0
    %p155 = por %p153, %p154
    %p156 = scmp.ne.s32.totalorder %s144, %s145
    %p157 = scmp.eq.s32.totalorder %s30, 1
    %p158 = por %p156, %p157
    %p160 = scmp.ne.s32.totalorder %s145, %s159
    %p161 = scmp.eq.s32.totalorder %s30, 0
    %p162 = por %p160, %p161
    %s164 = sadd.s32 %s163, 1
    %p167 = scmp.eq.s32.totalorder %s24, 1
    %p168 = scmp.ne.s32.totalorder %s163, %s165
    %p169 = scmp.eq.s32.totalorder %s24, 0
    %p170 = por %p168, %p169
    %p171 = scmp.ne.s32.totalorder %s163, %s165
    %p172 = scmp.eq.s32.totalorder %s29, 1
    %p173 = por %p171, %p172
    %p174 = scmp.ne.s32.totalorder %s165, %s166
    %p175 = scmp.eq.s32.totalorder %s29, 0
    %p176 = por %p174, %p175
    %p177 = scmp.ne.s32.totalorder %s165, %s166
    %p178 = scmp.eq.s32.totalorder %s30, 1
    %p179 = por %p177, %p178
    %p181 = scmp.ne.s32.totalorder %s166, %s180
    %p182 = scmp.eq.s32.totalorder %s30, 0
    %p183 = por %p181, %p182
    %s185 = sadd.s32 %s184, 1
    %p188 = scmp.eq.s32.totalorder %s24, 1
    %p189 = scmp.ne.s32.totalorder %s184, %s186
    %p190 = scmp.eq.s32.totalorder %s24, 0
    %p191 = por %p189, %p190
    %p192 = scmp.ne.s32.totalorder %s184, %s186
    %p193 = scmp.eq.s32.totalorder %s29, 1
    %p194 = por %p192, %p193
    %p195 = scmp.ne.s32.totalorder %s186, %s187
    %p196 = scmp.eq.s32.totalorder %s29, 0
    %p197 = por %p195, %p196
    %p198 = scmp.ne.s32.totalorder %s186, %s187
    %p199 = scmp.eq.s32.totalorder %s30, 1
    %p200 = por %p198, %p199
    %p202 = scmp.ne.s32.totalorder %s187, %s201
    %p203 = scmp.eq.s32.totalorder %s30, 0
    %p204 = por %p202, %p203
    %s206 = sadd.s32 %s205, 1
    %p209 = scmp.eq.s32.totalorder %s24, 1
    %p210 = scmp.ne.s32.totalorder %s205, %s207
    %p211 = scmp.eq.s32.totalorder %s24, 0
    %p212 = por %p210, %p211
    %p213 = scmp.ne.s32.totalorder %s205, %s207
    %p214 = scmp.eq.s32.totalorder %s29, 1
    %p215 = por %p213, %p214
    %p216 = scmp.ne.s32.totalorder %s207, %s208
    %p217 = scmp.eq.s32.totalorder %s29, 0
    %p218 = por %p216, %p217
    %p219 = scmp.ne.s32.totalorder %s207, %s208
    %p220 = scmp.eq.s32.totalorder %s30, 1
    %p221 = por %p219, %p220
    %p223 = scmp.ne.s32.totalorder %s208, %s222
    %p224 = scmp.eq.s32.totalorder %s30, 0
    %p225 = por %p223, %p224
    %s227 = sadd.s32 %s226, 1
    %p230 = scmp.eq.s32.totalorder %s24, 1
    %p231 = scmp.ne.s32.totalorder %s226, %s228
    %p232 = scmp.eq.s32.totalorder %s24, 0
    %p233 = por %p231, %p232
    %p234 = scmp.ne.s32.totalorder %s226, %s228
    %p235 = scmp.eq.s32.totalorder %s29, 1
    %p236 = por %p234, %p235
    %p237 = scmp.ne.s32.totalorder %s228, %s229
    %p238 = scmp.eq.s32.totalorder %s29, 0
    %p239 = por %p237, %p238
    %p240 = scmp.ne.s32.totalorder %s228, %s229
    %p241 = scmp.eq.s32.totalorder %s30, 1
    %p242 = por %p240, %p241
    %p244 = scmp.ne.s32.totalorder %s229, %s243
    %p245 = scmp.eq.s32.totalorder %s30, 0
    %p246 = por %p244, %p245
    %s248 = sadd.s32 %s247, 1
    %p251 = scmp.eq.s32.totalorder %s24, 1
    %p252 = scmp.ne.s32.totalorder %s247, %s249
    %p253 = scmp.eq.s32.totalorder %s24, 0
    %p254 = por %p252, %p253
    %p255 = scmp.ne.s32.totalorder %s247, %s249
    %p256 = scmp.eq.s32.totalorder %s29, 1
    %p257 = por %p255, %p256
    %p258 = scmp.ne.s32.totalorder %s249, %s250
    %p259 = scmp.eq.s32.totalorder %s29, 0
    %p260 = por %p258, %p259
    %p261 = scmp.ne.s32.totalorder %s249, %s250
    %p262 = scmp.eq.s32.totalorder %s30, 1
    %p263 = por %p261, %p262
    %p265 = scmp.ne.s32.totalorder %s250, %s264
    %p266 = scmp.eq.s32.totalorder %s30, 0
    %p267 = por %p265, %p266
    %s269 = sadd.s32 %s268, 1
    %p272 = scmp.eq.s32.totalorder %s24, 1
    %p273 = scmp.ne.s32.totalorder %s268, %s270
    %p274 = scmp.eq.s32.totalorder %s24, 0
    %p275 = por %p273, %p274
    %p276 = scmp.ne.s32.totalorder %s268, %s270
    %p277 = scmp.eq.s32.totalorder %s29, 1
    %p278 = por %p276, %p277
    %p279 = scmp.ne.s32.totalorder %s270, %s271
    %p280 = scmp.eq.s32.totalorder %s29, 0
    %p281 = por %p279, %p280
    %p282 = scmp.ne.s32.totalorder %s270, %s271
    %p283 = scmp.eq.s32.totalorder %s30, 1
    %p284 = por %p282, %p283
    %p286 = scmp.ne.s32.totalorder %s271, %s285
    %p287 = scmp.eq.s32.totalorder %s30, 0
    %p288 = por %p286, %p287
    %s290 = sadd.s32 %s289, 1
    %p293 = scmp.eq.s32.totalorder %s24, 1
    %p294 = scmp.ne.s32.totalorder %s289, %s291
    %p295 = scmp.eq.s32.totalorder %s24, 0
    %p296 = por %p294, %p295
    %p297 = scmp.ne.s32.totalorder %s289, %s291
    %p298 = scmp.eq.s32.totalorder %s29, 1
    %p299 = por %p297, %p298
    %p300 = scmp.ne.s32.totalorder %s291, %s292
    %p301 = scmp.eq.s32.totalorder %s29, 0
    %p302 = por %p300, %p301
    %p303 = scmp.ne.s32.totalorder %s291, %s292
    %p304 = scmp.eq.s32.totalorder %s30, 1
    %p305 = por %p303, %p304
    %p307 = scmp.ne.s32.totalorder %s292, %s306
    %p308 = scmp.eq.s32.totalorder %s30, 0
    %p309 = por %p307, %p308
    %s311 = sadd.s32 %s310, 1
    %p314 = scmp.eq.s32.totalorder %s24, 1
    %p315 = scmp.ne.s32.totalorder %s310, %s312
    %p316 = scmp.eq.s32.totalorder %s24, 0
    %p317 = por %p315, %p316
    %p318 = scmp.ne.s32.totalorder %s310, %s312
    %p319 = scmp.eq.s32.totalorder %s29, 1
    %p320 = por %p318, %p319
    %p321 = scmp.ne.s32.totalorder %s312, %s313
    %p322 = scmp.eq.s32.totalorder %s29, 0
    %p323 = por %p321, %p322
    %p324 = scmp.ne.s32.totalorder %s312, %s313
    %p325 = scmp.eq.s32.totalorder %s30, 1
    %p326 = por %p324, %p325
    %p328 = scmp.ne.s32.totalorder %s313, %s327
    %p329 = scmp.eq.s32.totalorder %s30, 0
    %p330 = por %p328, %p329
    %s332 = sadd.s32 %s331, 1
    %p335 = scmp.eq.s32.totalorder %s24, 1
    %p336 = scmp.ne.s32.totalorder %s331, %s333
    %p337 = scmp.eq.s32.totalorder %s24, 0
    %p338 = por %p336, %p337
    %p339 = scmp.ne.s32.totalorder %s331, %s333
    %p340 = scmp.eq.s32.totalorder %s29, 1
    %p341 = por %p339, %p340
    %p342 = scmp.ne.s32.totalorder %s333, %s334
    %p343 = scmp.eq.s32.totalorder %s29, 0
    %p344 = por %p342, %p343
    %p345 = scmp.ne.s32.totalorder %s333, %s334
    %p346 = scmp.eq.s32.totalorder %s30, 1
    %p347 = por %p345, %p346
    %p349 = scmp.ne.s32.totalorder %s334, %s348
    %p350 = scmp.eq.s32.totalorder %s30, 0
    %p351 = por %p349, %p350
    %s353 = sadd.s32 %s352, 1
    %p356 = scmp.eq.s32.totalorder %s24, 1
    %p357 = scmp.ne.s32.totalorder %s352, %s354
    %p358 = scmp.eq.s32.totalorder %s24, 0
    %p359 = por %p357, %p358
    %p360 = scmp.ne.s32.totalorder %s352, %s354
    %p361 = scmp.eq.s32.totalorder %s29, 1
    %p362 = por %p360, %p361
    %p363 = scmp.ne.s32.totalorder %s354, %s355
    %p364 = scmp.eq.s32.totalorder %s29, 0
    %p365 = por %p363, %p364
    %p366 = scmp.ne.s32.totalorder %s354, %s355
    %p367 = scmp.eq.s32.totalorder %s30, 1
    %p368 = por %p366, %p367
    %p370 = scmp.ne.s32.totalorder %s355, %s369
    %p371 = scmp.eq.s32.totalorder %s30, 0
    %p372 = por %p370, %p371
    %s374 = sadd.s32 %s373, 1
    %p377 = scmp.eq.s32.totalorder %s24, 1
    %p378 = scmp.ne.s32.totalorder %s373, %s375
    %p379 = scmp.eq.s32.totalorder %s24, 0
    %p380 = por %p378, %p379
    %p381 = scmp.ne.s32.totalorder %s373, %s375
    %p382 = scmp.eq.s32.totalorder %s29, 1
    %p383 = por %p381, %p382
    %p384 = scmp.ne.s32.totalorder %s375, %s376
    %p385 = scmp.eq.s32.totalorder %s29, 0
    %p386 = por %p384, %p385
    %p387 = scmp.ne.s32.totalorder %s375, %s376
    %p388 = scmp.eq.s32.totalorder %s30, 1
    %p389 = por %p387, %p388
    %p391 = scmp.ne.s32.totalorder %s376, %s390
    %p392 = scmp.eq.s32.totalorder %s30, 0
    %p393 = por %p391, %p392
    %s395 = sadd.s32 %s394, 1
    %p398 = scmp.eq.s32.totalorder %s24, 1
    %p399 = scmp.ne.s32.totalorder %s394, %s396
    %p400 = scmp.eq.s32.totalorder %s24, 0
    %p401 = por %p399, %p400
    %p402 = scmp.ne.s32.totalorder %s394, %s396
    %p403 = scmp.eq.s32.totalorder %s29, 1
    %p404 = por %p402, %p403
    %p405 = scmp.ne.s32.totalorder %s396, %s397
    %p406 = scmp.eq.s32.totalorder %s29, 0
    %p407 = por %p405, %p406
    %p408 = scmp.ne.s32.totalorder %s396, %s397
    %p409 = scmp.eq.s32.totalorder %s30, 1
    %p410 = por %p408, %p409
    %p412 = scmp.ne.s32.totalorder %s397, %s411
    %p413 = scmp.eq.s32.totalorder %s30, 0
    %p414 = por %p412, %p413
    %s415 = ssub.s32 %s24, %s31
    %p416 = scmp.eq.s32.totalorder %s415, 0
    %s418 = sadd.s32 %s417, 1
    %s419 = scalar_select %p416, %s417, %s418
    %p422 = pneg %p416
    %p423 = scmp.eq.s32.totalorder %s24, 1
    %p424 = por %p422, %p423
    %p425 = scmp.ne.s32.totalorder %s417, %s420
    %p426 = scmp.eq.s32.totalorder %s24, 0
    %p427 = por %p425, %p426
    %p428 = scmp.ne.s32.totalorder %s417, %s420
    %p429 = scmp.eq.s32.totalorder %s29, 1
    %p430 = por %p428, %p429
    %p431 = scmp.ne.s32.totalorder %s420, %s421
    %p432 = scmp.eq.s32.totalorder %s29, 0
    %p433 = por %p431, %p432
    %p434 = scmp.ne.s32.totalorder %s420, %s421
    %p435 = scmp.eq.s32.totalorder %s30, 1
    %p436 = por %p434, %p435
    %p438 = scmp.ne.s32.totalorder %s421, %s437
    %p439 = scmp.eq.s32.totalorder %s30, 0
    %p440 = por %p438, %p439
    %p441 = scmp.le.s32.totalorder 1, %s24
    %p442 = scmp.lt.s32.totalorder %s24, 3
    %p443 = pnand %p441, %p442
    %p444 = pneg %p443
    // Predicated region
    $region9: #{forward.1} parent=5 // pred_check
      _
    $region10: #{forward.1} parent=5 // pred_check_branch
      %446 = sbr.rel (%p443) target = $region12
    $region11: #{forward.1} parent=5 // pred_region
      %s447 = ssub.s32 %s24, 1
      // Predicated region
      $region13: #{forward.1} parent=11 // pred_check
        %p448 = pneg %p71
      $region14: #{forward.1} parent=11 // pred_check_branch
        %450 = sbr.rel (%p448) target = $region16
      $region15: #{forward.1} parent=11 // pred_region
        _
      $region16: #{forward.1} parent=11 // pred_fallthru
        _
      // Predicated region
      $region17: #{forward.1} parent=11 // pred_check
        %p451 = pneg %p92
      $region18: #{forward.1} parent=11 // pred_check_branch
        %453 = sbr.rel (%p451) target = $region20
      $region19: #{forward.1} parent=11 // pred_region
        _
      $region20: #{forward.1} parent=11 // pred_fallthru
        _
      // Predicated region
      $region21: #{forward.1} parent=11 // pred_check
        %p454 = pneg %p113
      $region22: #{forward.1} parent=11 // pred_check_branch
        %456 = sbr.rel (%p454) target = $region24
      $region23: #{forward.1} parent=11 // pred_region
        _
      $region24: #{forward.1} parent=11 // pred_fallthru
        _
      // Predicated region
      $region25: #{forward.1} parent=11 // pred_check
        %p457 = pneg %p134
      $region26: #{forward.1} parent=11 // pred_check_branch
        %459 = sbr.rel (%p457) target = $region28
      $region27: #{forward.1} parent=11 // pred_region
        _
      $region28: #{forward.1} parent=11 // pred_fallthru
        _
      // Predicated region
      $region29: #{forward.1} parent=11 // pred_check
        %p460 = pneg %p155
      $region30: #{forward.1} parent=11 // pred_check_branch
        %462 = sbr.rel (%p460) target = $region32
      $region31: #{forward.1} parent=11 // pred_region
        _
      $region32: #{forward.1} parent=11 // pred_fallthru
        _
      // Predicated region
      $region33: #{forward.1} parent=11 // pred_check
        %p463 = pneg %p176
      $region34: #{forward.1} parent=11 // pred_check_branch
        %465 = sbr.rel (%p463) target = $region36
      $region35: #{forward.1} parent=11 // pred_region
        _
      $region36: #{forward.1} parent=11 // pred_fallthru
        _
      // Predicated region
      $region37: #{forward.1} parent=11 // pred_check
        %p466 = pneg %p197
      $region38: #{forward.1} parent=11 // pred_check_branch
        %468 = sbr.rel (%p466) target = $region40
      $region39: #{forward.1} parent=11 // pred_region
        _
      $region40: #{forward.1} parent=11 // pred_fallthru
        _
      // Predicated region
      $region41: #{forward.1} parent=11 // pred_check
        %p469 = pneg %p218
      $region42: #{forward.1} parent=11 // pred_check_branch
        %471 = sbr.rel (%p469) target = $region44
      $region43: #{forward.1} parent=11 // pred_region
        _
      $region44: #{forward.1} parent=11 // pred_fallthru
        _
      // Predicated region
      $region45: #{forward.1} parent=11 // pred_check
        %p472 = pneg %p239
      $region46: #{forward.1} parent=11 // pred_check_branch
        %474 = sbr.rel (%p472) target = $region48
      $region47: #{forward.1} parent=11 // pred_region
        _
      $region48: #{forward.1} parent=11 // pred_fallthru
        _
      // Predicated region
      $region49: #{forward.1} parent=11 // pred_check
        %p475 = pneg %p260
      $region50: #{forward.1} parent=11 // pred_check_branch
        %477 = sbr.rel (%p475) target = $region52
      $region51: #{forward.1} parent=11 // pred_region
        _
      $region52: #{forward.1} parent=11 // pred_fallthru
        _
      // Predicated region
      $region53: #{forward.1} parent=11 // pred_check
        %p478 = pneg %p281
      $region54: #{forward.1} parent=11 // pred_check_branch
        %480 = sbr.rel (%p478) target = $region56
      $region55: #{forward.1} parent=11 // pred_region
        _
      $region56: #{forward.1} parent=11 // pred_fallthru
        _
      // Predicated region
      $region57: #{forward.1} parent=11 // pred_check
        %p481 = pneg %p302
      $region58: #{forward.1} parent=11 // pred_check_branch
        %483 = sbr.rel (%p481) target = $region60
      $region59: #{forward.1} parent=11 // pred_region
        _
      $region60: #{forward.1} parent=11 // pred_fallthru
        _
      // Predicated region
      $region61: #{forward.1} parent=11 // pred_check
        %p484 = pneg %p323
      $region62: #{forward.1} parent=11 // pred_check_branch
        %486 = sbr.rel (%p484) target = $region64
      $region63: #{forward.1} parent=11 // pred_region
        _
      $region64: #{forward.1} parent=11 // pred_fallthru
        _
      // Predicated region
      $region65: #{forward.1} parent=11 // pred_check
        %p487 = pneg %p344
      $region66: #{forward.1} parent=11 // pred_check_branch
        %489 = sbr.rel (%p487) target = $region68
      $region67: #{forward.1} parent=11 // pred_region
        _
      $region68: #{forward.1} parent=11 // pred_fallthru
        _
      // Predicated region
      $region69: #{forward.1} parent=11 // pred_check
        %p490 = pneg %p365
      $region70: #{forward.1} parent=11 // pred_check_branch
        %492 = sbr.rel (%p490) target = $region72
      $region71: #{forward.1} parent=11 // pred_region
        _
      $region72: #{forward.1} parent=11 // pred_fallthru
        _
      // Predicated region
      $region73: #{forward.1} parent=11 // pred_check
        %p493 = pneg %p386
      $region74: #{forward.1} parent=11 // pred_check_branch
        %495 = sbr.rel (%p493) target = $region76
      $region75: #{forward.1} parent=11 // pred_region
        _
      $region76: #{forward.1} parent=11 // pred_fallthru
        _
      // Predicated region
      $region77: #{forward.1} parent=11 // pred_check
        %p496 = pneg %p407
      $region78: #{forward.1} parent=11 // pred_check_branch
        %498 = sbr.rel (%p496) target = $region80
      $region79: #{forward.1} parent=11 // pred_region
        _
      $region80: #{forward.1} parent=11 // pred_fallthru
        _
    $region12: #{forward.1} parent=5 // pred_fallthru
      _
    %p499 = scmp.lt.s32.totalorder %s24, 2
    // Predicated region
    $region81: #{forward.1} parent=5 // pred_check
      %p500 = pneg %p499
    $region82: #{forward.1} parent=5 // pred_check_branch
      %502 = sbr.rel (%p500) target = $region84
    $region83: #{forward.1} parent=5 // pred_region
      // Predicated region
      $region85: #{forward.1} parent=83 // pred_check
        %p503 = pneg %p44
      $region86: #{forward.1} parent=83 // pred_check_branch
        %505 = sbr.rel (%p503) target = $region88
      $region87: #{forward.1} parent=83 // pred_region
        %p506 = scmp.lt.s32.totalorder %s24, 1
        %s507 = scalar_select %p506, %s24, 1
        %s508 = smul.addr %s507, 13
        %s509 = smul.addr %s508, 4
        %s510 = scalar_lea.vmem %s0, %s509
      $region88: #{forward.1} parent=83 // pred_fallthru
        _
    $region84: #{forward.1} parent=5 // pred_fallthru
      _
    %p511 = scmp.le.s32.totalorder 1, %s24
    %p512 = scmp.lt.s32.totalorder %s24, 3
    %p513 = pnand %p511, %p512
    %p514 = pneg %p513
    // Predicated region
    $region89: #{forward.1} parent=5 // pred_check
      _
    $region90: #{forward.1} parent=5 // pred_check_branch
      %516 = sbr.rel (%p513) target = $region92
    $region91: #{forward.1} parent=5 // pred_region
      %s517 = ssub.s32 %s24, 1
      %p518 = scmp.lt.s32.totalorder %s29, 1
      %s519 = scalar_select %p518, %s29, 1
      %s520 = smul.addr %s519, 13
      %s521 = smul.addr %s520, 4
      %s522 = scalar_lea.vmem %s0, %s521
      %p523 = pneg %p50
      %p524 = pneg %p47
      %p525 = pneg %p71
      %p526 = pneg %p68
      %p527 = pneg %p92
      %p528 = pneg %p89
      %p529 = pneg %p113
      %p530 = pneg %p110
      %p531 = pneg %p134
      %p532 = pneg %p131
      %p533 = pneg %p155
      %p534 = pneg %p152
      %p535 = pneg %p176
      %p536 = pneg %p173
      %p537 = pneg %p197
      %p538 = pneg %p194
      %p539 = pneg %p218
      %p540 = pneg %p215
      %p541 = pneg %p239
      %p542 = pneg %p236
      %p543 = pneg %p260
      %p544 = pneg %p257
      %p545 = pneg %p281
      %p546 = pneg %p278
      %p547 = pneg %p302
      %p548 = pneg %p299
      %p549 = pneg %p323
      %p550 = pneg %p320
      %p551 = pneg %p344
      %p552 = pneg %p341
      %p553 = pneg %p365
      %p554 = pneg %p362
      %p555 = pneg %p386
      %p556 = pneg %p383
      %p557 = pneg %p407
      %p558 = pneg %p404
      %p559 = pneg %p433
      %p560 = pneg %p430
      %p561 = scmp.lt.s32.totalorder %s29, 1
      %s562 = scalar_select %p561, %s29, 1
      %s563 = smul.addr %s562, 2
      %s564 = smul.addr %s563, 8
      %s565 = scalar_lea.vmem %s18, %s564
      %p566 = scmp.lt.s32.totalorder %s29, 1
      %s567 = scalar_select %p566, %s29, 1
      %s568 = smul.addr %s567, 13
      %s569 = smul.addr %s568, 4
      %s570 = scalar_lea.vmem %s0, %s569
      %p571 = scmp.lt.s32.totalorder %s29, 1
      %s572 = scalar_select %p571, %s29, 1
      %s573 = smul.addr %s572, 2
      %s574 = smul.addr %s573, 8
      %s575 = scalar_lea.vmem %s18, %s574
      %vm577 = vcmask 261120
      %578 = vst.msk [vmem:[#allocation2] sm:$0xff] %vm577, 0.0
      %579 = vst.msk [vmem:[#allocation2 + $0x8] sm:$0xff] %vm577, 0.0
      %580 = vst.msk [vmem:[#allocation2 + $0x10] sm:$0xff] %vm577, 0.0
      %581 = vst.msk [vmem:[#allocation2 + $0x18] sm:$0xff] %vm577, 0.0
      %582 = vst.msk [vmem:[#allocation2 + $0x20] sm:$0xff] %vm577, 0.0
      %583 = vst.msk [vmem:[#allocation2 + $0x28] sm:$0xff] %vm577, 0.0
      %584 = vst.msk [vmem:[#allocation2 + $0x30] sm:$0xff] %vm577, 0.0
      %585 = vst.msk [vmem:[#allocation2 + $0x38] sm:$0xff] %vm577, 0.0
      %586 = vst.msk [vmem:[#allocation2 + $0x40] sm:$0xff] %vm577, 0.0
      %587 = vst.msk [vmem:[#allocation2 + $0x48] sm:$0xff] %vm577, 0.0
      %588 = vst.msk [vmem:[#allocation2 + $0x50] sm:$0xff] %vm577, 0.0
      %589 = vst.msk [vmem:[#allocation2 + $0x58] sm:$0xff] %vm577, 0.0
      %590 = vst.msk [vmem:[#allocation2 + $0x60] sm:$0xff] %vm577, 0.0
      %591 = vst.msk [vmem:[#allocation2 + $0x68] sm:$0xff] %vm577, 0.0
      %592 = vst.msk [vmem:[#allocation2 + $0x70] sm:$0xff] %vm577, 0.0
      %593 = vst.msk [vmem:[#allocation2 + $0x78] sm:$0xff] %vm577, 0.0
      %594 = vst.msk [vmem:[#allocation3] sm:$0xff] %vm577, 0.0
      %595 = vst.msk [vmem:[#allocation3 + $0x8] sm:$0xff] %vm577, 0.0
      %596 = vst.msk [vmem:[#allocation3 + $0x10] sm:$0xff] %vm577, 0.0
      %597 = vst.msk [vmem:[#allocation3 + $0x18] sm:$0xff] %vm577, 0.0
      %598 = vst.msk [vmem:[#allocation3 + $0x20] sm:$0xff] %vm577, 0.0
      %599 = vst.msk [vmem:[#allocation3 + $0x28] sm:$0xff] %vm577, 0.0
      %600 = vst.msk [vmem:[#allocation3 + $0x30] sm:$0xff] %vm577, 0.0
      %601 = vst.msk [vmem:[#allocation3 + $0x38] sm:$0xff] %vm577, 0.0
      %602 = vst.msk [vmem:[#allocation3 + $0x40] sm:$0xff] %vm577, 0.0
      %603 = vst.msk [vmem:[#allocation3 + $0x48] sm:$0xff] %vm577, 0.0
      %604 = vst.msk [vmem:[#allocation3 + $0x50] sm:$0xff] %vm577, 0.0
      %605 = vst.msk [vmem:[#allocation3 + $0x58] sm:$0xff] %vm577, 0.0
      %606 = vst.msk [vmem:[#allocation3 + $0x60] sm:$0xff] %vm577, 0.0
      %607 = vst.msk [vmem:[#allocation3 + $0x68] sm:$0xff] %vm577, 0.0
      %vm608 = vcmask 523264
      %609 = vst.msk [vmem:[#allocation4] sm:$0xff] %vm608, 0.0
      %610 = vst.msk [vmem:[#allocation4 + $0x8] sm:$0xff] %vm608, 0.0
      %611 = vst.msk [vmem:[#allocation4 + $0x10] sm:$0xff] %vm608, 0.0
      %612 = vst.msk [vmem:[#allocation4 + $0x18] sm:$0xff] %vm608, 0.0
      %613 = vst.msk [vmem:[#allocation4 + $0x20] sm:$0xff] %vm608, 0.0
      %614 = vst.msk [vmem:[#allocation4 + $0x28] sm:$0xff] %vm608, 0.0
      %615 = vst.msk [vmem:[#allocation4 + $0x30] sm:$0xff] %vm608, 0.0
      %616 = vst.msk [vmem:[#allocation5] sm:$0xff] %vm608, 0.0
      %617 = vst.msk [vmem:[#allocation5 + $0x8] sm:$0xff] %vm608, 0.0
      %618 = vst.msk [vmem:[#allocation5 + $0x10] sm:$0xff] %vm608, 0.0
      %619 = vst.msk [vmem:[#allocation5 + $0x18] sm:$0xff] %vm608, 0.0
      %620 = vst.msk [vmem:[#allocation5 + $0x20] sm:$0xff] %vm608, 0.0
      %621 = vst.msk [vmem:[#allocation5 + $0x28] sm:$0xff] %vm608, 0.0
      %622 = vst [vmem:[#allocation6] sm:$0xff] 0.0
      %623 = vst [vmem:[#allocation6 + $0x8] sm:$0xff] 0.0
      %624 = vst [vmem:[#allocation6 + $0x10] sm:$0xff] 0.0
      %625 = vst [vmem:[#allocation6 + $0x18] sm:$0xff] 0.0
      %v626 = vld [vmem:[%s570] sm:$0xf]
      %v627 = vld [vmem:[%s570 + $0x4] sm:$0xf]
      %v628 = vld [vmem:[%s570 + $0x8] sm:$0xf]
      %v629 = vld [vmem:[%s570 + $0xc] sm:$0xf]
      %v630 = vld [vmem:[%s570 + $0x10] sm:$0xf]
      %v631 = vld [vmem:[%s570 + $0x14] sm:$0xf]
      %v632 = vld [vmem:[%s570 + $0x18] sm:$0xf]
      %v633 = vld [vmem:[%s570 + $0x1c] sm:$0xf]
      %v634 = vld [vmem:[%s570 + $0x20] sm:$0xf]
      %v635 = vld [vmem:[%s570 + $0x24] sm:$0xf]
      %v636 = vld [vmem:[%s570 + $0x28] sm:$0xf]
      %v637 = vld [vmem:[%s570 + $0x2c] sm:$0xf]
      %v638 = vld [vmem:[%s570 + $0x30] sm:$0x3]
      %v639 = vld [vmem:[%s1] sm:$0xf]
      %v640 = vld [vmem:[%s1 + $0x4] sm:$0x1]
      %v641 = vld [vmem:[%s8] sm:$0x1]
      %v643 = vlaneseq
      %v644 = vshrl.u32 %v643, 7
      %v645 = vsub.s32 0, %v644
      %v646 = vrot.slane %v641, %v645
      %v661 = vunpack.c.l.b16 %v626
      %v662 = vunpack.c.l.b16 %v627
      %v663 = vunpack.c.l.b16 %v628
      %v664 = vunpack.c.l.b16 %v629
      %v665 = vunpack.c.l.b16 %v630
      %v666 = vunpack.c.l.b16 %v631
      %v667 = vunpack.c.l.b16 %v632
      %v668 = vunpack.c.l.b16 %v633
      %v669 = vunpack.c.l.b16 %v634
      %v670 = vunpack.c.l.b16 %v635
      %v671 = vunpack.c.l.b16 %v636
      %v672 = vunpack.c.l.b16 %v637
      %v673 = vunpack.c.l.b16 %v638
      %v674 = vpack.c.b16 %v662, %v661
      %v675 = vpack.c.b16 %v664, %v663
      %v676 = vpack.c.b16 %v666, %v665
      %v677 = vpack.c.b16 %v668, %v667
      %v678 = vpack.c.b16 %v670, %v669
      %v679 = vpack.c.b16 %v672, %v671
      %v680 = vpack.c.b16 %v673, %v673
      %v683 = vunpack.c.l.b16 %v639
      %v684 = vunpack.c.l.b16 %v640
      %v685 = vpack.c.b16 %v684, %v683
      %vm686 = vcmask 72704
      %v688 = vsel %vm686, %v674, 0
      %v691 = vsel %vm686, %v675, 0
      %v694 = vsel %vm686, %v676, 0
      %v697 = vsel %vm686, %v677, 0
      %v700 = vsel %vm686, %v678, 0
      %v703 = vsel %vm686, %v679, 0
      %v706 = vsel %vm686, %v680, 0
      %vm708 = vcmask 1043456
      %vm709 = vcmask 1044480
      %v710 = vsel %vm708, 4294967295, 65535
      %v711 = vsel %vm709, %v710, 0
      %v713 = vand.u32 %v685, %v711
      %715 = vmatprep.subr.bf16.mxu0 0
      %716 = vmatpush1.bf16.msra.mxu0 %v713
      %717 = vmatprep.subr.bf16.mxu0 0
      %718 = vmatpush1.bf16.msra.mxu0 0
      %719 = vmatprep.subr.bf16.mxu0 0
      %720 = vmatpush1.bf16.msra.mxu0 0
      %721 = vmatprep.subr.bf16.mxu0 0
      %722 = vmatpush1.bf16.msra.mxu0 0
      %723 = vmatprep.subr.bf16.mxu0 0
      %724 = vmatpush1.bf16.msra.mxu0 0
      %725 = vmatprep.subr.bf16.mxu0 0
      %726 = vmatpush1.bf16.msra.mxu0 0
      %727 = vmatprep.subr.bf16.mxu0 0
      %728 = vmatpush1.bf16.msra.mxu0 0
      %729 = vmatprep.subr.bf16.mxu0 0
      %730 = vmatpush1.bf16.msra.mxu0 0
      %731 = vmatprep.subr.bf16.mxu0 0
      %732 = vmatpush1.bf16.msra.mxu0 0
      %733 = vmatprep.subr.bf16.mxu0 0
      %734 = vmatpush1.bf16.msra.mxu0 0
      %735 = vmatprep.subr.bf16.mxu0 0
      %736 = vmatpush1.bf16.msra.mxu0 0
      %737 = vmatprep.subr.bf16.mxu0 0
      %738 = vmatpush1.bf16.msra.mxu0 0
      %739 = vmatprep.subr.bf16.mxu0 0
      %740 = vmatpush1.bf16.msra.mxu0 0
      %741 = vmatprep.subr.bf16.mxu0 0
      %742 = vmatpush1.bf16.msra.mxu0 0
      %743 = vmatprep.subr.bf16.mxu0 0
      %744 = vmatpush1.bf16.msra.mxu0 0
      %745 = vmatprep.subr.bf16.mxu0 0
      %746 = vmatpush1.bf16.msra.mxu0 0
      %747 = vmatprep.mubr.bf16.mxu0 0
      %748 = vmatmul.mubr.bf16.gmra.mrb[0].mxu0 %v688
      %v749 = vpop.f32.mrb[0].mxu0
      %v750 = vadd.f32 %v646, %v749
      %v751 = vpop.f32.mrb[0].mxu0
      %v752 = vpop.f32.mrb[0].mxu0
      %v753 = vadd.f32 %v646, %v752
      %v754 = vpop.f32.mrb[0].mxu0
      %755 = vmatprep.mubr.bf16.mxu0 0
      %756 = vmatmul.mubr.bf16.gmra.mrb[0].mxu0 %v691
      %v757 = vpop.f32.mrb[0].mxu0
      %v758 = vadd.f32 %v646, %v757
      %v759 = vpop.f32.mrb[0].mxu0
      %v760 = vpop.f32.mrb[0].mxu0
      %v761 = vadd.f32 %v646, %v760
      %v762 = vpop.f32.mrb[0].mxu0
      %763 = vmatprep.mubr.bf16.mxu0 0
      %764 = vmatmul.mubr.bf16.gmra.mrb[0].mxu0 %v694
      %v765 = vpop.f32.mrb[0].mxu0
      %v766 = vadd.f32 %v646, %v765
      %v767 = vpop.f32.mrb[0].mxu0
      %v768 = vpop.f32.mrb[0].mxu0
      %v769 = vadd.f32 %v646, %v768
      %v770 = vpop.f32.mrb[0].mxu0
      %771 = vmatprep.mubr.bf16.mxu0 0
      %772 = vmatmul.mubr.bf16.gmra.mrb[0].mxu0 %v697
      %v773 = vpop.f32.mrb[0].mxu0
      %v774 = vadd.f32 %v646, %v773
      %v775 = vpop.f32.mrb[0].mxu0
      %v776 = vpop.f32.mrb[0].mxu0
      %v777 = vadd.f32 %v646, %v776
      %v778 = vpop.f32.mrb[0].mxu0
      %779 = vmatprep.mubr.bf16.mxu0 0
      %780 = vmatmul.mubr.bf16.gmra.mrb[0].mxu0 %v700
      %v781 = vpop.f32.mrb[0].mxu0
      %v782 = vadd.f32 %v646, %v781
      %v783 = vpop.f32.mrb[0].mxu0
      %v784 = vpop.f32.mrb[0].mxu0
      %v785 = vadd.f32 %v646, %v784
      %v786 = vpop.f32.mrb[0].mxu0
      %787 = vmatprep.mubr.bf16.mxu0 0
      %788 = vmatmul.mubr.bf16.gmra.mrb[0].mxu0 %v703
      %v789 = vpop.f32.mrb[0].mxu0
      %v790 = vadd.f32 %v646, %v789
      %v791 = vpop.f32.mrb[0].mxu0
      %v792 = vpop.f32.mrb[0].mxu0
      %v793 = vadd.f32 %v646, %v792
      %v794 = vpop.f32.mrb[0].mxu0
      %795 = vmatprep.mubr.bf16.mxu0 0
      %796 = vmatmul.mubr.bf16.gmra.mrb[0].mxu0 %v706
      %v797 = vpop.f32.mrb[0].mxu0
      %v798 = vadd.f32 %v646, %v797
      %v799 = vpop.f32.mrb[0].mxu0
      %v800 = vpop.f32.mrb[0].mxu0
      %v801 = vpop.f32.mrb[0].mxu0
      %802 = vdwg.mxu0
      %v803 = vmul.f32 %v750, 0.251
      %v804 = vmul.f32 %v753, 0.251
      %v805 = vmul.f32 %v758, 0.251
      %v806 = vmul.f32 %v761, 0.251
      %v807 = vmul.f32 %v766, 0.251
      %v808 = vmul.f32 %v769, 0.251
      %v809 = vmul.f32 %v774, 0.251
      %v810 = vmul.f32 %v777, 0.251
      %v811 = vmul.f32 %v782, 0.251
      %v812 = vmul.f32 %v785, 0.251
      %v813 = vmul.f32 %v790, 0.251
      %v814 = vmul.f32 %v793, 0.251
      %v815 = vmul.f32 %v798, 0.251
      %v816 = vadd.f32 %v803, 1.4855
      %v817 = vadd.f32 %v804, 1.4855
      %v818 = vadd.f32 %v805, 1.4855
      %v819 = vadd.f32 %v806, 1.4855
      %v820 = vadd.f32 %v807, 1.4855
      %v821 = vadd.f32 %v808, 1.4855
      %v822 = vadd.f32 %v809, 1.4855
      %v823 = vadd.f32 %v810, 1.4855
      %v824 = vadd.f32 %v811, 1.4855
      %v825 = vadd.f32 %v812, 1.4855
      %v826 = vadd.f32 %v813, 1.4855
      %v827 = vadd.f32 %v814, 1.4855
      %v828 = vadd.f32 %v815, 1.4855
      %v829 = vmul.f32 %v816, %v750
      %v830 = vmul.f32 %v817, %v753
      %v831 = vmul.f32 %v818, %v758
      %v832 = vmul.f32 %v819, %v761
      %v833 = vmul.f32 %v820, %v766
      %v834 = vmul.f32 %v821, %v769
      %v835 = vmul.f32 %v822, %v774
      %v836 = vmul.f32 %v823, %v777
      %v837 = vmul.f32 %v824, %v782
      %v838 = vmul.f32 %v825, %v785
      %v839 = vmul.f32 %v826, %v790
      %v840 = vmul.f32 %v827, %v793
      %v841 = vmul.f32 %v828, %v798
      %v842 = vadd.f32 %v829, 3.052
      %v843 = vadd.f32 %v830, 3.052
      %v844 = vadd.f32 %v831, 3.052
      %v845 = vadd.f32 %v832, 3.052
      %v846 = vadd.f32 %v833, 3.052
      %v847 = vadd.f32 %v834, 3.052
      %v848 = vadd.f32 %v835, 3.052
      %v849 = vadd.f32 %v836, 3.052
      %v850 = vadd.f32 %v837, 3.052
      %v851 = vadd.f32 %v838, 3.052
      %v852 = vadd.f32 %v839, 3.052
      %v853 = vadd.f32 %v840, 3.052
      %v854 = vadd.f32 %v841, 3.052
      %v855 = vmul.f32 %v842, %v750
      %v856 = vmul.f32 %v843, %v753
      %v857 = vmul.f32 %v844, %v758
      %v858 = vmul.f32 %v845, %v761
      %v859 = vmul.f32 %v846, %v766
      %v860 = vmul.f32 %v847, %v769
      %v861 = vmul.f32 %v848, %v774
      %v862 = vmul.f32 %v849, %v777
      %v863 = vmul.f32 %v850, %v782
      %v864 = vmul.f32 %v851, %v785
      %v865 = vmul.f32 %v852, %v790
      %v866 = vmul.f32 %v853, %v793
      %v867 = vmul.f32 %v854, %v798
      %v868 = vadd.f32 %v855, 2.3235
      %v869 = vadd.f32 %v856, 2.3235
      %v870 = vadd.f32 %v857, 2.3235
      %v871 = vadd.f32 %v858, 2.3235
      %v872 = vadd.f32 %v859, 2.3235
      %v873 = vadd.f32 %v860, 2.3235
      %v874 = vadd.f32 %v861, 2.3235
      %v875 = vadd.f32 %v862, 2.3235
      %v876 = vadd.f32 %v863, 2.3235
      %v877 = vadd.f32 %v864, 2.3235
      %v878 = vadd.f32 %v865, 2.3235
      %v879 = vadd.f32 %v866, 2.3235
      %v880 = vadd.f32 %v867, 2.3235
      %v881 = vmul.f32 %v868, %v750
      %v882 = vmul.f32 %v869, %v753
      %v883 = vmul.f32 %v870, %v758
      %v884 = vmul.f32 %v871, %v761
      %v885 = vmul.f32 %v872, %v766
      %v886 = vmul.f32 %v873, %v769
      %v887 = vmul.f32 %v874, %v774
      %v888 = vmul.f32 %v875, %v777
      %v889 = vmul.f32 %v876, %v782
      %v890 = vmul.f32 %v877, %v785
      %v891 = vmul.f32 %v878, %v790
      %v892 = vmul.f32 %v879, %v793
      %v893 = vmul.f32 %v880, %v798
      %v894 = vadd.f32 %v881, 0.6184
      %v895 = vadd.f32 %v882, 0.6184
      %v896 = vadd.f32 %v883, 0.6184
      %v897 = vadd.f32 %v884, 0.6184
      %v898 = vadd.f32 %v885, 0.6184
      %v899 = vadd.f32 %v886, 0.6184
      %v900 = vadd.f32 %v887, 0.6184
      %v901 = vadd.f32 %v888, 0.6184
      %v902 = vadd.f32 %v889, 0.6184
      %v903 = vadd.f32 %v890, 0.6184
      %v904 = vadd.f32 %v891, 0.6184
      %v905 = vadd.f32 %v892, 0.6184
      %v906 = vadd.f32 %v893, 0.6184
      %v907 = vmul.f32 %v894, %v750
      %v908 = vmul.f32 %v895, %v753
      %v909 = vmul.f32 %v896, %v758
      %v910 = vmul.f32 %v897, %v761
      %v911 = vmul.f32 %v898, %v766
      %v912 = vmul.f32 %v899, %v769
      %v913 = vmul.f32 %v900, %v774
      %v914 = vmul.f32 %v901, %v777
      %v915 = vmul.f32 %v902, %v782
      %v916 = vmul.f32 %v903, %v785
      %v917 = vmul.f32 %v904, %v790
      %v918 = vmul.f32 %v905, %v793
      %v919 = vmul.f32 %v906, %v798
      %v920 = vadd.f32 %v907, 0.0298
      %v921 = vadd.f32 %v908, 0.0298
      %v922 = vadd.f32 %v909, 0.0298
      %v923 = vadd.f32 %v910, 0.0298
      %v924 = vadd.f32 %v911, 0.0298
      %v925 = vadd.f32 %v912, 0.0298
      %v926 = vadd.f32 %v913, 0.0298
      %v927 = vadd.f32 %v914, 0.0298
      %v928 = vadd.f32 %v915, 0.0298
      %v929 = vadd.f32 %v916, 0.0298
      %v930 = vadd.f32 %v917, 0.0298
      %v931 = vadd.f32 %v918, 0.0298
      %v932 = vadd.f32 %v919, 0.0298
      %v933 = vand.u32 2147483647, %v750
      %v934 = vand.u32 2147483647, %v753
      %v935 = vand.u32 2147483647, %v758
      %v936 = vand.u32 2147483647, %v761
      %v937 = vand.u32 2147483647, %v766
      %v938 = vand.u32 2147483647, %v769
      %v939 = vand.u32 2147483647, %v774
      %v940 = vand.u32 2147483647, %v777
      %v941 = vand.u32 2147483647, %v782
      %v942 = vand.u32 2147483647, %v785
      %v943 = vand.u32 2147483647, %v790
      %v944 = vand.u32 2147483647, %v793
      %v945 = vand.u32 2147483647, %v798
      %v946 = vmul.f32 %v933, 0.0
      %v947 = vmul.f32 %v934, 0.0
      %v948 = vmul.f32 %v935, 0.0
      %v949 = vmul.f32 %v936, 0.0
      %v950 = vmul.f32 %v937, 0.0
      %v951 = vmul.f32 %v938, 0.0
      %v952 = vmul.f32 %v939, 0.0
      %v953 = vmul.f32 %v940, 0.0
      %v954 = vmul.f32 %v941, 0.0
      %v955 = vmul.f32 %v942, 0.0
      %v956 = vmul.f32 %v943, 0.0
      %v957 = vmul.f32 %v944, 0.0
      %v958 = vmul.f32 %v945, 0.0
      %v959 = vadd.f32 %v946, 3.0
      %v960 = vadd.f32 %v947, 3.0
      %v961 = vadd.f32 %v948, 3.0
      %v962 = vadd.f32 %v949, 3.0
      %v963 = vadd.f32 %v950, 3.0
      %v964 = vadd.f32 %v951, 3.0
      %v965 = vadd.f32 %v952, 3.0
      %v966 = vadd.f32 %v953, 3.0
      %v967 = vadd.f32 %v954, 3.0
      %v968 = vadd.f32 %v955, 3.0
      %v969 = vadd.f32 %v956, 3.0
      %v970 = vadd.f32 %v957, 3.0
      %v971 = vadd.f32 %v958, 3.0
      %v972 = vmul.f32 %v959, %v933
      %v973 = vmul.f32 %v960, %v934
      %v974 = vmul.f32 %v961, %v935
      %v975 = vmul.f32 %v962, %v936
      %v976 = vmul.f32 %v963, %v937
      %v977 = vmul.f32 %v964, %v938
      %v978 = vmul.f32 %v965, %v939
      %v979 = vmul.f32 %v966, %v940
      %v980 = vmul.f32 %v967, %v941
      %v981 = vmul.f32 %v968, %v942
      %v982 = vmul.f32 %v969, %v943
      %v983 = vmul.f32 %v970, %v944
      %v984 = vmul.f32 %v971, %v945
      %v985 = vadd.f32 %v972, 0.0
      %v986 = vadd.f32 %v973, 0.0
      %v987 = vadd.f32 %v974, 0.0
      %v988 = vadd.f32 %v975, 0.0
      %v989 = vadd.f32 %v976, 0.0
      %v990 = vadd.f32 %v977, 0.0
      %v991 = vadd.f32 %v978, 0.0
      %v992 = vadd.f32 %v979, 0.0
      %v993 = vadd.f32 %v980, 0.0
      %v994 = vadd.f32 %v981, 0.0
      %v995 = vadd.f32 %v982, 0.0
      %v996 = vadd.f32 %v983, 0.0
      %v997 = vadd.f32 %v984, 0.0
      %v998 = vmul.f32 %v985, %v933
      %v999 = vmul.f32 %v986, %v934
      %v1000 = vmul.f32 %v987, %v935
      %v1001 = vmul.f32 %v988, %v936
      %v1002 = vmul.f32 %v989, %v937
      %v1003 = vmul.f32 %v990, %v938
      %v1004 = vmul.f32 %v991, %v939
      %v1005 = vmul.f32 %v992, %v940
      %v1006 = vmul.f32 %v993, %v941
      %v1007 = vmul.f32 %v994, %v942
      %v1008 = vmul.f32 %v995, %v943
      %v1009 = vmul.f32 %v996, %v944
      %v1010 = vmul.f32 %v997, %v945
      %v1011 = vadd.f32 %v998, 2.3831
      %v1012 = vadd.f32 %v999, 2.3831
      %v1013 = vadd.f32 %v1000, 2.3831
      %v1014 = vadd.f32 %v1001, 2.3831
      %v1015 = vadd.f32 %v1002, 2.3831
      %v1016 = vadd.f32 %v1003, 2.3831
      %v1017 = vadd.f32 %v1004, 2.3831
      %v1018 = vadd.f32 %v1005, 2.3831
      %v1019 = vadd.f32 %v1006, 2.3831
      %v1020 = vadd.f32 %v1007, 2.3831
      %v1021 = vadd.f32 %v1008, 2.3831
      %v1022 = vadd.f32 %v1009, 2.3831
      %v1023 = vadd.f32 %v1010, 2.3831
      %v1024 = vmul.f32 %v1011, %v933
      %v1025 = vmul.f32 %v1012, %v934
      %v1026 = vmul.f32 %v1013, %v935
      %v1027 = vmul.f32 %v1014, %v936
      %v1028 = vmul.f32 %v1015, %v937
      %v1029 = vmul.f32 %v1016, %v938
      %v1030 = vmul.f32 %v1017, %v939
      %v1031 = vmul.f32 %v1018, %v940
      %v1032 = vmul.f32 %v1019, %v941
      %v1033 = vmul.f32 %v1020, %v942
      %v1034 = vmul.f32 %v1021, %v943
      %v1035 = vmul.f32 %v1022, %v944
      %v1036 = vmul.f32 %v1023, %v945
      %v1037 = vadd.f32 %v1024, 1.0
      %v1038 = vadd.f32 %v1025, 1.0
      %v1039 = vadd.f32 %v1026, 1.0
      %v1040 = vadd.f32 %v1027, 1.0
      %v1041 = vadd.f32 %v1028, 1.0
      %v1042 = vadd.f32 %v1029, 1.0
      %v1043 = vadd.f32 %v1030, 1.0
      %v1044 = vadd.f32 %v1031, 1.0
      %v1045 = vadd.f32 %v1032, 1.0
      %v1046 = vadd.f32 %v1033, 1.0
      %v1047 = vadd.f32 %v1034, 1.0
      %v1048 = vadd.f32 %v1035, 1.0
      %v1049 = vadd.f32 %v1036, 1.0
      %v1050 = vrcp.pop %v1037
      %v1051 = vrcp.pop %v1038
      %v1052 = vrcp.pop %v1039
      %v1053 = vrcp.pop %v1040
      %v1054 = vrcp.pop %v1041
      %v1055 = vrcp.pop %v1042
      %v1056 = vrcp.pop %v1043
      %v1057 = vrcp.pop %v1044
      %v1058 = vrcp.pop %v1045
      %v1059 = vrcp.pop %v1046
      %v1060 = vrcp.pop %v1047
      %v1061 = vrcp.pop %v1048
      %v1062 = vrcp.pop %v1049
      %v1063 = vmul.f32 %v920, %v1050
      %v1064 = vmul.f32 %v921, %v1051
      %v1065 = vmul.f32 %v922, %v1052
      %v1066 = vmul.f32 %v923, %v1053
      %v1067 = vmul.f32 %v924, %v1054
      %v1068 = vmul.f32 %v925, %v1055
      %v1069 = vmul.f32 %v926, %v1056
      %v1070 = vmul.f32 %v927, %v1057
      %v1071 = vmul.f32 %v928, %v1058
      %v1072 = vmul.f32 %v929, %v1059
      %v1073 = vmul.f32 %v930, %v1060
      %v1074 = vmul.f32 %v931, %v1061
      %v1075 = vmul.f32 %v932, %v1062
      %v1076 = vld [vmem:[%s15] sm:$0xff]
      %v1077 = vld [vmem:[%s15 + $0x8] sm:$0xff]
      %v1078 = vld [vmem:[%s15 + $0x10] sm:$0xff]
      %v1079 = vld [vmem:[%s15 + $0x18] sm:$0xff]
      %v1080 = vld [vmem:[%s15 + $0x20] sm:$0xff]
      %v1081 = vld [vmem:[%s15 + $0x28] sm:$0xff]
      %v1082 = vld [vmem:[%s15 + $0x30] sm:$0xff]
      %v1083 = vld [vmem:[%s15 + $0x38] sm:$0xff]
      %v1084 = vld [vmem:[%s15 + $0x40] sm:$0xff]
      %v1085 = vld [vmem:[%s15 + $0x48] sm:$0xff]
      %v1086 = vld [vmem:[%s15 + $0x50] sm:$0xff]
      %v1087 = vld [vmem:[%s15 + $0x58] sm:$0xff]
      %v1088 = vld [vmem:[%s15 + $0x60] sm:$0xf]
      %1090 = vset.pattern.permute.xlu0 0
      %1091 = vperm.xlu0 %1090, %v1076
      %v1092 = vpop.permute.xlu0 %1091
      %1095 = vset.pattern.permute.xlu0 0
      %1096 = vperm.xlu0 %1095, %v1077
      %v1097 = vpop.permute.xlu0 %1096
      %1100 = vset.pattern.permute.xlu0 0
      %1101 = vperm.xlu0 %1100, %v1078
      %v1102 = vpop.permute.xlu0 %1101
      %1105 = vset.pattern.permute.xlu0 0
      %1106 = vperm.xlu0 %1105, %v1079
      %v1107 = vpop.permute.xlu0 %1106
      %1110 = vset.pattern.permute.xlu0 0
      %1111 = vperm.xlu0 %1110, %v1080
      %v1112 = vpop.permute.xlu0 %1111
      %1115 = vset.pattern.permute.xlu0 0
      %1116 = vperm.xlu0 %1115, %v1081
      %v1117 = vpop.permute.xlu0 %1116
      %1120 = vset.pattern.permute.xlu0 0
      %1121 = vperm.xlu0 %1120, %v1082
      %v1122 = vpop.permute.xlu0 %1121
      %1125 = vset.pattern.permute.xlu0 0
      %1126 = vperm.xlu0 %1125, %v1083
      %v1127 = vpop.permute.xlu0 %1126
      %1130 = vset.pattern.permute.xlu0 0
      %1131 = vperm.xlu0 %1130, %v1084
      %v1132 = vpop.permute.xlu0 %1131
      %1135 = vset.pattern.permute.xlu0 0
      %1136 = vperm.xlu0 %1135, %v1085
      %v1137 = vpop.permute.xlu0 %1136
      %1140 = vset.pattern.permute.xlu0 0
      %1141 = vperm.xlu0 %1140, %v1086
      %v1142 = vpop.permute.xlu0 %1141
      %1145 = vset.pattern.permute.xlu0 0
      %1146 = vperm.xlu0 %1145, %v1087
      %v1147 = vpop.permute.xlu0 %1146
      %1150 = vset.pattern.permute.xlu0 0
      %1151 = vperm.xlu0 %1150, %v1088
      %v1152 = vpop.permute.xlu0 %1151
      %v1154 = vmul.f32 %v1063, %v1092
      %v1155 = vmul.f32 %v1064, %v1097
      %v1156 = vmul.f32 %v1065, %v1102
      %v1157 = vmul.f32 %v1066, %v1107
      %v1158 = vmul.f32 %v1067, %v1112
      %v1159 = vmul.f32 %v1068, %v1117
      %v1160 = vmul.f32 %v1069, %v1122
      %v1161 = vmul.f32 %v1070, %v1127
      %v1162 = vmul.f32 %v1071, %v1132
      %v1163 = vmul.f32 %v1072, %v1137
      %v1164 = vmul.f32 %v1073, %v1142
      %v1165 = vmul.f32 %v1074, %v1147
      %v1166 = vmul.f32 %v1075, %v1152
      %1167 = vst.msk [vmem:[#allocation2] sm:$0xff] %vm577, %v1154
      %1168 = vst.msk [vmem:[#allocation2 + $0x8] sm:$0xff] %vm577, %v1155
      %1169 = vst.msk [vmem:[#allocation2 + $0x10] sm:$0xff] %vm577, %v1156
      %1170 = vst.msk [vmem:[#allocation2 + $0x18] sm:$0xff] %vm577, %v1157
      %1171 = vst.msk [vmem:[#allocation2 + $0x20] sm:$0xff] %vm577, %v1158
      %1172 = vst.msk [vmem:[#allocation2 + $0x28] sm:$0xff] %vm577, %v1159
      %1173 = vst.msk [vmem:[#allocation2 + $0x30] sm:$0xff] %vm577, %v1160
      %1174 = vst.msk [vmem:[#allocation2 + $0x38] sm:$0xff] %vm577, %v1161
      %1175 = vst.msk [vmem:[#allocation2 + $0x40] sm:$0xff] %vm577, %v1162
      %1176 = vst.msk [vmem:[#allocation2 + $0x48] sm:$0xff] %vm577, %v1163
      %1177 = vst.msk [vmem:[#allocation2 + $0x50] sm:$0xff] %vm577, %v1164
      %1178 = vst.msk [vmem:[#allocation2 + $0x58] sm:$0xff] %vm577, %v1165
      %vm1179 = vcmask 257024
      %1180 = vst.msk [vmem:[#allocation2 + $0x60] sm:$0xf] %vm1179, %v1166
      %v1181 = vld [vmem:[#allocation2] sm:$0xff]
      %v1182 = vld [vmem:[#allocation2 + $0x8] sm:$0xff]
      %v1183 = vld [vmem:[#allocation2 + $0x10] sm:$0xff]
      %v1184 = vld [vmem:[#allocation2 + $0x18] sm:$0xff]
      %v1185 = vld [vmem:[#allocation2 + $0x20] sm:$0xff]
      %v1186 = vld [vmem:[#allocation2 + $0x28] sm:$0xff]
      %v1187 = vld [vmem:[#allocation2 + $0x30] sm:$0xff]
      %v1188 = vld [vmem:[#allocation2 + $0x38] sm:$0xff]
      %v1189 = vld [vmem:[#allocation2 + $0x40] sm:$0xff]
      %v1190 = vld [vmem:[#allocation2 + $0x48] sm:$0xff]
      %v1191 = vld [vmem:[#allocation2 + $0x50] sm:$0xff]
      %v1192 = vld [vmem:[#allocation2 + $0x58] sm:$0xff]
      %v1193 = vld [vmem:[#allocation2 + $0x60] sm:$0xf]
      %1194 = vst.msk [vmem:[#allocation7] sm:$0xff] %vm577, %v1181
      %1195 = vst.msk [vmem:[#allocation7 + $0x18] sm:$0xff] %vm577, %v1182
      %1196 = vst.msk [vmem:[#allocation7 + $0x30] sm:$0xff] %vm577, %v1183
      %1197 = vst.msk [vmem:[#allocation7 + $0x48] sm:$0xff] %vm577, %v1184
      %1198 = vst.msk [vmem:[#allocation7 + $0x60] sm:$0xff] %vm577, %v1185
      %1199 = vst.msk [vmem:[#allocation7 + $0x78] sm:$0xff] %vm577, %v1186
      %1200 = vst.msk [vmem:[#allocation7 + $0x90] sm:$0xff] %vm577, %v1187
      %1201 = vst.msk [vmem:[#allocation7 + $0xa8] sm:$0xff] %vm577, %v1188
      %1202 = vst.msk [vmem:[#allocation7 + $0xc0] sm:$0xff] %vm577, %v1189
      %1203 = vst.msk [vmem:[#allocation7 + $0xd8] sm:$0xff] %vm577, %v1190
      %1204 = vst.msk [vmem:[#allocation7 + $0xf0] sm:$0xff] %vm577, %v1191
      %1205 = vst.msk [vmem:[#allocation7 + $0x108] sm:$0xff] %vm577, %v1192
      %1206 = vst.msk [vmem:[#allocation7 + $0x120] sm:$0xf] %vm1179, %v1193
      %v1207 = vld [vmem:[#allocation2 + $0x1] sm:$0xff]
      %v1208 = vld [vmem:[#allocation2 + $0x9] sm:$0xff]
      %v1209 = vld [vmem:[#allocation2 + $0x11] sm:$0xff]
      %v1210 = vld [vmem:[#allocation2 + $0x19] sm:$0xff]
      %v1211 = vld [vmem:[#allocation2 + $0x21] sm:$0xff]
      %v1212 = vld [vmem:[#allocation2 + $0x29] sm:$0xff]
      %v1213 = vld [vmem:[#allocation2 + $0x31] sm:$0xff]
      %v1214 = vld [vmem:[#allocation2 + $0x39] sm:$0xff]
      %v1215 = vld [vmem:[#allocation2 + $0x41] sm:$0xff]
      %v1216 = vld [vmem:[#allocation2 + $0x49] sm:$0xff]
      %v1217 = vld [vmem:[#allocation2 + $0x51] sm:$0xff]
      %v1218 = vld [vmem:[#allocation2 + $0x59] sm:$0xff]
      %v1219 = vld [vmem:[#allocation2 + $0x61] sm:$0xf]
      %1233 = vrot.lane.b32.xlu0 %v1207, 32
      %v1234 = vpop.permute.xlu0 %1233
      %1235 = vrot.lane.b32.xlu0 %v1208, 32
      %v1236 = vpop.permute.xlu0 %1235
      %1237 = vrot.lane.b32.xlu0 %v1209, 32
      %v1238 = vpop.permute.xlu0 %1237
      %1239 = vrot.lane.b32.xlu0 %v1210, 32
      %v1240 = vpop.permute.xlu0 %1239
      %1241 = vrot.lane.b32.xlu0 %v1211, 32
      %v1242 = vpop.permute.xlu0 %1241
      %1243 = vrot.lane.b32.xlu0 %v1212, 32
      %v1244 = vpop.permute.xlu0 %1243
      %1245 = vrot.lane.b32.xlu0 %v1213, 32
      %v1246 = vpop.permute.xlu0 %1245
      %1247 = vrot.lane.b32.xlu0 %v1214, 32
      %v1248 = vpop.permute.xlu0 %1247
      %1249 = vrot.lane.b32.xlu0 %v1215, 32
      %v1250 = vpop.permute.xlu0 %1249
      %1251 = vrot.lane.b32.xlu0 %v1216, 32
      %v1252 = vpop.permute.xlu0 %1251
      %1253 = vrot.lane.b32.xlu0 %v1217, 32
      %v1254 = vpop.permute.xlu0 %1253
      %1255 = vrot.lane.b32.xlu0 %v1218, 32
      %v1256 = vpop.permute.xlu0 %1255
      %1257 = vrot.lane.b32.xlu0 %v1219, 32
      %v1258 = vpop.permute.xlu0 %1257
      %vm1272 = vcmask 523520
      %1273 = vst.msk [vmem:[#allocation7] sm:$0xff] %vm1272, %v1234
      %1274 = vst.msk [vmem:[#allocation7 + $0x18] sm:$0xff] %vm1272, %v1236
      %1275 = vst.msk [vmem:[#allocation7 + $0x30] sm:$0xff] %vm1272, %v1238
      %1276 = vst.msk [vmem:[#allocation7 + $0x48] sm:$0xff] %vm1272, %v1240
      %1277 = vst.msk [vmem:[#allocation7 + $0x60] sm:$0xff] %vm1272, %v1242
      %1278 = vst.msk [vmem:[#allocation7 + $0x78] sm:$0xff] %vm1272, %v1244
      %1279 = vst.msk [vmem:[#allocation7 + $0x90] sm:$0xff] %vm1272, %v1246
      %1280 = vst.msk [vmem:[#allocation7 + $0xa8] sm:$0xff] %vm1272, %v1248
      %1281 = vst.msk [vmem:[#allocation7 + $0xc0] sm:$0xff] %vm1272, %v1250
      %1282 = vst.msk [vmem:[#allocation7 + $0xd8] sm:$0xff] %vm1272, %v1252
      %1283 = vst.msk [vmem:[#allocation7 + $0xf0] sm:$0xff] %vm1272, %v1254
      %1284 = vst.msk [vmem:[#allocation7 + $0x108] sm:$0xff] %vm1272, %v1256
      %vm1285 = vcmask 519424
      %1286 = vst.msk [vmem:[#allocation7 + $0x120] sm:$0xf] %vm1285, %v1258
      %v1287 = vld [vmem:[#allocation2 + $0x2] sm:$0xff]
      %v1288 = vld [vmem:[#allocation2 + $0xa] sm:$0xff]
      %v1289 = vld [vmem:[#allocation2 + $0x12] sm:$0xff]
      %v1290 = vld [vmem:[#allocation2 + $0x1a] sm:$0xff]
      %v1291 = vld [vmem:[#allocation2 + $0x22] sm:$0xff]
      %v1292 = vld [vmem:[#allocation2 + $0x2a] sm:$0xff]
      %v1293 = vld [vmem:[#allocation2 + $0x32] sm:$0xff]
      %v1294 = vld [vmem:[#allocation2 + $0x3a] sm:$0xff]
      %v1295 = vld [vmem:[#allocation2 + $0x42] sm:$0xff]
      %v1296 = vld [vmem:[#allocation2 + $0x4a] sm:$0xff]
      %v1297 = vld [vmem:[#allocation2 + $0x52] sm:$0xff]
      %v1298 = vld [vmem:[#allocation2 + $0x5a] sm:$0xff]
      %v1299 = vld [vmem:[#allocation2 + $0x62] sm:$0xf]
      %1313 = vrot.lane.b32.xlu0 %v1287, 64
      %v1314 = vpop.permute.xlu0 %1313
      %1315 = vrot.lane.b32.xlu0 %v1288, 64
      %v1316 = vpop.permute.xlu0 %1315
      %1317 = vrot.lane.b32.xlu0 %v1289, 64
      %v1318 = vpop.permute.xlu0 %1317
      %1319 = vrot.lane.b32.xlu0 %v1290, 64
      %v1320 = vpop.permute.xlu0 %1319
      %1321 = vrot.lane.b32.xlu0 %v1291, 64
      %v1322 = vpop.permute.xlu0 %1321
      %1323 = vrot.lane.b32.xlu0 %v1292, 64
      %v1324 = vpop.permute.xlu0 %1323
      %1325 = vrot.lane.b32.xlu0 %v1293, 64
      %v1326 = vpop.permute.xlu0 %1325
      %1327 = vrot.lane.b32.xlu0 %v1294, 64
      %v1328 = vpop.permute.xlu0 %1327
      %1329 = vrot.lane.b32.xlu0 %v1295, 64
      %v1330 = vpop.permute.xlu0 %1329
      %1331 = vrot.lane.b32.xlu0 %v1296, 64
      %v1332 = vpop.permute.xlu0 %1331
      %1333 = vrot.lane.b32.xlu0 %v1297, 64
      %v1334 = vpop.permute.xlu0 %1333
      %1335 = vrot.lane.b32.xlu0 %v1298, 64
      %v1336 = vpop.permute.xlu0 %1335
      %1337 = vrot.lane.b32.xlu0 %v1299, 64
      %v1338 = vpop.permute.xlu0 %1337
      %vm1352 = vcmask 785920
      %1353 = vst.msk [vmem:[#allocation7] sm:$0xff] %vm1352, %v1314
      %1354 = vst.msk [vmem:[#allocation7 + $0x18] sm:$0xff] %vm1352, %v1316
      %1355 = vst.msk [vmem:[#allocation7 + $0x30] sm:$0xff] %vm1352, %v1318
      %1356 = vst.msk [vmem:[#allocation7 + $0x48] sm:$0xff] %vm1352, %v1320
      %1357 = vst.msk [vmem:[#allocation7 + $0x60] sm:$0xff] %vm1352, %v1322
      %1358 = vst.msk [vmem:[#allocation7 + $0x78] sm:$0xff] %vm1352, %v1324
      %1359 = vst.msk [vmem:[#allocation7 + $0x90] sm:$0xff] %vm1352, %v1326
      %1360 = vst.msk [vmem:[#allocation7 + $0xa8] sm:$0xff] %vm1352, %v1328
      %1361 = vst.msk [vmem:[#allocation7 + $0xc0] sm:$0xff] %vm1352, %v1330
      %1362 = vst.msk [vmem:[#allocation7 + $0xd8] sm:$0xff] %vm1352, %v1332
      %1363 = vst.msk [vmem:[#allocation7 + $0xf0] sm:$0xff] %vm1352, %v1334
      %1364 = vst.msk [vmem:[#allocation7 + $0x108] sm:$0xff] %vm1352, %v1336
      %vm1365 = vcmask 781824
      %1366 = vst.msk [vmem:[#allocation7 + $0x120] sm:$0xf] %vm1365, %v1338
      %v1367 = vld [vmem:[#allocation2 + $0xa] sm:$0xff]
      %v1368 = vld [vmem:[#allocation2 + $0x12] sm:$0xff]
      %v1369 = vld [vmem:[#allocation2 + $0x1a] sm:$0xff]
      %v1370 = vld [vmem:[#allocation2 + $0x22] sm:$0xff]
      %v1371 = vld [vmem:[#allocation2 + $0x2a] sm:$0xff]
      %v1372 = vld [vmem:[#allocation2 + $0x32] sm:$0xff]
      %v1373 = vld [vmem:[#allocation2 + $0x3a] sm:$0xff]
      %v1374 = vld [vmem:[#allocation2 + $0x42] sm:$0xff]
      %v1375 = vld [vmem:[#allocation2 + $0x4a] sm:$0xff]
      %v1376 = vld [vmem:[#allocation2 + $0x52] sm:$0xff]
      %v1377 = vld [vmem:[#allocation2 + $0x5a] sm:$0xff]
      %v1378 = vld [vmem:[#allocation2 + $0x62] sm:$0xff]
      %v1379 = vld [vmem:[#allocation2 + $0x6a] sm:$0xf]
      %1393 = vrot.lane.b32.xlu0 %v1367, 96
      %v1394 = vpop.permute.xlu0 %1393
      %1395 = vrot.lane.b32.xlu0 %v1368, 96
      %v1396 = vpop.permute.xlu0 %1395
      %1397 = vrot.lane.b32.xlu0 %v1369, 96
      %v1398 = vpop.permute.xlu0 %1397
      %1399 = vrot.lane.b32.xlu0 %v1370, 96
      %v1400 = vpop.permute.xlu0 %1399
      %1401 = vrot.lane.b32.xlu0 %v1371, 96
      %v1402 = vpop.permute.xlu0 %1401
      %1403 = vrot.lane.b32.xlu0 %v1372, 96
      %v1404 = vpop.permute.xlu0 %1403
      %1405 = vrot.lane.b32.xlu0 %v1373, 96
      %v1406 = vpop.permute.xlu0 %1405
      %1407 = vrot.lane.b32.xlu0 %v1374, 96
      %v1408 = vpop.permute.xlu0 %1407
      %1409 = vrot.lane.b32.xlu0 %v1375, 96
      %v1410 = vpop.permute.xlu0 %1409
      %1411 = vrot.lane.b32.xlu0 %v1376, 96
      %v1412 = vpop.permute.xlu0 %1411
      %1413 = vrot.lane.b32.xlu0 %v1377, 96
      %v1414 = vpop.permute.xlu0 %1413
      %1415 = vrot.lane.b32.xlu0 %v1378, 96
      %v1416 = vpop.permute.xlu0 %1415
      %1417 = vrot.lane.b32.xlu0 %v1379, 96
      %v1418 = vpop.permute.xlu0 %1417
      %vm1432 = vcmask 1048320
      %1433 = vst.msk [vmem:[#allocation7] sm:$0xff] %vm1432, %v1394
      %1434 = vst.msk [vmem:[#allocation7 + $0x18] sm:$0xff] %vm1432, %v1396
      %1435 = vst.msk [vmem:[#allocation7 + $0x30] sm:$0xff] %vm1432, %v1398
      %1436 = vst.msk [vmem:[#allocation7 + $0x48] sm:$0xff] %vm1432, %v1400
      %1437 = vst.msk [vmem:[#allocation7 + $0x60] sm:$0xff] %vm1432, %v1402
      %1438 = vst.msk [vmem:[#allocation7 + $0x78] sm:$0xff] %vm1432, %v1404
      %1439 = vst.msk [vmem:[#allocation7 + $0x90] sm:$0xff] %vm1432, %v1406
      %1440 = vst.msk [vmem:[#allocation7 + $0xa8] sm:$0xff] %vm1432, %v1408
      %1441 = vst.msk [vmem:[#allocation7 + $0xc0] sm:$0xff] %vm1432, %v1410
      %1442 = vst.msk [vmem:[#allocation7 + $0xd8] sm:$0xff] %vm1432, %v1412
      %1443 = vst.msk [vmem:[#allocation7 + $0xf0] sm:$0xff] %vm1432, %v1414
      %1444 = vst.msk [vmem:[#allocation7 + $0x108] sm:$0xff] %vm1432, %v1416
      %vm1445 = vcmask 1044224
      %1446 = vst.msk [vmem:[#allocation7 + $0x120] sm:$0xf] %vm1445, %v1418
      %v1447 = vld [vmem:[#allocation2 + $0xb] sm:$0xff]
      %v1448 = vld [vmem:[#allocation2 + $0x13] sm:$0xff]
      %v1449 = vld [vmem:[#allocation2 + $0x1b] sm:$0xff]
      %v1450 = vld [vmem:[#allocation2 + $0x23] sm:$0xff]
      %v1451 = vld [vmem:[#allocation2 + $0x2b] sm:$0xff]
      %v1452 = vld [vmem:[#allocation2 + $0x33] sm:$0xff]
      %v1453 = vld [vmem:[#allocation2 + $0x3b] sm:$0xff]
      %v1454 = vld [vmem:[#allocation2 + $0x43] sm:$0xff]
      %v1455 = vld [vmem:[#allocation2 + $0x4b] sm:$0xff]
      %v1456 = vld [vmem:[#allocation2 + $0x53] sm:$0xff]
      %v1457 = vld [vmem:[#allocation2 + $0x5b] sm:$0xff]
      %v1458 = vld [vmem:[#allocation2 + $0x63] sm:$0xff]
      %v1459 = vld [vmem:[#allocation2 + $0x6b] sm:$0xf]
      %1460 = vst.msk [vmem:[#allocation7 + $0x8] sm:$0xff] %vm577, %v1447
      %1461 = vst.msk [vmem:[#allocation7 + $0x20] sm:$0xff] %vm577, %v1448
      %1462 = vst.msk [vmem:[#allocation7 + $0x38] sm:$0xff] %vm577, %v1449
      %1463 = vst.msk [vmem:[#allocation7 + $0x50] sm:$0xff] %vm577, %v1450
      %1464 = vst.msk [vmem:[#allocation7 + $0x68] sm:$0xff] %vm577, %v1451
      %1465 = vst.msk [vmem:[#allocation7 + $0x80] sm:$0xff] %vm577, %v1452
      %1466 = vst.msk [vmem:[#allocation7 + $0x98] sm:$0xff] %vm577, %v1453
      %1467 = vst.msk [vmem:[#allocation7 + $0xb0] sm:$0xff] %vm577, %v1454
      %1468 = vst.msk [vmem:[#allocation7 + $0xc8] sm:$0xff] %vm577, %v1455
      %1469 = vst.msk [vmem:[#allocation7 + $0xe0] sm:$0xff] %vm577, %v1456
      %1470 = vst.msk [vmem:[#allocation7 + $0xf8] sm:$0xff] %vm577, %v1457
      %1471 = vst.msk [vmem:[#allocation7 + $0x110] sm:$0xff] %vm577, %v1458
      %1472 = vst.msk [vmem:[#allocation7 + $0x128] sm:$0xf] %vm1179, %v1459
      %v1473 = vld [vmem:[#allocation2 + $0xc] sm:$0xff]
      %v1474 = vld [vmem:[#allocation2 + $0x14] sm:$0xff]
      %v1475 = vld [vmem:[#allocation2 + $0x1c] sm:$0xff]
      %v1476 = vld [vmem:[#allocation2 + $0x24] sm:$0xff]
      %v1477 = vld [vmem:[#allocation2 + $0x2c] sm:$0xff]
      %v1478 = vld [vmem:[#allocation2 + $0x34] sm:$0xff]
      %v1479 = vld [vmem:[#allocation2 + $0x3c] sm:$0xff]
      %v1480 = vld [vmem:[#allocation2 + $0x44] sm:$0xff]
      %v1481 = vld [vmem:[#allocation2 + $0x4c] sm:$0xff]
      %v1482 = vld [vmem:[#allocation2 + $0x54] sm:$0xff]
      %v1483 = vld [vmem:[#allocation2 + $0x5c] sm:$0xff]
      %v1484 = vld [vmem:[#allocation2 + $0x64] sm:$0xff]
      %v1485 = vld [vmem:[#allocation2 + $0x6c] sm:$0xf]
      %1499 = vrot.lane.b32.xlu0 %v1473, 32
      %v1500 = vpop.permute.xlu0 %1499
      %1501 = vrot.lane.b32.xlu0 %v1474, 32
      %v1502 = vpop.permute.xlu0 %1501
      %1503 = vrot.lane.b32.xlu0 %v1475, 32
      %v1504 = vpop.permute.xlu0 %1503
      %1505 = vrot.lane.b32.xlu0 %v1476, 32
      %v1506 = vpop.permute.xlu0 %1505
      %1507 = vrot.lane.b32.xlu0 %v1477, 32
      %v1508 = vpop.permute.xlu0 %1507
      %1509 = vrot.lane.b32.xlu0 %v1478, 32
      %v1510 = vpop.permute.xlu0 %1509
      %1511 = vrot.lane.b32.xlu0 %v1479, 32
      %v1512 = vpop.permute.xlu0 %1511
      %1513 = vrot.lane.b32.xlu0 %v1480, 32
      %v1514 = vpop.permute.xlu0 %1513
      %1515 = vrot.lane.b32.xlu0 %v1481, 32
      %v1516 = vpop.permute.xlu0 %1515
      %1517 = vrot.lane.b32.xlu0 %v1482, 32
      %v1518 = vpop.permute.xlu0 %1517
      %1519 = vrot.lane.b32.xlu0 %v1483, 32
      %v1520 = vpop.permute.xlu0 %1519
      %1521 = vrot.lane.b32.xlu0 %v1484, 32
      %v1522 = vpop.permute.xlu0 %1521
      %1523 = vrot.lane.b32.xlu0 %v1485, 32
      %v1524 = vpop.permute.xlu0 %1523
      %1538 = vst.msk [vmem:[#allocation7 + $0x8] sm:$0xff] %vm1272, %v1500
      %1539 = vst.msk [vmem:[#allocation7 + $0x20] sm:$0xff] %vm1272, %v1502
      %1540 = vst.msk [vmem:[#allocation7 + $0x38] sm:$0xff] %vm1272, %v1504
      %1541 = vst.msk [vmem:[#allocation7 + $0x50] sm:$0xff] %vm1272, %v1506
      %1542 = vst.msk [vmem:[#allocation7 + $0x68] sm:$0xff] %vm1272, %v1508
      %1543 = vst.msk [vmem:[#allocation7 + $0x80] sm:$0xff] %vm1272, %v1510
      %1544 = vst.msk [vmem:[#allocation7 + $0x98] sm:$0xff] %vm1272, %v1512
      %1545 = vst.msk [vmem:[#allocation7 + $0xb0] sm:$0xff] %vm1272, %v1514
      %1546 = vst.msk [vmem:[#allocation7 + $0xc8] sm:$0xff] %vm1272, %v1516
      %1547 = vst.msk [vmem:[#allocation7 + $0xe0] sm:$0xff] %vm1272, %v1518
      %1548 = vst.msk [vmem:[#allocation7 + $0xf8] sm:$0xff] %vm1272, %v1520
      %1549 = vst.msk [vmem:[#allocation7 + $0x110] sm:$0xff] %vm1272, %v1522
      %1550 = vst.msk [vmem:[#allocation7 + $0x128] sm:$0xf] %vm1285, %v1524
      %v1551 = vld [vmem:[#allocation2 + $0x14] sm:$0xff]
      %v1552 = vld [vmem:[#allocation2 + $0x1c] sm:$0xff]
      %v1553 = vld [vmem:[#allocation2 + $0x24] sm:$0xff]
      %v1554 = vld [vmem:[#allocation2 + $0x2c] sm:$0xff]
      %v1555 = vld [vmem:[#allocation2 + $0x34] sm:$0xff]
      %v1556 = vld [vmem:[#allocation2 + $0x3c] sm:$0xff]
      %v1557 = vld [vmem:[#allocation2 + $0x44] sm:$0xff]
      %v1558 = vld [vmem:[#allocation2 + $0x4c] sm:$0xff]
      %v1559 = vld [vmem:[#allocation2 + $0x54] sm:$0xff]
      %v1560 = vld [vmem:[#allocation2 + $0x5c] sm:$0xff]
      %v1561 = vld [vmem:[#allocation2 + $0x64] sm:$0xff]
      %v1562 = vld [vmem:[#allocation2 + $0x6c] sm:$0xff]
      %v1563 = vld [vmem:[#allocation2 + $0x74] sm:$0xf]
      %1577 = vrot.lane.b32.xlu0 %v1551, 64
      %v1578 = vpop.permute.xlu0 %1577
      %1579 = vrot.lane.b32.xlu0 %v1552, 64
      %v1580 = vpop.permute.xlu0 %1579
      %1581 = vrot.lane.b32.xlu0 %v1553, 64
      %v1582 = vpop.permute.xlu0 %1581
      %1583 = vrot.lane.b32.xlu0 %v1554, 64
      %v1584 = vpop.permute.xlu0 %1583
      %1585 = vrot.lane.b32.xlu0 %v1555, 64
      %v1586 = vpop.permute.xlu0 %1585
      %1587 = vrot.lane.b32.xlu0 %v1556, 64
      %v1588 = vpop.permute.xlu0 %1587
      %1589 = vrot.lane.b32.xlu0 %v1557, 64
      %v1590 = vpop.permute.xlu0 %1589
      %1591 = vrot.lane.b32.xlu0 %v1558, 64
      %v1592 = vpop.permute.xlu0 %1591
      %1593 = vrot.lane.b32.xlu0 %v1559, 64
      %v1594 = vpop.permute.xlu0 %1593
      %1595 = vrot.lane.b32.xlu0 %v1560, 64
      %v1596 = vpop.permute.xlu0 %1595
      %1597 = vrot.lane.b32.xlu0 %v1561, 64
      %v1598 = vpop.permute.xlu0 %1597
      %1599 = vrot.lane.b32.xlu0 %v1562, 64
      %v1600 = vpop.permute.xlu0 %1599
      %1601 = vrot.lane.b32.xlu0 %v1563, 64
      %v1602 = vpop.permute.xlu0 %1601
      %1616 = vst.msk [vmem:[#allocation7 + $0x8] sm:$0xff] %vm1352, %v1578
      %1617 = vst.msk [vmem:[#allocation7 + $0x20] sm:$0xff] %vm1352, %v1580
      %1618 = vst.msk [vmem:[#allocation7 + $0x38] sm:$0xff] %vm1352, %v1582
      %1619 = vst.msk [vmem:[#allocation7 + $0x50] sm:$0xff] %vm1352, %v1584
      %1620 = vst.msk [vmem:[#allocation7 + $0x68] sm:$0xff] %vm1352, %v1586
      %1621 = vst.msk [vmem:[#allocation7 + $0x80] sm:$0xff] %vm1352, %v1588
      %1622 = vst.msk [vmem:[#allocation7 + $0x98] sm:$0xff] %vm1352, %v1590
      %1623 = vst.msk [vmem:[#allocation7 + $0xb0] sm:$0xff] %vm1352, %v1592
      %1624 = vst.msk [vmem:[#allocation7 + $0xc8] sm:$0xff] %vm1352, %v1594
      %1625 = vst.msk [vmem:[#allocation7 + $0xe0] sm:$0xff] %vm1352, %v1596
      %1626 = vst.msk [vmem:[#allocation7 + $0xf8] sm:$0xff] %vm1352, %v1598
      %1627 = vst.msk [vmem:[#allocation7 + $0x110] sm:$0xff] %vm1352, %v1600
      %1628 = vst.msk [vmem:[#allocation7 + $0x128] sm:$0xf] %vm1365, %v1602
      %v1629 = vld [vmem:[#allocation2 + $0x15] sm:$0xff]
      %v1630 = vld [vmem:[#allocation2 + $0x1d] sm:$0xff]
      %v1631 = vld [vmem:[#allocation2 + $0x25] sm:$0xff]
      %v1632 = vld [vmem:[#allocation2 + $0x2d] sm:$0xff]
      %v1633 = vld [vmem:[#allocation2 + $0x35] sm:$0xff]
      %v1634 = vld [vmem:[#allocation2 + $0x3d] sm:$0xff]
      %v1635 = vld [vmem:[#allocation2 + $0x45] sm:$0xff]
      %v1636 = vld [vmem:[#allocation2 + $0x4d] sm:$0xff]
      %v1637 = vld [vmem:[#allocation2 + $0x55] sm:$0xff]
      %v1638 = vld [vmem:[#allocation2 + $0x5d] sm:$0xff]
      %v1639 = vld [vmem:[#allocation2 + $0x65] sm:$0xff]
      %v1640 = vld [vmem:[#allocation2 + $0x6d] sm:$0xff]
      %v1641 = vld [vmem:[#allocation2 + $0x75] sm:$0xf]
      %1655 = vrot.lane.b32.xlu0 %v1629, 96
      %v1656 = vpop.permute.xlu0 %1655
      %1657 = vrot.lane.b32.xlu0 %v1630, 96
      %v1658 = vpop.permute.xlu0 %1657
      %1659 = vrot.lane.b32.xlu0 %v1631, 96
      %v1660 = vpop.permute.xlu0 %1659
      %1661 = vrot.lane.b32.xlu0 %v1632, 96
      %v1662 = vpop.permute.xlu0 %1661
      %1663 = vrot.lane.b32.xlu0 %v1633, 96
      %v1664 = vpop.permute.xlu0 %1663
      %1665 = vrot.lane.b32.xlu0 %v1634, 96
      %v1666 = vpop.permute.xlu0 %1665
      %1667 = vrot.lane.b32.xlu0 %v1635, 96
      %v1668 = vpop.permute.xlu0 %1667
      %1669 = vrot.lane.b32.xlu0 %v1636, 96
      %v1670 = vpop.permute.xlu0 %1669
      %1671 = vrot.lane.b32.xlu0 %v1637, 96
      %v1672 = vpop.permute.xlu0 %1671
      %1673 = vrot.lane.b32.xlu0 %v1638, 96
      %v1674 = vpop.permute.xlu0 %1673
      %1675 = vrot.lane.b32.xlu0 %v1639, 96
      %v1676 = vpop.permute.xlu0 %1675
      %1677 = vrot.lane.b32.xlu0 %v1640, 96
      %v1678 = vpop.permute.xlu0 %1677
      %1679 = vrot.lane.b32.xlu0 %v1641, 96
      %v1680 = vpop.permute.xlu0 %1679
      %1694 = vst.msk [vmem:[#allocation7 + $0x8] sm:$0xff] %vm1432, %v1656
      %1695 = vst.msk [vmem:[#allocation7 + $0x20] sm:$0xff] %vm1432, %v1658
      %1696 = vst.msk [vmem:[#allocation7 + $0x38] sm:$0xff] %vm1432, %v1660
      %1697 = vst.msk [vmem:[#allocation7 + $0x50] sm:$0xff] %vm1432, %v1662
      %1698 = vst.msk [vmem:[#allocation7 + $0x68] sm:$0xff] %vm1432, %v1664
      %1699 = vst.msk [vmem:[#allocation7 + $0x80] sm:$0xff] %vm1432, %v1666
      %1700 = vst.msk [vmem:[#allocation7 + $0x98] sm:$0xff] %vm1432, %v1668
      %1701 = vst.msk [vmem:[#allocation7 + $0xb0] sm:$0xff] %vm1432, %v1670
      %1702 = vst.msk [vmem:[#allocation7 + $0xc8] sm:$0xff] %vm1432, %v1672
      %1703 = vst.msk [vmem:[#allocation7 + $0xe0] sm:$0xff] %vm1432, %v1674
      %1704 = vst.msk [vmem:[#allocation7 + $0xf8] sm:$0xff] %vm1432, %v1676
      %1705 = vst.msk [vmem:[#allocation7 + $0x110] sm:$0xff] %vm1432, %v1678
      %1706 = vst.msk [vmem:[#allocation7 + $0x128] sm:$0xf] %vm1445, %v1680
      %v1707 = vld [vmem:[#allocation2 + $0x16] sm:$0xff]
      %v1708 = vld [vmem:[#allocation2 + $0x1e] sm:$0xff]
      %v1709 = vld [vmem:[#allocation2 + $0x26] sm:$0xff]
      %v1710 = vld [vmem:[#allocation2 + $0x2e] sm:$0xff]
      %v1711 = vld [vmem:[#allocation2 + $0x36] sm:$0xff]
      %v1712 = vld [vmem:[#allocation2 + $0x3e] sm:$0xff]
      %v1713 = vld [vmem:[#allocation2 + $0x46] sm:$0xff]
      %v1714 = vld [vmem:[#allocation2 + $0x4e] sm:$0xff]
      %v1715 = vld [vmem:[#allocation2 + $0x56] sm:$0xff]
      %v1716 = vld [vmem:[#allocation2 + $0x5e] sm:$0xff]
      %v1717 = vld [vmem:[#allocation2 + $0x66] sm:$0xff]
      %v1718 = vld [vmem:[#allocation2 + $0x6e] sm:$0xff]
      %v1719 = vld [vmem:[#allocation2 + $0x76] sm:$0xf]
      %1720 = vst.msk [vmem:[#allocation7 + $0x10] sm:$0xff] %vm577, %v1707
      %1721 = vst.msk [vmem:[#allocation7 + $0x28] sm:$0xff] %vm577, %v1708
      %1722 = vst.msk [vmem:[#allocation7 + $0x40] sm:$0xff] %vm577, %v1709
      %1723 = vst.msk [vmem:[#allocation7 + $0x58] sm:$0xff] %vm577, %v1710
      %1724 = vst.msk [vmem:[#allocation7 + $0x70] sm:$0xff] %vm577, %v1711
      %1725 = vst.msk [vmem:[#allocation7 + $0x88] sm:$0xff] %vm577, %v1712
      %1726 = vst.msk [vmem:[#allocation7 + $0xa0] sm:$0xff] %vm577, %v1713
      %1727 = vst.msk [vmem:[#allocation7 + $0xb8] sm:$0xff] %vm577, %v1714
      %1728 = vst.msk [vmem:[#allocation7 + $0xd0] sm:$0xff] %vm577, %v1715
      %1729 = vst.msk [vmem:[#allocation7 + $0xe8] sm:$0xff] %vm577, %v1716
      %1730 = vst.msk [vmem:[#allocation7 + $0x100] sm:$0xff] %vm577, %v1717
      %1731 = vst.msk [vmem:[#allocation7 + $0x118] sm:$0xff] %vm577, %v1718
      %1732 = vst.msk [vmem:[#allocation7 + $0x130] sm:$0xf] %vm1179, %v1719
      %v1733 = vld [vmem:[#allocation7] sm:$0xff]
      %v1734 = vld [vmem:[#allocation7 + $0x8] sm:$0xff]
      %v1735 = vld [vmem:[#allocation7 + $0x10] sm:$0xff]
      %v1736 = vld [vmem:[#allocation7 + $0x18] sm:$0xff]
      %v1737 = vld [vmem:[#allocation7 + $0x20] sm:$0xff]
      %v1738 = vld [vmem:[#allocation7 + $0x28] sm:$0xff]
      %v1739 = vld [vmem:[#allocation7 + $0x30] sm:$0xff]
      %v1740 = vld [vmem:[#allocation7 + $0x38] sm:$0xff]
      %v1741 = vld [vmem:[#allocation7 + $0x40] sm:$0xff]
      %v1742 = vld [vmem:[#allocation7 + $0x48] sm:$0xff]
      %v1743 = vld [vmem:[#allocation7 + $0x50] sm:$0xff]
      %v1744 = vld [vmem:[#allocation7 + $0x58] sm:$0xff]
      %v1745 = vld [vmem:[#allocation7 + $0x60] sm:$0xff]
      %v1746 = vld [vmem:[#allocation7 + $0x68] sm:$0xff]
      %v1747 = vld [vmem:[#allocation7 + $0x70] sm:$0xff]
      %v1748 = vld [vmem:[#allocation7 + $0x78] sm:$0xff]
      %v1749 = vld [vmem:[#allocation7 + $0x80] sm:$0xff]
      %v1750 = vld [vmem:[#allocation7 + $0x88] sm:$0xff]
      %v1751 = vld [vmem:[#allocation7 + $0x90] sm:$0xff]
      %v1752 = vld [vmem:[#allocation7 + $0x98] sm:$0xff]
      %v1753 = vld [vmem:[#allocation7 + $0xa0] sm:$0xff]
      %v1754 = vld [vmem:[#allocation7 + $0xa8] sm:$0xff]
      %v1755 = vld [vmem:[#allocation7 + $0xb0] sm:$0xff]
      %v1756 = vld [vmem:[#allocation7 + $0xb8] sm:$0xff]
      %v1757 = vld [vmem:[#allocation7 + $0xc0] sm:$0xff]
      %v1758 = vld [vmem:[#allocation7 + $0xc8] sm:$0xff]
      %v1759 = vld [vmem:[#allocation7 + $0xd0] sm:$0xff]
      %v1760 = vld [vmem:[#allocation7 + $0xd8] sm:$0xff]
      %v1761 = vld [vmem:[#allocation7 + $0xe0] sm:$0xff]
      %v1762 = vld [vmem:[#allocation7 + $0xe8] sm:$0xff]
      %v1763 = vld [vmem:[#allocation7 + $0xf0] sm:$0xff]
      %v1764 = vld [vmem:[#allocation7 + $0xf8] sm:$0xff]
      %v1765 = vld [vmem:[#allocation7 + $0x100] sm:$0xff]
      %v1766 = vld [vmem:[#allocation7 + $0x108] sm:$0xff]
      %v1767 = vld [vmem:[#allocation7 + $0x110] sm:$0xff]
      %v1768 = vld [vmem:[#allocation7 + $0x118] sm:$0xff]
      %v1769 = vld [vmem:[#allocation7 + $0x120] sm:$0xf]
      %v1770 = vld [vmem:[#allocation7 + $0x128] sm:$0xf]
      %v1771 = vld [vmem:[#allocation7 + $0x130] sm:$0xf]
      %v1772 = vpack.c.bf16 %v1736, %v1733
      %v1773 = vpack.c.bf16 %v1737, %v1734
      %v1774 = vpack.c.bf16 %v1738, %v1735
      %v1775 = vpack.c.bf16 %v1742, %v1739
      %v1776 = vpack.c.bf16 %v1743, %v1740
      %v1777 = vpack.c.bf16 %v1744, %v1741
      %v1778 = vpack.c.bf16 %v1748, %v1745
      %v1779 = vpack.c.bf16 %v1749, %v1746
      %v1780 = vpack.c.bf16 %v1750, %v1747
      %v1781 = vpack.c.bf16 %v1754, %v1751
      %v1782 = vpack.c.bf16 %v1755, %v1752
      %v1783 = vpack.c.bf16 %v1756, %v1753
      %v1784 = vpack.c.bf16 %v1760, %v1757
      %v1785 = vpack.c.bf16 %v1761, %v1758
      %v1786 = vpack.c.bf16 %v1762, %v1759
      %v1787 = vpack.c.bf16 %v1766, %v1763
      %v1788 = vpack.c.bf16 %v1767, %v1764
      %v1789 = vpack.c.bf16 %v1768, %v1765
      %v1790 = vpack.c.bf16 %v1769, %v1769
      %v1791 = vpack.c.bf16 %v1770, %v1770
      %v1792 = vpack.c.bf16 %v1771, %v1771
      %v1793 = vld [vmem:[%s2] sm:$0xf]
      %v1794 = vld [vmem:[%s2 + $0x4] sm:$0xf]
      %v1795 = vld [vmem:[%s2 + $0x8] sm:$0xf]
      %v1796 = vld [vmem:[%s2 + $0xc] sm:$0xf]
      %v1797 = vld [vmem:[%s2 + $0x10] sm:$0xf]
      %v1798 = vld [vmem:[%s2 + $0x14] sm:$0xf]
      %v1799 = vld [vmem:[%s2 + $0x18] sm:$0xf]
      %v1800 = vld [vmem:[%s2 + $0x1c] sm:$0xf]
      %v1801 = vld [vmem:[%s2 + $0x20] sm:$0xf]
      %v1802 = vld [vmem:[%s2 + $0x24] sm:$0xf]
      %v1803 = vld [vmem:[%s2 + $0x28] sm:$0xf]
      %v1804 = vld [vmem:[%s2 + $0x2c] sm:$0xf]
      %v1805 = vld [vmem:[%s2 + $0x30] sm:$0xf]
      %v1806 = vld [vmem:[%s2 + $0x34] sm:$0xf]
      %v1807 = vld [vmem:[%s2 + $0x38] sm:$0xf]
      %v1808 = vld [vmem:[%s2 + $0x3c] sm:$0xf]
      %v1809 = vld [vmem:[%s2 + $0x40] sm:$0xf]
      %v1810 = vld [vmem:[%s2 + $0x44] sm:$0xf]
      %v1811 = vld [vmem:[%s2 + $0x48] sm:$0xf]
      %v1812 = vld [vmem:[%s2 + $0x4c] sm:$0xf]
      %v1813 = vld [vmem:[%s2 + $0x50] sm:$0xf]
      %v1814 = vld [vmem:[%s2 + $0x54] sm:$0xf]
      %v1815 = vld [vmem:[%s2 + $0x58] sm:$0xf]
      %v1816 = vld [vmem:[%s2 + $0x5c] sm:$0xf]
      %v1817 = vld [vmem:[%s2 + $0x60] sm:$0xf]
      %v1818 = vld [vmem:[%s2 + $0x64] sm:$0xf]
      %v1819 = vld [vmem:[%s2 + $0x68] sm:$0xf]
      %v1820 = vld [vmem:[%s2 + $0x6c] sm:$0xf]
      %v1821 = vld [vmem:[%s2 + $0x70] sm:$0xf]
      %v1822 = vld [vmem:[%s2 + $0x74] sm:$0xf]
      %v1823 = vld [vmem:[%s2 + $0x78] sm:$0xf]
      %v1824 = vld [vmem:[%s2 + $0x7c] sm:$0xf]
      %v1825 = vld [vmem:[%s2 + $0x80] sm:$0xf]
      %v1826 = vld [vmem:[%s2 + $0x84] sm:$0xf]
      %v1827 = vld [vmem:[%s2 + $0x88] sm:$0xf]
      %v1828 = vld [vmem:[%s2 + $0x8c] sm:$0xf]
      %v1829 = vld [vmem:[%s9] sm:$0x1]
      %v1831 = vlaneseq
      %v1832 = vshrl.u32 %v1831, 7
      %v1833 = vsub.s32 0, %v1832
      %v1834 = vrot.slane %v1829, %v1833
      %v1872 = vunpack.c.l.b16 %v1793
      %v1873 = vunpack.c.l.b16 %v1794
      %v1874 = vunpack.c.l.b16 %v1795
      %v1875 = vunpack.c.l.b16 %v1796
      %v1876 = vunpack.c.l.b16 %v1797
      %v1877 = vunpack.c.l.b16 %v1798
      %v1878 = vunpack.c.l.b16 %v1799
      %v1879 = vunpack.c.l.b16 %v1800
      %v1880 = vunpack.c.l.b16 %v1801
      %v1881 = vunpack.c.l.b16 %v1802
      %v1882 = vunpack.c.l.b16 %v1803
      %v1883 = vunpack.c.l.b16 %v1804
      %v1884 = vunpack.c.l.b16 %v1805
      %v1885 = vunpack.c.l.b16 %v1806
      %v1886 = vunpack.c.l.b16 %v1807
      %v1887 = vunpack.c.l.b16 %v1808
      %v1888 = vunpack.c.l.b16 %v1809
      %v1889 = vunpack.c.l.b16 %v1810
      %v1890 = vunpack.c.l.b16 %v1811
      %v1891 = vunpack.c.l.b16 %v1812
      %v1892 = vunpack.c.l.b16 %v1813
      %v1893 = vunpack.c.l.b16 %v1814
      %v1894 = vunpack.c.l.b16 %v1815
      %v1895 = vunpack.c.l.b16 %v1816
      %v1896 = vunpack.c.l.b16 %v1817
      %v1897 = vunpack.c.l.b16 %v1818
      %v1898 = vunpack.c.l.b16 %v1819
      %v1899 = vunpack.c.l.b16 %v1820
      %v1900 = vunpack.c.l.b16 %v1821
      %v1901 = vunpack.c.l.b16 %v1822
      %v1902 = vunpack.c.l.b16 %v1823
      %v1903 = vunpack.c.l.b16 %v1824
      %v1904 = vunpack.c.l.b16 %v1825
      %v1905 = vunpack.c.l.b16 %v1826
      %v1906 = vunpack.c.l.b16 %v1827
      %v1907 = vunpack.c.l.b16 %v1828
      %v1908 = vpack.c.b16 %v1873, %v1872
      %v1909 = vpack.c.b16 %v1875, %v1874
      %v1910 = vpack.c.b16 %v1877, %v1876
      %v1911 = vpack.c.b16 %v1879, %v1878
      %v1912 = vpack.c.b16 %v1881, %v1880
      %v1913 = vpack.c.b16 %v1883, %v1882
      %v1914 = vpack.c.b16 %v1885, %v1884
      %v1915 = vpack.c.b16 %v1887, %v1886
      %v1916 = vpack.c.b16 %v1889, %v1888
      %v1917 = vpack.c.b16 %v1891, %v1890
      %v1918 = vpack.c.b16 %v1893, %v1892
      %v1919 = vpack.c.b16 %v1895, %v1894
      %v1920 = vpack.c.b16 %v1897, %v1896
      %v1921 = vpack.c.b16 %v1899, %v1898
      %v1922 = vpack.c.b16 %v1901, %v1900
      %v1923 = vpack.c.b16 %v1903, %v1902
      %v1924 = vpack.c.b16 %v1905, %v1904
      %v1925 = vpack.c.b16 %v1907, %v1906
      %v1945 = vsel %vm577, %v1774, 0
      %v1948 = vsel %vm577, %v1777, 0
      %v1951 = vsel %vm577, %v1780, 0
      %v1954 = vsel %vm577, %v1783, 0
      %v1957 = vsel %vm577, %v1786, 0
      %v1960 = vsel %vm577, %v1789, 0
      %v1963 = vsel %vm577, %v1792, 0
      %1965 = vmatprep.subr.bf16.mxu0 0
      %1966 = vmatpush1.bf16.msra.mxu0 %v1908
      %1967 = vmatprep.subr.bf16.mxu0 0
      %1968 = vmatpush1.bf16.msra.mxu0 %v1909
      %1969 = vmatprep.subr.bf16.mxu0 0
      %1970 = vmatpush1.bf16.msra.mxu0 %v1910
      %1971 = vmatprep.subr.bf16.mxu0 0
      %1972 = vmatpush1.bf16.msra.mxu0 %v1911
      %1973 = vmatprep.subr.bf16.mxu0 0
      %1974 = vmatpush1.bf16.msra.mxu0 %v1912
      %1975 = vmatprep.subr.bf16.mxu0 0
      %1976 = vmatpush1.bf16.msra.mxu0 %v1913
      %1977 = vmatprep.subr.bf16.mxu0 0
      %1978 = vmatpush1.bf16.msra.mxu0 %v1914
      %1979 = vmatprep.subr.bf16.mxu0 0
      %1980 = vmatpush1.bf16.msra.mxu0 %v1915
      %1981 = vmatprep.subr.bf16.mxu0 0
      %1982 = vmatpush1.bf16.msra.mxu0 %v1916
      %1983 = vmatprep.subr.bf16.mxu0 0
      %1984 = vmatpush1.bf16.msra.mxu0 %v1917
      %1985 = vmatprep.subr.bf16.mxu0 0
      %1986 = vmatpush1.bf16.msra.mxu0 %v1918
      %1987 = vmatprep.subr.bf16.mxu0 0
      %1988 = vmatpush1.bf16.msra.mxu0 %v1919
      %1989 = vmatprep.subr.bf16.mxu0 0
      %1990 = vmatpush1.bf16.msra.mxu0 %v1920
      %1991 = vmatprep.subr.bf16.mxu0 0
      %1992 = vmatpush1.bf16.msra.mxu0 %v1921
      %1993 = vmatprep.subr.bf16.mxu0 0
      %1994 = vmatpush1.bf16.msra.mxu0 %v1922
      %1995 = vmatprep.subr.bf16.mxu0 0
      %1996 = vmatpush1.bf16.msra.mxu0 %v1923
      %1997 = vmatprep.mubr.bf16.mxu0 %v1773
      %1998 = vmatmul.mubr.bf16.gmra.mrb[0].mxu0 %v1772
      %v1999 = vpop.f32.mrb[0].mxu0
      %v2000 = vadd.f32 %v1834, %v1999
      %v2001 = vpop.f32.mrb[0].mxu0
      %v2002 = vpop.f32.mrb[0].mxu0
      %v2003 = vadd.f32 %v1834, %v2002
      %v2004 = vpop.f32.mrb[0].mxu0
      %2005 = vmatprep.mubr.bf16.mxu0 %v1776
      %2006 = vmatmul.mubr.bf16.gmra.mrb[0].mxu0 %v1775
      %v2007 = vpop.f32.mrb[0].mxu0
      %v2008 = vadd.f32 %v1834, %v2007
      %v2009 = vpop.f32.mrb[0].mxu0
      %v2010 = vpop.f32.mrb[0].mxu0
      %v2011 = vadd.f32 %v1834, %v2010
      %v2012 = vpop.f32.mrb[0].mxu0
      %2013 = vmatprep.mubr.bf16.mxu0 %v1779
      %2014 = vmatmul.mubr.bf16.gmra.mrb[0].mxu0 %v1778
      %v2015 = vpop.f32.mrb[0].mxu0
      %v2016 = vadd.f32 %v1834, %v2015
      %v2017 = vpop.f32.mrb[0].mxu0
      %v2018 = vpop.f32.mrb[0].mxu0
      %v2019 = vadd.f32 %v1834, %v2018
      %v2020 = vpop.f32.mrb[0].mxu0
      %2021 = vmatprep.mubr.bf16.mxu0 %v1782
      %2022 = vmatmul.mubr.bf16.gmra.mrb[0].mxu0 %v1781
      %v2023 = vpop.f32.mrb[0].mxu0
      %v2024 = vadd.f32 %v1834, %v2023
      %v2025 = vpop.f32.mrb[0].mxu0
      %v2026 = vpop.f32.mrb[0].mxu0
      %v2027 = vadd.f32 %v1834, %v2026
      %v2028 = vpop.f32.mrb[0].mxu0
      %2029 = vmatprep.mubr.bf16.mxu0 %v1785
      %2030 = vmatmul.mubr.bf16.gmra.mrb[0].mxu0 %v1784
      %v2031 = vpop.f32.mrb[0].mxu0
      %v2032 = vadd.f32 %v1834, %v2031
      %v2033 = vpop.f32.mrb[0].mxu0
      %v2034 = vpop.f32.mrb[0].mxu0
      %v2035 = vadd.f32 %v1834, %v2034
      %v2036 = vpop.f32.mrb[0].mxu0
      %2037 = vmatprep.mubr.bf16.mxu0 %v1788
      %2038 = vmatmul.mubr.bf16.gmra.mrb[0].mxu0 %v1787
      %v2039 = vpop.f32.mrb[0].mxu0
      %v2040 = vadd.f32 %v1834, %v2039
      %v2041 = vpop.f32.mrb[0].mxu0
      %v2042 = vpop.f32.mrb[0].mxu0
      %v2043 = vadd.f32 %v1834, %v2042
      %v2044 = vpop.f32.mrb[0].mxu0
      %2045 = vmatprep.mubr.bf16.mxu0 %v1791
      %2046 = vmatmul.mubr.bf16.gmra.mrb[0].mxu0 %v1790
      %v2047 = vpop.f32.mrb[0].mxu0
      %v2048 = vadd.f32 %v1834, %v2047
      %v2049 = vpop.f32.mrb[0].mxu0
      %v2050 = vpop.f32.mrb[0].mxu0
      %v2051 = vpop.f32.mrb[0].mxu0
      %2052 = vdwg.mxu0
      %2053 = vmatprep.subr.bf16.mxu0 0
      %2054 = vmatpush1.bf16.msra.mxu0 %v1924
      %2055 = vmatprep.subr.bf16.mxu0 0
      %2056 = vmatpush1.bf16.msra.mxu0 %v1925
      %2057 = vmatprep.subr.bf16.mxu0 0
      %2058 = vmatpush1.bf16.msra.mxu0 0
      %2059 = vmatprep.subr.bf16.mxu0 0
      %2060 = vmatpush1.bf16.msra.mxu0 0
      %2061 = vmatprep.subr.bf16.mxu0 0
      %2062 = vmatpush1.bf16.msra.mxu0 0
      %2063 = vmatprep.subr.bf16.mxu0 0
      %2064 = vmatpush1.bf16.msra.mxu0 0
      %2065 = vmatprep.subr.bf16.mxu0 0
      %2066 = vmatpush1.bf16.msra.mxu0 0
      %2067 = vmatprep.subr.bf16.mxu0 0
      %2068 = vmatpush1.bf16.msra.mxu0 0
      %2069 = vmatprep.subr.bf16.mxu0 0
      %2070 = vmatpush1.bf16.msra.mxu0 0
      %2071 = vmatprep.subr.bf16.mxu0 0
      %2072 = vmatpush1.bf16.msra.mxu0 0
      %2073 = vmatprep.subr.bf16.mxu0 0
      %2074 = vmatpush1.bf16.msra.mxu0 0
      %2075 = vmatprep.subr.bf16.mxu0 0
      %2076 = vmatpush1.bf16.msra.mxu0 0
      %2077 = vmatprep.subr.bf16.mxu0 0
      %2078 = vmatpush1.bf16.msra.mxu0 0
      %2079 = vmatprep.subr.bf16.mxu0 0
      %2080 = vmatpush1.bf16.msra.mxu0 0
      %2081 = vmatprep.subr.bf16.mxu0 0
      %2082 = vmatpush1.bf16.msra.mxu0 0
      %2083 = vmatprep.subr.bf16.mxu0 0
      %2084 = vmatpush1.bf16.msra.mxu0 0
      %2085 = vmatprep.mubr.bf16.mxu0 0
      %2086 = vmatmul.mubr.bf16.gmra.mrb[0].mxu0 %v1945
      %v2087 = vpop.f32.mrb[0].mxu0
      %v2088 = vadd.f32 %v2000, %v2087
      %v2089 = vpop.f32.mrb[0].mxu0
      %v2090 = vpop.f32.mrb[0].mxu0
      %v2091 = vadd.f32 %v2003, %v2090
      %v2092 = vpop.f32.mrb[0].mxu0
      %2093 = vmatprep.mubr.bf16.mxu0 0
      %2094 = vmatmul.mubr.bf16.gmra.mrb[0].mxu0 %v1948
      %v2095 = vpop.f32.mrb[0].mxu0
      %v2096 = vadd.f32 %v2008, %v2095
      %v2097 = vpop.f32.mrb[0].mxu0
      %v2098 = vpop.f32.mrb[0].mxu0
      %v2099 = vadd.f32 %v2011, %v2098
      %v2100 = vpop.f32.mrb[0].mxu0
      %2101 = vmatprep.mubr.bf16.mxu0 0
      %2102 = vmatmul.mubr.bf16.gmra.mrb[0].mxu0 %v1951
      %v2103 = vpop.f32.mrb[0].mxu0
      %v2104 = vadd.f32 %v2016, %v2103
      %v2105 = vpop.f32.mrb[0].mxu0
      %v2106 = vpop.f32.mrb[0].mxu0
      %v2107 = vadd.f32 %v2019, %v2106
      %v2108 = vpop.f32.mrb[0].mxu0
      %2109 = vmatprep.mubr.bf16.mxu0 0
      %2110 = vmatmul.mubr.bf16.gmra.mrb[0].mxu0 %v1954
      %v2111 = vpop.f32.mrb[0].mxu0
      %v2112 = vadd.f32 %v2024, %v2111
      %v2113 = vpop.f32.mrb[0].mxu0
      %v2114 = vpop.f32.mrb[0].mxu0
      %v2115 = vadd.f32 %v2027, %v2114
      %v2116 = vpop.f32.mrb[0].mxu0
      %2117 = vmatprep.mubr.bf16.mxu0 0
      %2118 = vmatmul.mubr.bf16.gmra.mrb[0].mxu0 %v1957
      %v2119 = vpop.f32.mrb[0].mxu0
      %v2120 = vadd.f32 %v2032, %v2119
      %v2121 = vpop.f32.mrb[0].mxu0
      %v2122 = vpop.f32.mrb[0].mxu0
      %v2123 = vadd.f32 %v2035, %v2122
      %v2124 = vpop.f32.mrb[0].mxu0
      %2125 = vmatprep.mubr.bf16.mxu0 0
      %2126 = vmatmul.mubr.bf16.gmra.mrb[0].mxu0 %v1960
      %v2127 = vpop.f32.mrb[0].mxu0
      %v2128 = vadd.f32 %v2040, %v2127
      %v2129 = vpop.f32.mrb[0].mxu0
      %v2130 = vpop.f32.mrb[0].mxu0
      %v2131 = vadd.f32 %v2043, %v2130
      %v2132 = vpop.f32.mrb[0].mxu0
      %2133 = vmatprep.mubr.bf16.mxu0 0
      %2134 = vmatmul.mubr.bf16.gmra.mrb[0].mxu0 %v1963
      %v2135 = vpop.f32.mrb[0].mxu0
      %v2136 = vadd.f32 %v2048, %v2135
      %v2137 = vpop.f32.mrb[0].mxu0
      %v2138 = vpop.f32.mrb[0].mxu0
      %v2139 = vpop.f32.mrb[0].mxu0
      %2140 = vdwg.mxu0
      %v2141 = vmul.f32 %v2088, 0.251
      %v2142 = vmul.f32 %v2091, 0.251
      %v2143 = vmul.f32 %v2096, 0.251
      %v2144 = vmul.f32 %v2099, 0.251
      %v2145 = vmul.f32 %v2104, 0.251
      %v2146 = vmul.f32 %v2107, 0.251
      %v2147 = vmul.f32 %v2112, 0.251
      %v2148 = vmul.f32 %v2115, 0.251
      %v2149 = vmul.f32 %v2120, 0.251
      %v2150 = vmul.f32 %v2123, 0.251
      %v2151 = vmul.f32 %v2128, 0.251
      %v2152 = vmul.f32 %v2131, 0.251
      %v2153 = vmul.f32 %v2136, 0.251
      %v2154 = vadd.f32 %v2141, 1.4855
      %v2155 = vadd.f32 %v2142, 1.4855
      %v2156 = vadd.f32 %v2143, 1.4855
      %v2157 = vadd.f32 %v2144, 1.4855
      %v2158 = vadd.f32 %v2145, 1.4855
      %v2159 = vadd.f32 %v2146, 1.4855
      %v2160 = vadd.f32 %v2147, 1.4855
      %v2161 = vadd.f32 %v2148, 1.4855
      %v2162 = vadd.f32 %v2149, 1.4855
      %v2163 = vadd.f32 %v2150, 1.4855
      %v2164 = vadd.f32 %v2151, 1.4855
      %v2165 = vadd.f32 %v2152, 1.4855
      %v2166 = vadd.f32 %v2153, 1.4855
      %v2167 = vmul.f32 %v2154, %v2088
      %v2168 = vmul.f32 %v2155, %v2091
      %v2169 = vmul.f32 %v2156, %v2096
      %v2170 = vmul.f32 %v2157, %v2099
      %v2171 = vmul.f32 %v2158, %v2104
      %v2172 = vmul.f32 %v2159, %v2107
      %v2173 = vmul.f32 %v2160, %v2112
      %v2174 = vmul.f32 %v2161, %v2115
      %v2175 = vmul.f32 %v2162, %v2120
      %v2176 = vmul.f32 %v2163, %v2123
      %v2177 = vmul.f32 %v2164, %v2128
      %v2178 = vmul.f32 %v2165, %v2131
      %v2179 = vmul.f32 %v2166, %v2136
      %v2180 = vadd.f32 %v2167, 3.052
      %v2181 = vadd.f32 %v2168, 3.052
      %v2182 = vadd.f32 %v2169, 3.052
      %v2183 = vadd.f32 %v2170, 3.052
      %v2184 = vadd.f32 %v2171, 3.052
      %v2185 = vadd.f32 %v2172, 3.052
      %v2186 = vadd.f32 %v2173, 3.052
      %v2187 = vadd.f32 %v2174, 3.052
      %v2188 = vadd.f32 %v2175, 3.052
      %v2189 = vadd.f32 %v2176, 3.052
      %v2190 = vadd.f32 %v2177, 3.052
      %v2191 = vadd.f32 %v2178, 3.052
      %v2192 = vadd.f32 %v2179, 3.052
      %v2193 = vmul.f32 %v2180, %v2088
      %v2194 = vmul.f32 %v2181, %v2091
      %v2195 = vmul.f32 %v2182, %v2096
      %v2196 = vmul.f32 %v2183, %v2099
      %v2197 = vmul.f32 %v2184, %v2104
      %v2198 = vmul.f32 %v2185, %v2107
      %v2199 = vmul.f32 %v2186, %v2112
      %v2200 = vmul.f32 %v2187, %v2115
      %v2201 = vmul.f32 %v2188, %v2120
      %v2202 = vmul.f32 %v2189, %v2123
      %v2203 = vmul.f32 %v2190, %v2128
      %v2204 = vmul.f32 %v2191, %v2131
      %v2205 = vmul.f32 %v2192, %v2136
      %v2206 = vadd.f32 %v2193, 2.3235
      %v2207 = vadd.f32 %v2194, 2.3235
      %v2208 = vadd.f32 %v2195, 2.3235
      %v2209 = vadd.f32 %v2196, 2.3235
      %v2210 = vadd.f32 %v2197, 2.3235
      %v2211 = vadd.f32 %v2198, 2.3235
      %v2212 = vadd.f32 %v2199, 2.3235
      %v2213 = vadd.f32 %v2200, 2.3235
      %v2214 = vadd.f32 %v2201, 2.3235
      %v2215 = vadd.f32 %v2202, 2.3235
      %v2216 = vadd.f32 %v2203, 2.3235
      %v2217 = vadd.f32 %v2204, 2.3235
      %v2218 = vadd.f32 %v2205, 2.3235
      %v2219 = vmul.f32 %v2206, %v2088
      %v2220 = vmul.f32 %v2207, %v2091
      %v2221 = vmul.f32 %v2208, %v2096
      %v2222 = vmul.f32 %v2209, %v2099
      %v2223 = vmul.f32 %v2210, %v2104
      %v2224 = vmul.f32 %v2211, %v2107
      %v2225 = vmul.f32 %v2212, %v2112
      %v2226 = vmul.f32 %v2213, %v2115
      %v2227 = vmul.f32 %v2214, %v2120
      %v2228 = vmul.f32 %v2215, %v2123
      %v2229 = vmul.f32 %v2216, %v2128
      %v2230 = vmul.f32 %v2217, %v2131
      %v2231 = vmul.f32 %v2218, %v2136
      %v2232 = vadd.f32 %v2219, 0.6184
      %v2233 = vadd.f32 %v2220, 0.6184
      %v2234 = vadd.f32 %v2221, 0.6184
      %v2235 = vadd.f32 %v2222, 0.6184
      %v2236 = vadd.f32 %v2223, 0.6184
      %v2237 = vadd.f32 %v2224, 0.6184
      %v2238 = vadd.f32 %v2225, 0.6184
      %v2239 = vadd.f32 %v2226, 0.6184
      %v2240 = vadd.f32 %v2227, 0.6184
      %v2241 = vadd.f32 %v2228, 0.6184
      %v2242 = vadd.f32 %v2229, 0.6184
      %v2243 = vadd.f32 %v2230, 0.6184
      %v2244 = vadd.f32 %v2231, 0.6184
      %v2245 = vmul.f32 %v2232, %v2088
      %v2246 = vmul.f32 %v2233, %v2091
      %v2247 = vmul.f32 %v2234, %v2096
      %v2248 = vmul.f32 %v2235, %v2099
      %v2249 = vmul.f32 %v2236, %v2104
      %v2250 = vmul.f32 %v2237, %v2107
      %v2251 = vmul.f32 %v2238, %v2112
      %v2252 = vmul.f32 %v2239, %v2115
      %v2253 = vmul.f32 %v2240, %v2120
      %v2254 = vmul.f32 %v2241, %v2123
      %v2255 = vmul.f32 %v2242, %v2128
      %v2256 = vmul.f32 %v2243, %v2131
      %v2257 = vmul.f32 %v2244, %v2136
      %v2258 = vadd.f32 %v2245, 0.0298
      %v2259 = vadd.f32 %v2246, 0.0298
      %v2260 = vadd.f32 %v2247, 0.0298
      %v2261 = vadd.f32 %v2248, 0.0298
      %v2262 = vadd.f32 %v2249, 0.0298
      %v2263 = vadd.f32 %v2250, 0.0298
      %v2264 = vadd.f32 %v2251, 0.0298
      %v2265 = vadd.f32 %v2252, 0.0298
      %v2266 = vadd.f32 %v2253, 0.0298
      %v2267 = vadd.f32 %v2254, 0.0298
      %v2268 = vadd.f32 %v2255, 0.0298
      %v2269 = vadd.f32 %v2256, 0.0298
      %v2270 = vadd.f32 %v2257, 0.0298
      %v2271 = vand.u32 2147483647, %v2088
      %v2272 = vand.u32 2147483647, %v2091
      %v2273 = vand.u32 2147483647, %v2096
      %v2274 = vand.u32 2147483647, %v2099
      %v2275 = vand.u32 2147483647, %v2104
      %v2276 = vand.u32 2147483647, %v2107
      %v2277 = vand.u32 2147483647, %v2112
      %v2278 = vand.u32 2147483647, %v2115
      %v2279 = vand.u32 2147483647, %v2120
      %v2280 = vand.u32 2147483647, %v2123
      %v2281 = vand.u32 2147483647, %v2128
      %v2282 = vand.u32 2147483647, %v2131
      %v2283 = vand.u32 2147483647, %v2136
      %v2284 = vmul.f32 %v2271, 0.0
      %v2285 = vmul.f32 %v2272, 0.0
      %v2286 = vmul.f32 %v2273, 0.0
      %v2287 = vmul.f32 %v2274, 0.0
      %v2288 = vmul.f32 %v2275, 0.0
      %v2289 = vmul.f32 %v2276, 0.0
      %v2290 = vmul.f32 %v2277, 0.0
      %v2291 = vmul.f32 %v2278, 0.0
      %v2292 = vmul.f32 %v2279, 0.0
      %v2293 = vmul.f32 %v2280, 0.0
      %v2294 = vmul.f32 %v2281, 0.0
      %v2295 = vmul.f32 %v2282, 0.0
      %v2296 = vmul.f32 %v2283, 0.0
      %v2297 = vadd.f32 %v2284, 3.0
      %v2298 = vadd.f32 %v2285, 3.0
      %v2299 = vadd.f32 %v2286, 3.0
      %v2300 = vadd.f32 %v2287, 3.0
      %v2301 = vadd.f32 %v2288, 3.0
      %v2302 = vadd.f32 %v2289, 3.0
      %v2303 = vadd.f32 %v2290, 3.0
      %v2304 = vadd.f32 %v2291, 3.0
      %v2305 = vadd.f32 %v2292, 3.0
      %v2306 = vadd.f32 %v2293, 3.0
      %v2307 = vadd.f32 %v2294, 3.0
      %v2308 = vadd.f32 %v2295, 3.0
      %v2309 = vadd.f32 %v2296, 3.0
      %v2310 = vmul.f32 %v2297, %v2271
      %v2311 = vmul.f32 %v2298, %v2272
      %v2312 = vmul.f32 %v2299, %v2273
      %v2313 = vmul.f32 %v2300, %v2274
      %v2314 = vmul.f32 %v2301, %v2275
      %v2315 = vmul.f32 %v2302, %v2276
      %v2316 = vmul.f32 %v2303, %v2277
      %v2317 = vmul.f32 %v2304, %v2278
      %v2318 = vmul.f32 %v2305, %v2279
      %v2319 = vmul.f32 %v2306, %v2280
      %v2320 = vmul.f32 %v2307, %v2281
      %v2321 = vmul.f32 %v2308, %v2282
      %v2322 = vmul.f32 %v2309, %v2283
      %v2323 = vadd.f32 %v2310, 0.0
      %v2324 = vadd.f32 %v2311, 0.0
      %v2325 = vadd.f32 %v2312, 0.0
      %v2326 = vadd.f32 %v2313, 0.0
      %v2327 = vadd.f32 %v2314, 0.0
      %v2328 = vadd.f32 %v2315, 0.0
      %v2329 = vadd.f32 %v2316, 0.0
      %v2330 = vadd.f32 %v2317, 0.0
      %v2331 = vadd.f32 %v2318, 0.0
      %v2332 = vadd.f32 %v2319, 0.0
      %v2333 = vadd.f32 %v2320, 0.0
      %v2334 = vadd.f32 %v2321, 0.0
      %v2335 = vadd.f32 %v2322, 0.0
      %v2336 = vmul.f32 %v2323, %v2271
      %v2337 = vmul.f32 %v2324, %v2272
      %v2338 = vmul.f32 %v2325, %v2273
      %v2339 = vmul.f32 %v2326, %v2274
      %v2340 = vmul.f32 %v2327, %v2275
      %v2341 = vmul.f32 %v2328, %v2276
      %v2342 = vmul.f32 %v2329, %v2277
      %v2343 = vmul.f32 %v2330, %v2278
      %v2344 = vmul.f32 %v2331, %v2279
      %v2345 = vmul.f32 %v2332, %v2280
      %v2346 = vmul.f32 %v2333, %v2281
      %v2347 = vmul.f32 %v2334, %v2282
      %v2348 = vmul.f32 %v2335, %v2283
      %v2349 = vadd.f32 %v2336, 2.3831
      %v2350 = vadd.f32 %v2337, 2.3831
      %v2351 = vadd.f32 %v2338, 2.3831
      %v2352 = vadd.f32 %v2339, 2.3831
      %v2353 = vadd.f32 %v2340, 2.3831
      %v2354 = vadd.f32 %v2341, 2.3831
      %v2355 = vadd.f32 %v2342, 2.3831
      %v2356 = vadd.f32 %v2343, 2.3831
      %v2357 = vadd.f32 %v2344, 2.3831
      %v2358 = vadd.f32 %v2345, 2.3831
      %v2359 = vadd.f32 %v2346, 2.3831
      %v2360 = vadd.f32 %v2347, 2.3831
      %v2361 = vadd.f32 %v2348, 2.3831
      %v2362 = vmul.f32 %v2349, %v2271
      %v2363 = vmul.f32 %v2350, %v2272
      %v2364 = vmul.f32 %v2351, %v2273
      %v2365 = vmul.f32 %v2352, %v2274
      %v2366 = vmul.f32 %v2353, %v2275
      %v2367 = vmul.f32 %v2354, %v2276
      %v2368 = vmul.f32 %v2355, %v2277
      %v2369 = vmul.f32 %v2356, %v2278
      %v2370 = vmul.f32 %v2357, %v2279
      %v2371 = vmul.f32 %v2358, %v2280
      %v2372 = vmul.f32 %v2359, %v2281
      %v2373 = vmul.f32 %v2360, %v2282
      %v2374 = vmul.f32 %v2361, %v2283
      %v2375 = vadd.f32 %v2362, 1.0
      %v2376 = vadd.f32 %v2363, 1.0
      %v2377 = vadd.f32 %v2364, 1.0
      %v2378 = vadd.f32 %v2365, 1.0
      %v2379 = vadd.f32 %v2366, 1.0
      %v2380 = vadd.f32 %v2367, 1.0
      %v2381 = vadd.f32 %v2368, 1.0
      %v2382 = vadd.f32 %v2369, 1.0
      %v2383 = vadd.f32 %v2370, 1.0
      %v2384 = vadd.f32 %v2371, 1.0
      %v2385 = vadd.f32 %v2372, 1.0
      %v2386 = vadd.f32 %v2373, 1.0
      %v2387 = vadd.f32 %v2374, 1.0
      %v2388 = vrcp.pop %v2375
      %v2389 = vrcp.pop %v2376
      %v2390 = vrcp.pop %v2377
      %v2391 = vrcp.pop %v2378
      %v2392 = vrcp.pop %v2379
      %v2393 = vrcp.pop %v2380
      %v2394 = vrcp.pop %v2381
      %v2395 = vrcp.pop %v2382
      %v2396 = vrcp.pop %v2383
      %v2397 = vrcp.pop %v2384
      %v2398 = vrcp.pop %v2385
      %v2399 = vrcp.pop %v2386
      %v2400 = vrcp.pop %v2387
      %v2401 = vmul.f32 %v2258, %v2388
      %v2402 = vmul.f32 %v2259, %v2389
      %v2403 = vmul.f32 %v2260, %v2390
      %v2404 = vmul.f32 %v2261, %v2391
      %v2405 = vmul.f32 %v2262, %v2392
      %v2406 = vmul.f32 %v2263, %v2393
      %v2407 = vmul.f32 %v2264, %v2394
      %v2408 = vmul.f32 %v2265, %v2395
      %v2409 = vmul.f32 %v2266, %v2396
      %v2410 = vmul.f32 %v2267, %v2397
      %v2411 = vmul.f32 %v2268, %v2398
      %v2412 = vmul.f32 %v2269, %v2399
      %v2413 = vmul.f32 %v2270, %v2400
      %v2414 = vld [vmem:[%s16] sm:$0xff]
      %v2415 = vld [vmem:[%s16 + $0x8] sm:$0xff]
      %v2416 = vld [vmem:[%s16 + $0x10] sm:$0xff]
      %v2417 = vld [vmem:[%s16 + $0x18] sm:$0xff]
      %v2418 = vld [vmem:[%s16 + $0x20] sm:$0xff]
      %v2419 = vld [vmem:[%s16 + $0x28] sm:$0xff]
      %v2420 = vld [vmem:[%s16 + $0x30] sm:$0xff]
      %v2421 = vld [vmem:[%s16 + $0x38] sm:$0xff]
      %v2422 = vld [vmem:[%s16 + $0x40] sm:$0xff]
      %v2423 = vld [vmem:[%s16 + $0x48] sm:$0xff]
      %v2424 = vld [vmem:[%s16 + $0x50] sm:$0xff]
      %v2425 = vld [vmem:[%s16 + $0x58] sm:$0xff]
      %v2426 = vld [vmem:[%s16 + $0x60] sm:$0xf]
      %2428 = vset.pattern.permute.xlu0 0
      %2429 = vperm.xlu0 %2428, %v2414
      %v2430 = vpop.permute.xlu0 %2429
      %2433 = vset.pattern.permute.xlu0 0
      %2434 = vperm.xlu0 %2433, %v2415
      %v2435 = vpop.permute.xlu0 %2434
      %2438 = vset.pattern.permute.xlu0 0
      %2439 = vperm.xlu0 %2438, %v2416
      %v2440 = vpop.permute.xlu0 %2439
      %2443 = vset.pattern.permute.xlu0 0
      %2444 = vperm.xlu0 %2443, %v2417
      %v2445 = vpop.permute.xlu0 %2444
      %2448 = vset.pattern.permute.xlu0 0
      %2449 = vperm.xlu0 %2448, %v2418
      %v2450 = vpop.permute.xlu0 %2449
      %2453 = vset.pattern.permute.xlu0 0
      %2454 = vperm.xlu0 %2453, %v2419
      %v2455 = vpop.permute.xlu0 %2454
      %2458 = vset.pattern.permute.xlu0 0
      %2459 = vperm.xlu0 %2458, %v2420
      %v2460 = vpop.permute.xlu0 %2459
      %2463 = vset.pattern.permute.xlu0 0
      %2464 = vperm.xlu0 %2463, %v2421
      %v2465 = vpop.permute.xlu0 %2464
      %2468 = vset.pattern.permute.xlu0 0
      %2469 = vperm.xlu0 %2468, %v2422
      %v2470 = vpop.permute.xlu0 %2469
      %2473 = vset.pattern.permute.xlu0 0
      %2474 = vperm.xlu0 %2473, %v2423
      %v2475 = vpop.permute.xlu0 %2474
      %2478 = vset.pattern.permute.xlu0 0
      %2479 = vperm.xlu0 %2478, %v2424
      %v2480 = vpop.permute.xlu0 %2479
      %2483 = vset.pattern.permute.xlu0 0
      %2484 = vperm.xlu0 %2483, %v2425
      %v2485 = vpop.permute.xlu0 %2484
      %2488 = vset.pattern.permute.xlu0 0
      %2489 = vperm.xlu0 %2488, %v2426
      %v2490 = vpop.permute.xlu0 %2489
      %v2492 = vmul.f32 %v2401, %v2430
      %v2493 = vmul.f32 %v2402, %v2435
      %v2494 = vmul.f32 %v2403, %v2440
      %v2495 = vmul.f32 %v2404, %v2445
      %v2496 = vmul.f32 %v2405, %v2450
      %v2497 = vmul.f32 %v2406, %v2455
      %v2498 = vmul.f32 %v2407, %v2460
      %v2499 = vmul.f32 %v2408, %v2465
      %v2500 = vmul.f32 %v2409, %v2470
      %v2501 = vmul.f32 %v2410, %v2475
      %v2502 = vmul.f32 %v2411, %v2480
      %v2503 = vmul.f32 %v2412, %v2485
      %v2504 = vmul.f32 %v2413, %v2490
      %2505 = vst.msk [vmem:[#allocation3 + $0xb] sm:$0xff] %vm577, %v2492
      %2506 = vst.msk [vmem:[#allocation3 + $0x13] sm:$0xff] %vm577, %v2493
      %2507 = vst.msk [vmem:[#allocation3 + $0x1b] sm:$0xff] %vm577, %v2494
      %2508 = vst.msk [vmem:[#allocation3 + $0x23] sm:$0xff] %vm577, %v2495
      %2509 = vst.msk [vmem:[#allocation3 + $0x2b] sm:$0xff] %vm577, %v2496
      %2510 = vst.msk [vmem:[#allocation3 + $0x33] sm:$0xff] %vm577, %v2497
      %2511 = vst.msk [vmem:[#allocation3 + $0x3b] sm:$0xff] %vm577, %v2498
      %2512 = vst.msk [vmem:[#allocation3 + $0x43] sm:$0xff] %vm577, %v2499
      %2513 = vst.msk [vmem:[#allocation3 + $0x4b] sm:$0xff] %vm577, %v2500
      %2514 = vst.msk [vmem:[#allocation3 + $0x53] sm:$0xff] %vm577, %v2501
      %2515 = vst.msk [vmem:[#allocation3 + $0x5b] sm:$0xff] %vm577, %v2502
      %2516 = vst.msk [vmem:[#allocation3 + $0x63] sm:$0xff] %vm577, %v2503
      %2517 = vst.msk [vmem:[#allocation3 + $0x6b] sm:$0xf] %vm1179, %v2504
      %v2518 = vld [vmem:[#allocation3] sm:$0x1]
      %vm2519 = vcmask 253952
      %2520 = vst.msk [vmem:[#allocation10] sm:$0x1] %vm2519, %v2518
      %v2521 = vld [vmem:[#allocation3 + $0x2] sm:$0x1]
      %2522 = vst.msk [vmem:[#allocation10 + $0x1] sm:$0x1] %vm2519, %v2521
      %v2523 = vld [vmem:[#allocation3 + $0x4] sm:$0x1]
      %2524 = vst.msk [vmem:[#allocation10 + $0x2] sm:$0x1] %vm2519, %v2523
      %v2525 = vld [vmem:[#allocation3 + $0x6] sm:$0x1]
      %2526 = vst.msk [vmem:[#allocation10 + $0x3] sm:$0x1] %vm2519, %v2525
      %v2527 = vld [vmem:[#allocation3 + $0x1] sm:$0x1]
      %2529 = vrot.lane.b32.xlu0 %v2527, 32
      %v2530 = vpop.permute.xlu0 %2529
      %vm2532 = vcmask 516352
      %2533 = vst.msk [vmem:[#allocation10] sm:$0x1] %vm2532, %v2530
      %v2534 = vld [vmem:[#allocation3 + $0x3] sm:$0x1]
      %2536 = vrot.lane.b32.xlu0 %v2534, 32
      %v2537 = vpop.permute.xlu0 %2536
      %2539 = vst.msk [vmem:[#allocation10 + $0x1] sm:$0x1] %vm2532, %v2537
      %v2540 = vld [vmem:[#allocation3 + $0x5] sm:$0x1]
      %2542 = vrot.lane.b32.xlu0 %v2540, 32
      %v2543 = vpop.permute.xlu0 %2542
      %2545 = vst.msk [vmem:[#allocation10 + $0x2] sm:$0x1] %vm2532, %v2543
      %v2546 = vld [vmem:[#allocation3 + $0x7] sm:$0x1]
      %2548 = vrot.lane.b32.xlu0 %v2546, 32
      %v2549 = vpop.permute.xlu0 %2548
      %2551 = vst.msk [vmem:[#allocation10 + $0x3] sm:$0x1] %vm2532, %v2549
      %v2552 = vld [vmem:[#allocation3 + $0x2] sm:$0x1]
      %2554 = vrot.lane.b32.xlu0 %v2552, 64
      %v2555 = vpop.permute.xlu0 %2554
      %vm2557 = vcmask 778752
      %2558 = vst.msk [vmem:[#allocation10] sm:$0x1] %vm2557, %v2555
      %v2559 = vld [vmem:[#allocation3 + $0x4] sm:$0x1]
      %2561 = vrot.lane.b32.xlu0 %v2559, 64
      %v2562 = vpop.permute.xlu0 %2561
      %2564 = vst.msk [vmem:[#allocation10 + $0x1] sm:$0x1] %vm2557, %v2562
      %v2565 = vld [vmem:[#allocation3 + $0x6] sm:$0x1]
      %2567 = vrot.lane.b32.xlu0 %v2565, 64
      %v2568 = vpop.permute.xlu0 %2567
      %2570 = vst.msk [vmem:[#allocation10 + $0x2] sm:$0x1] %vm2557, %v2568
      %v2571 = vld [vmem:[#allocation3 + $0x8] sm:$0x1]
      %2573 = vrot.lane.b32.xlu0 %v2571, 64
      %v2574 = vpop.permute.xlu0 %2573
      %2576 = vst.msk [vmem:[#allocation10 + $0x3] sm:$0x1] %vm2557, %v2574
      %v2577 = vld [vmem:[#allocation3 + $0xa] sm:$0x1]
      %2579 = vrot.lane.b32.xlu0 %v2577, 96
      %v2580 = vpop.permute.xlu0 %2579
      %vm2582 = vcmask 1041152
      %2583 = vst.msk [vmem:[#allocation10] sm:$0x1] %vm2582, %v2580
      %v2584 = vld [vmem:[#allocation3 + $0xc] sm:$0x1]
      %2586 = vrot.lane.b32.xlu0 %v2584, 96
      %v2587 = vpop.permute.xlu0 %2586
      %2589 = vst.msk [vmem:[#allocation10 + $0x1] sm:$0x1] %vm2582, %v2587
      %v2590 = vld [vmem:[#allocation3 + $0xe] sm:$0x1]
      %2592 = vrot.lane.b32.xlu0 %v2590, 96
      %v2593 = vpop.permute.xlu0 %2592
      %2595 = vst.msk [vmem:[#allocation10 + $0x2] sm:$0x1] %vm2582, %v2593
      %v2596 = vld [vmem:[#allocation3 + $0x10] sm:$0x1]
      %2598 = vrot.lane.b32.xlu0 %v2596, 96
      %v2599 = vpop.permute.xlu0 %2598
      %2601 = vst.msk [vmem:[#allocation10 + $0x3] sm:$0x1] %vm2582, %v2599
      %v2602 = vld [vmem:[#allocation3 + $0xb] sm:$0x1]
      %2603 = vst.msk [vmem:[#allocation10 + $0x4] sm:$0x1] %vm2519, %v2602
      %v2604 = vld [vmem:[#allocation3 + $0xd] sm:$0x1]
      %2605 = vst.msk [vmem:[#allocation10 + $0x5] sm:$0x1] %vm2519, %v2604
      %v2606 = vld [vmem:[#allocation3 + $0xf] sm:$0x1]
      %2607 = vst.msk [vmem:[#allocation10 + $0x6] sm:$0x1] %vm2519, %v2606
      %v2608 = vld [vmem:[#allocation3 + $0x11] sm:$0x1]
      %2609 = vst.msk [vmem:[#allocation10 + $0x7] sm:$0x1] %vm2519, %v2608
      %v2610 = vld [vmem:[#allocation3 + $0xc] sm:$0x1]
      %2612 = vrot.lane.b32.xlu0 %v2610, 32
      %v2613 = vpop.permute.xlu0 %2612
      %2615 = vst.msk [vmem:[#allocation10 + $0x4] sm:$0x1] %vm2532, %v2613
      %v2616 = vld [vmem:[#allocation3 + $0xe] sm:$0x1]
      %2618 = vrot.lane.b32.xlu0 %v2616, 32
      %v2619 = vpop.permute.xlu0 %2618
      %2621 = vst.msk [vmem:[#allocation10 + $0x5] sm:$0x1] %vm2532, %v2619
      %v2622 = vld [vmem:[#allocation3 + $0x10] sm:$0x1]
      %2624 = vrot.lane.b32.xlu0 %v2622, 32
      %v2625 = vpop.permute.xlu0 %2624
      %2627 = vst.msk [vmem:[#allocation10 + $0x6] sm:$0x1] %vm2532, %v2625
      %v2628 = vld [vmem:[#allocation3 + $0x12] sm:$0x1]
      %2630 = vrot.lane.b32.xlu0 %v2628, 32
      %v2631 = vpop.permute.xlu0 %2630
      %2633 = vst.msk [vmem:[#allocation10 + $0x7] sm:$0x1] %vm2532, %v2631
      %v2634 = vld [vmem:[#allocation3 + $0x14] sm:$0x1]
      %2636 = vrot.lane.b32.xlu0 %v2634, 64
      %v2637 = vpop.permute.xlu0 %2636
      %2639 = vst.msk [vmem:[#allocation10 + $0x4] sm:$0x1] %vm2557, %v2637
      %v2640 = vld [vmem:[#allocation3 + $0x16] sm:$0x1]
      %2642 = vrot.lane.b32.xlu0 %v2640, 64
      %v2643 = vpop.permute.xlu0 %2642
      %2645 = vst.msk [vmem:[#allocation10 + $0x5] sm:$0x1] %vm2557, %v2643
      %v2646 = vld [vmem:[#allocation3 + $0x18] sm:$0x1]
      %2648 = vrot.lane.b32.xlu0 %v2646, 64
      %v2649 = vpop.permute.xlu0 %2648
      %2651 = vst.msk [vmem:[#allocation10 + $0x6] sm:$0x1] %vm2557, %v2649
      %v2652 = vld [vmem:[#allocation3 + $0x1a] sm:$0x1]
      %2654 = vrot.lane.b32.xlu0 %v2652, 64
      %v2655 = vpop.permute.xlu0 %2654
      %2657 = vst.msk [vmem:[#allocation10 + $0x7] sm:$0x1] %vm2557, %v2655
      %v2658 = vld [vmem:[#allocation3 + $0x15] sm:$0x1]
      %2660 = vrot.lane.b32.xlu0 %v2658, 96
      %v2661 = vpop.permute.xlu0 %2660
      %2663 = vst.msk [vmem:[#allocation10 + $0x4] sm:$0x1] %vm2582, %v2661
      %v2664 = vld [vmem:[#allocation3 + $0x17] sm:$0x1]
      %2666 = vrot.lane.b32.xlu0 %v2664, 96
      %v2667 = vpop.permute.xlu0 %2666
      %2669 = vst.msk [vmem:[#allocation10 + $0x5] sm:$0x1] %vm2582, %v2667
      %v2670 = vld [vmem:[#allocation3 + $0x19] sm:$0x1]
      %2672 = vrot.lane.b32.xlu0 %v2670, 96
      %v2673 = vpop.permute.xlu0 %2672
      %2675 = vst.msk [vmem:[#allocation10 + $0x6] sm:$0x1] %vm2582, %v2673
      %v2676 = vld [vmem:[#allocation3 + $0x1b] sm:$0x1]
      %2678 = vrot.lane.b32.xlu0 %v2676, 96
      %v2679 = vpop.permute.xlu0 %2678
      %2681 = vst.msk [vmem:[#allocation10 + $0x7] sm:$0x1] %vm2582, %v2679
      %v2682 = vld [vmem:[#allocation3 + $0x16] sm:$0x1]
      %2683 = vst.msk [vmem:[#allocation10 + $0x8] sm:$0x1] %vm2519, %v2682
      %v2684 = vld [vmem:[#allocation3 + $0x18] sm:$0x1]
      %2685 = vst.msk [vmem:[#allocation10 + $0x9] sm:$0x1] %vm2519, %v2684
      %v2686 = vld [vmem:[#allocation3 + $0x1a] sm:$0x1]
      %2687 = vst.msk [vmem:[#allocation10 + $0xa] sm:$0x1] %vm2519, %v2686
      %v2688 = vld [vmem:[#allocation3 + $0x1c] sm:$0x1]
      %2689 = vst.msk [vmem:[#allocation10 + $0xb] sm:$0x1] %vm2519, %v2688
      %v2690 = vld [vmem:[#allocation10] sm:$0xff]
      %v2691 = vld [vmem:[#allocation10 + $0x8] sm:$0xf]
      %v2693 = vcombine.high %v2690, %v2690
      %v2695 = vpack.c.bf16 %v2690, %v2690
      %v2696 = vpack.c.bf16 %v2693, %v2693
      %v2697 = vpack.c.bf16 %v2691, %v2691
      %v2698 = vld [vmem:[%s3] sm:$0xf]
      %v2699 = vld [vmem:[%s3 + $0x4] sm:$0xf]
      %v2700 = vld [vmem:[%s3 + $0x8] sm:$0xf]
      %v2701 = vld [vmem:[%s3 + $0xc] sm:$0xf]
      %v2702 = vld [vmem:[%s3 + $0x10] sm:$0xf]
      %v2703 = vld [vmem:[%s3 + $0x14] sm:$0xf]
      %v2704 = vld [vmem:[%s3 + $0x18] sm:$0xf]
      %v2705 = vld [vmem:[%s3 + $0x1c] sm:$0xf]
      %v2706 = vld [vmem:[%s3 + $0x20] sm:$0xf]
      %v2707 = vld [vmem:[%s3 + $0x24] sm:$0xf]
      %v2708 = vld [vmem:[%s3 + $0x28] sm:$0xf]
      %v2709 = vld [vmem:[%s3 + $0x2c] sm:$0xf]
      %v2710 = vld [vmem:[%s3 + $0x30] sm:$0xf]
      %v2711 = vld [vmem:[%s3 + $0x34] sm:$0xf]
      %v2712 = vld [vmem:[%s3 + $0x38] sm:$0xf]
      %v2713 = vld [vmem:[%s3 + $0x3c] sm:$0xf]
      %v2714 = vld [vmem:[%s3 + $0x40] sm:$0xf]
      %v2715 = vld [vmem:[%s3 + $0x44] sm:$0xf]
      %v2716 = vld [vmem:[%s3 + $0x48] sm:$0xf]
      %v2717 = vld [vmem:[%s3 + $0x4c] sm:$0xf]
      %v2718 = vld [vmem:[%s3 + $0x50] sm:$0xf]
      %v2719 = vld [vmem:[%s3 + $0x54] sm:$0xf]
      %v2720 = vld [vmem:[%s3 + $0x58] sm:$0xf]
      %v2721 = vld [vmem:[%s3 + $0x5c] sm:$0xf]
      %v2722 = vld [vmem:[%s3 + $0x60] sm:$0xf]
      %v2723 = vld [vmem:[%s3 + $0x64] sm:$0xf]
      %v2724 = vld [vmem:[%s3 + $0x68] sm:$0xf]
      %v2725 = vld [vmem:[%s3 + $0x6c] sm:$0xf]
      %v2726 = vld [vmem:[%s3 + $0x70] sm:$0xf]
      %v2727 = vld [vmem:[%s3 + $0x74] sm:$0xf]
      %v2728 = vld [vmem:[%s3 + $0x78] sm:$0xf]
      %v2729 = vld [vmem:[%s3 + $0x7c] sm:$0xf]
      %v2730 = vld [vmem:[%s3 + $0x80] sm:$0xf]
      %v2731 = vld [vmem:[%s3 + $0x84] sm:$0xf]
      %v2732 = vld [vmem:[%s3 + $0x88] sm:$0xf]
      %v2733 = vld [vmem:[%s3 + $0x8c] sm:$0xf]
      %v2734 = vld [vmem:[%s10] sm:$0x1]
      %v2736 = vlaneseq
      %v2737 = vshrl.u32 %v2736, 7
      %v2738 = vsub.s32 0, %v2737
      %v2739 = vrot.slane %v2734, %v2738
      %v2777 = vunpack.c.l.b16 %v2698
      %v2778 = vunpack.c.l.b16 %v2699
      %v2779 = vunpack.c.l.b16 %v2700
      %v2780 = vunpack.c.l.b16 %v2701
      %v2781 = vunpack.c.l.b16 %v2702
      %v2782 = vunpack.c.l.b16 %v2703
      %v2783 = vunpack.c.l.b16 %v2704
      %v2784 = vunpack.c.l.b16 %v2705
      %v2785 = vunpack.c.l.b16 %v2706
      %v2786 = vunpack.c.l.b16 %v2707
      %v2787 = vunpack.c.l.b16 %v2708
      %v2788 = vunpack.c.l.b16 %v2709
      %v2789 = vunpack.c.l.b16 %v2710
      %v2790 = vunpack.c.l.b16 %v2711
      %v2791 = vunpack.c.l.b16 %v2712
      %v2792 = vunpack.c.l.b16 %v2713
      %v2793 = vunpack.c.l.b16 %v2714
      %v2794 = vunpack.c.l.b16 %v2715
      %v2795 = vunpack.c.l.b16 %v2716
      %v2796 = vunpack.c.l.b16 %v2717
      %v2797 = vunpack.c.l.b16 %v2718
      %v2798 = vunpack.c.l.b16 %v2719
      %v2799 = vunpack.c.l.b16 %v2720
      %v2800 = vunpack.c.l.b16 %v2721
      %v2801 = vunpack.c.l.b16 %v2722
      %v2802 = vunpack.c.l.b16 %v2723
      %v2803 = vunpack.c.l.b16 %v2724
      %v2804 = vunpack.c.l.b16 %v2725
      %v2805 = vunpack.c.l.b16 %v2726
      %v2806 = vunpack.c.l.b16 %v2727
      %v2807 = vunpack.c.l.b16 %v2728
      %v2808 = vunpack.c.l.b16 %v2729
      %v2809 = vunpack.c.l.b16 %v2730
      %v2810 = vunpack.c.l.b16 %v2731
      %v2811 = vunpack.c.l.b16 %v2732
      %v2812 = vunpack.c.l.b16 %v2733
      %v2813 = vpack.c.b16 %v2778, %v2777
      %v2814 = vpack.c.b16 %v2780, %v2779
      %v2815 = vpack.c.b16 %v2782, %v2781
      %v2816 = vpack.c.b16 %v2784, %v2783
      %v2817 = vpack.c.b16 %v2786, %v2785
      %v2818 = vpack.c.b16 %v2788, %v2787
      %v2819 = vpack.c.b16 %v2790, %v2789
      %v2820 = vpack.c.b16 %v2792, %v2791
      %v2821 = vpack.c.b16 %v2794, %v2793
      %v2822 = vpack.c.b16 %v2796, %v2795
      %v2823 = vpack.c.b16 %v2798, %v2797
      %v2824 = vpack.c.b16 %v2800, %v2799
      %v2825 = vpack.c.b16 %v2802, %v2801
      %v2826 = vpack.c.b16 %v2804, %v2803
      %v2827 = vpack.c.b16 %v2806, %v2805
      %v2828 = vpack.c.b16 %v2808, %v2807
      %v2829 = vpack.c.b16 %v2810, %v2809
      %v2830 = vpack.c.b16 %v2812, %v2811
      %v2850 = vsel %vm577, %v2697, 0
      %2852 = vmatprep.subr.bf16.mxu0 0
      %2853 = vmatpush1.bf16.msra.mxu0 %v2813
      %2854 = vmatprep.subr.bf16.mxu0 0
      %2855 = vmatpush1.bf16.msra.mxu0 %v2814
      %2856 = vmatprep.subr.bf16.mxu0 0
      %2857 = vmatpush1.bf16.msra.mxu0 %v2815
      %2858 = vmatprep.subr.bf16.mxu0 0
      %2859 = vmatpush1.bf16.msra.mxu0 %v2816
      %2860 = vmatprep.subr.bf16.mxu0 0
      %2861 = vmatpush1.bf16.msra.mxu0 %v2817
      %2862 = vmatprep.subr.bf16.mxu0 0
      %2863 = vmatpush1.bf16.msra.mxu0 %v2818
      %2864 = vmatprep.subr.bf16.mxu0 0
      %2865 = vmatpush1.bf16.msra.mxu0 %v2819
      %2866 = vmatprep.subr.bf16.mxu0 0
      %2867 = vmatpush1.bf16.msra.mxu0 %v2820
      %2868 = vmatprep.subr.bf16.mxu0 0
      %2869 = vmatpush1.bf16.msra.mxu0 %v2821
      %2870 = vmatprep.subr.bf16.mxu0 0
      %2871 = vmatpush1.bf16.msra.mxu0 %v2822
      %2872 = vmatprep.subr.bf16.mxu0 0
      %2873 = vmatpush1.bf16.msra.mxu0 %v2823
      %2874 = vmatprep.subr.bf16.mxu0 0
      %2875 = vmatpush1.bf16.msra.mxu0 %v2824
      %2876 = vmatprep.subr.bf16.mxu0 0
      %2877 = vmatpush1.bf16.msra.mxu0 %v2825
      %2878 = vmatprep.subr.bf16.mxu0 0
      %2879 = vmatpush1.bf16.msra.mxu0 %v2826
      %2880 = vmatprep.subr.bf16.mxu0 0
      %2881 = vmatpush1.bf16.msra.mxu0 %v2827
      %2882 = vmatprep.subr.bf16.mxu0 0
      %2883 = vmatpush1.bf16.msra.mxu0 %v2828
      %2884 = vmatprep.mubr.bf16.mxu0 %v2696
      %2885 = vmatmul.mubr.bf16.gmra.mrb[0].mxu0 %v2695
      %v2886 = vpop.f32.mrb[0].mxu0
      %v2887 = vadd.f32 %v2739, %v2886
      %v2888 = vpop.f32.mrb[0].mxu0
      %v2889 = vpop.f32.mrb[0].mxu0
      %v2890 = vpop.f32.mrb[0].mxu0
      %2891 = vdwg.mxu0
      %2892 = vmatprep.subr.bf16.mxu0 0
      %2893 = vmatpush1.bf16.msra.mxu0 %v2829
      %2894 = vmatprep.subr.bf16.mxu0 0
      %2895 = vmatpush1.bf16.msra.mxu0 %v2830
      %2896 = vmatprep.subr.bf16.mxu0 0
      %2897 = vmatpush1.bf16.msra.mxu0 0
      %2898 = vmatprep.subr.bf16.mxu0 0
      %2899 = vmatpush1.bf16.msra.mxu0 0
      %2900 = vmatprep.subr.bf16.mxu0 0
      %2901 = vmatpush1.bf16.msra.mxu0 0
      %2902 = vmatprep.subr.bf16.mxu0 0
      %2903 = vmatpush1.bf16.msra.mxu0 0
      %2904 = vmatprep.subr.bf16.mxu0 0
      %2905 = vmatpush1.bf16.msra.mxu0 0
      %2906 = vmatprep.subr.bf16.mxu0 0
      %2907 = vmatpush1.bf16.msra.mxu0 0
      %2908 = vmatprep.subr.bf16.mxu0 0
      %2909 = vmatpush1.bf16.msra.mxu0 0
      %2910 = vmatprep.subr.bf16.mxu0 0
      %2911 = vmatpush1.bf16.msra.mxu0 0
      %2912 = vmatprep.subr.bf16.mxu0 0
      %2913 = vmatpush1.bf16.msra.mxu0 0
      %2914 = vmatprep.subr.bf16.mxu0 0
      %2915 = vmatpush1.bf16.msra.mxu0 0
      %2916 = vmatprep.subr.bf16.mxu0 0
      %2917 = vmatpush1.bf16.msra.mxu0 0
      %2918 = vmatprep.subr.bf16.mxu0 0
      %2919 = vmatpush1.bf16.msra.mxu0 0
      %2920 = vmatprep.subr.bf16.mxu0 0
      %2921 = vmatpush1.bf16.msra.mxu0 0
      %2922 = vmatprep.subr.bf16.mxu0 0
      %2923 = vmatpush1.bf16.msra.mxu0 0
      %2924 = vmatprep.mubr.bf16.mxu0 0
      %2925 = vmatmul.mubr.bf16.gmra.mrb[0].mxu0 %v2850
      %v2926 = vpop.f32.mrb[0].mxu0
      %v2927 = vadd.f32 %v2887, %v2926
      %v2928 = vpop.f32.mrb[0].mxu0
      %v2929 = vpop.f32.mrb[0].mxu0
      %v2930 = vpop.f32.mrb[0].mxu0
      %2931 = vdwg.mxu0
      %v2932 = vmul.f32 %v2927, 0.251
      %v2933 = vadd.f32 %v2932, 1.4855
      %v2934 = vmul.f32 %v2933, %v2927
      %v2935 = vadd.f32 %v2934, 3.052
      %v2936 = vmul.f32 %v2935, %v2927
      %v2937 = vadd.f32 %v2936, 2.3235
      %v2938 = vmul.f32 %v2937, %v2927
      %v2939 = vadd.f32 %v2938, 0.6184
      %v2940 = vmul.f32 %v2939, %v2927
      %v2941 = vadd.f32 %v2940, 0.0298
      %v2942 = vand.u32 2147483647, %v2927
      %v2943 = vmul.f32 %v2942, 0.0
      %v2944 = vadd.f32 %v2943, 3.0
      %v2945 = vmul.f32 %v2944, %v2942
      %v2946 = vadd.f32 %v2945, 0.0
      %v2947 = vmul.f32 %v2946, %v2942
      %v2948 = vadd.f32 %v2947, 2.3831
      %v2949 = vmul.f32 %v2948, %v2942
      %v2950 = vadd.f32 %v2949, 1.0
      %v2951 = vrcp.pop %v2950
      %v2952 = vmul.f32 %v2941, %v2951
      %vm2953 = vcmask 519168
      %2954 = vst.msk [vmem:[#allocation4 + $0x7] sm:$0xf] %vm2953, %v2952
      %v2955 = vld [vmem:[#allocation3 + $0x14] sm:$0x1]
      %2956 = vst.msk [vmem:[#allocation10] sm:$0x1] %vm2519, %v2955
      %v2957 = vld [vmem:[#allocation3 + $0x16] sm:$0x1]
      %2958 = vst.msk [vmem:[#allocation10 + $0x1] sm:$0x1] %vm2519, %v2957
      %v2959 = vld [vmem:[#allocation3 + $0x18] sm:$0x1]
      %2960 = vst.msk [vmem:[#allocation10 + $0x2] sm:$0x1] %vm2519, %v2959
      %v2961 = vld [vmem:[#allocation3 + $0x1a] sm:$0x1]
      %2962 = vst.msk [vmem:[#allocation10 + $0x3] sm:$0x1] %vm2519, %v2961
      %v2963 = vld [vmem:[#allocation3 + $0x15] sm:$0x1]
      %2965 = vrot.lane.b32.xlu0 %v2963, 32
      %v2966 = vpop.permute.xlu0 %2965
      %2968 = vst.msk [vmem:[#allocation10] sm:$0x1] %vm2532, %v2966
      %v2969 = vld [vmem:[#allocation3 + $0x17] sm:$0x1]
      %2971 = vrot.lane.b32.xlu0 %v2969, 32
      %v2972 = vpop.permute.xlu0 %2971
      %2974 = vst.msk [vmem:[#allocation10 + $0x1] sm:$0x1] %vm2532, %v2972
      %v2975 = vld [vmem:[#allocation3 + $0x19] sm:$0x1]
      %2977 = vrot.lane.b32.xlu0 %v2975, 32
      %v2978 = vpop.permute.xlu0 %2977
      %2980 = vst.msk [vmem:[#allocation10 + $0x2] sm:$0x1] %vm2532, %v2978
      %v2981 = vld [vmem:[#allocation3 + $0x1b] sm:$0x1]
      %2983 = vrot.lane.b32.xlu0 %v2981, 32
      %v2984 = vpop.permute.xlu0 %2983
      %2986 = vst.msk [vmem:[#allocation10 + $0x3] sm:$0x1] %vm2532, %v2984
      %v2987 = vld [vmem:[#allocation3 + $0x16] sm:$0x1]
      %2989 = vrot.lane.b32.xlu0 %v2987, 64
      %v2990 = vpop.permute.xlu0 %2989
      %2992 = vst.msk [vmem:[#allocation10] sm:$0x1] %vm2557, %v2990
      %v2993 = vld [vmem:[#allocation3 + $0x18] sm:$0x1]
      %2995 = vrot.lane.b32.xlu0 %v2993, 64
      %v2996 = vpop.permute.xlu0 %2995
      %2998 = vst.msk [vmem:[#allocation10 + $0x1] sm:$0x1] %vm2557, %v2996
      %v2999 = vld [vmem:[#allocation3 + $0x1a] sm:$0x1]
      %3001 = vrot.lane.b32.xlu0 %v2999, 64
      %v3002 = vpop.permute.xlu0 %3001
      %3004 = vst.msk [vmem:[#allocation10 + $0x2] sm:$0x1] %vm2557, %v3002
      %v3005 = vld [vmem:[#allocation3 + $0x1c] sm:$0x1]
      %3007 = vrot.lane.b32.xlu0 %v3005, 64
      %v3008 = vpop.permute.xlu0 %3007
      %3010 = vst.msk [vmem:[#allocation10 + $0x3] sm:$0x1] %vm2557, %v3008
      %v3011 = vld [vmem:[#allocation3 + $0x1e] sm:$0x1]
      %3013 = vrot.lane.b32.xlu0 %v3011, 96
      %v3014 = vpop.permute.xlu0 %3013
      %3016 = vst.msk [vmem:[#allocation10] sm:$0x1] %vm2582, %v3014
      %v3017 = vld [vmem:[#allocation3 + $0x20] sm:$0x1]
      %3019 = vrot.lane.b32.xlu0 %v3017, 96
      %v3020 = vpop.permute.xlu0 %3019
      %3022 = vst.msk [vmem:[#allocation10 + $0x1] sm:$0x1] %vm2582, %v3020
      %v3023 = vld [vmem:[#allocation3 + $0x22] sm:$0x1]
      %3025 = vrot.lane.b32.xlu0 %v3023, 96
      %v3026 = vpop.permute.xlu0 %3025
      %3028 = vst.msk [vmem:[#allocation10 + $0x2] sm:$0x1] %vm2582, %v3026
      %v3029 = vld [vmem:[#allocation3 + $0x24] sm:$0x1]
      %3031 = vrot.lane.b32.xlu0 %v3029, 96
      %v3032 = vpop.permute.xlu0 %3031
      %3034 = vst.msk [vmem:[#allocation10 + $0x3] sm:$0x1] %vm2582, %v3032
      %v3035 = vld [vmem:[#allocation3 + $0x1f] sm:$0x1]
      %3036 = vst.msk [vmem:[#allocation10 + $0x4] sm:$0x1] %vm2519, %v3035
      %v3037 = vld [vmem:[#allocation3 + $0x21] sm:$0x1]
      %3038 = vst.msk [vmem:[#allocation10 + $0x5] sm:$0x1] %vm2519, %v3037
      %v3039 = vld [vmem:[#allocation3 + $0x23] sm:$0x1]
      %3040 = vst.msk [vmem:[#allocation10 + $0x6] sm:$0x1] %vm2519, %v3039
      %v3041 = vld [vmem:[#allocation3 + $0x25] sm:$0x1]
      %3042 = vst.msk [vmem:[#allocation10 + $0x7] sm:$0x1] %vm2519, %v3041
      %v3043 = vld [vmem:[#allocation3 + $0x20] sm:$0x1]
      %3045 = vrot.lane.b32.xlu0 %v3043, 32
      %v3046 = vpop.permute.xlu0 %3045
      %3048 = vst.msk [vmem:[#allocation10 + $0x4] sm:$0x1] %vm2532, %v3046
      %v3049 = vld [vmem:[#allocation3 + $0x22] sm:$0x1]
      %3051 = vrot.lane.b32.xlu0 %v3049, 32
      %v3052 = vpop.permute.xlu0 %3051
      %3054 = vst.msk [vmem:[#allocation10 + $0x5] sm:$0x1] %vm2532, %v3052
      %v3055 = vld [vmem:[#allocation3 + $0x24] sm:$0x1]
      %3057 = vrot.lane.b32.xlu0 %v3055, 32
      %v3058 = vpop.permute.xlu0 %3057
      %3060 = vst.msk [vmem:[#allocation10 + $0x6] sm:$0x1] %vm2532, %v3058
      %v3061 = vld [vmem:[#allocation3 + $0x26] sm:$0x1]
      %3063 = vrot.lane.b32.xlu0 %v3061, 32
      %v3064 = vpop.permute.xlu0 %3063
      %3066 = vst.msk [vmem:[#allocation10 + $0x7] sm:$0x1] %vm2532, %v3064
      %v3067 = vld [vmem:[#allocation3 + $0x28] sm:$0x1]
      %3069 = vrot.lane.b32.xlu0 %v3067, 64
      %v3070 = vpop.permute.xlu0 %3069
      %3072 = vst.msk [vmem:[#allocation10 + $0x4] sm:$0x1] %vm2557, %v3070
      %v3073 = vld [vmem:[#allocation3 + $0x2a] sm:$0x1]
      %3075 = vrot.lane.b32.xlu0 %v3073, 64
      %v3076 = vpop.permute.xlu0 %3075
      %3078 = vst.msk [vmem:[#allocation10 + $0x5] sm:$0x1] %vm2557, %v3076
      %v3079 = vld [vmem:[#allocation3 + $0x2c] sm:$0x1]
      %3081 = vrot.lane.b32.xlu0 %v3079, 64
      %v3082 = vpop.permute.xlu0 %3081
      %3084 = vst.msk [vmem:[#allocation10 + $0x6] sm:$0x1] %vm2557, %v3082
      %v3085 = vld [vmem:[#allocation3 + $0x2e] sm:$0x1]
      %3087 = vrot.lane.b32.xlu0 %v3085, 64
      %v3088 = vpop.permute.xlu0 %3087
      %3090 = vst.msk [vmem:[#allocation10 + $0x7] sm:$0x1] %vm2557, %v3088
      %v3091 = vld [vmem:[#allocation3 + $0x29] sm:$0x1]
      %3093 = vrot.lane.b32.xlu0 %v3091, 96
      %v3094 = vpop.permute.xlu0 %3093
      %3096 = vst.msk [vmem:[#allocation10 + $0x4] sm:$0x1] %vm2582, %v3094
      %v3097 = vld [vmem:[#allocation3 + $0x2b] sm:$0x1]
      %3099 = vrot.lane.b32.xlu0 %v3097, 96
      %v3100 = vpop.permute.xlu0 %3099
      %3102 = vst.msk [vmem:[#allocation10 + $0x5] sm:$0x1] %vm2582, %v3100
      %v3103 = vld [vmem:[#allocation3 + $0x2d] sm:$0x1]
      %3105 = vrot.lane.b32.xlu0 %v3103, 96
      %v3106 = vpop.permute.xlu0 %3105
      %3108 = vst.msk [vmem:[#allocation10 + $0x6] sm:$0x1] %vm2582, %v3106
      %v3109 = vld [vmem:[#allocation3 + $0x2f] sm:$0x1]
      %3111 = vrot.lane.b32.xlu0 %v3109, 96
      %v3112 = vpop.permute.xlu0 %3111
      %3114 = vst.msk [vmem:[#allocation10 + $0x7] sm:$0x1] %vm2582, %v3112
      %v3115 = vld [vmem:[#allocation3 + $0x2a] sm:$0x1]
      %3116 = vst.msk [vmem:[#allocation10 + $0x8] sm:$0x1] %vm2519, %v3115
      %v3117 = vld [vmem:[#allocation3 + $0x2c] sm:$0x1]
      %3118 = vst.msk [vmem:[#allocation10 + $0x9] sm:$0x1] %vm2519, %v3117
      %v3119 = vld [vmem:[#allocation3 + $0x2e] sm:$0x1]
      %3120 = vst.msk [vmem:[#allocation10 + $0xa] sm:$0x1] %vm2519, %v3119
      %v3121 = vld [vmem:[#allocation3 + $0x30] sm:$0x1]
      %3122 = vst.msk [vmem:[#allocation10 + $0xb] sm:$0x1] %vm2519, %v3121
      %v3123 = vld [vmem:[#allocation10] sm:$0xff]
      %v3124 = vld [vmem:[#allocation10 + $0x8] sm:$0xf]
      %v3126 = vcombine.high %v3123, %v3123
      %v3128 = vpack.c.bf16 %v3123, %v3123
      %v3129 = vpack.c.bf16 %v3126, %v3126
      %v3130 = vpack.c.bf16 %v3124, %v3124
      %v3131 = vld [vmem:[%s3] sm:$0xf]
      %v3132 = vld [vmem:[%s3 + $0x4] sm:$0xf]
      %v3133 = vld [vmem:[%s3 + $0x8] sm:$0xf]
      %v3134 = vld [vmem:[%s3 + $0xc] sm:$0xf]
      %v3135 = vld [vmem:[%s3 + $0x10] sm:$0xf]
      %v3136 = vld [vmem:[%s3 + $0x14] sm:$0xf]
      %v3137 = vld [vmem:[%s3 + $0x18] sm:$0xf]
      %v3138 = vld [vmem:[%s3 + $0x1c] sm:$0xf]
      %v3139 = vld [vmem:[%s3 + $0x20] sm:$0xf]
      %v3140 = vld [vmem:[%s3 + $0x24] sm:$0xf]
      %v3141 = vld [vmem:[%s3 + $0x28] sm:$0xf]
      %v3142 = vld [vmem:[%s3 + $0x2c] sm:$0xf]
      %v3143 = vld [vmem:[%s3 + $0x30] sm:$0xf]
      %v3144 = vld [vmem:[%s3 + $0x34] sm:$0xf]
      %v3145 = vld [vmem:[%s3 + $0x38] sm:$0xf]
      %v3146 = vld [vmem:[%s3 + $0x3c] sm:$0xf]
      %v3147 = vld [vmem:[%s3 + $0x40] sm:$0xf]
      %v3148 = vld [vmem:[%s3 + $0x44] sm:$0xf]
      %v3149 = vld [vmem:[%s3 + $0x48] sm:$0xf]
      %v3150 = vld [vmem:[%s3 + $0x4c] sm:$0xf]
      %v3151 = vld [vmem:[%s3 + $0x50] sm:$0xf]
      %v3152 = vld [vmem:[%s3 + $0x54] sm:$0xf]
      %v3153 = vld [vmem:[%s3 + $0x58] sm:$0xf]
      %v3154 = vld [vmem:[%s3 + $0x5c] sm:$0xf]
      %v3155 = vld [vmem:[%s3 + $0x60] sm:$0xf]
      %v3156 = vld [vmem:[%s3 + $0x64] sm:$0xf]
      %v3157 = vld [vmem:[%s3 + $0x68] sm:$0xf]
      %v3158 = vld [vmem:[%s3 + $0x6c] sm:$0xf]
      %v3159 = vld [vmem:[%s3 + $0x70] sm:$0xf]
      %v3160 = vld [vmem:[%s3 + $0x74] sm:$0xf]
      %v3161 = vld [vmem:[%s3 + $0x78] sm:$0xf]
      %v3162 = vld [vmem:[%s3 + $0x7c] sm:$0xf]
      %v3163 = vld [vmem:[%s3 + $0x80] sm:$0xf]
      %v3164 = vld [vmem:[%s3 + $0x84] sm:$0xf]
      %v3165 = vld [vmem:[%s3 + $0x88] sm:$0xf]
      %v3166 = vld [vmem:[%s3 + $0x8c] sm:$0xf]
      %v3167 = vld [vmem:[%s10] sm:$0x1]
      %v3169 = vlaneseq
      %v3170 = vshrl.u32 %v3169, 7
      %v3171 = vsub.s32 0, %v3170
      %v3172 = vrot.slane %v3167, %v3171
      %v3210 = vunpack.c.l.b16 %v3131
      %v3211 = vunpack.c.l.b16 %v3132
      %v3212 = vunpack.c.l.b16 %v3133
      %v3213 = vunpack.c.l.b16 %v3134
      %v3214 = vunpack.c.l.b16 %v3135
      %v3215 = vunpack.c.l.b16 %v3136
      %v3216 = vunpack.c.l.b16 %v3137
      %v3217 = vunpack.c.l.b16 %v3138
      %v3218 = vunpack.c.l.b16 %v3139
      %v3219 = vunpack.c.l.b16 %v3140
      %v3220 = vunpack.c.l.b16 %v3141
      %v3221 = vunpack.c.l.b16 %v3142
      %v3222 = vunpack.c.l.b16 %v3143
      %v3223 = vunpack.c.l.b16 %v3144
      %v3224 = vunpack.c.l.b16 %v3145
      %v3225 = vunpack.c.l.b16 %v3146
      %v3226 = vunpack.c.l.b16 %v3147
      %v3227 = vunpack.c.l.b16 %v3148
      %v3228 = vunpack.c.l.b16 %v3149
      %v3229 = vunpack.c.l.b16 %v3150
      %v3230 = vunpack.c.l.b16 %v3151
      %v3231 = vunpack.c.l.b16 %v3152
      %v3232 = vunpack.c.l.b16 %v3153
      %v3233 = vunpack.c.l.b16 %v3154
      %v3234 = vunpack.c.l.b16 %v3155
      %v3235 = vunpack.c.l.b16 %v3156
      %v3236 = vunpack.c.l.b16 %v3157
      %v3237 = vunpack.c.l.b16 %v3158
      %v3238 = vunpack.c.l.b16 %v3159
      %v3239 = vunpack.c.l.b16 %v3160
      %v3240 = vunpack.c.l.b16 %v3161
      %v3241 = vunpack.c.l.b16 %v3162
      %v3242 = vunpack.c.l.b16 %v3163
      %v3243 = vunpack.c.l.b16 %v3164
      %v3244 = vunpack.c.l.b16 %v3165
      %v3245 = vunpack.c.l.b16 %v3166
      %v3246 = vpack.c.b16 %v3211, %v3210
      %v3247 = vpack.c.b16 %v3213, %v3212
      %v3248 = vpack.c.b16 %v3215, %v3214
      %v3249 = vpack.c.b16 %v3217, %v3216
      %v3250 = vpack.c.b16 %v3219, %v3218
      %v3251 = vpack.c.b16 %v3221, %v3220
      %v3252 = vpack.c.b16 %v3223, %v3222
      %v3253 = vpack.c.b16 %v3225, %v3224
      %v3254 = vpack.c.b16 %v3227, %v3226
      %v3255 = vpack.c.b16 %v3229, %v3228
      %v3256 = vpack.c.b16 %v3231, %v3230
      %v3257 = vpack.c.b16 %v3233, %v3232
      %v3258 = vpack.c.b16 %v3235, %v3234
      %v3259 = vpack.c.b16 %v3237, %v3236
      %v3260 = vpack.c.b16 %v3239, %v3238
      %v3261 = vpack.c.b16 %v3241, %v3240
      %v3262 = vpack.c.b16 %v3243, %v3242
      %v3263 = vpack.c.b16 %v3245, %v3244
      %v3283 = vsel %vm577, %v3130, 0
      %3285 = vmatprep.subr.bf16.mxu0 0
      %3286 = vmatpush1.bf16.msra.mxu0 %v3246
      %3287 = vmatprep.subr.bf16.mxu0 0
      %3288 = vmatpush1.bf16.msra.mxu0 %v3247
      %3289 = vmatprep.subr.bf16.mxu0 0
      %3290 = vmatpush1.bf16.msra.mxu0 %v3248
      %3291 = vmatprep.subr.bf16.mxu0 0
      %3292 = vmatpush1.bf16.msra.mxu0 %v3249
      %3293 = vmatprep.subr.bf16.mxu0 0
      %3294 = vmatpush1.bf16.msra.mxu0 %v3250
      %3295 = vmatprep.subr.bf16.mxu0 0
      %3296 = vmatpush1.bf16.msra.mxu0 %v3251
      %3297 = vmatprep.subr.bf16.mxu0 0
      %3298 = vmatpush1.bf16.msra.mxu0 %v3252
      %3299 = vmatprep.subr.bf16.mxu0 0
      %3300 = vmatpush1.bf16.msra.mxu0 %v3253
      %3301 = vmatprep.subr.bf16.mxu0 0
      %3302 = vmatpush1.bf16.msra.mxu0 %v3254
      %3303 = vmatprep.subr.bf16.mxu0 0
      %3304 = vmatpush1.bf16.msra.mxu0 %v3255
      %3305 = vmatprep.subr.bf16.mxu0 0
      %3306 = vmatpush1.bf16.msra.mxu0 %v3256
      %3307 = vmatprep.subr.bf16.mxu0 0
      %3308 = vmatpush1.bf16.msra.mxu0 %v3257
      %3309 = vmatprep.subr.bf16.mxu0 0
      %3310 = vmatpush1.bf16.msra.mxu0 %v3258
      %3311 = vmatprep.subr.bf16.mxu0 0
      %3312 = vmatpush1.bf16.msra.mxu0 %v3259
      %3313 = vmatprep.subr.bf16.mxu0 0
      %3314 = vmatpush1.bf16.msra.mxu0 %v3260
      %3315 = vmatprep.subr.bf16.mxu0 0
      %3316 = vmatpush1.bf16.msra.mxu0 %v3261
      %3317 = vmatprep.mubr.bf16.mxu0 %v3129
      %3318 = vmatmul.mubr.bf16.gmra.mrb[0].mxu0 %v3128
      %v3319 = vpop.f32.mrb[0].mxu0
      %v3320 = vadd.f32 %v3172, %v3319
      %v3321 = vpop.f32.mrb[0].mxu0
      %v3322 = vpop.f32.mrb[0].mxu0
      %v3323 = vpop.f32.mrb[0].mxu0
      %3324 = vdwg.mxu0
      %3325 = vmatprep.subr.bf16.mxu0 0
      %3326 = vmatpush1.bf16.msra.mxu0 %v3262
      %3327 = vmatprep.subr.bf16.mxu0 0
      %3328 = vmatpush1.bf16.msra.mxu0 %v3263
      %3329 = vmatprep.subr.bf16.mxu0 0
      %3330 = vmatpush1.bf16.msra.mxu0 0
      %3331 = vmatprep.subr.bf16.mxu0 0
      %3332 = vmatpush1.bf16.msra.mxu0 0
      %3333 = vmatprep.subr.bf16.mxu0 0
      %3334 = vmatpush1.bf16.msra.mxu0 0
      %3335 = vmatprep.subr.bf16.mxu0 0
      %3336 = vmatpush1.bf16.msra.mxu0 0
      %3337 = vmatprep.subr.bf16.mxu0 0
      %3338 = vmatpush1.bf16.msra.mxu0 0
      %3339 = vmatprep.subr.bf16.mxu0 0
      %3340 = vmatpush1.bf16.msra.mxu0 0
      %3341 = vmatprep.subr.bf16.mxu0 0
      %3342 = vmatpush1.bf16.msra.mxu0 0
      %3343 = vmatprep.subr.bf16.mxu0 0
      %3344 = vmatpush1.bf16.msra.mxu0 0
      %3345 = vmatprep.subr.bf16.mxu0 0
      %3346 = vmatpush1.bf16.msra.mxu0 0
      %3347 = vmatprep.subr.bf16.mxu0 0
      %3348 = vmatpush1.bf16.msra.mxu0 0
      %3349 = vmatprep.subr.bf16.mxu0 0
      %3350 = vmatpush1.bf16.msra.mxu0 0
      %3351 = vmatprep.subr.bf16.mxu0 0
      %3352 = vmatpush1.bf16.msra.mxu0 0
      %3353 = vmatprep.subr.bf16.mxu0 0
      %3354 = vmatpush1.bf16.msra.mxu0 0
      %3355 = vmatprep.subr.bf16.mxu0 0
      %3356 = vmatpush1.bf16.msra.mxu0 0
      %3357 = vmatprep.mubr.bf16.mxu0 0
      %3358 = vmatmul.mubr.bf16.gmra.mrb[0].mxu0 %v3283
      %v3359 = vpop.f32.mrb[0].mxu0
      %v3360 = vadd.f32 %v3320, %v3359
      %v3361 = vpop.f32.mrb[0].mxu0
      %v3362 = vpop.f32.mrb[0].mxu0
      %v3363 = vpop.f32.mrb[0].mxu0
      %3364 = vdwg.mxu0
      %v3365 = vmul.f32 %v3360, 0.251
      %v3366 = vadd.f32 %v3365, 1.4855
      %v3367 = vmul.f32 %v3366, %v3360
      %v3368 = vadd.f32 %v3367, 3.052
      %v3369 = vmul.f32 %v3368, %v3360
      %v3370 = vadd.f32 %v3369, 2.3235
      %v3371 = vmul.f32 %v3370, %v3360
      %v3372 = vadd.f32 %v3371, 0.6184
      %v3373 = vmul.f32 %v3372, %v3360
      %v3374 = vadd.f32 %v3373, 0.0298
      %v3375 = vand.u32 2147483647, %v3360
      %v3376 = vmul.f32 %v3375, 0.0
      %v3377 = vadd.f32 %v3376, 3.0
      %v3378 = vmul.f32 %v3377, %v3375
      %v3379 = vadd.f32 %v3378, 0.0
      %v3380 = vmul.f32 %v3379, %v3375
      %v3381 = vadd.f32 %v3380, 2.3831
      %v3382 = vmul.f32 %v3381, %v3375
      %v3383 = vadd.f32 %v3382, 1.0
      %v3384 = vrcp.pop %v3383
      %v3385 = vmul.f32 %v3374, %v3384
      %3386 = vst.msk [vmem:[#allocation4 + $0xd] sm:$0xf] %vm2953, %v3385
      %v3387 = vld [vmem:[#allocation3 + $0x28] sm:$0x1]
      %3388 = vst.msk [vmem:[#allocation10] sm:$0x1] %vm2519, %v3387
      %v3389 = vld [vmem:[#allocation3 + $0x2a] sm:$0x1]
      %3390 = vst.msk [vmem:[#allocation10 + $0x1] sm:$0x1] %vm2519, %v3389
      %v3391 = vld [vmem:[#allocation3 + $0x2c] sm:$0x1]
      %3392 = vst.msk [vmem:[#allocation10 + $0x2] sm:$0x1] %vm2519, %v3391
      %v3393 = vld [vmem:[#allocation3 + $0x2e] sm:$0x1]
      %3394 = vst.msk [vmem:[#allocation10 + $0x3] sm:$0x1] %vm2519, %v3393
      %v3395 = vld [vmem:[#allocation3 + $0x29] sm:$0x1]
      %3397 = vrot.lane.b32.xlu0 %v3395, 32
      %v3398 = vpop.permute.xlu0 %3397
      %3400 = vst.msk [vmem:[#allocation10] sm:$0x1] %vm2532, %v3398
      %v3401 = vld [vmem:[#allocation3 + $0x2b] sm:$0x1]
      %3403 = vrot.lane.b32.xlu0 %v3401, 32
      %v3404 = vpop.permute.xlu0 %3403
      %3406 = vst.msk [vmem:[#allocation10 + $0x1] sm:$0x1] %vm2532, %v3404
      %v3407 = vld [vmem:[#allocation3 + $0x2d] sm:$0x1]
      %3409 = vrot.lane.b32.xlu0 %v3407, 32
      %v3410 = vpop.permute.xlu0 %3409
      %3412 = vst.msk [vmem:[#allocation10 + $0x2] sm:$0x1] %vm2532, %v3410
      %v3413 = vld [vmem:[#allocation3 + $0x2f] sm:$0x1]
      %3415 = vrot.lane.b32.xlu0 %v3413, 32
      %v3416 = vpop.permute.xlu0 %3415
      %3418 = vst.msk [vmem:[#allocation10 + $0x3] sm:$0x1] %vm2532, %v3416
      %v3419 = vld [vmem:[#allocation3 + $0x2a] sm:$0x1]
      %3421 = vrot.lane.b32.xlu0 %v3419, 64
      %v3422 = vpop.permute.xlu0 %3421
      %3424 = vst.msk [vmem:[#allocation10] sm:$0x1] %vm2557, %v3422
      %v3425 = vld [vmem:[#allocation3 + $0x2c] sm:$0x1]
      %3427 = vrot.lane.b32.xlu0 %v3425, 64
      %v3428 = vpop.permute.xlu0 %3427
      %3430 = vst.msk [vmem:[#allocation10 + $0x1] sm:$0x1] %vm2557, %v3428
      %v3431 = vld [vmem:[#allocation3 + $0x2e] sm:$0x1]
      %3433 = vrot.lane.b32.xlu0 %v3431, 64
      %v3434 = vpop.permute.xlu0 %3433
      %3436 = vst.msk [vmem:[#allocation10 + $0x2] sm:$0x1] %vm2557, %v3434
      %v3437 = vld [vmem:[#allocation3 + $0x30] sm:$0x1]
      %3439 = vrot.lane.b32.xlu0 %v3437, 64
      %v3440 = vpop.permute.xlu0 %3439
      %3442 = vst.msk [vmem:[#allocation10 + $0x3] sm:$0x1] %vm2557, %v3440
      %v3443 = vld [vmem:[#allocation3 + $0x32] sm:$0x1]
      %3445 = vrot.lane.b32.xlu0 %v3443, 96
      %v3446 = vpop.permute.xlu0 %3445
      %3448 = vst.msk [vmem:[#allocation10] sm:$0x1] %vm2582, %v3446
      %v3449 = vld [vmem:[#allocation3 + $0x34] sm:$0x1]
      %3451 = vrot.lane.b32.xlu0 %v3449, 96
      %v3452 = vpop.permute.xlu0 %3451
      %3454 = vst.msk [vmem:[#allocation10 + $0x1] sm:$0x1] %vm2582, %v3452
      %v3455 = vld [vmem:[#allocation3 + $0x36] sm:$0x1]
      %3457 = vrot.lane.b32.xlu0 %v3455, 96
      %v3458 = vpop.permute.xlu0 %3457
      %3460 = vst.msk [vmem:[#allocation10 + $0x2] sm:$0x1] %vm2582, %v3458
      %v3461 = vld [vmem:[#allocation3 + $0x38] sm:$0x1]
      %3463 = vrot.lane.b32.xlu0 %v3461, 96
      %v3464 = vpop.permute.xlu0 %3463
      %3466 = vst.msk [vmem:[#allocation10 + $0x3] sm:$0x1] %vm2582, %v3464
      %v3467 = vld [vmem:[#allocation3 + $0x33] sm:$0x1]
      %3468 = vst.msk [vmem:[#allocation10 + $0x4] sm:$0x1] %vm2519, %v3467
      %v3469 = vld [vmem:[#allocation3 + $0x35] sm:$0x1]
      %3470 = vst.msk [vmem:[#allocation10 + $0x5] sm:$0x1] %vm2519, %v3469
      %v3471 = vld [vmem:[#allocation3 + $0x37] sm:$0x1]
      %3472 = vst.msk [vmem:[#allocation10 + $0x6] sm:$0x1] %vm2519, %v3471
      %v3473 = vld [vmem:[#allocation3 + $0x39] sm:$0x1]
      %3474 = vst.msk [vmem:[#allocation10 + $0x7] sm:$0x1] %vm2519, %v3473
      %v3475 = vld [vmem:[#allocation3 + $0x34] sm:$0x1]
      %3477 = vrot.lane.b32.xlu0 %v3475, 32
      %v3478 = vpop.permute.xlu0 %3477
      %3480 = vst.msk [vmem:[#allocation10 + $0x4] sm:$0x1] %vm2532, %v3478
      %v3481 = vld [vmem:[#allocation3 + $0x36] sm:$0x1]
      %3483 = vrot.lane.b32.xlu0 %v3481, 32
      %v3484 = vpop.permute.xlu0 %3483
      %3486 = vst.msk [vmem:[#allocation10 + $0x5] sm:$0x1] %vm2532, %v3484
      %v3487 = vld [vmem:[#allocation3 + $0x38] sm:$0x1]
      %3489 = vrot.lane.b32.xlu0 %v3487, 32
      %v3490 = vpop.permute.xlu0 %3489
      %3492 = vst.msk [vmem:[#allocation10 + $0x6] sm:$0x1] %vm2532, %v3490
      %v3493 = vld [vmem:[#allocation3 + $0x3a] sm:$0x1]
      %3495 = vrot.lane.b32.xlu0 %v3493, 32
      %v3496 = vpop.permute.xlu0 %3495
      %3498 = vst.msk [vmem:[#allocation10 + $0x7] sm:$0x1] %vm2532, %v3496
      %v3499 = vld [vmem:[#allocation3 + $0x3c] sm:$0x1]
      %3501 = vrot.lane.b32.xlu0 %v3499, 64
      %v3502 = vpop.permute.xlu0 %3501
      %3504 = vst.msk [vmem:[#allocation10 + $0x4] sm:$0x1] %vm2557, %v3502
      %v3505 = vld [vmem:[#allocation3 + $0x3e] sm:$0x1]
      %3507 = vrot.lane.b32.xlu0 %v3505, 64
      %v3508 = vpop.permute.xlu0 %3507
      %3510 = vst.msk [vmem:[#allocation10 + $0x5] sm:$0x1] %vm2557, %v3508
      %v3511 = vld [vmem:[#allocation3 + $0x40] sm:$0x1]
      %3513 = vrot.lane.b32.xlu0 %v3511, 64
      %v3514 = vpop.permute.xlu0 %3513
      %3516 = vst.msk [vmem:[#allocation10 + $0x6] sm:$0x1] %vm2557, %v3514
      %v3517 = vld [vmem:[#allocation3 + $0x42] sm:$0x1]
      %3519 = vrot.lane.b32.xlu0 %v3517, 64
      %v3520 = vpop.permute.xlu0 %3519
      %3522 = vst.msk [vmem:[#allocation10 + $0x7] sm:$0x1] %vm2557, %v3520
      %v3523 = vld [vmem:[#allocation3 + $0x3d] sm:$0x1]
      %3525 = vrot.lane.b32.xlu0 %v3523, 96
      %v3526 = vpop.permute.xlu0 %3525
      %3528 = vst.msk [vmem:[#allocation10 + $0x4] sm:$0x1] %vm2582, %v3526
      %v3529 = vld [vmem:[#allocation3 + $0x3f] sm:$0x1]
      %3531 = vrot.lane.b32.xlu0 %v3529, 96
      %v3532 = vpop.permute.xlu0 %3531
      %3534 = vst.msk [vmem:[#allocation10 + $0x5] sm:$0x1] %vm2582, %v3532
      %v3535 = vld [vmem:[#allocation3 + $0x41] sm:$0x1]
      %3537 = vrot.lane.b32.xlu0 %v3535, 96
      %v3538 = vpop.permute.xlu0 %3537
      %3540 = vst.msk [vmem:[#allocation10 + $0x6] sm:$0x1] %vm2582, %v3538
      %v3541 = vld [vmem:[#allocation3 + $0x43] sm:$0x1]
      %3543 = vrot.lane.b32.xlu0 %v3541, 96
      %v3544 = vpop.permute.xlu0 %3543
      %3546 = vst.msk [vmem:[#allocation10 + $0x7] sm:$0x1] %vm2582, %v3544
      %v3547 = vld [vmem:[#allocation3 + $0x3e] sm:$0x1]
      %3548 = vst.msk [vmem:[#allocation10 + $0x8] sm:$0x1] %vm2519, %v3547
      %v3549 = vld [vmem:[#allocation3 + $0x40] sm:$0x1]
      %3550 = vst.msk [vmem:[#allocation10 + $0x9] sm:$0x1] %vm2519, %v3549
      %v3551 = vld [vmem:[#allocation3 + $0x42] sm:$0x1]
      %3552 = vst.msk [vmem:[#allocation10 + $0xa] sm:$0x1] %vm2519, %v3551
      %v3553 = vld [vmem:[#allocation3 + $0x44] sm:$0x1]
      %3554 = vst.msk [vmem:[#allocation10 + $0xb] sm:$0x1] %vm2519, %v3553
      %v3555 = vld [vmem:[#allocation10] sm:$0xff]
      %v3556 = vld [vmem:[#allocation10 + $0x8] sm:$0xf]
      %v3558 = vcombine.high %v3555, %v3555
      %v3560 = vpack.c.bf16 %v3555, %v3555
      %v3561 = vpack.c.bf16 %v3558, %v3558
      %v3562 = vpack.c.bf16 %v3556, %v3556
      %v3563 = vld [vmem:[%s3] sm:$0xf]
      %v3564 = vld [vmem:[%s3 + $0x4] sm:$0xf]
      %v3565 = vld [vmem:[%s3 + $0x8] sm:$0xf]
      %v3566 = vld [vmem:[%s3 + $0xc] sm:$0xf]
      %v3567 = vld [vmem:[%s3 + $0x10] sm:$0xf]
      %v3568 = vld [vmem:[%s3 + $0x14] sm:$0xf]
      %v3569 = vld [vmem:[%s3 + $0x18] sm:$0xf]
      %v3570 = vld [vmem:[%s3 + $0x1c] sm:$0xf]
      %v3571 = vld [vmem:[%s3 + $0x20] sm:$0xf]
      %v3572 = vld [vmem:[%s3 + $0x24] sm:$0xf]
      %v3573 = vld [vmem:[%s3 + $0x28] sm:$0xf]
      %v3574 = vld [vmem:[%s3 + $0x2c] sm:$0xf]
      %v3575 = vld [vmem:[%s3 + $0x30] sm:$0xf]
      %v3576 = vld [vmem:[%s3 + $0x34] sm:$0xf]
      %v3577 = vld [vmem:[%s3 + $0x38] sm:$0xf]
      %v3578 = vld [vmem:[%s3 + $0x3c] sm:$0xf]
      %v3579 = vld [vmem:[%s3 + $0x40] sm:$0xf]
      %v3580 = vld [vmem:[%s3 + $0x44] sm:$0xf]
      %v3581 = vld [vmem:[%s3 + $0x48] sm:$0xf]
      %v3582 = vld [vmem:[%s3 + $0x4c] sm:$0xf]
      %v3583 = vld [vmem:[%s3 + $0x50] sm:$0xf]
      %v3584 = vld [vmem:[%s3 + $0x54] sm:$0xf]
      %v3585 = vld [vmem:[%s3 + $0x58] sm:$0xf]
      %v3586 = vld [vmem:[%s3 + $0x5c] sm:$0xf]
      %v3587 = vld [vmem:[%s3 + $0x60] sm:$0xf]
      %v3588 = vld [vmem:[%s3 + $0x64] sm:$0xf]
      %v3589 = vld [vmem:[%s3 + $0x68] sm:$0xf]
      %v3590 = vld [vmem:[%s3 + $0x6c] sm:$0xf]
      %v3591 = vld [vmem:[%s3 + $0x70] sm:$0xf]
      %v3592 = vld [vmem:[%s3 + $0x74] sm:$0xf]
      %v3593 = vld [vmem:[%s3 + $0x78] sm:$0xf]
      %v3594 = vld [vmem:[%s3 + $0x7c] sm:$0xf]
      %v3595 = vld [vmem:[%s3 + $0x80] sm:$0xf]
      %v3596 = vld [vmem:[%s3 + $0x84] sm:$0xf]
      %v3597 = vld [vmem:[%s3 + $0x88] sm:$0xf]
      %v3598 = vld [vmem:[%s3 + $0x8c] sm:$0xf]
      %v3599 = vld [vmem:[%s10] sm:$0x1]
      %v3601 = vlaneseq
      %v3602 = vshrl.u32 %v3601, 7
      %v3603 = vsub.s32 0, %v3602
      %v3604 = vrot.slane %v3599, %v3603
      %v3642 = vunpack.c.l.b16 %v3563
      %v3643 = vunpack.c.l.b16 %v3564
      %v3644 = vunpack.c.l.b16 %v3565
      %v3645 = vunpack.c.l.b16 %v3566
      %v3646 = vunpack.c.l.b16 %v3567
      %v3647 = vunpack.c.l.b16 %v3568
      %v3648 = vunpack.c.l.b16 %v3569
      %v3649 = vunpack.c.l.b16 %v3570
      %v3650 = vunpack.c.l.b16 %v3571
      %v3651 = vunpack.c.l.b16 %v3572
      %v3652 = vunpack.c.l.b16 %v3573
      %v3653 = vunpack.c.l.b16 %v3574
      %v3654 = vunpack.c.l.b16 %v3575
      %v3655 = vunpack.c.l.b16 %v3576
      %v3656 = vunpack.c.l.b16 %v3577
      %v3657 = vunpack.c.l.b16 %v3578
      %v3658 = vunpack.c.l.b16 %v3579
      %v3659 = vunpack.c.l.b16 %v3580
      %v3660 = vunpack.c.l.b16 %v3581
      %v3661 = vunpack.c.l.b16 %v3582
      %v3662 = vunpack.c.l.b16 %v3583
      %v3663 = vunpack.c.l.b16 %v3584
      %v3664 = vunpack.c.l.b16 %v3585
      %v3665 = vunpack.c.l.b16 %v3586
      %v3666 = vunpack.c.l.b16 %v3587
      %v3667 = vunpack.c.l.b16 %v3588
      %v3668 = vunpack.c.l.b16 %v3589
      %v3669 = vunpack.c.l.b16 %v3590
      %v3670 = vunpack.c.l.b16 %v3591
      %v3671 = vunpack.c.l.b16 %v3592
      %v3672 = vunpack.c.l.b16 %v3593
      %v3673 = vunpack.c.l.b16 %v3594
      %v3674 = vunpack.c.l.b16 %v3595
      %v3675 = vunpack.c.l.b16 %v3596
      %v3676 = vunpack.c.l.b16 %v3597
      %v3677 = vunpack.c.l.b16 %v3598
      %v3678 = vpack.c.b16 %v3643, %v3642
      %v3679 = vpack.c.b16 %v3645, %v3644
      %v3680 = vpack.c.b16 %v3647, %v3646
      %v3681 = vpack.c.b16 %v3649, %v3648
      %v3682 = vpack.c.b16 %v3651, %v3650
      %v3683 = vpack.c.b16 %v3653, %v3652
      %v3684 = vpack.c.b16 %v3655, %v3654
      %v3685 = vpack.c.b16 %v3657, %v3656
      %v3686 = vpack.c.b16 %v3659, %v3658
      %v3687 = vpack.c.b16 %v3661, %v3660
      %v3688 = vpack.c.b16 %v3663, %v3662
      %v3689 = vpack.c.b16 %v3665, %v3664
      %v3690 = vpack.c.b16 %v3667, %v3666
      %v3691 = vpack.c.b16 %v3669, %v3668
      %v3692 = vpack.c.b16 %v3671, %v3670
      %v3693 = vpack.c.b16 %v3673, %v3672
      %v3694 = vpack.c.b16 %v3675, %v3674
      %v3695 = vpack.c.b16 %v3677, %v3676
      %v3715 = vsel %vm577, %v3562, 0
      %3717 = vmatprep.subr.bf16.mxu0 0
      %3718 = vmatpush1.bf16.msra.mxu0 %v3678
      %3719 = vmatprep.subr.bf16.mxu0 0
      %3720 = vmatpush1.bf16.msra.mxu0 %v3679
      %3721 = vmatprep.subr.bf16.mxu0 0
      %3722 = vmatpush1.bf16.msra.mxu0 %v3680
      %3723 = vmatprep.subr.bf16.mxu0 0
      %3724 = vmatpush1.bf16.msra.mxu0 %v3681
      %3725 = vmatprep.subr.bf16.mxu0 0
      %3726 = vmatpush1.bf16.msra.mxu0 %v3682
      %3727 = vmatprep.subr.bf16.mxu0 0
      %3728 = vmatpush1.bf16.msra.mxu0 %v3683
      %3729 = vmatprep.subr.bf16.mxu0 0
      %3730 = vmatpush1.bf16.msra.mxu0 %v3684
      %3731 = vmatprep.subr.bf16.mxu0 0
      %3732 = vmatpush1.bf16.msra.mxu0 %v3685
      %3733 = vmatprep.subr.bf16.mxu0 0
      %3734 = vmatpush1.bf16.msra.mxu0 %v3686
      %3735 = vmatprep.subr.bf16.mxu0 0
      %3736 = vmatpush1.bf16.msra.mxu0 %v3687
      %3737 = vmatprep.subr.bf16.mxu0 0
      %3738 = vmatpush1.bf16.msra.mxu0 %v3688
      %3739 = vmatprep.subr.bf16.mxu0 0
      %3740 = vmatpush1.bf16.msra.mxu0 %v3689
      %3741 = vmatprep.subr.bf16.mxu0 0
      %3742 = vmatpush1.bf16.msra.mxu0 %v3690
      %3743 = vmatprep.subr.bf16.mxu0 0
      %3744 = vmatpush1.bf16.msra.mxu0 %v3691
      %3745 = vmatprep.subr.bf16.mxu0 0
      %3746 = vmatpush1.bf16.msra.mxu0 %v3692
      %3747 = vmatprep.subr.bf16.mxu0 0
      %3748 = vmatpush1.bf16.msra.mxu0 %v3693
      %3749 = vmatprep.mubr.bf16.mxu0 %v3561
      %3750 = vmatmul.mubr.bf16.gmra.mrb[0].mxu0 %v3560
      %v3751 = vpop.f32.mrb[0].mxu0
      %v3752 = vadd.f32 %v3604, %v3751
      %v3753 = vpop.f32.mrb[0].mxu0
      %v3754 = vpop.f32.mrb[0].mxu0
      %v3755 = vpop.f32.mrb[0].mxu0
      %3756 = vdwg.mxu0
      %3757 = vmatprep.subr.bf16.mxu0 0
      %3758 = vmatpush1.bf16.msra.mxu0 %v3694
      %3759 = vmatprep.subr.bf16.mxu0 0
      %3760 = vmatpush1.bf16.msra.mxu0 %v3695
      %3761 = vmatprep.subr.bf16.mxu0 0
      %3762 = vmatpush1.bf16.msra.mxu0 0
      %3763 = vmatprep.subr.bf16.mxu0 0
      %3764 = vmatpush1.bf16.msra.mxu0 0
      %3765 = vmatprep.subr.bf16.mxu0 0
      %3766 = vmatpush1.bf16.msra.mxu0 0
      %3767 = vmatprep.subr.bf16.mxu0 0
      %3768 = vmatpush1.bf16.msra.mxu0 0
      %3769 = vmatprep.subr.bf16.mxu0 0
      %3770 = vmatpush1.bf16.msra.mxu0 0
      %3771 = vmatprep.subr.bf16.mxu0 0
      %3772 = vmatpush1.bf16.msra.mxu0 0
      %3773 = vmatprep.subr.bf16.mxu0 0
      %3774 = vmatpush1.bf16.msra.mxu0 0
      %3775 = vmatprep.subr.bf16.mxu0 0
      %3776 = vmatpush1.bf16.msra.mxu0 0
      %3777 = vmatprep.subr.bf16.mxu0 0
      %3778 = vmatpush1.bf16.msra.mxu0 0
      %3779 = vmatprep.subr.bf16.mxu0 0
      %3780 = vmatpush1.bf16.msra.mxu0 0
      %3781 = vmatprep.subr.bf16.mxu0 0
      %3782 = vmatpush1.bf16.msra.mxu0 0
      %3783 = vmatprep.subr.bf16.mxu0 0
      %3784 = vmatpush1.bf16.msra.mxu0 0
      %3785 = vmatprep.subr.bf16.mxu0 0
      %3786 = vmatpush1.bf16.msra.mxu0 0
      %3787 = vmatprep.subr.bf16.mxu0 0
      %3788 = vmatpush1.bf16.msra.mxu0 0
      %3789 = vmatprep.mubr.bf16.mxu0 0
      %3790 = vmatmul.mubr.bf16.gmra.mrb[0].mxu0 %v3715
      %v3791 = vpop.f32.mrb[0].mxu0
      %v3792 = vadd.f32 %v3752, %v3791
      %v3793 = vpop.f32.mrb[0].mxu0
      %v3794 = vpop.f32.mrb[0].mxu0
      %v3795 = vpop.f32.mrb[0].mxu0
      %3796 = vdwg.mxu0
      %v3797 = vmul.f32 %v3792, 0.251
      %v3798 = vadd.f32 %v3797, 1.4855
      %v3799 = vmul.f32 %v3798, %v3792
      %v3800 = vadd.f32 %v3799, 3.052
      %v3801 = vmul.f32 %v3800, %v3792
      %v3802 = vadd.f32 %v3801, 2.3235
      %v3803 = vmul.f32 %v3802, %v3792
      %v3804 = vadd.f32 %v3803, 0.6184
      %v3805 = vmul.f32 %v3804, %v3792
      %v3806 = vadd.f32 %v3805, 0.0298
      %v3807 = vand.u32 2147483647, %v3792
      %v3808 = vmul.f32 %v3807, 0.0
      %v3809 = vadd.f32 %v3808, 3.0
      %v3810 = vmul.f32 %v3809, %v3807
      %v3811 = vadd.f32 %v3810, 0.0
      %v3812 = vmul.f32 %v3811, %v3807
      %v3813 = vadd.f32 %v3812, 2.3831
      %v3814 = vmul.f32 %v3813, %v3807
      %v3815 = vadd.f32 %v3814, 1.0
      %v3816 = vrcp.pop %v3815
      %v3817 = vmul.f32 %v3806, %v3816
      %3818 = vst.msk [vmem:[#allocation4 + $0x13] sm:$0xf] %vm2953, %v3817
      %v3819 = vld [vmem:[#allocation3 + $0x3c] sm:$0x1]
      %3820 = vst.msk [vmem:[#allocation10] sm:$0x1] %vm2519, %v3819
      %v3821 = vld [vmem:[#allocation3 + $0x3e] sm:$0x1]
      %3822 = vst.msk [vmem:[#allocation10 + $0x1] sm:$0x1] %vm2519, %v3821
      %v3823 = vld [vmem:[#allocation3 + $0x40] sm:$0x1]
      %3824 = vst.msk [vmem:[#allocation10 + $0x2] sm:$0x1] %vm2519, %v3823
      %v3825 = vld [vmem:[#allocation3 + $0x42] sm:$0x1]
      %3826 = vst.msk [vmem:[#allocation10 + $0x3] sm:$0x1] %vm2519, %v3825
      %v3827 = vld [vmem:[#allocation3 + $0x3d] sm:$0x1]
      %3829 = vrot.lane.b32.xlu0 %v3827, 32
      %v3830 = vpop.permute.xlu0 %3829
      %3832 = vst.msk [vmem:[#allocation10] sm:$0x1] %vm2532, %v3830
      %v3833 = vld [vmem:[#allocation3 + $0x3f] sm:$0x1]
      %3835 = vrot.lane.b32.xlu0 %v3833, 32
      %v3836 = vpop.permute.xlu0 %3835
      %3838 = vst.msk [vmem:[#allocation10 + $0x1] sm:$0x1] %vm2532, %v3836
      %v3839 = vld [vmem:[#allocation3 + $0x41] sm:$0x1]
      %3841 = vrot.lane.b32.xlu0 %v3839, 32
      %v3842 = vpop.permute.xlu0 %3841
      %3844 = vst.msk [vmem:[#allocation10 + $0x2] sm:$0x1] %vm2532, %v3842
      %v3845 = vld [vmem:[#allocation3 + $0x43] sm:$0x1]
      %3847 = vrot.lane.b32.xlu0 %v3845, 32
      %v3848 = vpop.permute.xlu0 %3847
      %3850 = vst.msk [vmem:[#allocation10 + $0x3] sm:$0x1] %vm2532, %v3848
      %v3851 = vld [vmem:[#allocation3 + $0x3e] sm:$0x1]
      %3853 = vrot.lane.b32.xlu0 %v3851, 64
      %v3854 = vpop.permute.xlu0 %3853
      %3856 = vst.msk [vmem:[#allocation10] sm:$0x1] %vm2557, %v3854
      %v3857 = vld [vmem:[#allocation3 + $0x40] sm:$0x1]
      %3859 = vrot.lane.b32.xlu0 %v3857, 64
      %v3860 = vpop.permute.xlu0 %3859
      %3862 = vst.msk [vmem:[#allocation10 + $0x1] sm:$0x1] %vm2557, %v3860
      %v3863 = vld [vmem:[#allocation3 + $0x42] sm:$0x1]
      %3865 = vrot.lane.b32.xlu0 %v3863, 64
      %v3866 = vpop.permute.xlu0 %3865
      %3868 = vst.msk [vmem:[#allocation10 + $0x2] sm:$0x1] %vm2557, %v3866
      %v3869 = vld [vmem:[#allocation3 + $0x44] sm:$0x1]
      %3871 = vrot.lane.b32.xlu0 %v3869, 64
      %v3872 = vpop.permute.xlu0 %3871
      %3874 = vst.msk [vmem:[#allocation10 + $0x3] sm:$0x1] %vm2557, %v3872
      %v3875 = vld [vmem:[#allocation3 + $0x46] sm:$0x1]
      %3877 = vrot.lane.b32.xlu0 %v3875, 96
      %v3878 = vpop.permute.xlu0 %3877
      %3880 = vst.msk [vmem:[#allocation10] sm:$0x1] %vm2582, %v3878
      %v3881 = vld [vmem:[#allocation3 + $0x48] sm:$0x1]
      %3883 = vrot.lane.b32.xlu0 %v3881, 96
      %v3884 = vpop.permute.xlu0 %3883
      %3886 = vst.msk [vmem:[#allocation10 + $0x1] sm:$0x1] %vm2582, %v3884
      %v3887 = vld [vmem:[#allocation3 + $0x4a] sm:$0x1]
      %3889 = vrot.lane.b32.xlu0 %v3887, 96
      %v3890 = vpop.permute.xlu0 %3889
      %3892 = vst.msk [vmem:[#allocation10 + $0x2] sm:$0x1] %vm2582, %v3890
      %v3893 = vld [vmem:[#allocation3 + $0x4c] sm:$0x1]
      %3895 = vrot.lane.b32.xlu0 %v3893, 96
      %v3896 = vpop.permute.xlu0 %3895
      %3898 = vst.msk [vmem:[#allocation10 + $0x3] sm:$0x1] %vm2582, %v3896
      %v3899 = vld [vmem:[#allocation3 + $0x47] sm:$0x1]
      %3900 = vst.msk [vmem:[#allocation10 + $0x4] sm:$0x1] %vm2519, %v3899
      %v3901 = vld [vmem:[#allocation3 + $0x49] sm:$0x1]
      %3902 = vst.msk [vmem:[#allocation10 + $0x5] sm:$0x1] %vm2519, %v3901
      %v3903 = vld [vmem:[#allocation3 + $0x4b] sm:$0x1]
      %3904 = vst.msk [vmem:[#allocation10 + $0x6] sm:$0x1] %vm2519, %v3903
      %v3905 = vld [vmem:[#allocation3 + $0x4d] sm:$0x1]
      %3906 = vst.msk [vmem:[#allocation10 + $0x7] sm:$0x1] %vm2519, %v3905
      %v3907 = vld [vmem:[#allocation3 + $0x48] sm:$0x1]
      %3909 = vrot.lane.b32.xlu0 %v3907, 32
      %v3910 = vpop.permute.xlu0 %3909
      %3912 = vst.msk [vmem:[#allocation10 + $0x4] sm:$0x1] %vm2532, %v3910
      %v3913 = vld [vmem:[#allocation3 + $0x4a] sm:$0x1]
      %3915 = vrot.lane.b32.xlu0 %v3913, 32
      %v3916 = vpop.permute.xlu0 %3915
      %3918 = vst.msk [vmem:[#allocation10 + $0x5] sm:$0x1] %vm2532, %v3916
      %v3919 = vld [vmem:[#allocation3 + $0x4c] sm:$0x1]
      %3921 = vrot.lane.b32.xlu0 %v3919, 32
      %v3922 = vpop.permute.xlu0 %3921
      %3924 = vst.msk [vmem:[#allocation10 + $0x6] sm:$0x1] %vm2532, %v3922
      %v3925 = vld [vmem:[#allocation3 + $0x4e] sm:$0x1]
      %3927 = vrot.lane.b32.xlu0 %v3925, 32
      %v3928 = vpop.permute.xlu0 %3927
      %3930 = vst.msk [vmem:[#allocation10 + $0x7] sm:$0x1] %vm2532, %v3928
      %v3931 = vld [vmem:[#allocation3 + $0x50] sm:$0x1]
      %3933 = vrot.lane.b32.xlu0 %v3931, 64
      %v3934 = vpop.permute.xlu0 %3933
      %3936 = vst.msk [vmem:[#allocation10 + $0x4] sm:$0x1] %vm2557, %v3934
      %v3937 = vld [vmem:[#allocation3 + $0x52] sm:$0x1]
      %3939 = vrot.lane.b32.xlu0 %v3937, 64
      %v3940 = vpop.permute.xlu0 %3939
      %3942 = vst.msk [vmem:[#allocation10 + $0x5] sm:$0x1] %vm2557, %v3940
      %v3943 = vld [vmem:[#allocation3 + $0x54] sm:$0x1]
      %3945 = vrot.lane.b32.xlu0 %v3943, 64
      %v3946 = vpop.permute.xlu0 %3945
      %3948 = vst.msk [vmem:[#allocation10 + $0x6] sm:$0x1] %vm2557, %v3946
      %v3949 = vld [vmem:[#allocation3 + $0x56] sm:$0x1]
      %3951 = vrot.lane.b32.xlu0 %v3949, 64
      %v3952 = vpop.permute.xlu0 %3951
      %3954 = vst.msk [vmem:[#allocation10 + $0x7] sm:$0x1] %vm2557, %v3952
      %v3955 = vld [vmem:[#allocation3 + $0x51] sm:$0x1]
      %3957 = vrot.lane.b32.xlu0 %v3955, 96
      %v3958 = vpop.permute.xlu0 %3957
      %3960 = vst.msk [vmem:[#allocation10 + $0x4] sm:$0x1] %vm2582, %v3958
      %v3961 = vld [vmem:[#allocation3 + $0x53] sm:$0x1]
      %3963 = vrot.lane.b32.xlu0 %v3961, 96
      %v3964 = vpop.permute.xlu0 %3963
      %3966 = vst.msk [vmem:[#allocation10 + $0x5] sm:$0x1] %vm2582, %v3964
      %v3967 = vld [vmem:[#allocation3 + $0x55] sm:$0x1]
      %3969 = vrot.lane.b32.xlu0 %v3967, 96
      %v3970 = vpop.permute.xlu0 %3969
      %3972 = vst.msk [vmem:[#allocation10 + $0x6] sm:$0x1] %vm2582, %v3970
      %v3973 = vld [vmem:[#allocation3 + $0x57] sm:$0x1]
      %3975 = vrot.lane.b32.xlu0 %v3973, 96
      %v3976 = vpop.permute.xlu0 %3975
      %3978 = vst.msk [vmem:[#allocation10 + $0x7] sm:$0x1] %vm2582, %v3976
      %v3979 = vld [vmem:[#allocation3 + $0x52] sm:$0x1]
      %3980 = vst.msk [vmem:[#allocation10 + $0x8] sm:$0x1] %vm2519, %v3979
      %v3981 = vld [vmem:[#allocation3 + $0x54] sm:$0x1]
      %3982 = vst.msk [vmem:[#allocation10 + $0x9] sm:$0x1] %vm2519, %v3981
      %v3983 = vld [vmem:[#allocation3 + $0x56] sm:$0x1]
      %3984 = vst.msk [vmem:[#allocation10 + $0xa] sm:$0x1] %vm2519, %v3983
      %v3985 = vld [vmem:[#allocation3 + $0x58] sm:$0x1]
      %3986 = vst.msk [vmem:[#allocation10 + $0xb] sm:$0x1] %vm2519, %v3985
      %v3987 = vld [vmem:[#allocation10] sm:$0xff]
      %v3988 = vld [vmem:[#allocation10 + $0x8] sm:$0xf]
      %v3990 = vcombine.high %v3987, %v3987
      %v3992 = vpack.c.bf16 %v3987, %v3987
      %v3993 = vpack.c.bf16 %v3990, %v3990
      %v3994 = vpack.c.bf16 %v3988, %v3988
      %v3995 = vld [vmem:[%s3] sm:$0xf]
      %v3996 = vld [vmem:[%s3 + $0x4] sm:$0xf]
      %v3997 = vld [vmem:[%s3 + $0x8] sm:$0xf]
      %v3998 = vld [vmem:[%s3 + $0xc] sm:$0xf]
      %v3999 = vld [vmem:[%s3 + $0x10] sm:$0xf]
      %v4000 = vld [vmem:[%s3 + $0x14] sm:$0xf]
      %v4001 = vld [vmem:[%s3 + $0x18] sm:$0xf]
      %v4002 = vld [vmem:[%s3 + $0x1c] sm:$0xf]
      %v4003 = vld [vmem:[%s3 + $0x20] sm:$0xf]
      %v4004 = vld [vmem:[%s3 + $0x24] sm:$0xf]
      %v4005 = vld [vmem:[%s3 + $0x28] sm:$0xf]
      %v4006 = vld [vmem:[%s3 + $0x2c] sm:$0xf]
      %v4007 = vld [vmem:[%s3 + $0x30] sm:$0xf]
      %v4008 = vld [vmem:[%s3 + $0x34] sm:$0xf]
      %v4009 = vld [vmem:[%s3 + $0x38] sm:$0xf]
      %v4010 = vld [vmem:[%s3 + $0x3c] sm:$0xf]
      %v4011 = vld [vmem:[%s3 + $0x40] sm:$0xf]
      %v4012 = vld [vmem:[%s3 + $0x44] sm:$0xf]
      %v4013 = vld [vmem:[%s3 + $0x48] sm:$0xf]
      %v4014 = vld [vmem:[%s3 + $0x4c] sm:$0xf]
      %v4015 = vld [vmem:[%s3 + $0x50] sm:$0xf]
      %v4016 = vld [vmem:[%s3 + $0x54] sm:$0xf]
      %v4017 = vld [vmem:[%s3 + $0x58] sm:$0xf]
      %v4018 = vld [vmem:[%s3 + $0x5c] sm:$0xf]
      %v4019 = vld [vmem:[%s3 + $0x60] sm:$0xf]
      %v4020 = vld [vmem:[%s3 + $0x64] sm:$0xf]
      %v4021 = vld [vmem:[%s3 + $0x68] sm:$0xf]
      %v4022 = vld [vmem:[%s3 + $0x6c] sm:$0xf]
      %v4023 = vld [vmem:[%s3 + $0x70] sm:$0xf]
      %v4024 = vld [vmem:[%s3 + $0x74] sm:$0xf]
      %v4025 = vld [vmem:[%s3 + $0x78] sm:$0xf]
      %v4026 = vld [vmem:[%s3 + $0x7c] sm:$0xf]
      %v4027 = vld [vmem:[%s3 + $0x80] sm:$0xf]
      %v4028 = vld [vmem:[%s3 + $0x84] sm:$0xf]
      %v4029 = vld [vmem:[%s3 + $0x88] sm:$0xf]
      %v4030 = vld [vmem:[%s3 + $0x8c] sm:$0xf]
      %v4031 = vld [vmem:[%s10] sm:$0x1]
      %v4033 = vlaneseq
      %v4034 = vshrl.u32 %v4033, 7
      %v4035 = vsub.s32 0, %v4034
      %v4036 = vrot.slane %v4031, %v4035
      %v4074 = vunpack.c.l.b16 %v3995
      %v4075 = vunpack.c.l.b16 %v3996
      %v4076 = vunpack.c.l.b16 %v3997
      %v4077 = vunpack.c.l.b16 %v3998
      %v4078 = vunpack.c.l.b16 %v3999
      %v4079 = vunpack.c.l.b16 %v4000
      %v4080 = vunpack.c.l.b16 %v4001
      %v4081 = vunpack.c.l.b16 %v4002
      %v4082 = vunpack.c.l.b16 %v4003
      %v4083 = vunpack.c.l.b16 %v4004
      %v4084 = vunpack.c.l.b16 %v4005
      %v4085 = vunpack.c.l.b16 %v4006
      %v4086 = vunpack.c.l.b16 %v4007
      %v4087 = vunpack.c.l.b16 %v4008
      %v4088 = vunpack.c.l.b16 %v4009
      %v4089 = vunpack.c.l.b16 %v4010
      %v4090 = vunpack.c.l.b16 %v4011
      %v4091 = vunpack.c.l.b16 %v4012
      %v4092 = vunpack.c.l.b16 %v4013
      %v4093 = vunpack.c.l.b16 %v4014
      %v4094 = vunpack.c.l.b16 %v4015
      %v4095 = vunpack.c.l.b16 %v4016
      %v4096 = vunpack.c.l.b16 %v4017
      %v4097 = vunpack.c.l.b16 %v4018
      %v4098 = vunpack.c.l.b16 %v4019
      %v4099 = vunpack.c.l.b16 %v4020
      %v4100 = vunpack.c.l.b16 %v4021
      %v4101 = vunpack.c.l.b16 %v4022
      %v4102 = vunpack.c.l.b16 %v4023
      %v4103 = vunpack.c.l.b16 %v4024
      %v4104 = vunpack.c.l.b16 %v4025
      %v4105 = vunpack.c.l.b16 %v4026
      %v4106 = vunpack.c.l.b16 %v4027
      %v4107 = vunpack.c.l.b16 %v4028
      %v4108 = vunpack.c.l.b16 %v4029
      %v4109 = vunpack.c.l.b16 %v4030
      %v4110 = vpack.c.b16 %v4075, %v4074
      %v4111 = vpack.c.b16 %v4077, %v4076
      %v4112 = vpack.c.b16 %v4079, %v4078
      %v4113 = vpack.c.b16 %v4081, %v4080
      %v4114 = vpack.c.b16 %v4083, %v4082
      %v4115 = vpack.c.b16 %v4085, %v4084
      %v4116 = vpack.c.b16 %v4087, %v4086
      %v4117 = vpack.c.b16 %v4089, %v4088
      %v4118 = vpack.c.b16 %v4091, %v4090
      %v4119 = vpack.c.b16 %v4093, %v4092
      %v4120 = vpack.c.b16 %v4095, %v4094
      %v4121 = vpack.c.b16 %v4097, %v4096
      %v4122 = vpack.c.b16 %v4099, %v4098
      %v4123 = vpack.c.b16 %v4101, %v4100
      %v4124 = vpack.c.b16 %v4103, %v4102
      %v4125 = vpack.c.b16 %v4105, %v4104
      %v4126 = vpack.c.b16 %v4107, %v4106
      %v4127 = vpack.c.b16 %v4109, %v4108
      %v4147 = vsel %vm577, %v3994, 0
      %4149 = vmatprep.subr.bf16.mxu0 0
      %4150 = vmatpush1.bf16.msra.mxu0 %v4110
      %4151 = vmatprep.subr.bf16.mxu0 0
      %4152 = vmatpush1.bf16.msra.mxu0 %v4111
      %4153 = vmatprep.subr.bf16.mxu0 0
      %4154 = vmatpush1.bf16.msra.mxu0 %v4112
      %4155 = vmatprep.subr.bf16.mxu0 0
      %4156 = vmatpush1.bf16.msra.mxu0 %v4113
      %4157 = vmatprep.subr.bf16.mxu0 0
      %4158 = vmatpush1.bf16.msra.mxu0 %v4114
      %4159 = vmatprep.subr.bf16.mxu0 0
      %4160 = vmatpush1.bf16.msra.mxu0 %v4115
      %4161 = vmatprep.subr.bf16.mxu0 0
      %4162 = vmatpush1.bf16.msra.mxu0 %v4116
      %4163 = vmatprep.subr.bf16.mxu0 0
      %4164 = vmatpush1.bf16.msra.mxu0 %v4117
      %4165 = vmatprep.subr.bf16.mxu0 0
      %4166 = vmatpush1.bf16.msra.mxu0 %v4118
      %4167 = vmatprep.subr.bf16.mxu0 0
      %4168 = vmatpush1.bf16.msra.mxu0 %v4119
      %4169 = vmatprep.subr.bf16.mxu0 0
      %4170 = vmatpush1.bf16.msra.mxu0 %v4120
      %4171 = vmatprep.subr.bf16.mxu0 0
      %4172 = vmatpush1.bf16.msra.mxu0 %v4121
      %4173 = vmatprep.subr.bf16.mxu0 0
      %4174 = vmatpush1.bf16.msra.mxu0 %v4122
      %4175 = vmatprep.subr.bf16.mxu0 0
      %4176 = vmatpush1.bf16.msra.mxu0 %v4123
      %4177 = vmatprep.subr.bf16.mxu0 0
      %4178 = vmatpush1.bf16.msra.mxu0 %v4124
      %4179 = vmatprep.subr.bf16.mxu0 0
      %4180 = vmatpush1.bf16.msra.mxu0 %v4125
      %4181 = vmatprep.mubr.bf16.mxu0 %v3993
      %4182 = vmatmul.mubr.bf16.gmra.mrb[0].mxu0 %v3992
      %v4183 = vpop.f32.mrb[0].mxu0
      %v4184 = vadd.f32 %v4036, %v4183
      %v4185 = vpop.f32.mrb[0].mxu0
      %v4186 = vpop.f32.mrb[0].mxu0
      %v4187 = vpop.f32.mrb[0].mxu0
      %4188 = vdwg.mxu0
      %4189 = vmatprep.subr.bf16.mxu0 0
      %4190 = vmatpush1.bf16.msra.mxu0 %v4126
      %4191 = vmatprep.subr.bf16.mxu0 0
      %4192 = vmatpush1.bf16.msra.mxu0 %v4127
      %4193 = vmatprep.subr.bf16.mxu0 0
      %4194 = vmatpush1.bf16.msra.mxu0 0
      %4195 = vmatprep.subr.bf16.mxu0 0
      %4196 = vmatpush1.bf16.msra.mxu0 0
      %4197 = vmatprep.subr.bf16.mxu0 0
      %4198 = vmatpush1.bf16.msra.mxu0 0
      %4199 = vmatprep.subr.bf16.mxu0 0
      %4200 = vmatpush1.bf16.msra.mxu0 0
      %4201 = vmatprep.subr.bf16.mxu0 0
      %4202 = vmatpush1.bf16.msra.mxu0 0
      %4203 = vmatprep.subr.bf16.mxu0 0
      %4204 = vmatpush1.bf16.msra.mxu0 0
      %4205 = vmatprep.subr.bf16.mxu0 0
      %4206 = vmatpush1.bf16.msra.mxu0 0
      %4207 = vmatprep.subr.bf16.mxu0 0
      %4208 = vmatpush1.bf16.msra.mxu0 0
      %4209 = vmatprep.subr.bf16.mxu0 0
      %4210 = vmatpush1.bf16.msra.mxu0 0
      %4211 = vmatprep.subr.bf16.mxu0 0
      %4212 = vmatpush1.bf16.msra.mxu0 0
      %4213 = vmatprep.subr.bf16.mxu0 0
      %4214 = vmatpush1.bf16.msra.mxu0 0
      %4215 = vmatprep.subr.bf16.mxu0 0
      %4216 = vmatpush1.bf16.msra.mxu0 0
      %4217 = vmatprep.subr.bf16.mxu0 0
      %4218 = vmatpush1.bf16.msra.mxu0 0
      %4219 = vmatprep.subr.bf16.mxu0 0
      %4220 = vmatpush1.bf16.msra.mxu0 0
      %4221 = vmatprep.mubr.bf16.mxu0 0
      %4222 = vmatmul.mubr.bf16.gmra.mrb[0].mxu0 %v4147
      %v4223 = vpop.f32.mrb[0].mxu0
      %v4224 = vadd.f32 %v4184, %v4223
      %v4225 = vpop.f32.mrb[0].mxu0
      %v4226 = vpop.f32.mrb[0].mxu0
      %v4227 = vpop.f32.mrb[0].mxu0
      %4228 = vdwg.mxu0
      %v4229 = vmul.f32 %v4224, 0.251
      %v4230 = vadd.f32 %v4229, 1.4855
      %v4231 = vmul.f32 %v4230, %v4224
      %v4232 = vadd.f32 %v4231, 3.052
      %v4233 = vmul.f32 %v4232, %v4224
      %v4234 = vadd.f32 %v4233, 2.3235
      %v4235 = vmul.f32 %v4234, %v4224
      %v4236 = vadd.f32 %v4235, 0.6184
      %v4237 = vmul.f32 %v4236, %v4224
      %v4238 = vadd.f32 %v4237, 0.0298
      %v4239 = vand.u32 2147483647, %v4224
      %v4240 = vmul.f32 %v4239, 0.0
      %v4241 = vadd.f32 %v4240, 3.0
      %v4242 = vmul.f32 %v4241, %v4239
      %v4243 = vadd.f32 %v4242, 0.0
      %v4244 = vmul.f32 %v4243, %v4239
      %v4245 = vadd.f32 %v4244, 2.3831
      %v4246 = vmul.f32 %v4245, %v4239
      %v4247 = vadd.f32 %v4246, 1.0
      %v4248 = vrcp.pop %v4247
      %v4249 = vmul.f32 %v4238, %v4248
      %4250 = vst.msk [vmem:[#allocation4 + $0x19] sm:$0xf] %vm2953, %v4249
      %v4251 = vld [vmem:[#allocation4] sm:$0xff]
      %v4252 = vld [vmem:[#allocation4 + $0x8] sm:$0xff]
      %v4253 = vld [vmem:[#allocation4 + $0x10] sm:$0xff]
      %v4254 = vld [vmem:[#allocation4 + $0x18] sm:$0xff]
      %v4255 = vld [vmem:[#allocation4 + $0x20] sm:$0xf]
      %4256 = vst.msk [vmem:[#allocation8] sm:$0xff] %vm608, %v4251
      %4257 = vst.msk [vmem:[#allocation8 + $0x28] sm:$0xff] %vm608, %v4252
      %4258 = vst.msk [vmem:[#allocation8 + $0x50] sm:$0xff] %vm608, %v4253
      %4259 = vst.msk [vmem:[#allocation8 + $0x78] sm:$0xff] %vm608, %v4254
      %4260 = vst.msk [vmem:[#allocation8 + $0xa0] sm:$0xf] %vm2953, %v4255
      %v4261 = vld [vmem:[#allocation4 + $0x1] sm:$0xff]
      %v4262 = vld [vmem:[#allocation4 + $0x9] sm:$0xff]
      %v4263 = vld [vmem:[#allocation4 + $0x11] sm:$0xff]
      %v4264 = vld [vmem:[#allocation4 + $0x19] sm:$0xff]
      %v4265 = vld [vmem:[#allocation4 + $0x21] sm:$0xf]
      %4271 = vrot.lane.b32.xlu0 %v4261, 64
      %v4272 = vpop.permute.xlu0 %4271
      %4273 = vrot.lane.b32.xlu0 %v4262, 64
      %v4274 = vpop.permute.xlu0 %4273
      %4275 = vrot.lane.b32.xlu0 %v4263, 64
      %v4276 = vpop.permute.xlu0 %4275
      %4277 = vrot.lane.b32.xlu0 %v4264, 64
      %v4278 = vpop.permute.xlu0 %4277
      %4279 = vrot.lane.b32.xlu0 %v4265, 64
      %v4280 = vpop.permute.xlu0 %4279
      %vm4286 = vcmask 1048064
      %4287 = vst.msk [vmem:[#allocation8] sm:$0xff] %vm4286, %v4272
      %4288 = vst.msk [vmem:[#allocation8 + $0x28] sm:$0xff] %vm4286, %v4274
      %4289 = vst.msk [vmem:[#allocation8 + $0x50] sm:$0xff] %vm4286, %v4276
      %4290 = vst.msk [vmem:[#allocation8 + $0x78] sm:$0xff] %vm4286, %v4278
      %vm4291 = vcmask 1043968
      %4292 = vst.msk [vmem:[#allocation8 + $0xa0] sm:$0xf] %vm4291, %v4280
      %v4293 = vld [vmem:[#allocation4 + $0x2] sm:$0xff]
      %v4294 = vld [vmem:[#allocation4 + $0xa] sm:$0xff]
      %v4295 = vld [vmem:[#allocation4 + $0x12] sm:$0xff]
      %v4296 = vld [vmem:[#allocation4 + $0x1a] sm:$0xff]
      %v4297 = vld [vmem:[#allocation4 + $0x22] sm:$0xf]
      %4298 = vst.msk [vmem:[#allocation8 + $0x8] sm:$0xff] %vm608, %v4293
      %4299 = vst.msk [vmem:[#allocation8 + $0x30] sm:$0xff] %vm608, %v4294
      %4300 = vst.msk [vmem:[#allocation8 + $0x58] sm:$0xff] %vm608, %v4295
      %4301 = vst.msk [vmem:[#allocation8 + $0x80] sm:$0xff] %vm608, %v4296
      %4302 = vst.msk [vmem:[#allocation8 + $0xa8] sm:$0xf] %vm2953, %v4297
      %v4303 = vld [vmem:[#allocation4 + $0x6] sm:$0xff]
      %v4304 = vld [vmem:[#allocation4 + $0xe] sm:$0xff]
      %v4305 = vld [vmem:[#allocation4 + $0x16] sm:$0xff]
      %v4306 = vld [vmem:[#allocation4 + $0x1e] sm:$0xff]
      %v4307 = vld [vmem:[#allocation4 + $0x26] sm:$0xf]
      %4313 = vrot.lane.b32.xlu0 %v4303, 64
      %v4314 = vpop.permute.xlu0 %4313
      %4315 = vrot.lane.b32.xlu0 %v4304, 64
      %v4316 = vpop.permute.xlu0 %4315
      %4317 = vrot.lane.b32.xlu0 %v4305, 64
      %v4318 = vpop.permute.xlu0 %4317
      %4319 = vrot.lane.b32.xlu0 %v4306, 64
      %v4320 = vpop.permute.xlu0 %4319
      %4321 = vrot.lane.b32.xlu0 %v4307, 64
      %v4322 = vpop.permute.xlu0 %4321
      %4328 = vst.msk [vmem:[#allocation8 + $0x8] sm:$0xff] %vm4286, %v4314
      %4329 = vst.msk [vmem:[#allocation8 + $0x30] sm:$0xff] %vm4286, %v4316
      %4330 = vst.msk [vmem:[#allocation8 + $0x58] sm:$0xff] %vm4286, %v4318
      %4331 = vst.msk [vmem:[#allocation8 + $0x80] sm:$0xff] %vm4286, %v4320
      %4332 = vst.msk [vmem:[#allocation8 + $0xa8] sm:$0xf] %vm4291, %v4322
      %v4333 = vld [vmem:[#allocation4 + $0x7] sm:$0xff]
      %v4334 = vld [vmem:[#allocation4 + $0xf] sm:$0xff]
      %v4335 = vld [vmem:[#allocation4 + $0x17] sm:$0xff]
      %v4336 = vld [vmem:[#allocation4 + $0x1f] sm:$0xff]
      %v4337 = vld [vmem:[#allocation4 + $0x27] sm:$0xf]
      %4338 = vst.msk [vmem:[#allocation8 + $0x10] sm:$0xff] %vm608, %v4333
      %4339 = vst.msk [vmem:[#allocation8 + $0x38] sm:$0xff] %vm608, %v4334
      %4340 = vst.msk [vmem:[#allocation8 + $0x60] sm:$0xff] %vm608, %v4335
      %4341 = vst.msk [vmem:[#allocation8 + $0x88] sm:$0xff] %vm608, %v4336
      %4342 = vst.msk [vmem:[#allocation8 + $0xb0] sm:$0xf] %vm2953, %v4337
      %v4343 = vld [vmem:[#allocation4 + $0x8] sm:$0xff]
      %v4344 = vld [vmem:[#allocation4 + $0x10] sm:$0xff]
      %v4345 = vld [vmem:[#allocation4 + $0x18] sm:$0xff]
      %v4346 = vld [vmem:[#allocation4 + $0x20] sm:$0xff]
      %v4347 = vld [vmem:[#allocation4 + $0x28] sm:$0xf]
      %4353 = vrot.lane.b32.xlu0 %v4343, 64
      %v4354 = vpop.permute.xlu0 %4353
      %4355 = vrot.lane.b32.xlu0 %v4344, 64
      %v4356 = vpop.permute.xlu0 %4355
      %4357 = vrot.lane.b32.xlu0 %v4345, 64
      %v4358 = vpop.permute.xlu0 %4357
      %4359 = vrot.lane.b32.xlu0 %v4346, 64
      %v4360 = vpop.permute.xlu0 %4359
      %4361 = vrot.lane.b32.xlu0 %v4347, 64
      %v4362 = vpop.permute.xlu0 %4361
      %4368 = vst.msk [vmem:[#allocation8 + $0x10] sm:$0xff] %vm4286, %v4354
      %4369 = vst.msk [vmem:[#allocation8 + $0x38] sm:$0xff] %vm4286, %v4356
      %4370 = vst.msk [vmem:[#allocation8 + $0x60] sm:$0xff] %vm4286, %v4358
      %4371 = vst.msk [vmem:[#allocation8 + $0x88] sm:$0xff] %vm4286, %v4360
      %4372 = vst.msk [vmem:[#allocation8 + $0xb0] sm:$0xf] %vm4291, %v4362
      %v4373 = vld [vmem:[#allocation4 + $0xc] sm:$0xff]
      %v4374 = vld [vmem:[#allocation4 + $0x14] sm:$0xff]
      %v4375 = vld [vmem:[#allocation4 + $0x1c] sm:$0xff]
      %v4376 = vld [vmem:[#allocation4 + $0x24] sm:$0xff]
      %v4377 = vld [vmem:[#allocation4 + $0x2c] sm:$0xf]
      %4378 = vst.msk [vmem:[#allocation8 + $0x18] sm:$0xff] %vm608, %v4373
      %4379 = vst.msk [vmem:[#allocation8 + $0x40] sm:$0xff] %vm608, %v4374
      %4380 = vst.msk [vmem:[#allocation8 + $0x68] sm:$0xff] %vm608, %v4375
      %4381 = vst.msk [vmem:[#allocation8 + $0x90] sm:$0xff] %vm608, %v4376
      %4382 = vst.msk [vmem:[#allocation8 + $0xb8] sm:$0xf] %vm2953, %v4377
      %v4383 = vld [vmem:[#allocation4 + $0xd] sm:$0xff]
      %v4384 = vld [vmem:[#allocation4 + $0x15] sm:$0xff]
      %v4385 = vld [vmem:[#allocation4 + $0x1d] sm:$0xff]
      %v4386 = vld [vmem:[#allocation4 + $0x25] sm:$0xff]
      %v4387 = vld [vmem:[#allocation4 + $0x2d] sm:$0xf]
      %4393 = vrot.lane.b32.xlu0 %v4383, 64
      %v4394 = vpop.permute.xlu0 %4393
      %4395 = vrot.lane.b32.xlu0 %v4384, 64
      %v4396 = vpop.permute.xlu0 %4395
      %4397 = vrot.lane.b32.xlu0 %v4385, 64
      %v4398 = vpop.permute.xlu0 %4397
      %4399 = vrot.lane.b32.xlu0 %v4386, 64
      %v4400 = vpop.permute.xlu0 %4399
      %4401 = vrot.lane.b32.xlu0 %v4387, 64
      %v4402 = vpop.permute.xlu0 %4401
      %4408 = vst.msk [vmem:[#allocation8 + $0x18] sm:$0xff] %vm4286, %v4394
      %4409 = vst.msk [vmem:[#allocation8 + $0x40] sm:$0xff] %vm4286, %v4396
      %4410 = vst.msk [vmem:[#allocation8 + $0x68] sm:$0xff] %vm4286, %v4398
      %4411 = vst.msk [vmem:[#allocation8 + $0x90] sm:$0xff] %vm4286, %v4400
      %4412 = vst.msk [vmem:[#allocation8 + $0xb8] sm:$0xf] %vm4291, %v4402
      %v4413 = vld [vmem:[#allocation4 + $0xe] sm:$0xff]
      %v4414 = vld [vmem:[#allocation4 + $0x16] sm:$0xff]
      %v4415 = vld [vmem:[#allocation4 + $0x1e] sm:$0xff]
      %v4416 = vld [vmem:[#allocation4 + $0x26] sm:$0xff]
      %v4417 = vld [vmem:[#allocation4 + $0x2e] sm:$0xf]
      %4418 = vst.msk [vmem:[#allocation8 + $0x20] sm:$0xff] %vm608, %v4413
      %4419 = vst.msk [vmem:[#allocation8 + $0x48] sm:$0xff] %vm608, %v4414
      %4420 = vst.msk [vmem:[#allocation8 + $0x70] sm:$0xff] %vm608, %v4415
      %4421 = vst.msk [vmem:[#allocation8 + $0x98] sm:$0xff] %vm608, %v4416
      %4422 = vst.msk [vmem:[#allocation8 + $0xc0] sm:$0xf] %vm2953, %v4417
      %v4423 = vld [vmem:[#allocation8] sm:$0xff]
      %v4424 = vld [vmem:[#allocation8 + $0x8] sm:$0xff]
      %v4425 = vld [vmem:[#allocation8 + $0x10] sm:$0xff]
      %v4426 = vld [vmem:[#allocation8 + $0x18] sm:$0xff]
      %v4427 = vld [vmem:[#allocation8 + $0x20] sm:$0xff]
      %v4428 = vld [vmem:[#allocation8 + $0x28] sm:$0xff]
      %v4429 = vld [vmem:[#allocation8 + $0x30] sm:$0xff]
      %v4430 = vld [vmem:[#allocation8 + $0x38] sm:$0xff]
      %v4431 = vld [vmem:[#allocation8 + $0x40] sm:$0xff]
      %v4432 = vld [vmem:[#allocation8 + $0x48] sm:$0xff]
      %v4433 = vld [vmem:[#allocation8 + $0x50] sm:$0xff]
      %v4434 = vld [vmem:[#allocation8 + $0x58] sm:$0xff]
      %v4435 = vld [vmem:[#allocation8 + $0x60] sm:$0xff]
      %v4436 = vld [vmem:[#allocation8 + $0x68] sm:$0xff]
      %v4437 = vld [vmem:[#allocation8 + $0x70] sm:$0xff]
      %v4438 = vld [vmem:[#allocation8 + $0x78] sm:$0xff]
      %v4439 = vld [vmem:[#allocation8 + $0x80] sm:$0xff]
      %v4440 = vld [vmem:[#allocation8 + $0x88] sm:$0xff]
      %v4441 = vld [vmem:[#allocation8 + $0x90] sm:$0xff]
      %v4442 = vld [vmem:[#allocation8 + $0x98] sm:$0xff]
      %v4443 = vld [vmem:[#allocation8 + $0xa0] sm:$0xf]
      %v4444 = vld [vmem:[#allocation8 + $0xa8] sm:$0xf]
      %v4445 = vld [vmem:[#allocation8 + $0xb0] sm:$0xf]
      %v4446 = vld [vmem:[#allocation8 + $0xb8] sm:$0xf]
      %v4447 = vld [vmem:[#allocation8 + $0xc0] sm:$0xf]
      %v4448 = vpack.c.bf16 %v4428, %v4423
      %v4449 = vpack.c.bf16 %v4429, %v4424
      %v4450 = vpack.c.bf16 %v4430, %v4425
      %v4451 = vpack.c.bf16 %v4431, %v4426
      %v4452 = vpack.c.bf16 %v4432, %v4427
      %v4453 = vpack.c.bf16 %v4438, %v4433
      %v4454 = vpack.c.bf16 %v4439, %v4434
      %v4455 = vpack.c.bf16 %v4440, %v4435
      %v4456 = vpack.c.bf16 %v4441, %v4436
      %v4457 = vpack.c.bf16 %v4442, %v4437
      %v4458 = vpack.c.bf16 %v4443, %v4443
      %v4459 = vpack.c.bf16 %v4444, %v4444
      %v4460 = vpack.c.bf16 %v4445, %v4445
      %v4461 = vpack.c.bf16 %v4446, %v4446
      %v4462 = vpack.c.bf16 %v4447, %v4447
      %v4463 = vld [vmem:[%s4] sm:$0xf]
      %v4464 = vld [vmem:[%s4 + $0x4] sm:$0xf]
      %v4465 = vld [vmem:[%s4 + $0x8] sm:$0xf]
      %v4466 = vld [vmem:[%s4 + $0xc] sm:$0xf]
      %v4467 = vld [vmem:[%s4 + $0x10] sm:$0xf]
      %v4468 = vld [vmem:[%s4 + $0x14] sm:$0xf]
      %v4469 = vld [vmem:[%s4 + $0x18] sm:$0xf]
      %v4470 = vld [vmem:[%s4 + $0x1c] sm:$0xf]
      %v4471 = vld [vmem:[%s4 + $0x20] sm:$0xf]
      %v4472 = vld [vmem:[%s4 + $0x24] sm:$0xf]
      %v4473 = vld [vmem:[%s4 + $0x28] sm:$0xf]
      %v4474 = vld [vmem:[%s4 + $0x2c] sm:$0xf]
      %v4475 = vld [vmem:[%s4 + $0x30] sm:$0xf]
      %v4476 = vld [vmem:[%s4 + $0x34] sm:$0xf]
      %v4477 = vld [vmem:[%s4 + $0x38] sm:$0xf]
      %v4478 = vld [vmem:[%s4 + $0x3c] sm:$0xf]
      %v4479 = vld [vmem:[%s4 + $0x40] sm:$0xf]
      %v4480 = vld [vmem:[%s4 + $0x44] sm:$0xf]
      %v4481 = vld [vmem:[%s4 + $0x48] sm:$0xf]
      %v4482 = vld [vmem:[%s4 + $0x4c] sm:$0xf]
      %v4483 = vld [vmem:[%s4 + $0x50] sm:$0xf]
      %v4484 = vld [vmem:[%s4 + $0x54] sm:$0xf]
      %v4485 = vld [vmem:[%s4 + $0x58] sm:$0xf]
      %v4486 = vld [vmem:[%s4 + $0x5c] sm:$0xf]
      %v4487 = vld [vmem:[%s4 + $0x60] sm:$0xf]
      %v4488 = vld [vmem:[%s4 + $0x64] sm:$0xf]
      %v4489 = vld [vmem:[%s4 + $0x68] sm:$0xf]
      %v4490 = vld [vmem:[%s4 + $0x6c] sm:$0xf]
      %v4491 = vld [vmem:[%s4 + $0x70] sm:$0xf]
      %v4492 = vld [vmem:[%s4 + $0x74] sm:$0xf]
      %v4493 = vld [vmem:[%s4 + $0x78] sm:$0xf]
      %v4494 = vld [vmem:[%s4 + $0x7c] sm:$0xf]
      %v4495 = vld [vmem:[%s4 + $0x80] sm:$0xf]
      %v4496 = vld [vmem:[%s4 + $0x84] sm:$0xf]
      %v4497 = vld [vmem:[%s4 + $0x88] sm:$0xf]
      %v4498 = vld [vmem:[%s4 + $0x8c] sm:$0xf]
      %v4499 = vld [vmem:[%s4 + $0x90] sm:$0xf]
      %v4500 = vld [vmem:[%s4 + $0x94] sm:$0xf]
      %v4501 = vld [vmem:[%s4 + $0x98] sm:$0xf]
      %v4502 = vld [vmem:[%s4 + $0x9c] sm:$0xf]
      %v4503 = vld [vmem:[%s4 + $0xa0] sm:$0xf]
      %v4504 = vld [vmem:[%s4 + $0xa4] sm:$0xf]
      %v4505 = vld [vmem:[%s4 + $0xa8] sm:$0xf]
      %v4506 = vld [vmem:[%s4 + $0xac] sm:$0xf]
      %v4507 = vld [vmem:[%s4 + $0xb0] sm:$0xf]
      %v4508 = vld [vmem:[%s4 + $0xb4] sm:$0xf]
      %v4509 = vld [vmem:[%s4 + $0xb8] sm:$0xf]
      %v4510 = vld [vmem:[%s4 + $0xbc] sm:$0xf]
      %v4511 = vld [vmem:[%s4 + $0xc0] sm:$0xf]
      %v4512 = vld [vmem:[%s4 + $0xc4] sm:$0xf]
      %v4513 = vld [vmem:[%s4 + $0xc8] sm:$0xf]
      %v4514 = vld [vmem:[%s4 + $0xcc] sm:$0xf]
      %v4515 = vld [vmem:[%s4 + $0xd0] sm:$0xf]
      %v4516 = vld [vmem:[%s4 + $0xd4] sm:$0xf]
      %v4517 = vld [vmem:[%s4 + $0xd8] sm:$0xf]
      %v4518 = vld [vmem:[%s4 + $0xdc] sm:$0xf]
      %v4519 = vld [vmem:[%s4 + $0xe0] sm:$0xf]
      %v4520 = vld [vmem:[%s4 + $0xe4] sm:$0xf]
      %v4521 = vld [vmem:[%s4 + $0xe8] sm:$0xf]
      %v4522 = vld [vmem:[%s4 + $0xec] sm:$0xf]
      %v4523 = vld [vmem:[%s4 + $0xf0] sm:$0xf]
      %v4524 = vld [vmem:[%s4 + $0xf4] sm:$0xf]
      %v4525 = vld [vmem:[%s4 + $0xf8] sm:$0xf]
      %v4526 = vld [vmem:[%s4 + $0xfc] sm:$0xf]
      %v4527 = vld [vmem:[%s4 + $0x100] sm:$0xf]
      %v4528 = vld [vmem:[%s4 + $0x104] sm:$0xf]
      %v4529 = vld [vmem:[%s4 + $0x108] sm:$0xf]
      %v4530 = vld [vmem:[%s4 + $0x10c] sm:$0xf]
      %v4531 = vld [vmem:[%s4 + $0x110] sm:$0xf]
      %v4532 = vld [vmem:[%s4 + $0x114] sm:$0xf]
      %v4533 = vld [vmem:[%s4 + $0x118] sm:$0xf]
      %v4534 = vld [vmem:[%s4 + $0x11c] sm:$0xf]
      %v4535 = vld [vmem:[%s11] sm:$0x1]
      %v4537 = vlaneseq
      %v4538 = vshrl.u32 %v4537, 7
      %v4539 = vsub.s32 0, %v4538
      %v4540 = vrot.slane %v4535, %v4539
      %v4614 = vunpack.c.l.b16 %v4463
      %v4615 = vunpack.c.l.b16 %v4464
      %v4616 = vunpack.c.l.b16 %v4465
      %v4617 = vunpack.c.l.b16 %v4466
      %v4618 = vunpack.c.l.b16 %v4467
      %v4619 = vunpack.c.l.b16 %v4468
      %v4620 = vunpack.c.l.b16 %v4469
      %v4621 = vunpack.c.l.b16 %v4470
      %v4622 = vunpack.c.l.b16 %v4471
      %v4623 = vunpack.c.l.b16 %v4472
      %v4624 = vunpack.c.l.b16 %v4473
      %v4625 = vunpack.c.l.b16 %v4474
      %v4626 = vunpack.c.l.b16 %v4475
      %v4627 = vunpack.c.l.b16 %v4476
      %v4628 = vunpack.c.l.b16 %v4477
      %v4629 = vunpack.c.l.b16 %v4478
      %v4630 = vunpack.c.l.b16 %v4479
      %v4631 = vunpack.c.l.b16 %v4480
      %v4632 = vunpack.c.l.b16 %v4481
      %v4633 = vunpack.c.l.b16 %v4482
      %v4634 = vunpack.c.l.b16 %v4483
      %v4635 = vunpack.c.l.b16 %v4484
      %v4636 = vunpack.c.l.b16 %v4485
      %v4637 = vunpack.c.l.b16 %v4486
      %v4638 = vunpack.c.l.b16 %v4487
      %v4639 = vunpack.c.l.b16 %v4488
      %v4640 = vunpack.c.l.b16 %v4489
      %v4641 = vunpack.c.l.b16 %v4490
      %v4642 = vunpack.c.l.b16 %v4491
      %v4643 = vunpack.c.l.b16 %v4492
      %v4644 = vunpack.c.l.b16 %v4493
      %v4645 = vunpack.c.l.b16 %v4494
      %v4646 = vunpack.c.l.b16 %v4495
      %v4647 = vunpack.c.l.b16 %v4496
      %v4648 = vunpack.c.l.b16 %v4497
      %v4649 = vunpack.c.l.b16 %v4498
      %v4650 = vunpack.c.l.b16 %v4499
      %v4651 = vunpack.c.l.b16 %v4500
      %v4652 = vunpack.c.l.b16 %v4501
      %v4653 = vunpack.c.l.b16 %v4502
      %v4654 = vunpack.c.l.b16 %v4503
      %v4655 = vunpack.c.l.b16 %v4504
      %v4656 = vunpack.c.l.b16 %v4505
      %v4657 = vunpack.c.l.b16 %v4506
      %v4658 = vunpack.c.l.b16 %v4507
      %v4659 = vunpack.c.l.b16 %v4508
      %v4660 = vunpack.c.l.b16 %v4509
      %v4661 = vunpack.c.l.b16 %v4510
      %v4662 = vunpack.c.l.b16 %v4511
      %v4663 = vunpack.c.l.b16 %v4512
      %v4664 = vunpack.c.l.b16 %v4513
      %v4665 = vunpack.c.l.b16 %v4514
      %v4666 = vunpack.c.l.b16 %v4515
      %v4667 = vunpack.c.l.b16 %v4516
      %v4668 = vunpack.c.l.b16 %v4517
      %v4669 = vunpack.c.l.b16 %v4518
      %v4670 = vunpack.c.l.b16 %v4519
      %v4671 = vunpack.c.l.b16 %v4520
      %v4672 = vunpack.c.l.b16 %v4521
      %v4673 = vunpack.c.l.b16 %v4522
      %v4674 = vunpack.c.l.b16 %v4523
      %v4675 = vunpack.c.l.b16 %v4524
      %v4676 = vunpack.c.l.b16 %v4525
      %v4677 = vunpack.c.l.b16 %v4526
      %v4678 = vunpack.c.l.b16 %v4527
      %v4679 = vunpack.c.l.b16 %v4528
      %v4680 = vunpack.c.l.b16 %v4529
      %v4681 = vunpack.c.l.b16 %v4530
      %v4682 = vunpack.c.l.b16 %v4531
      %v4683 = vunpack.c.l.b16 %v4532
      %v4684 = vunpack.c.l.b16 %v4533
      %v4685 = vunpack.c.l.b16 %v4534
      %v4686 = vpack.c.b16 %v4615, %v4614
      %v4687 = vpack.c.b16 %v4617, %v4616
      %v4688 = vpack.c.b16 %v4619, %v4618
      %v4689 = vpack.c.b16 %v4621, %v4620
      %v4690 = vpack.c.b16 %v4623, %v4622
      %v4691 = vpack.c.b16 %v4625, %v4624
      %v4692 = vpack.c.b16 %v4627, %v4626
      %v4693 = vpack.c.b16 %v4629, %v4628
      %v4694 = vpack.c.b16 %v4631, %v4630
      %v4695 = vpack.c.b16 %v4633, %v4632
      %v4696 = vpack.c.b16 %v4635, %v4634
      %v4697 = vpack.c.b16 %v4637, %v4636
      %v4698 = vpack.c.b16 %v4639, %v4638
      %v4699 = vpack.c.b16 %v4641, %v4640
      %v4700 = vpack.c.b16 %v4643, %v4642
      %v4701 = vpack.c.b16 %v4645, %v4644
      %v4702 = vpack.c.b16 %v4647, %v4646
      %v4703 = vpack.c.b16 %v4649, %v4648
      %v4704 = vpack.c.b16 %v4651, %v4650
      %v4705 = vpack.c.b16 %v4653, %v4652
      %v4706 = vpack.c.b16 %v4655, %v4654
      %v4707 = vpack.c.b16 %v4657, %v4656
      %v4708 = vpack.c.b16 %v4659, %v4658
      %v4709 = vpack.c.b16 %v4661, %v4660
      %v4710 = vpack.c.b16 %v4663, %v4662
      %v4711 = vpack.c.b16 %v4665, %v4664
      %v4712 = vpack.c.b16 %v4667, %v4666
      %v4713 = vpack.c.b16 %v4669, %v4668
      %v4714 = vpack.c.b16 %v4671, %v4670
      %v4715 = vpack.c.b16 %v4673, %v4672
      %v4716 = vpack.c.b16 %v4675, %v4674
      %v4717 = vpack.c.b16 %v4677, %v4676
      %v4718 = vpack.c.b16 %v4679, %v4678
      %v4719 = vpack.c.b16 %v4681, %v4680
      %v4720 = vpack.c.b16 %v4683, %v4682
      %v4721 = vpack.c.b16 %v4685, %v4684
      %v4759 = vsel %vm608, %v4452, 0
      %v4762 = vsel %vm608, %v4457, 0
      %v4765 = vsel %vm608, %v4462, 0
      %4767 = vmatprep.subr.bf16.mxu0 0
      %4768 = vmatpush1.bf16.msra.mxu0 %v4686
      %4769 = vmatprep.subr.bf16.mxu0 0
      %4770 = vmatpush1.bf16.msra.mxu0 %v4687
      %4771 = vmatprep.subr.bf16.mxu0 0
      %4772 = vmatpush1.bf16.msra.mxu0 %v4688
      %4773 = vmatprep.subr.bf16.mxu0 0
      %4774 = vmatpush1.bf16.msra.mxu0 %v4689
      %4775 = vmatprep.subr.bf16.mxu0 0
      %4776 = vmatpush1.bf16.msra.mxu0 %v4690
      %4777 = vmatprep.subr.bf16.mxu0 0
      %4778 = vmatpush1.bf16.msra.mxu0 %v4691
      %4779 = vmatprep.subr.bf16.mxu0 0
      %4780 = vmatpush1.bf16.msra.mxu0 %v4692
      %4781 = vmatprep.subr.bf16.mxu0 0
      %4782 = vmatpush1.bf16.msra.mxu0 %v4693
      %4783 = vmatprep.subr.bf16.mxu0 0
      %4784 = vmatpush1.bf16.msra.mxu0 %v4694
      %4785 = vmatprep.subr.bf16.mxu0 0
      %4786 = vmatpush1.bf16.msra.mxu0 %v4695
      %4787 = vmatprep.subr.bf16.mxu0 0
      %4788 = vmatpush1.bf16.msra.mxu0 %v4696
      %4789 = vmatprep.subr.bf16.mxu0 0
      %4790 = vmatpush1.bf16.msra.mxu0 %v4697
      %4791 = vmatprep.subr.bf16.mxu0 0
      %4792 = vmatpush1.bf16.msra.mxu0 %v4698
      %4793 = vmatprep.subr.bf16.mxu0 0
      %4794 = vmatpush1.bf16.msra.mxu0 %v4699
      %4795 = vmatprep.subr.bf16.mxu0 0
      %4796 = vmatpush1.bf16.msra.mxu0 %v4700
      %4797 = vmatprep.subr.bf16.mxu0 0
      %4798 = vmatpush1.bf16.msra.mxu0 %v4701
      %4799 = vmatprep.mubr.bf16.mxu0 %v4449
      %4800 = vmatmul.mubr.bf16.gmra.mrb[0].mxu0 %v4448
      %v4801 = vpop.f32.mrb[0].mxu0
      %v4802 = vadd.f32 %v4540, %v4801
      %v4803 = vpop.f32.mrb[0].mxu0
      %v4804 = vpop.f32.mrb[0].mxu0
      %v4805 = vadd.f32 %v4540, %v4804
      %v4806 = vpop.f32.mrb[0].mxu0
      %4807 = vmatprep.mubr.bf16.mxu0 %v4454
      %4808 = vmatmul.mubr.bf16.gmra.mrb[0].mxu0 %v4453
      %v4809 = vpop.f32.mrb[0].mxu0
      %v4810 = vadd.f32 %v4540, %v4809
      %v4811 = vpop.f32.mrb[0].mxu0
      %v4812 = vpop.f32.mrb[0].mxu0
      %v4813 = vadd.f32 %v4540, %v4812
      %v4814 = vpop.f32.mrb[0].mxu0
      %4815 = vmatprep.mubr.bf16.mxu0 %v4459
      %4816 = vmatmul.mubr.bf16.gmra.mrb[0].mxu0 %v4458
      %v4817 = vpop.f32.mrb[0].mxu0
      %v4818 = vadd.f32 %v4540, %v4817
      %v4819 = vpop.f32.mrb[0].mxu0
      %v4820 = vpop.f32.mrb[0].mxu0
      %v4821 = vpop.f32.mrb[0].mxu0
      %4822 = vdwg.mxu0
      %4823 = vmatprep.subr.bf16.mxu0 0
      %4824 = vmatpush1.bf16.msra.mxu0 %v4702
      %4825 = vmatprep.subr.bf16.mxu0 0
      %4826 = vmatpush1.bf16.msra.mxu0 %v4703
      %4827 = vmatprep.subr.bf16.mxu0 0
      %4828 = vmatpush1.bf16.msra.mxu0 %v4704
      %4829 = vmatprep.subr.bf16.mxu0 0
      %4830 = vmatpush1.bf16.msra.mxu0 %v4705
      %4831 = vmatprep.subr.bf16.mxu0 0
      %4832 = vmatpush1.bf16.msra.mxu0 %v4706
      %4833 = vmatprep.subr.bf16.mxu0 0
      %4834 = vmatpush1.bf16.msra.mxu0 %v4707
      %4835 = vmatprep.subr.bf16.mxu0 0
      %4836 = vmatpush1.bf16.msra.mxu0 %v4708
      %4837 = vmatprep.subr.bf16.mxu0 0
      %4838 = vmatpush1.bf16.msra.mxu0 %v4709
      %4839 = vmatprep.subr.bf16.mxu0 0
      %4840 = vmatpush1.bf16.msra.mxu0 %v4710
      %4841 = vmatprep.subr.bf16.mxu0 0
      %4842 = vmatpush1.bf16.msra.mxu0 %v4711
      %4843 = vmatprep.subr.bf16.mxu0 0
      %4844 = vmatpush1.bf16.msra.mxu0 %v4712
      %4845 = vmatprep.subr.bf16.mxu0 0
      %4846 = vmatpush1.bf16.msra.mxu0 %v4713
      %4847 = vmatprep.subr.bf16.mxu0 0
      %4848 = vmatpush1.bf16.msra.mxu0 %v4714
      %4849 = vmatprep.subr.bf16.mxu0 0
      %4850 = vmatpush1.bf16.msra.mxu0 %v4715
      %4851 = vmatprep.subr.bf16.mxu0 0
      %4852 = vmatpush1.bf16.msra.mxu0 %v4716
      %4853 = vmatprep.subr.bf16.mxu0 0
      %4854 = vmatpush1.bf16.msra.mxu0 %v4717
      %4855 = vmatprep.mubr.bf16.mxu0 %v4451
      %4856 = vmatmul.mubr.bf16.gmra.mrb[0].mxu0 %v4450
      %v4857 = vpop.f32.mrb[0].mxu0
      %v4858 = vadd.f32 %v4802, %v4857
      %v4859 = vpop.f32.mrb[0].mxu0
      %v4860 = vpop.f32.mrb[0].mxu0
      %v4861 = vadd.f32 %v4805, %v4860
      %v4862 = vpop.f32.mrb[0].mxu0
      %4863 = vmatprep.mubr.bf16.mxu0 %v4456
      %4864 = vmatmul.mubr.bf16.gmra.mrb[0].mxu0 %v4455
      %v4865 = vpop.f32.mrb[0].mxu0
      %v4866 = vadd.f32 %v4810, %v4865
      %v4867 = vpop.f32.mrb[0].mxu0
      %v4868 = vpop.f32.mrb[0].mxu0
      %v4869 = vadd.f32 %v4813, %v4868
      %v4870 = vpop.f32.mrb[0].mxu0
      %4871 = vmatprep.mubr.bf16.mxu0 %v4461
      %4872 = vmatmul.mubr.bf16.gmra.mrb[0].mxu0 %v4460
      %v4873 = vpop.f32.mrb[0].mxu0
      %v4874 = vadd.f32 %v4818, %v4873
      %v4875 = vpop.f32.mrb[0].mxu0
      %v4876 = vpop.f32.mrb[0].mxu0
      %v4877 = vpop.f32.mrb[0].mxu0
      %4878 = vdwg.mxu0
      %4879 = vmatprep.subr.bf16.mxu0 0
      %4880 = vmatpush1.bf16.msra.mxu0 %v4718
      %4881 = vmatprep.subr.bf16.mxu0 0
      %4882 = vmatpush1.bf16.msra.mxu0 %v4719
      %4883 = vmatprep.subr.bf16.mxu0 0
      %4884 = vmatpush1.bf16.msra.mxu0 %v4720
      %4885 = vmatprep.subr.bf16.mxu0 0
      %4886 = vmatpush1.bf16.msra.mxu0 %v4721
      %4887 = vmatprep.subr.bf16.mxu0 0
      %4888 = vmatpush1.bf16.msra.mxu0 0
      %4889 = vmatprep.subr.bf16.mxu0 0
      %4890 = vmatpush1.bf16.msra.mxu0 0
      %4891 = vmatprep.subr.bf16.mxu0 0
      %4892 = vmatpush1.bf16.msra.mxu0 0
      %4893 = vmatprep.subr.bf16.mxu0 0
      %4894 = vmatpush1.bf16.msra.mxu0 0
      %4895 = vmatprep.subr.bf16.mxu0 0
      %4896 = vmatpush1.bf16.msra.mxu0 0
      %4897 = vmatprep.subr.bf16.mxu0 0
      %4898 = vmatpush1.bf16.msra.mxu0 0
      %4899 = vmatprep.subr.bf16.mxu0 0
      %4900 = vmatpush1.bf16.msra.mxu0 0
      %4901 = vmatprep.subr.bf16.mxu0 0
      %4902 = vmatpush1.bf16.msra.mxu0 0
      %4903 = vmatprep.subr.bf16.mxu0 0
      %4904 = vmatpush1.bf16.msra.mxu0 0
      %4905 = vmatprep.subr.bf16.mxu0 0
      %4906 = vmatpush1.bf16.msra.mxu0 0
      %4907 = vmatprep.subr.bf16.mxu0 0
      %4908 = vmatpush1.bf16.msra.mxu0 0
      %4909 = vmatprep.subr.bf16.mxu0 0
      %4910 = vmatpush1.bf16.msra.mxu0 0
      %4911 = vmatprep.mubr.bf16.mxu0 0
      %4912 = vmatmul.mubr.bf16.gmra.mrb[0].mxu0 %v4759
      %v4913 = vpop.f32.mrb[0].mxu0
      %v4914 = vadd.f32 %v4858, %v4913
      %v4915 = vpop.f32.mrb[0].mxu0
      %v4916 = vpop.f32.mrb[0].mxu0
      %v4917 = vadd.f32 %v4861, %v4916
      %v4918 = vpop.f32.mrb[0].mxu0
      %4919 = vmatprep.mubr.bf16.mxu0 0
      %4920 = vmatmul.mubr.bf16.gmra.mrb[0].mxu0 %v4762
      %v4921 = vpop.f32.mrb[0].mxu0
      %v4922 = vadd.f32 %v4866, %v4921
      %v4923 = vpop.f32.mrb[0].mxu0
      %v4924 = vpop.f32.mrb[0].mxu0
      %v4925 = vadd.f32 %v4869, %v4924
      %v4926 = vpop.f32.mrb[0].mxu0
      %4927 = vmatprep.mubr.bf16.mxu0 0
      %4928 = vmatmul.mubr.bf16.gmra.mrb[0].mxu0 %v4765
      %v4929 = vpop.f32.mrb[0].mxu0
      %v4930 = vadd.f32 %v4874, %v4929
      %v4931 = vpop.f32.mrb[0].mxu0
      %v4932 = vpop.f32.mrb[0].mxu0
      %v4933 = vpop.f32.mrb[0].mxu0
      %4934 = vdwg.mxu0
      %v4935 = vmul.f32 %v4914, 0.251
      %v4936 = vmul.f32 %v4917, 0.251
      %v4937 = vmul.f32 %v4922, 0.251
      %v4938 = vmul.f32 %v4925, 0.251
      %v4939 = vmul.f32 %v4930, 0.251
      %v4940 = vadd.f32 %v4935, 1.4855
      %v4941 = vadd.f32 %v4936, 1.4855
      %v4942 = vadd.f32 %v4937, 1.4855
      %v4943 = vadd.f32 %v4938, 1.4855
      %v4944 = vadd.f32 %v4939, 1.4855
      %v4945 = vmul.f32 %v4940, %v4914
      %v4946 = vmul.f32 %v4941, %v4917
      %v4947 = vmul.f32 %v4942, %v4922
      %v4948 = vmul.f32 %v4943, %v4925
      %v4949 = vmul.f32 %v4944, %v4930
      %v4950 = vadd.f32 %v4945, 3.052
      %v4951 = vadd.f32 %v4946, 3.052
      %v4952 = vadd.f32 %v4947, 3.052
      %v4953 = vadd.f32 %v4948, 3.052
      %v4954 = vadd.f32 %v4949, 3.052
      %v4955 = vmul.f32 %v4950, %v4914
      %v4956 = vmul.f32 %v4951, %v4917
      %v4957 = vmul.f32 %v4952, %v4922
      %v4958 = vmul.f32 %v4953, %v4925
      %v4959 = vmul.f32 %v4954, %v4930
      %v4960 = vadd.f32 %v4955, 2.3235
      %v4961 = vadd.f32 %v4956, 2.3235
      %v4962 = vadd.f32 %v4957, 2.3235
      %v4963 = vadd.f32 %v4958, 2.3235
      %v4964 = vadd.f32 %v4959, 2.3235
      %v4965 = vmul.f32 %v4960, %v4914
      %v4966 = vmul.f32 %v4961, %v4917
      %v4967 = vmul.f32 %v4962, %v4922
      %v4968 = vmul.f32 %v4963, %v4925
      %v4969 = vmul.f32 %v4964, %v4930
      %v4970 = vadd.f32 %v4965, 0.6184
      %v4971 = vadd.f32 %v4966, 0.6184
      %v4972 = vadd.f32 %v4967, 0.6184
      %v4973 = vadd.f32 %v4968, 0.6184
      %v4974 = vadd.f32 %v4969, 0.6184
      %v4975 = vmul.f32 %v4970, %v4914
      %v4976 = vmul.f32 %v4971, %v4917
      %v4977 = vmul.f32 %v4972, %v4922
      %v4978 = vmul.f32 %v4973, %v4925
      %v4979 = vmul.f32 %v4974, %v4930
      %v4980 = vadd.f32 %v4975, 0.0298
      %v4981 = vadd.f32 %v4976, 0.0298
      %v4982 = vadd.f32 %v4977, 0.0298
      %v4983 = vadd.f32 %v4978, 0.0298
      %v4984 = vadd.f32 %v4979, 0.0298
      %v4985 = vand.u32 2147483647, %v4914
      %v4986 = vand.u32 2147483647, %v4917
      %v4987 = vand.u32 2147483647, %v4922
      %v4988 = vand.u32 2147483647, %v4925
      %v4989 = vand.u32 2147483647, %v4930
      %v4990 = vmul.f32 %v4985, 0.0
      %v4991 = vmul.f32 %v4986, 0.0
      %v4992 = vmul.f32 %v4987, 0.0
      %v4993 = vmul.f32 %v4988, 0.0
      %v4994 = vmul.f32 %v4989, 0.0
      %v4995 = vadd.f32 %v4990, 3.0
      %v4996 = vadd.f32 %v4991, 3.0
      %v4997 = vadd.f32 %v4992, 3.0
      %v4998 = vadd.f32 %v4993, 3.0
      %v4999 = vadd.f32 %v4994, 3.0
      %v5000 = vmul.f32 %v4995, %v4985
      %v5001 = vmul.f32 %v4996, %v4986
      %v5002 = vmul.f32 %v4997, %v4987
      %v5003 = vmul.f32 %v4998, %v4988
      %v5004 = vmul.f32 %v4999, %v4989
      %v5005 = vadd.f32 %v5000, 0.0
      %v5006 = vadd.f32 %v5001, 0.0
      %v5007 = vadd.f32 %v5002, 0.0
      %v5008 = vadd.f32 %v5003, 0.0
      %v5009 = vadd.f32 %v5004, 0.0
      %v5010 = vmul.f32 %v5005, %v4985
      %v5011 = vmul.f32 %v5006, %v4986
      %v5012 = vmul.f32 %v5007, %v4987
      %v5013 = vmul.f32 %v5008, %v4988
      %v5014 = vmul.f32 %v5009, %v4989
      %v5015 = vadd.f32 %v5010, 2.3831
      %v5016 = vadd.f32 %v5011, 2.3831
      %v5017 = vadd.f32 %v5012, 2.3831
      %v5018 = vadd.f32 %v5013, 2.3831
      %v5019 = vadd.f32 %v5014, 2.3831
      %v5020 = vmul.f32 %v5015, %v4985
      %v5021 = vmul.f32 %v5016, %v4986
      %v5022 = vmul.f32 %v5017, %v4987
      %v5023 = vmul.f32 %v5018, %v4988
      %v5024 = vmul.f32 %v5019, %v4989
      %v5025 = vadd.f32 %v5020, 1.0
      %v5026 = vadd.f32 %v5021, 1.0
      %v5027 = vadd.f32 %v5022, 1.0
      %v5028 = vadd.f32 %v5023, 1.0
      %v5029 = vadd.f32 %v5024, 1.0
      %v5030 = vrcp.pop %v5025
      %v5031 = vrcp.pop %v5026
      %v5032 = vrcp.pop %v5027
      %v5033 = vrcp.pop %v5028
      %v5034 = vrcp.pop %v5029
      %v5035 = vmul.f32 %v4980, %v5030
      %v5036 = vmul.f32 %v4981, %v5031
      %v5037 = vmul.f32 %v4982, %v5032
      %v5038 = vmul.f32 %v4983, %v5033
      %v5039 = vmul.f32 %v4984, %v5034
      %v5040 = vld [vmem:[%s17] sm:$0xff]
      %v5041 = vld [vmem:[%s17 + $0x8] sm:$0xff]
      %v5042 = vld [vmem:[%s17 + $0x10] sm:$0xff]
      %v5043 = vld [vmem:[%s17 + $0x18] sm:$0xff]
      %v5044 = vld [vmem:[%s17 + $0x20] sm:$0xf]
      %5046 = vset.pattern.permute.xlu0 0
      %5047 = vperm.xlu0 %5046, %v5040
      %v5048 = vpop.permute.xlu0 %5047
      %5051 = vset.pattern.permute.xlu0 0
      %5052 = vperm.xlu0 %5051, %v5041
      %v5053 = vpop.permute.xlu0 %5052
      %5056 = vset.pattern.permute.xlu0 0
      %5057 = vperm.xlu0 %5056, %v5042
      %v5058 = vpop.permute.xlu0 %5057
      %5061 = vset.pattern.permute.xlu0 0
      %5062 = vperm.xlu0 %5061, %v5043
      %v5063 = vpop.permute.xlu0 %5062
      %5066 = vset.pattern.permute.xlu0 0
      %5067 = vperm.xlu0 %5066, %v5044
      %v5068 = vpop.permute.xlu0 %5067
      %v5070 = vmul.f32 %v5035, %v5048
      %v5071 = vmul.f32 %v5036, %v5053
      %v5072 = vmul.f32 %v5037, %v5058
      %v5073 = vmul.f32 %v5038, %v5063
      %v5074 = vmul.f32 %v5039, %v5068
      %5075 = vst.msk [vmem:[#allocation5 + $0x7] sm:$0xff] %vm608, %v5070
      %5076 = vst.msk [vmem:[#allocation5 + $0xf] sm:$0xff] %vm608, %v5071
      %5077 = vst.msk [vmem:[#allocation5 + $0x17] sm:$0xff] %vm608, %v5072
      %5078 = vst.msk [vmem:[#allocation5 + $0x1f] sm:$0xff] %vm608, %v5073
      %5079 = vst.msk [vmem:[#allocation5 + $0x27] sm:$0xf] %vm2953, %v5074
      %v5080 = vld [vmem:[#allocation5] sm:$0x1]
      %vm5081 = vcmask 516096
      %5082 = vst.msk [vmem:[#allocation11] sm:$0x1] %vm5081, %v5080
      %v5083 = vld [vmem:[#allocation5 + $0x2] sm:$0x1]
      %5084 = vst.msk [vmem:[#allocation11 + $0x1] sm:$0x1] %vm5081, %v5083
      %v5085 = vld [vmem:[#allocation5 + $0x1] sm:$0x1]
      %v5088 = vunpack.c.l.s4 1983009808
      %v5089 = vunpack.c.0.s8 %v5088
      %v5090 = vlaneseq
      %v5091 = vshrl.u32 %v5090, 7
      %v5092 = vsub.s32 %v5089, %v5091
      %v5093 = vrot.slane %v5085, %v5092
      %5094 = vrot.lane.b32.xlu0 %v5093, 64
      %v5095 = vpop.permute.xlu0 %5094
      %vm5097 = vcmask 1040896
      %5098 = vst.msk [vmem:[#allocation11] sm:$0x1] %vm5097, %v5095
      %v5099 = vld [vmem:[#allocation5 + $0x3] sm:$0x1]
      %v5102 = vunpack.c.l.s4 1983009808
      %v5103 = vunpack.c.0.s8 %v5102
      %v5104 = vlaneseq
      %v5105 = vshrl.u32 %v5104, 7
      %v5106 = vsub.s32 %v5103, %v5105
      %v5107 = vrot.slane %v5099, %v5106
      %5108 = vrot.lane.b32.xlu0 %v5107, 64
      %v5109 = vpop.permute.xlu0 %5108
      %5111 = vst.msk [vmem:[#allocation11 + $0x1] sm:$0x1] %vm5097, %v5109
      %v5112 = vld [vmem:[#allocation5 + $0x2] sm:$0x1]
      %5113 = vst.msk [vmem:[#allocation11 + $0x2] sm:$0x1] %vm5081, %v5112
      %v5114 = vld [vmem:[#allocation5 + $0x4] sm:$0x1]
      %5115 = vst.msk [vmem:[#allocation11 + $0x3] sm:$0x1] %vm5081, %v5114
      %v5116 = vld [vmem:[#allocation5 + $0x6] sm:$0x1]
      %v5119 = vunpack.c.l.s4 1983009808
      %v5120 = vunpack.c.0.s8 %v5119
      %v5121 = vlaneseq
      %v5122 = vshrl.u32 %v5121, 7
      %v5123 = vsub.s32 %v5120, %v5122
      %v5124 = vrot.slane %v5116, %v5123
      %5125 = vrot.lane.b32.xlu0 %v5124, 64
      %v5126 = vpop.permute.xlu0 %5125
      %5128 = vst.msk [vmem:[#allocation11 + $0x2] sm:$0x1] %vm5097, %v5126
      %v5129 = vld [vmem:[#allocation5 + $0x8] sm:$0x1]
      %v5132 = vunpack.c.l.s4 1983009808
      %v5133 = vunpack.c.0.s8 %v5132
      %v5134 = vlaneseq
      %v5135 = vshrl.u32 %v5134, 7
      %v5136 = vsub.s32 %v5133, %v5135
      %v5137 = vrot.slane %v5129, %v5136
      %5138 = vrot.lane.b32.xlu0 %v5137, 64
      %v5139 = vpop.permute.xlu0 %5138
      %5141 = vst.msk [vmem:[#allocation11 + $0x3] sm:$0x1] %vm5097, %v5139
      %v5142 = vld [vmem:[#allocation5 + $0x7] sm:$0x1]
      %5143 = vst.msk [vmem:[#allocation11 + $0x4] sm:$0x1] %vm5081, %v5142
      %v5144 = vld [vmem:[#allocation5 + $0x9] sm:$0x1]
      %5145 = vst.msk [vmem:[#allocation11 + $0x5] sm:$0x1] %vm5081, %v5144
      %v5146 = vld [vmem:[#allocation5 + $0x8] sm:$0x1]
      %v5149 = vunpack.c.l.s4 1983009808
      %v5150 = vunpack.c.0.s8 %v5149
      %v5151 = vlaneseq
      %v5152 = vshrl.u32 %v5151, 7
      %v5153 = vsub.s32 %v5150, %v5152
      %v5154 = vrot.slane %v5146, %v5153
      %5155 = vrot.lane.b32.xlu0 %v5154, 64
      %v5156 = vpop.permute.xlu0 %5155
      %5158 = vst.msk [vmem:[#allocation11 + $0x4] sm:$0x1] %vm5097, %v5156
      %v5159 = vld [vmem:[#allocation5 + $0xa] sm:$0x1]
      %v5162 = vunpack.c.l.s4 1983009808
      %v5163 = vunpack.c.0.s8 %v5162
      %v5164 = vlaneseq
      %v5165 = vshrl.u32 %v5164, 7
      %v5166 = vsub.s32 %v5163, %v5165
      %v5167 = vrot.slane %v5159, %v5166
      %5168 = vrot.lane.b32.xlu0 %v5167, 64
      %v5169 = vpop.permute.xlu0 %5168
      %5171 = vst.msk [vmem:[#allocation11 + $0x5] sm:$0x1] %vm5097, %v5169
      %v5172 = vld [vmem:[#allocation5 + $0xc] sm:$0x1]
      %5173 = vst.msk [vmem:[#allocation11 + $0x6] sm:$0x1] %vm5081, %v5172
      %v5174 = vld [vmem:[#allocation5 + $0xe] sm:$0x1]
      %5175 = vst.msk [vmem:[#allocation11 + $0x7] sm:$0x1] %vm5081, %v5174
      %v5176 = vld [vmem:[#allocation5 + $0xd] sm:$0x1]
      %v5179 = vunpack.c.l.s4 1983009808
      %v5180 = vunpack.c.0.s8 %v5179
      %v5181 = vlaneseq
      %v5182 = vshrl.u32 %v5181, 7
      %v5183 = vsub.s32 %v5180, %v5182
      %v5184 = vrot.slane %v5176, %v5183
      %5185 = vrot.lane.b32.xlu0 %v5184, 64
      %v5186 = vpop.permute.xlu0 %5185
      %5188 = vst.msk [vmem:[#allocation11 + $0x6] sm:$0x1] %vm5097, %v5186
      %v5189 = vld [vmem:[#allocation5 + $0xf] sm:$0x1]
      %v5192 = vunpack.c.l.s4 1983009808
      %v5193 = vunpack.c.0.s8 %v5192
      %v5194 = vlaneseq
      %v5195 = vshrl.u32 %v5194, 7
      %v5196 = vsub.s32 %v5193, %v5195
      %v5197 = vrot.slane %v5189, %v5196
      %5198 = vrot.lane.b32.xlu0 %v5197, 64
      %v5199 = vpop.permute.xlu0 %5198
      %5201 = vst.msk [vmem:[#allocation11 + $0x7] sm:$0x1] %vm5097, %v5199
      %v5202 = vld [vmem:[#allocation5 + $0xe] sm:$0x1]
      %5203 = vst.msk [vmem:[#allocation11 + $0x8] sm:$0x1] %vm5081, %v5202
      %v5204 = vld [vmem:[#allocation5 + $0x10] sm:$0x1]
      %5205 = vst.msk [vmem:[#allocation11 + $0x9] sm:$0x1] %vm5081, %v5204
      %v5206 = vld [vmem:[#allocation11] sm:$0xff]
      %v5207 = vld [vmem:[#allocation11 + $0x8] sm:$0x3]
      %v5210 = vcombine.high %v5206, %v5206
      %v5212 = vunpack.c.l.s4 1983009808
      %v5213 = vunpack.c.0.s8 %v5212
      %v5214 = vlaneseq
      %v5215 = vshrl.u32 %v5214, 7
      %v5216 = vsub.s32 %v5213, %v5215
      %v5217 = vrot.slane %v5206, %v5216
      %v5219 = vunpack.c.l.s4 1983009808
      %v5220 = vunpack.c.0.s8 %v5219
      %v5221 = vlaneseq
      %v5222 = vshrl.u32 %v5221, 7
      %v5223 = vsub.s32 %v5220, %v5222
      %v5224 = vrot.slane %v5210, %v5223
      %v5225 = vcombine.high %v5217, %v5217
      %v5226 = vcombine.high %v5224, %v5224
      %v5228 = vunpack.c.l.s4 1983009808
      %v5229 = vunpack.c.0.s8 %v5228
      %v5230 = vlaneseq
      %v5231 = vshrl.u32 %v5230, 7
      %v5232 = vsub.s32 %v5229, %v5231
      %v5233 = vrot.slane %v5207, %v5232
      %v5239 = vpack.c.bf16 %v5217, %v5217
      %v5240 = vpack.c.bf16 %v5225, %v5225
      %v5241 = vpack.c.bf16 %v5224, %v5224
      %v5242 = vpack.c.bf16 %v5226, %v5226
      %v5243 = vpack.c.bf16 %v5233, %v5233
      %v5244 = vld [vmem:[%s5] sm:$0xf]
      %v5245 = vld [vmem:[%s5 + $0x4] sm:$0xf]
      %v5246 = vld [vmem:[%s5 + $0x8] sm:$0xf]
      %v5247 = vld [vmem:[%s5 + $0xc] sm:$0xf]
      %v5248 = vld [vmem:[%s5 + $0x10] sm:$0xf]
      %v5249 = vld [vmem:[%s5 + $0x14] sm:$0xf]
      %v5250 = vld [vmem:[%s5 + $0x18] sm:$0xf]
      %v5251 = vld [vmem:[%s5 + $0x1c] sm:$0xf]
      %v5252 = vld [vmem:[%s5 + $0x20] sm:$0xf]
      %v5253 = vld [vmem:[%s5 + $0x24] sm:$0xf]
      %v5254 = vld [vmem:[%s5 + $0x28] sm:$0xf]
      %v5255 = vld [vmem:[%s5 + $0x2c] sm:$0xf]
      %v5256 = vld [vmem:[%s5 + $0x30] sm:$0xf]
      %v5257 = vld [vmem:[%s5 + $0x34] sm:$0xf]
      %v5258 = vld [vmem:[%s5 + $0x38] sm:$0xf]
      %v5259 = vld [vmem:[%s5 + $0x3c] sm:$0xf]
      %v5260 = vld [vmem:[%s5 + $0x40] sm:$0xf]
      %v5261 = vld [vmem:[%s5 + $0x44] sm:$0xf]
      %v5262 = vld [vmem:[%s5 + $0x48] sm:$0xf]
      %v5263 = vld [vmem:[%s5 + $0x4c] sm:$0xf]
      %v5264 = vld [vmem:[%s5 + $0x50] sm:$0xf]
      %v5265 = vld [vmem:[%s5 + $0x54] sm:$0xf]
      %v5266 = vld [vmem:[%s5 + $0x58] sm:$0xf]
      %v5267 = vld [vmem:[%s5 + $0x5c] sm:$0xf]
      %v5268 = vld [vmem:[%s5 + $0x60] sm:$0xf]
      %v5269 = vld [vmem:[%s5 + $0x64] sm:$0xf]
      %v5270 = vld [vmem:[%s5 + $0x68] sm:$0xf]
      %v5271 = vld [vmem:[%s5 + $0x6c] sm:$0xf]
      %v5272 = vld [vmem:[%s5 + $0x70] sm:$0xf]
      %v5273 = vld [vmem:[%s5 + $0x74] sm:$0xf]
      %v5274 = vld [vmem:[%s5 + $0x78] sm:$0xf]
      %v5275 = vld [vmem:[%s5 + $0x7c] sm:$0xf]
      %v5276 = vld [vmem:[%s5 + $0x80] sm:$0xf]
      %v5277 = vld [vmem:[%s5 + $0x84] sm:$0xf]
      %v5278 = vld [vmem:[%s5 + $0x88] sm:$0xf]
      %v5279 = vld [vmem:[%s5 + $0x8c] sm:$0xf]
      %v5280 = vld [vmem:[%s5 + $0x90] sm:$0xf]
      %v5281 = vld [vmem:[%s5 + $0x94] sm:$0xf]
      %v5282 = vld [vmem:[%s5 + $0x98] sm:$0xf]
      %v5283 = vld [vmem:[%s5 + $0x9c] sm:$0xf]
      %v5284 = vld [vmem:[%s5 + $0xa0] sm:$0xf]
      %v5285 = vld [vmem:[%s5 + $0xa4] sm:$0xf]
      %v5286 = vld [vmem:[%s5 + $0xa8] sm:$0xf]
      %v5287 = vld [vmem:[%s5 + $0xac] sm:$0xf]
      %v5288 = vld [vmem:[%s5 + $0xb0] sm:$0xf]
      %v5289 = vld [vmem:[%s5 + $0xb4] sm:$0xf]
      %v5290 = vld [vmem:[%s5 + $0xb8] sm:$0xf]
      %v5291 = vld [vmem:[%s5 + $0xbc] sm:$0xf]
      %v5292 = vld [vmem:[%s5 + $0xc0] sm:$0xf]
      %v5293 = vld [vmem:[%s5 + $0xc4] sm:$0xf]
      %v5294 = vld [vmem:[%s5 + $0xc8] sm:$0xf]
      %v5295 = vld [vmem:[%s5 + $0xcc] sm:$0xf]
      %v5296 = vld [vmem:[%s5 + $0xd0] sm:$0xf]
      %v5297 = vld [vmem:[%s5 + $0xd4] sm:$0xf]
      %v5298 = vld [vmem:[%s5 + $0xd8] sm:$0xf]
      %v5299 = vld [vmem:[%s5 + $0xdc] sm:$0xf]
      %v5300 = vld [vmem:[%s5 + $0xe0] sm:$0xf]
      %v5301 = vld [vmem:[%s5 + $0xe4] sm:$0xf]
      %v5302 = vld [vmem:[%s5 + $0xe8] sm:$0xf]
      %v5303 = vld [vmem:[%s5 + $0xec] sm:$0xf]
      %v5304 = vld [vmem:[%s5 + $0xf0] sm:$0xf]
      %v5305 = vld [vmem:[%s5 + $0xf4] sm:$0xf]
      %v5306 = vld [vmem:[%s5 + $0xf8] sm:$0xf]
      %v5307 = vld [vmem:[%s5 + $0xfc] sm:$0xf]
      %v5308 = vld [vmem:[%s5 + $0x100] sm:$0xf]
      %v5309 = vld [vmem:[%s5 + $0x104] sm:$0xf]
      %v5310 = vld [vmem:[%s5 + $0x108] sm:$0xf]
      %v5311 = vld [vmem:[%s5 + $0x10c] sm:$0xf]
      %v5312 = vld [vmem:[%s5 + $0x110] sm:$0xf]
      %v5313 = vld [vmem:[%s5 + $0x114] sm:$0xf]
      %v5314 = vld [vmem:[%s5 + $0x118] sm:$0xf]
      %v5315 = vld [vmem:[%s5 + $0x11c] sm:$0xf]
      %v5316 = vld [vmem:[%s12] sm:$0x1]
      %v5318 = vlaneseq
      %v5319 = vshrl.u32 %v5318, 7
      %v5320 = vsub.s32 0, %v5319
      %v5321 = vrot.slane %v5316, %v5320
      %v5395 = vunpack.c.l.b16 %v5244
      %v5396 = vunpack.c.l.b16 %v5245
      %v5397 = vunpack.c.l.b16 %v5246
      %v5398 = vunpack.c.l.b16 %v5247
      %v5399 = vunpack.c.l.b16 %v5248
      %v5400 = vunpack.c.l.b16 %v5249
      %v5401 = vunpack.c.l.b16 %v5250
      %v5402 = vunpack.c.l.b16 %v5251
      %v5403 = vunpack.c.l.b16 %v5252
      %v5404 = vunpack.c.l.b16 %v5253
      %v5405 = vunpack.c.l.b16 %v5254
      %v5406 = vunpack.c.l.b16 %v5255
      %v5407 = vunpack.c.l.b16 %v5256
      %v5408 = vunpack.c.l.b16 %v5257
      %v5409 = vunpack.c.l.b16 %v5258
      %v5410 = vunpack.c.l.b16 %v5259
      %v5411 = vunpack.c.l.b16 %v5260
      %v5412 = vunpack.c.l.b16 %v5261
      %v5413 = vunpack.c.l.b16 %v5262
      %v5414 = vunpack.c.l.b16 %v5263
      %v5415 = vunpack.c.l.b16 %v5264
      %v5416 = vunpack.c.l.b16 %v5265
      %v5417 = vunpack.c.l.b16 %v5266
      %v5418 = vunpack.c.l.b16 %v5267
      %v5419 = vunpack.c.l.b16 %v5268
      %v5420 = vunpack.c.l.b16 %v5269
      %v5421 = vunpack.c.l.b16 %v5270
      %v5422 = vunpack.c.l.b16 %v5271
      %v5423 = vunpack.c.l.b16 %v5272
      %v5424 = vunpack.c.l.b16 %v5273
      %v5425 = vunpack.c.l.b16 %v5274
      %v5426 = vunpack.c.l.b16 %v5275
      %v5427 = vunpack.c.l.b16 %v5276
      %v5428 = vunpack.c.l.b16 %v5277
      %v5429 = vunpack.c.l.b16 %v5278
      %v5430 = vunpack.c.l.b16 %v5279
      %v5431 = vunpack.c.l.b16 %v5280
      %v5432 = vunpack.c.l.b16 %v5281
      %v5433 = vunpack.c.l.b16 %v5282
      %v5434 = vunpack.c.l.b16 %v5283
      %v5435 = vunpack.c.l.b16 %v5284
      %v5436 = vunpack.c.l.b16 %v5285
      %v5437 = vunpack.c.l.b16 %v5286
      %v5438 = vunpack.c.l.b16 %v5287
      %v5439 = vunpack.c.l.b16 %v5288
      %v5440 = vunpack.c.l.b16 %v5289
      %v5441 = vunpack.c.l.b16 %v5290
      %v5442 = vunpack.c.l.b16 %v5291
      %v5443 = vunpack.c.l.b16 %v5292
      %v5444 = vunpack.c.l.b16 %v5293
      %v5445 = vunpack.c.l.b16 %v5294
      %v5446 = vunpack.c.l.b16 %v5295
      %v5447 = vunpack.c.l.b16 %v5296
      %v5448 = vunpack.c.l.b16 %v5297
      %v5449 = vunpack.c.l.b16 %v5298
      %v5450 = vunpack.c.l.b16 %v5299
      %v5451 = vunpack.c.l.b16 %v5300
      %v5452 = vunpack.c.l.b16 %v5301
      %v5453 = vunpack.c.l.b16 %v5302
      %v5454 = vunpack.c.l.b16 %v5303
      %v5455 = vunpack.c.l.b16 %v5304
      %v5456 = vunpack.c.l.b16 %v5305
      %v5457 = vunpack.c.l.b16 %v5306
      %v5458 = vunpack.c.l.b16 %v5307
      %v5459 = vunpack.c.l.b16 %v5308
      %v5460 = vunpack.c.l.b16 %v5309
      %v5461 = vunpack.c.l.b16 %v5310
      %v5462 = vunpack.c.l.b16 %v5311
      %v5463 = vunpack.c.l.b16 %v5312
      %v5464 = vunpack.c.l.b16 %v5313
      %v5465 = vunpack.c.l.b16 %v5314
      %v5466 = vunpack.c.l.b16 %v5315
      %v5467 = vpack.c.b16 %v5396, %v5395
      %v5468 = vpack.c.b16 %v5398, %v5397
      %v5469 = vpack.c.b16 %v5400, %v5399
      %v5470 = vpack.c.b16 %v5402, %v5401
      %v5471 = vpack.c.b16 %v5404, %v5403
      %v5472 = vpack.c.b16 %v5406, %v5405
      %v5473 = vpack.c.b16 %v5408, %v5407
      %v5474 = vpack.c.b16 %v5410, %v5409
      %v5475 = vpack.c.b16 %v5412, %v5411
      %v5476 = vpack.c.b16 %v5414, %v5413
      %v5477 = vpack.c.b16 %v5416, %v5415
      %v5478 = vpack.c.b16 %v5418, %v5417
      %v5479 = vpack.c.b16 %v5420, %v5419
      %v5480 = vpack.c.b16 %v5422, %v5421
      %v5481 = vpack.c.b16 %v5424, %v5423
      %v5482 = vpack.c.b16 %v5426, %v5425
      %v5483 = vpack.c.b16 %v5428, %v5427
      %v5484 = vpack.c.b16 %v5430, %v5429
      %v5485 = vpack.c.b16 %v5432, %v5431
      %v5486 = vpack.c.b16 %v5434, %v5433
      %v5487 = vpack.c.b16 %v5436, %v5435
      %v5488 = vpack.c.b16 %v5438, %v5437
      %v5489 = vpack.c.b16 %v5440, %v5439
      %v5490 = vpack.c.b16 %v5442, %v5441
      %v5491 = vpack.c.b16 %v5444, %v5443
      %v5492 = vpack.c.b16 %v5446, %v5445
      %v5493 = vpack.c.b16 %v5448, %v5447
      %v5494 = vpack.c.b16 %v5450, %v5449
      %v5495 = vpack.c.b16 %v5452, %v5451
      %v5496 = vpack.c.b16 %v5454, %v5453
      %v5497 = vpack.c.b16 %v5456, %v5455
      %v5498 = vpack.c.b16 %v5458, %v5457
      %v5499 = vpack.c.b16 %v5460, %v5459
      %v5500 = vpack.c.b16 %v5462, %v5461
      %v5501 = vpack.c.b16 %v5464, %v5463
      %v5502 = vpack.c.b16 %v5466, %v5465
      %v5540 = vsel %vm608, %v5243, 0
      %5542 = vmatprep.subr.bf16.mxu0 0
      %5543 = vmatpush1.bf16.msra.mxu0 %v5467
      %5544 = vmatprep.subr.bf16.mxu0 0
      %5545 = vmatpush1.bf16.msra.mxu0 %v5468
      %5546 = vmatprep.subr.bf16.mxu0 0
      %5547 = vmatpush1.bf16.msra.mxu0 %v5469
      %5548 = vmatprep.subr.bf16.mxu0 0
      %5549 = vmatpush1.bf16.msra.mxu0 %v5470
      %5550 = vmatprep.subr.bf16.mxu0 0
      %5551 = vmatpush1.bf16.msra.mxu0 %v5471
      %5552 = vmatprep.subr.bf16.mxu0 0
      %5553 = vmatpush1.bf16.msra.mxu0 %v5472
      %5554 = vmatprep.subr.bf16.mxu0 0
      %5555 = vmatpush1.bf16.msra.mxu0 %v5473
      %5556 = vmatprep.subr.bf16.mxu0 0
      %5557 = vmatpush1.bf16.msra.mxu0 %v5474
      %5558 = vmatprep.subr.bf16.mxu0 0
      %5559 = vmatpush1.bf16.msra.mxu0 %v5475
      %5560 = vmatprep.subr.bf16.mxu0 0
      %5561 = vmatpush1.bf16.msra.mxu0 %v5476
      %5562 = vmatprep.subr.bf16.mxu0 0
      %5563 = vmatpush1.bf16.msra.mxu0 %v5477
      %5564 = vmatprep.subr.bf16.mxu0 0
      %5565 = vmatpush1.bf16.msra.mxu0 %v5478
      %5566 = vmatprep.subr.bf16.mxu0 0
      %5567 = vmatpush1.bf16.msra.mxu0 %v5479
      %5568 = vmatprep.subr.bf16.mxu0 0
      %5569 = vmatpush1.bf16.msra.mxu0 %v5480
      %5570 = vmatprep.subr.bf16.mxu0 0
      %5571 = vmatpush1.bf16.msra.mxu0 %v5481
      %5572 = vmatprep.subr.bf16.mxu0 0
      %5573 = vmatpush1.bf16.msra.mxu0 %v5482
      %5574 = vmatprep.mubr.bf16.mxu0 %v5240
      %5575 = vmatmul.mubr.bf16.gmra.mrb[0].mxu0 %v5239
      %v5576 = vpop.f32.mrb[0].mxu0
      %v5577 = vadd.f32 %v5321, %v5576
      %v5578 = vpop.f32.mrb[0].mxu0
      %v5579 = vpop.f32.mrb[0].mxu0
      %v5580 = vpop.f32.mrb[0].mxu0
      %5581 = vdwg.mxu0
      %5582 = vmatprep.subr.bf16.mxu0 0
      %5583 = vmatpush1.bf16.msra.mxu0 %v5483
      %5584 = vmatprep.subr.bf16.mxu0 0
      %5585 = vmatpush1.bf16.msra.mxu0 %v5484
      %5586 = vmatprep.subr.bf16.mxu0 0
      %5587 = vmatpush1.bf16.msra.mxu0 %v5485
      %5588 = vmatprep.subr.bf16.mxu0 0
      %5589 = vmatpush1.bf16.msra.mxu0 %v5486
      %5590 = vmatprep.subr.bf16.mxu0 0
      %5591 = vmatpush1.bf16.msra.mxu0 %v5487
      %5592 = vmatprep.subr.bf16.mxu0 0
      %5593 = vmatpush1.bf16.msra.mxu0 %v5488
      %5594 = vmatprep.subr.bf16.mxu0 0
      %5595 = vmatpush1.bf16.msra.mxu0 %v5489
      %5596 = vmatprep.subr.bf16.mxu0 0
      %5597 = vmatpush1.bf16.msra.mxu0 %v5490
      %5598 = vmatprep.subr.bf16.mxu0 0
      %5599 = vmatpush1.bf16.msra.mxu0 %v5491
      %5600 = vmatprep.subr.bf16.mxu0 0
      %5601 = vmatpush1.bf16.msra.mxu0 %v5492
      %5602 = vmatprep.subr.bf16.mxu0 0
      %5603 = vmatpush1.bf16.msra.mxu0 %v5493
      %5604 = vmatprep.subr.bf16.mxu0 0
      %5605 = vmatpush1.bf16.msra.mxu0 %v5494
      %5606 = vmatprep.subr.bf16.mxu0 0
      %5607 = vmatpush1.bf16.msra.mxu0 %v5495
      %5608 = vmatprep.subr.bf16.mxu0 0
      %5609 = vmatpush1.bf16.msra.mxu0 %v5496
      %5610 = vmatprep.subr.bf16.mxu0 0
      %5611 = vmatpush1.bf16.msra.mxu0 %v5497
      %5612 = vmatprep.subr.bf16.mxu0 0
      %5613 = vmatpush1.bf16.msra.mxu0 %v5498
      %5614 = vmatprep.mubr.bf16.mxu0 %v5242
      %5615 = vmatmul.mubr.bf16.gmra.mrb[0].mxu0 %v5241
      %v5616 = vpop.f32.mrb[0].mxu0
      %v5617 = vadd.f32 %v5577, %v5616
      %v5618 = vpop.f32.mrb[0].mxu0
      %v5619 = vpop.f32.mrb[0].mxu0
      %v5620 = vpop.f32.mrb[0].mxu0
      %5621 = vdwg.mxu0
      %5622 = vmatprep.subr.bf16.mxu0 0
      %5623 = vmatpush1.bf16.msra.mxu0 %v5499
      %5624 = vmatprep.subr.bf16.mxu0 0
      %5625 = vmatpush1.bf16.msra.mxu0 %v5500
      %5626 = vmatprep.subr.bf16.mxu0 0
      %5627 = vmatpush1.bf16.msra.mxu0 %v5501
      %5628 = vmatprep.subr.bf16.mxu0 0
      %5629 = vmatpush1.bf16.msra.mxu0 %v5502
      %5630 = vmatprep.subr.bf16.mxu0 0
      %5631 = vmatpush1.bf16.msra.mxu0 0
      %5632 = vmatprep.subr.bf16.mxu0 0
      %5633 = vmatpush1.bf16.msra.mxu0 0
      %5634 = vmatprep.subr.bf16.mxu0 0
      %5635 = vmatpush1.bf16.msra.mxu0 0
      %5636 = vmatprep.subr.bf16.mxu0 0
      %5637 = vmatpush1.bf16.msra.mxu0 0
      %5638 = vmatprep.subr.bf16.mxu0 0
      %5639 = vmatpush1.bf16.msra.mxu0 0
      %5640 = vmatprep.subr.bf16.mxu0 0
      %5641 = vmatpush1.bf16.msra.mxu0 0
      %5642 = vmatprep.subr.bf16.mxu0 0
      %5643 = vmatpush1.bf16.msra.mxu0 0
      %5644 = vmatprep.subr.bf16.mxu0 0
      %5645 = vmatpush1.bf16.msra.mxu0 0
      %5646 = vmatprep.subr.bf16.mxu0 0
      %5647 = vmatpush1.bf16.msra.mxu0 0
      %5648 = vmatprep.subr.bf16.mxu0 0
      %5649 = vmatpush1.bf16.msra.mxu0 0
      %5650 = vmatprep.subr.bf16.mxu0 0
      %5651 = vmatpush1.bf16.msra.mxu0 0
      %5652 = vmatprep.subr.bf16.mxu0 0
      %5653 = vmatpush1.bf16.msra.mxu0 0
      %5654 = vmatprep.mubr.bf16.mxu0 0
      %5655 = vmatmul.mubr.bf16.gmra.mrb[0].mxu0 %v5540
      %v5656 = vpop.f32.mrb[0].mxu0
      %v5657 = vadd.f32 %v5617, %v5656
      %v5658 = vpop.f32.mrb[0].mxu0
      %v5659 = vpop.f32.mrb[0].mxu0
      %v5660 = vpop.f32.mrb[0].mxu0
      %5661 = vdwg.mxu0
      %v5662 = vmul.f32 %v5657, 0.251
      %v5663 = vadd.f32 %v5662, 1.4855
      %v5664 = vmul.f32 %v5663, %v5657
      %v5665 = vadd.f32 %v5664, 3.052
      %v5666 = vmul.f32 %v5665, %v5657
      %v5667 = vadd.f32 %v5666, 2.3235
      %v5668 = vmul.f32 %v5667, %v5657
      %v5669 = vadd.f32 %v5668, 0.6184
      %v5670 = vmul.f32 %v5669, %v5657
      %v5671 = vadd.f32 %v5670, 0.0298
      %v5672 = vand.u32 2147483647, %v5657
      %v5673 = vmul.f32 %v5672, 0.0
      %v5674 = vadd.f32 %v5673, 3.0
      %v5675 = vmul.f32 %v5674, %v5672
      %v5676 = vadd.f32 %v5675, 0.0
      %v5677 = vmul.f32 %v5676, %v5672
      %v5678 = vadd.f32 %v5677, 2.3831
      %v5679 = vmul.f32 %v5678, %v5672
      %v5680 = vadd.f32 %v5679, 1.0
      %v5681 = vrcp.pop %v5680
      %v5682 = vmul.f32 %v5671, %v5681
      %5683 = vst [vmem:[#allocation6 + $0x5] sm:$0x3] %v5682
      %v5684 = vld [vmem:[#allocation5 + $0xc] sm:$0x1]
      %5685 = vst.msk [vmem:[#allocation11] sm:$0x1] %vm5081, %v5684
      %v5686 = vld [vmem:[#allocation5 + $0xe] sm:$0x1]
      %5687 = vst.msk [vmem:[#allocation11 + $0x1] sm:$0x1] %vm5081, %v5686
      %v5688 = vld [vmem:[#allocation5 + $0xd] sm:$0x1]
      %v5691 = vunpack.c.l.s4 1983009808
      %v5692 = vunpack.c.0.s8 %v5691
      %v5693 = vlaneseq
      %v5694 = vshrl.u32 %v5693, 7
      %v5695 = vsub.s32 %v5692, %v5694
      %v5696 = vrot.slane %v5688, %v5695
      %5697 = vrot.lane.b32.xlu0 %v5696, 64
      %v5698 = vpop.permute.xlu0 %5697
      %5700 = vst.msk [vmem:[#allocation11] sm:$0x1] %vm5097, %v5698
      %v5701 = vld [vmem:[#allocation5 + $0xf] sm:$0x1]
      %v5704 = vunpack.c.l.s4 1983009808
      %v5705 = vunpack.c.0.s8 %v5704
      %v5706 = vlaneseq
      %v5707 = vshrl.u32 %v5706, 7
      %v5708 = vsub.s32 %v5705, %v5707
      %v5709 = vrot.slane %v5701, %v5708
      %5710 = vrot.lane.b32.xlu0 %v5709, 64
      %v5711 = vpop.permute.xlu0 %5710
      %5713 = vst.msk [vmem:[#allocation11 + $0x1] sm:$0x1] %vm5097, %v5711
      %v5714 = vld [vmem:[#allocation5 + $0xe] sm:$0x1]
      %5715 = vst.msk [vmem:[#allocation11 + $0x2] sm:$0x1] %vm5081, %v5714
      %v5716 = vld [vmem:[#allocation5 + $0x10] sm:$0x1]
      %5717 = vst.msk [vmem:[#allocation11 + $0x3] sm:$0x1] %vm5081, %v5716
      %v5718 = vld [vmem:[#allocation5 + $0x12] sm:$0x1]
      %v5721 = vunpack.c.l.s4 1983009808
      %v5722 = vunpack.c.0.s8 %v5721
      %v5723 = vlaneseq
      %v5724 = vshrl.u32 %v5723, 7
      %v5725 = vsub.s32 %v5722, %v5724
      %v5726 = vrot.slane %v5718, %v5725
      %5727 = vrot.lane.b32.xlu0 %v5726, 64
      %v5728 = vpop.permute.xlu0 %5727
      %5730 = vst.msk [vmem:[#allocation11 + $0x2] sm:$0x1] %vm5097, %v5728
      %v5731 = vld [vmem:[#allocation5 + $0x14] sm:$0x1]
      %v5734 = vunpack.c.l.s4 1983009808
      %v5735 = vunpack.c.0.s8 %v5734
      %v5736 = vlaneseq
      %v5737 = vshrl.u32 %v5736, 7
      %v5738 = vsub.s32 %v5735, %v5737
      %v5739 = vrot.slane %v5731, %v5738
      %5740 = vrot.lane.b32.xlu0 %v5739, 64
      %v5741 = vpop.permute.xlu0 %5740
      %5743 = vst.msk [vmem:[#allocation11 + $0x3] sm:$0x1] %vm5097, %v5741
      %v5744 = vld [vmem:[#allocation5 + $0x13] sm:$0x1]
      %5745 = vst.msk [vmem:[#allocation11 + $0x4] sm:$0x1] %vm5081, %v5744
      %v5746 = vld [vmem:[#allocation5 + $0x15] sm:$0x1]
      %5747 = vst.msk [vmem:[#allocation11 + $0x5] sm:$0x1] %vm5081, %v5746
      %v5748 = vld [vmem:[#allocation5 + $0x14] sm:$0x1]
      %v5751 = vunpack.c.l.s4 1983009808
      %v5752 = vunpack.c.0.s8 %v5751
      %v5753 = vlaneseq
      %v5754 = vshrl.u32 %v5753, 7
      %v5755 = vsub.s32 %v5752, %v5754
      %v5756 = vrot.slane %v5748, %v5755
      %5757 = vrot.lane.b32.xlu0 %v5756, 64
      %v5758 = vpop.permute.xlu0 %5757
      %5760 = vst.msk [vmem:[#allocation11 + $0x4] sm:$0x1] %vm5097, %v5758
      %v5761 = vld [vmem:[#allocation5 + $0x16] sm:$0x1]
      %v5764 = vunpack.c.l.s4 1983009808
      %v5765 = vunpack.c.0.s8 %v5764
      %v5766 = vlaneseq
      %v5767 = vshrl.u32 %v5766, 7
      %v5768 = vsub.s32 %v5765, %v5767
      %v5769 = vrot.slane %v5761, %v5768
      %5770 = vrot.lane.b32.xlu0 %v5769, 64
      %v5771 = vpop.permute.xlu0 %5770
      %5773 = vst.msk [vmem:[#allocation11 + $0x5] sm:$0x1] %vm5097, %v5771
      %v5774 = vld [vmem:[#allocation5 + $0x18] sm:$0x1]
      %5775 = vst.msk [vmem:[#allocation11 + $0x6] sm:$0x1] %vm5081, %v5774
      %v5776 = vld [vmem:[#allocation5 + $0x1a] sm:$0x1]
      %5777 = vst.msk [vmem:[#allocation11 + $0x7] sm:$0x1] %vm5081, %v5776
      %v5778 = vld [vmem:[#allocation5 + $0x19] sm:$0x1]
      %v5781 = vunpack.c.l.s4 1983009808
      %v5782 = vunpack.c.0.s8 %v5781
      %v5783 = vlaneseq
      %v5784 = vshrl.u32 %v5783, 7
      %v5785 = vsub.s32 %v5782, %v5784
      %v5786 = vrot.slane %v5778, %v5785
      %5787 = vrot.lane.b32.xlu0 %v5786, 64
      %v5788 = vpop.permute.xlu0 %5787
      %5790 = vst.msk [vmem:[#allocation11 + $0x6] sm:$0x1] %vm5097, %v5788
      %v5791 = vld [vmem:[#allocation5 + $0x1b] sm:$0x1]
      %v5794 = vunpack.c.l.s4 1983009808
      %v5795 = vunpack.c.0.s8 %v5794
      %v5796 = vlaneseq
      %v5797 = vshrl.u32 %v5796, 7
      %v5798 = vsub.s32 %v5795, %v5797
      %v5799 = vrot.slane %v5791, %v5798
      %5800 = vrot.lane.b32.xlu0 %v5799, 64
      %v5801 = vpop.permute.xlu0 %5800
      %5803 = vst.msk [vmem:[#allocation11 + $0x7] sm:$0x1] %vm5097, %v5801
      %v5804 = vld [vmem:[#allocation5 + $0x1a] sm:$0x1]
      %5805 = vst.msk [vmem:[#allocation11 + $0x8] sm:$0x1] %vm5081, %v5804
      %v5806 = vld [vmem:[#allocation5 + $0x1c] sm:$0x1]
      %5807 = vst.msk [vmem:[#allocation11 + $0x9] sm:$0x1] %vm5081, %v5806
      %v5808 = vld [vmem:[#allocation11] sm:$0xff]
      %v5809 = vld [vmem:[#allocation11 + $0x8] sm:$0x3]
      %v5812 = vcombine.high %v5808, %v5808
      %v5814 = vunpack.c.l.s4 1983009808
      %v5815 = vunpack.c.0.s8 %v5814
      %v5816 = vlaneseq
      %v5817 = vshrl.u32 %v5816, 7
      %v5818 = vsub.s32 %v5815, %v5817
      %v5819 = vrot.slane %v5808, %v5818
      %v5821 = vunpack.c.l.s4 1983009808
      %v5822 = vunpack.c.0.s8 %v5821
      %v5823 = vlaneseq
      %v5824 = vshrl.u32 %v5823, 7
      %v5825 = vsub.s32 %v5822, %v5824
      %v5826 = vrot.slane %v5812, %v5825
      %v5827 = vcombine.high %v5819, %v5819
      %v5828 = vcombine.high %v5826, %v5826
      %v5830 = vunpack.c.l.s4 1983009808
      %v5831 = vunpack.c.0.s8 %v5830
      %v5832 = vlaneseq
      %v5833 = vshrl.u32 %v5832, 7
      %v5834 = vsub.s32 %v5831, %v5833
      %v5835 = vrot.slane %v5809, %v5834
      %v5841 = vpack.c.bf16 %v5819, %v5819
      %v5842 = vpack.c.bf16 %v5827, %v5827
      %v5843 = vpack.c.bf16 %v5826, %v5826
      %v5844 = vpack.c.bf16 %v5828, %v5828
      %v5845 = vpack.c.bf16 %v5835, %v5835
      %v5846 = vld [vmem:[%s5] sm:$0xf]
      %v5847 = vld [vmem:[%s5 + $0x4] sm:$0xf]
      %v5848 = vld [vmem:[%s5 + $0x8] sm:$0xf]
      %v5849 = vld [vmem:[%s5 + $0xc] sm:$0xf]
      %v5850 = vld [vmem:[%s5 + $0x10] sm:$0xf]
      %v5851 = vld [vmem:[%s5 + $0x14] sm:$0xf]
      %v5852 = vld [vmem:[%s5 + $0x18] sm:$0xf]
      %v5853 = vld [vmem:[%s5 + $0x1c] sm:$0xf]
      %v5854 = vld [vmem:[%s5 + $0x20] sm:$0xf]
      %v5855 = vld [vmem:[%s5 + $0x24] sm:$0xf]
      %v5856 = vld [vmem:[%s5 + $0x28] sm:$0xf]
      %v5857 = vld [vmem:[%s5 + $0x2c] sm:$0xf]
      %v5858 = vld [vmem:[%s5 + $0x30] sm:$0xf]
      %v5859 = vld [vmem:[%s5 + $0x34] sm:$0xf]
      %v5860 = vld [vmem:[%s5 + $0x38] sm:$0xf]
      %v5861 = vld [vmem:[%s5 + $0x3c] sm:$0xf]
      %v5862 = vld [vmem:[%s5 + $0x40] sm:$0xf]
      %v5863 = vld [vmem:[%s5 + $0x44] sm:$0xf]
      %v5864 = vld [vmem:[%s5 + $0x48] sm:$0xf]
      %v5865 = vld [vmem:[%s5 + $0x4c] sm:$0xf]
      %v5866 = vld [vmem:[%s5 + $0x50] sm:$0xf]
      %v5867 = vld [vmem:[%s5 + $0x54] sm:$0xf]
      %v5868 = vld [vmem:[%s5 + $0x58] sm:$0xf]
      %v5869 = vld [vmem:[%s5 + $0x5c] sm:$0xf]
      %v5870 = vld [vmem:[%s5 + $0x60] sm:$0xf]
      %v5871 = vld [vmem:[%s5 + $0x64] sm:$0xf]
      %v5872 = vld [vmem:[%s5 + $0x68] sm:$0xf]
      %v5873 = vld [vmem:[%s5 + $0x6c] sm:$0xf]
      %v5874 = vld [vmem:[%s5 + $0x70] sm:$0xf]
      %v5875 = vld [vmem:[%s5 + $0x74] sm:$0xf]
      %v5876 = vld [vmem:[%s5 + $0x78] sm:$0xf]
      %v5877 = vld [vmem:[%s5 + $0x7c] sm:$0xf]
      %v5878 = vld [vmem:[%s5 + $0x80] sm:$0xf]
      %v5879 = vld [vmem:[%s5 + $0x84] sm:$0xf]
      %v5880 = vld [vmem:[%s5 + $0x88] sm:$0xf]
      %v5881 = vld [vmem:[%s5 + $0x8c] sm:$0xf]
      %v5882 = vld [vmem:[%s5 + $0x90] sm:$0xf]
      %v5883 = vld [vmem:[%s5 + $0x94] sm:$0xf]
      %v5884 = vld [vmem:[%s5 + $0x98] sm:$0xf]
      %v5885 = vld [vmem:[%s5 + $0x9c] sm:$0xf]
      %v5886 = vld [vmem:[%s5 + $0xa0] sm:$0xf]
      %v5887 = vld [vmem:[%s5 + $0xa4] sm:$0xf]
      %v5888 = vld [vmem:[%s5 + $0xa8] sm:$0xf]
      %v5889 = vld [vmem:[%s5 + $0xac] sm:$0xf]
      %v5890 = vld [vmem:[%s5 + $0xb0] sm:$0xf]
      %v5891 = vld [vmem:[%s5 + $0xb4] sm:$0xf]
      %v5892 = vld [vmem:[%s5 + $0xb8] sm:$0xf]
      %v5893 = vld [vmem:[%s5 + $0xbc] sm:$0xf]
      %v5894 = vld [vmem:[%s5 + $0xc0] sm:$0xf]
      %v5895 = vld [vmem:[%s5 + $0xc4] sm:$0xf]
      %v5896 = vld [vmem:[%s5 + $0xc8] sm:$0xf]
      %v5897 = vld [vmem:[%s5 + $0xcc] sm:$0xf]
      %v5898 = vld [vmem:[%s5 + $0xd0] sm:$0xf]
      %v5899 = vld [vmem:[%s5 + $0xd4] sm:$0xf]
      %v5900 = vld [vmem:[%s5 + $0xd8] sm:$0xf]
      %v5901 = vld [vmem:[%s5 + $0xdc] sm:$0xf]
      %v5902 = vld [vmem:[%s5 + $0xe0] sm:$0xf]
      %v5903 = vld [vmem:[%s5 + $0xe4] sm:$0xf]
      %v5904 = vld [vmem:[%s5 + $0xe8] sm:$0xf]
      %v5905 = vld [vmem:[%s5 + $0xec] sm:$0xf]
      %v5906 = vld [vmem:[%s5 + $0xf0] sm:$0xf]
      %v5907 = vld [vmem:[%s5 + $0xf4] sm:$0xf]
      %v5908 = vld [vmem:[%s5 + $0xf8] sm:$0xf]
      %v5909 = vld [vmem:[%s5 + $0xfc] sm:$0xf]
      %v5910 = vld [vmem:[%s5 + $0x100] sm:$0xf]
      %v5911 = vld [vmem:[%s5 + $0x104] sm:$0xf]
      %v5912 = vld [vmem:[%s5 + $0x108] sm:$0xf]
      %v5913 = vld [vmem:[%s5 + $0x10c] sm:$0xf]
      %v5914 = vld [vmem:[%s5 + $0x110] sm:$0xf]
      %v5915 = vld [vmem:[%s5 + $0x114] sm:$0xf]
      %v5916 = vld [vmem:[%s5 + $0x118] sm:$0xf]
      %v5917 = vld [vmem:[%s5 + $0x11c] sm:$0xf]
      %v5918 = vld [vmem:[%s12] sm:$0x1]
      %v5920 = vlaneseq
      %v5921 = vshrl.u32 %v5920, 7
      %v5922 = vsub.s32 0, %v5921
      %v5923 = vrot.slane %v5918, %v5922
      %v5997 = vunpack.c.l.b16 %v5846
      %v5998 = vunpack.c.l.b16 %v5847
      %v5999 = vunpack.c.l.b16 %v5848
      %v6000 = vunpack.c.l.b16 %v5849
      %v6001 = vunpack.c.l.b16 %v5850
      %v6002 = vunpack.c.l.b16 %v5851
      %v6003 = vunpack.c.l.b16 %v5852
      %v6004 = vunpack.c.l.b16 %v5853
      %v6005 = vunpack.c.l.b16 %v5854
      %v6006 = vunpack.c.l.b16 %v5855
      %v6007 = vunpack.c.l.b16 %v5856
      %v6008 = vunpack.c.l.b16 %v5857
      %v6009 = vunpack.c.l.b16 %v5858
      %v6010 = vunpack.c.l.b16 %v5859
      %v6011 = vunpack.c.l.b16 %v5860
      %v6012 = vunpack.c.l.b16 %v5861
      %v6013 = vunpack.c.l.b16 %v5862
      %v6014 = vunpack.c.l.b16 %v5863
      %v6015 = vunpack.c.l.b16 %v5864
      %v6016 = vunpack.c.l.b16 %v5865
      %v6017 = vunpack.c.l.b16 %v5866
      %v6018 = vunpack.c.l.b16 %v5867
      %v6019 = vunpack.c.l.b16 %v5868
      %v6020 = vunpack.c.l.b16 %v5869
      %v6021 = vunpack.c.l.b16 %v5870
      %v6022 = vunpack.c.l.b16 %v5871
      %v6023 = vunpack.c.l.b16 %v5872
      %v6024 = vunpack.c.l.b16 %v5873
      %v6025 = vunpack.c.l.b16 %v5874
      %v6026 = vunpack.c.l.b16 %v5875
      %v6027 = vunpack.c.l.b16 %v5876
      %v6028 = vunpack.c.l.b16 %v5877
      %v6029 = vunpack.c.l.b16 %v5878
      %v6030 = vunpack.c.l.b16 %v5879
      %v6031 = vunpack.c.l.b16 %v5880
      %v6032 = vunpack.c.l.b16 %v5881
      %v6033 = vunpack.c.l.b16 %v5882
      %v6034 = vunpack.c.l.b16 %v5883
      %v6035 = vunpack.c.l.b16 %v5884
      %v6036 = vunpack.c.l.b16 %v5885
      %v6037 = vunpack.c.l.b16 %v5886
      %v6038 = vunpack.c.l.b16 %v5887
      %v6039 = vunpack.c.l.b16 %v5888
      %v6040 = vunpack.c.l.b16 %v5889
      %v6041 = vunpack.c.l.b16 %v5890
      %v6042 = vunpack.c.l.b16 %v5891
      %v6043 = vunpack.c.l.b16 %v5892
      %v6044 = vunpack.c.l.b16 %v5893
      %v6045 = vunpack.c.l.b16 %v5894
      %v6046 = vunpack.c.l.b16 %v5895
      %v6047 = vunpack.c.l.b16 %v5896
      %v6048 = vunpack.c.l.b16 %v5897
      %v6049 = vunpack.c.l.b16 %v5898
      %v6050 = vunpack.c.l.b16 %v5899
      %v6051 = vunpack.c.l.b16 %v5900
      %v6052 = vunpack.c.l.b16 %v5901
      %v6053 = vunpack.c.l.b16 %v5902
      %v6054 = vunpack.c.l.b16 %v5903
      %v6055 = vunpack.c.l.b16 %v5904
      %v6056 = vunpack.c.l.b16 %v5905
      %v6057 = vunpack.c.l.b16 %v5906
      %v6058 = vunpack.c.l.b16 %v5907
      %v6059 = vunpack.c.l.b16 %v5908
      %v6060 = vunpack.c.l.b16 %v5909
      %v6061 = vunpack.c.l.b16 %v5910
      %v6062 = vunpack.c.l.b16 %v5911
      %v6063 = vunpack.c.l.b16 %v5912
      %v6064 = vunpack.c.l.b16 %v5913
      %v6065 = vunpack.c.l.b16 %v5914
      %v6066 = vunpack.c.l.b16 %v5915
      %v6067 = vunpack.c.l.b16 %v5916
      %v6068 = vunpack.c.l.b16 %v5917
      %v6069 = vpack.c.b16 %v5998, %v5997
      %v6070 = vpack.c.b16 %v6000, %v5999
      %v6071 = vpack.c.b16 %v6002, %v6001
      %v6072 = vpack.c.b16 %v6004, %v6003
      %v6073 = vpack.c.b16 %v6006, %v6005
      %v6074 = vpack.c.b16 %v6008, %v6007
      %v6075 = vpack.c.b16 %v6010, %v6009
      %v6076 = vpack.c.b16 %v6012, %v6011
      %v6077 = vpack.c.b16 %v6014, %v6013
      %v6078 = vpack.c.b16 %v6016, %v6015
      %v6079 = vpack.c.b16 %v6018, %v6017
      %v6080 = vpack.c.b16 %v6020, %v6019
      %v6081 = vpack.c.b16 %v6022, %v6021
      %v6082 = vpack.c.b16 %v6024, %v6023
      %v6083 = vpack.c.b16 %v6026, %v6025
      %v6084 = vpack.c.b16 %v6028, %v6027
      %v6085 = vpack.c.b16 %v6030, %v6029
      %v6086 = vpack.c.b16 %v6032, %v6031
      %v6087 = vpack.c.b16 %v6034, %v6033
      %v6088 = vpack.c.b16 %v6036, %v6035
      %v6089 = vpack.c.b16 %v6038, %v6037
      %v6090 = vpack.c.b16 %v6040, %v6039
      %v6091 = vpack.c.b16 %v6042, %v6041
      %v6092 = vpack.c.b16 %v6044, %v6043
      %v6093 = vpack.c.b16 %v6046, %v6045
      %v6094 = vpack.c.b16 %v6048, %v6047
      %v6095 = vpack.c.b16 %v6050, %v6049
      %v6096 = vpack.c.b16 %v6052, %v6051
      %v6097 = vpack.c.b16 %v6054, %v6053
      %v6098 = vpack.c.b16 %v6056, %v6055
      %v6099 = vpack.c.b16 %v6058, %v6057
      %v6100 = vpack.c.b16 %v6060, %v6059
      %v6101 = vpack.c.b16 %v6062, %v6061
      %v6102 = vpack.c.b16 %v6064, %v6063
      %v6103 = vpack.c.b16 %v6066, %v6065
      %v6104 = vpack.c.b16 %v6068, %v6067
      %v6142 = vsel %vm608, %v5845, 0
      %6144 = vmatprep.subr.bf16.mxu0 0
      %6145 = vmatpush1.bf16.msra.mxu0 %v6069
      %6146 = vmatprep.subr.bf16.mxu0 0
      %6147 = vmatpush1.bf16.msra.mxu0 %v6070
      %6148 = vmatprep.subr.bf16.mxu0 0
      %6149 = vmatpush1.bf16.msra.mxu0 %v6071
      %6150 = vmatprep.subr.bf16.mxu0 0
      %6151 = vmatpush1.bf16.msra.mxu0 %v6072
      %6152 = vmatprep.subr.bf16.mxu0 0
      %6153 = vmatpush1.bf16.msra.mxu0 %v6073
      %6154 = vmatprep.subr.bf16.mxu0 0
      %6155 = vmatpush1.bf16.msra.mxu0 %v6074
      %6156 = vmatprep.subr.bf16.mxu0 0
      %6157 = vmatpush1.bf16.msra.mxu0 %v6075
      %6158 = vmatprep.subr.bf16.mxu0 0
      %6159 = vmatpush1.bf16.msra.mxu0 %v6076
      %6160 = vmatprep.subr.bf16.mxu0 0
      %6161 = vmatpush1.bf16.msra.mxu0 %v6077
      %6162 = vmatprep.subr.bf16.mxu0 0
      %6163 = vmatpush1.bf16.msra.mxu0 %v6078
      %6164 = vmatprep.subr.bf16.mxu0 0
      %6165 = vmatpush1.bf16.msra.mxu0 %v6079
      %6166 = vmatprep.subr.bf16.mxu0 0
      %6167 = vmatpush1.bf16.msra.mxu0 %v6080
      %6168 = vmatprep.subr.bf16.mxu0 0
      %6169 = vmatpush1.bf16.msra.mxu0 %v6081
      %6170 = vmatprep.subr.bf16.mxu0 0
      %6171 = vmatpush1.bf16.msra.mxu0 %v6082
      %6172 = vmatprep.subr.bf16.mxu0 0
      %6173 = vmatpush1.bf16.msra.mxu0 %v6083
      %6174 = vmatprep.subr.bf16.mxu0 0
      %6175 = vmatpush1.bf16.msra.mxu0 %v6084
      %6176 = vmatprep.mubr.bf16.mxu0 %v5842
      %6177 = vmatmul.mubr.bf16.gmra.mrb[0].mxu0 %v5841
      %v6178 = vpop.f32.mrb[0].mxu0
      %v6179 = vadd.f32 %v5923, %v6178
      %v6180 = vpop.f32.mrb[0].mxu0
      %v6181 = vpop.f32.mrb[0].mxu0
      %v6182 = vpop.f32.mrb[0].mxu0
      %6183 = vdwg.mxu0
      %6184 = vmatprep.subr.bf16.mxu0 0
      %6185 = vmatpush1.bf16.msra.mxu0 %v6085
      %6186 = vmatprep.subr.bf16.mxu0 0
      %6187 = vmatpush1.bf16.msra.mxu0 %v6086
      %6188 = vmatprep.subr.bf16.mxu0 0
      %6189 = vmatpush1.bf16.msra.mxu0 %v6087
      %6190 = vmatprep.subr.bf16.mxu0 0
      %6191 = vmatpush1.bf16.msra.mxu0 %v6088
      %6192 = vmatprep.subr.bf16.mxu0 0
      %6193 = vmatpush1.bf16.msra.mxu0 %v6089
      %6194 = vmatprep.subr.bf16.mxu0 0
      %6195 = vmatpush1.bf16.msra.mxu0 %v6090
      %6196 = vmatprep.subr.bf16.mxu0 0
      %6197 = vmatpush1.bf16.msra.mxu0 %v6091
      %6198 = vmatprep.subr.bf16.mxu0 0
      %6199 = vmatpush1.bf16.msra.mxu0 %v6092
      %6200 = vmatprep.subr.bf16.mxu0 0
      %6201 = vmatpush1.bf16.msra.mxu0 %v6093
      %6202 = vmatprep.subr.bf16.mxu0 0
      %6203 = vmatpush1.bf16.msra.mxu0 %v6094
      %6204 = vmatprep.subr.bf16.mxu0 0
      %6205 = vmatpush1.bf16.msra.mxu0 %v6095
      %6206 = vmatprep.subr.bf16.mxu0 0
      %6207 = vmatpush1.bf16.msra.mxu0 %v6096
      %6208 = vmatprep.subr.bf16.mxu0 0
      %6209 = vmatpush1.bf16.msra.mxu0 %v6097
      %6210 = vmatprep.subr.bf16.mxu0 0
      %6211 = vmatpush1.bf16.msra.mxu0 %v6098
      %6212 = vmatprep.subr.bf16.mxu0 0
      %6213 = vmatpush1.bf16.msra.mxu0 %v6099
      %6214 = vmatprep.subr.bf16.mxu0 0
      %6215 = vmatpush1.bf16.msra.mxu0 %v6100
      %6216 = vmatprep.mubr.bf16.mxu0 %v5844
      %6217 = vmatmul.mubr.bf16.gmra.mrb[0].mxu0 %v5843
      %v6218 = vpop.f32.mrb[0].mxu0
      %v6219 = vadd.f32 %v6179, %v6218
      %v6220 = vpop.f32.mrb[0].mxu0
      %v6221 = vpop.f32.mrb[0].mxu0
      %v6222 = vpop.f32.mrb[0].mxu0
      %6223 = vdwg.mxu0
      %6224 = vmatprep.subr.bf16.mxu0 0
      %6225 = vmatpush1.bf16.msra.mxu0 %v6101
      %6226 = vmatprep.subr.bf16.mxu0 0
      %6227 = vmatpush1.bf16.msra.mxu0 %v6102
      %6228 = vmatprep.subr.bf16.mxu0 0
      %6229 = vmatpush1.bf16.msra.mxu0 %v6103
      %6230 = vmatprep.subr.bf16.mxu0 0
      %6231 = vmatpush1.bf16.msra.mxu0 %v6104
      %6232 = vmatprep.subr.bf16.mxu0 0
      %6233 = vmatpush1.bf16.msra.mxu0 0
      %6234 = vmatprep.subr.bf16.mxu0 0
      %6235 = vmatpush1.bf16.msra.mxu0 0
      %6236 = vmatprep.subr.bf16.mxu0 0
      %6237 = vmatpush1.bf16.msra.mxu0 0
      %6238 = vmatprep.subr.bf16.mxu0 0
      %6239 = vmatpush1.bf16.msra.mxu0 0
      %6240 = vmatprep.subr.bf16.mxu0 0
      %6241 = vmatpush1.bf16.msra.mxu0 0
      %6242 = vmatprep.subr.bf16.mxu0 0
      %6243 = vmatpush1.bf16.msra.mxu0 0
      %6244 = vmatprep.subr.bf16.mxu0 0
      %6245 = vmatpush1.bf16.msra.mxu0 0
      %6246 = vmatprep.subr.bf16.mxu0 0
      %6247 = vmatpush1.bf16.msra.mxu0 0
      %6248 = vmatprep.subr.bf16.mxu0 0
      %6249 = vmatpush1.bf16.msra.mxu0 0
      %6250 = vmatprep.subr.bf16.mxu0 0
      %6251 = vmatpush1.bf16.msra.mxu0 0
      %6252 = vmatprep.subr.bf16.mxu0 0
      %6253 = vmatpush1.bf16.msra.mxu0 0
      %6254 = vmatprep.subr.bf16.mxu0 0
      %6255 = vmatpush1.bf16.msra.mxu0 0
      %6256 = vmatprep.mubr.bf16.mxu0 0
      %6257 = vmatmul.mubr.bf16.gmra.mrb[0].mxu0 %v6142
      %v6258 = vpop.f32.mrb[0].mxu0
      %v6259 = vadd.f32 %v6219, %v6258
      %v6260 = vpop.f32.mrb[0].mxu0
      %v6261 = vpop.f32.mrb[0].mxu0
      %v6262 = vpop.f32.mrb[0].mxu0
      %6263 = vdwg.mxu0
      %v6264 = vmul.f32 %v6259, 0.251
      %v6265 = vadd.f32 %v6264, 1.4855
      %v6266 = vmul.f32 %v6265, %v6259
      %v6267 = vadd.f32 %v6266, 3.052
      %v6268 = vmul.f32 %v6267, %v6259
      %v6269 = vadd.f32 %v6268, 2.3235
      %v6270 = vmul.f32 %v6269, %v6259
      %v6271 = vadd.f32 %v6270, 0.6184
      %v6272 = vmul.f32 %v6271, %v6259
      %v6273 = vadd.f32 %v6272, 0.0298
      %v6274 = vand.u32 2147483647, %v6259
      %v6275 = vmul.f32 %v6274, 0.0
      %v6276 = vadd.f32 %v6275, 3.0
      %v6277 = vmul.f32 %v6276, %v6274
      %v6278 = vadd.f32 %v6277, 0.0
      %v6279 = vmul.f32 %v6278, %v6274
      %v6280 = vadd.f32 %v6279, 2.3831
      %v6281 = vmul.f32 %v6280, %v6274
      %v6282 = vadd.f32 %v6281, 1.0
      %v6283 = vrcp.pop %v6282
      %v6284 = vmul.f32 %v6273, %v6283
      %6285 = vst [vmem:[#allocation6 + $0x9] sm:$0x3] %v6284
      %v6286 = vld [vmem:[#allocation6] sm:$0xff]
      %v6287 = vld [vmem:[#allocation6 + $0x8] sm:$0xff]
      %6288 = vst [vmem:[#allocation9] sm:$0xff] %v6286
      %6289 = vst [vmem:[#allocation9 + $0x48] sm:$0xff] %v6287
      %v6290 = vld [vmem:[#allocation6 + $0x1] sm:$0xff]
      %v6291 = vld [vmem:[#allocation6 + $0x9] sm:$0xff]
      %6292 = vst [vmem:[#allocation9 + $0x8] sm:$0xff] %v6290
      %6293 = vst [vmem:[#allocation9 + $0x50] sm:$0xff] %v6291
      %v6294 = vld [vmem:[#allocation6 + $0x2] sm:$0xff]
      %v6295 = vld [vmem:[#allocation6 + $0xa] sm:$0xff]
      %6296 = vst [vmem:[#allocation9 + $0x10] sm:$0xff] %v6294
      %6297 = vst [vmem:[#allocation9 + $0x58] sm:$0xff] %v6295
      %v6298 = vld [vmem:[#allocation6 + $0x4] sm:$0xff]
      %v6299 = vld [vmem:[#allocation6 + $0xc] sm:$0xff]
      %6300 = vst [vmem:[#allocation9 + $0x18] sm:$0xff] %v6298
      %6301 = vst [vmem:[#allocation9 + $0x60] sm:$0xff] %v6299
      %v6302 = vld [vmem:[#allocation6 + $0x5] sm:$0xff]
      %v6303 = vld [vmem:[#allocation6 + $0xd] sm:$0xff]
      %6304 = vst [vmem:[#allocation9 + $0x20] sm:$0xff] %v6302
      %6305 = vst [vmem:[#allocation9 + $0x68] sm:$0xff] %v6303
      %v6306 = vld [vmem:[#allocation6 + $0x6] sm:$0xff]
      %v6307 = vld [vmem:[#allocation6 + $0xe] sm:$0xff]
      %6308 = vst [vmem:[#allocation9 + $0x28] sm:$0xff] %v6306
      %6309 = vst [vmem:[#allocation9 + $0x70] sm:$0xff] %v6307
      %v6310 = vld [vmem:[#allocation6 + $0x8] sm:$0xff]
      %v6311 = vld [vmem:[#allocation6 + $0x10] sm:$0xff]
      %6312 = vst [vmem:[#allocation9 + $0x30] sm:$0xff] %v6310
      %6313 = vst [vmem:[#allocation9 + $0x78] sm:$0xff] %v6311
      %v6314 = vld [vmem:[#allocation6 + $0x9] sm:$0xff]
      %v6315 = vld [vmem:[#allocation6 + $0x11] sm:$0xff]
      %6316 = vst [vmem:[#allocation9 + $0x38] sm:$0xff] %v6314
      %6317 = vst [vmem:[#allocation9 + $0x80] sm:$0xff] %v6315
      %v6318 = vld [vmem:[#allocation6 + $0xa] sm:$0xff]
      %v6319 = vld [vmem:[#allocation6 + $0x12] sm:$0xff]
      %6320 = vst [vmem:[#allocation9 + $0x40] sm:$0xff] %v6318
      %6321 = vst [vmem:[#allocation9 + $0x88] sm:$0xff] %v6319
      %v6322 = vld [vmem:[#allocation9] sm:$0xff]
      %v6323 = vld [vmem:[#allocation9 + $0x8] sm:$0xff]
      %v6324 = vld [vmem:[#allocation9 + $0x10] sm:$0xff]
      %v6325 = vld [vmem:[#allocation9 + $0x18] sm:$0xff]
      %v6326 = vld [vmem:[#allocation9 + $0x20] sm:$0xff]
      %v6327 = vld [vmem:[#allocation9 + $0x28] sm:$0xff]
      %v6328 = vld [vmem:[#allocation9 + $0x30] sm:$0xff]
      %v6329 = vld [vmem:[#allocation9 + $0x38] sm:$0xff]
      %v6330 = vld [vmem:[#allocation9 + $0x40] sm:$0xff]
      %v6331 = vld [vmem:[#allocation9 + $0x48] sm:$0xff]
      %v6332 = vld [vmem:[#allocation9 + $0x50] sm:$0xff]
      %v6333 = vld [vmem:[#allocation9 + $0x58] sm:$0xff]
      %v6334 = vld [vmem:[#allocation9 + $0x60] sm:$0xff]
      %v6335 = vld [vmem:[#allocation9 + $0x68] sm:$0xff]
      %v6336 = vld [vmem:[#allocation9 + $0x70] sm:$0xff]
      %v6337 = vld [vmem:[#allocation9 + $0x78] sm:$0xff]
      %v6338 = vld [vmem:[#allocation9 + $0x80] sm:$0xff]
      %v6339 = vld [vmem:[#allocation9 + $0x88] sm:$0xff]
      %v6340 = vpack.c.bf16 %v6331, %v6322
      %v6341 = vpack.c.bf16 %v6332, %v6323
      %v6342 = vpack.c.bf16 %v6333, %v6324
      %v6343 = vpack.c.bf16 %v6334, %v6325
      %v6344 = vpack.c.bf16 %v6335, %v6326
      %v6345 = vpack.c.bf16 %v6336, %v6327
      %v6346 = vpack.c.bf16 %v6337, %v6328
      %v6347 = vpack.c.bf16 %v6338, %v6329
      %v6348 = vpack.c.bf16 %v6339, %v6330
      %v6349 = vld [vmem:[%s6] sm:$0xf]
      %v6350 = vld [vmem:[%s6 + $0x4] sm:$0xf]
      %v6351 = vld [vmem:[%s6 + $0x8] sm:$0xf]
      %v6352 = vld [vmem:[%s6 + $0xc] sm:$0xf]
      %v6353 = vld [vmem:[%s6 + $0x10] sm:$0xf]
      %v6354 = vld [vmem:[%s6 + $0x14] sm:$0xf]
      %v6355 = vld [vmem:[%s6 + $0x18] sm:$0xf]
      %v6356 = vld [vmem:[%s6 + $0x1c] sm:$0xf]
      %v6357 = vld [vmem:[%s6 + $0x20] sm:$0xf]
      %v6358 = vld [vmem:[%s6 + $0x24] sm:$0xf]
      %v6359 = vld [vmem:[%s6 + $0x28] sm:$0xf]
      %v6360 = vld [vmem:[%s6 + $0x2c] sm:$0xf]
      %v6361 = vld [vmem:[%s6 + $0x30] sm:$0xf]
      %v6362 = vld [vmem:[%s6 + $0x34] sm:$0xf]
      %v6363 = vld [vmem:[%s6 + $0x38] sm:$0xf]
      %v6364 = vld [vmem:[%s6 + $0x3c] sm:$0xf]
      %v6365 = vld [vmem:[%s6 + $0x40] sm:$0xf]
      %v6366 = vld [vmem:[%s6 + $0x44] sm:$0xf]
      %v6367 = vld [vmem:[%s6 + $0x48] sm:$0xf]
      %v6368 = vld [vmem:[%s6 + $0x4c] sm:$0xf]
      %v6369 = vld [vmem:[%s6 + $0x50] sm:$0xf]
      %v6370 = vld [vmem:[%s6 + $0x54] sm:$0xf]
      %v6371 = vld [vmem:[%s6 + $0x58] sm:$0xf]
      %v6372 = vld [vmem:[%s6 + $0x5c] sm:$0xf]
      %v6373 = vld [vmem:[%s6 + $0x60] sm:$0xf]
      %v6374 = vld [vmem:[%s6 + $0x64] sm:$0xf]
      %v6375 = vld [vmem:[%s6 + $0x68] sm:$0xf]
      %v6376 = vld [vmem:[%s6 + $0x6c] sm:$0xf]
      %v6377 = vld [vmem:[%s6 + $0x70] sm:$0xf]
      %v6378 = vld [vmem:[%s6 + $0x74] sm:$0xf]
      %v6379 = vld [vmem:[%s6 + $0x78] sm:$0xf]
      %v6380 = vld [vmem:[%s6 + $0x7c] sm:$0xf]
      %v6381 = vld [vmem:[%s6 + $0x80] sm:$0xf]
      %v6382 = vld [vmem:[%s6 + $0x84] sm:$0xf]
      %v6383 = vld [vmem:[%s6 + $0x88] sm:$0xf]
      %v6384 = vld [vmem:[%s6 + $0x8c] sm:$0xf]
      %v6385 = vld [vmem:[%s6 + $0x90] sm:$0xf]
      %v6386 = vld [vmem:[%s6 + $0x94] sm:$0xf]
      %v6387 = vld [vmem:[%s6 + $0x98] sm:$0xf]
      %v6388 = vld [vmem:[%s6 + $0x9c] sm:$0xf]
      %v6389 = vld [vmem:[%s6 + $0xa0] sm:$0xf]
      %v6390 = vld [vmem:[%s6 + $0xa4] sm:$0xf]
      %v6391 = vld [vmem:[%s6 + $0xa8] sm:$0xf]
      %v6392 = vld [vmem:[%s6 + $0xac] sm:$0xf]
      %v6393 = vld [vmem:[%s6 + $0xb0] sm:$0xf]
      %v6394 = vld [vmem:[%s6 + $0xb4] sm:$0xf]
      %v6395 = vld [vmem:[%s6 + $0xb8] sm:$0xf]
      %v6396 = vld [vmem:[%s6 + $0xbc] sm:$0xf]
      %v6397 = vld [vmem:[%s6 + $0xc0] sm:$0xf]
      %v6398 = vld [vmem:[%s6 + $0xc4] sm:$0xf]
      %v6399 = vld [vmem:[%s6 + $0xc8] sm:$0xf]
      %v6400 = vld [vmem:[%s6 + $0xcc] sm:$0xf]
      %v6401 = vld [vmem:[%s6 + $0xd0] sm:$0xf]
      %v6402 = vld [vmem:[%s6 + $0xd4] sm:$0xf]
      %v6403 = vld [vmem:[%s6 + $0xd8] sm:$0xf]
      %v6404 = vld [vmem:[%s6 + $0xdc] sm:$0xf]
      %v6405 = vld [vmem:[%s6 + $0xe0] sm:$0xf]
      %v6406 = vld [vmem:[%s6 + $0xe4] sm:$0xf]
      %v6407 = vld [vmem:[%s6 + $0xe8] sm:$0xf]
      %v6408 = vld [vmem:[%s6 + $0xec] sm:$0xf]
      %v6409 = vld [vmem:[%s6 + $0xf0] sm:$0xf]
      %v6410 = vld [vmem:[%s6 + $0xf4] sm:$0xf]
      %v6411 = vld [vmem:[%s6 + $0xf8] sm:$0xf]
      %v6412 = vld [vmem:[%s6 + $0xfc] sm:$0xf]
      %v6413 = vld [vmem:[%s6 + $0x100] sm:$0xf]
      %v6414 = vld [vmem:[%s6 + $0x104] sm:$0xf]
      %v6415 = vld [vmem:[%s6 + $0x108] sm:$0xf]
      %v6416 = vld [vmem:[%s6 + $0x10c] sm:$0xf]
      %v6417 = vld [vmem:[%s6 + $0x110] sm:$0xf]
      %v6418 = vld [vmem:[%s6 + $0x114] sm:$0xf]
      %v6419 = vld [vmem:[%s6 + $0x118] sm:$0xf]
      %v6420 = vld [vmem:[%s6 + $0x11c] sm:$0xf]
      %v6421 = vld [vmem:[%s6 + $0x120] sm:$0xf]
      %v6422 = vld [vmem:[%s6 + $0x124] sm:$0xf]
      %v6423 = vld [vmem:[%s6 + $0x128] sm:$0xf]
      %v6424 = vld [vmem:[%s6 + $0x12c] sm:$0xf]
      %v6425 = vld [vmem:[%s6 + $0x130] sm:$0xf]
      %v6426 = vld [vmem:[%s6 + $0x134] sm:$0xf]
      %v6427 = vld [vmem:[%s6 + $0x138] sm:$0xf]
      %v6428 = vld [vmem:[%s6 + $0x13c] sm:$0xf]
      %v6429 = vld [vmem:[%s6 + $0x140] sm:$0xf]
      %v6430 = vld [vmem:[%s6 + $0x144] sm:$0xf]
      %v6431 = vld [vmem:[%s6 + $0x148] sm:$0xf]
      %v6432 = vld [vmem:[%s6 + $0x14c] sm:$0xf]
      %v6433 = vld [vmem:[%s6 + $0x150] sm:$0xf]
      %v6434 = vld [vmem:[%s6 + $0x154] sm:$0xf]
      %v6435 = vld [vmem:[%s6 + $0x158] sm:$0xf]
      %v6436 = vld [vmem:[%s6 + $0x15c] sm:$0xf]
      %v6437 = vld [vmem:[%s6 + $0x160] sm:$0xf]
      %v6438 = vld [vmem:[%s6 + $0x164] sm:$0xf]
      %v6439 = vld [vmem:[%s6 + $0x168] sm:$0xf]
      %v6440 = vld [vmem:[%s6 + $0x16c] sm:$0xf]
      %v6441 = vld [vmem:[%s6 + $0x170] sm:$0xf]
      %v6442 = vld [vmem:[%s6 + $0x174] sm:$0xf]
      %v6443 = vld [vmem:[%s6 + $0x178] sm:$0xf]
      %v6444 = vld [vmem:[%s6 + $0x17c] sm:$0xf]
      %v6445 = vld [vmem:[%s6 + $0x180] sm:$0xf]
      %v6446 = vld [vmem:[%s6 + $0x184] sm:$0xf]
      %v6447 = vld [vmem:[%s6 + $0x188] sm:$0xf]
      %v6448 = vld [vmem:[%s6 + $0x18c] sm:$0xf]
      %v6449 = vld [vmem:[%s6 + $0x190] sm:$0xf]
      %v6450 = vld [vmem:[%s6 + $0x194] sm:$0xf]
      %v6451 = vld [vmem:[%s6 + $0x198] sm:$0xf]
      %v6452 = vld [vmem:[%s6 + $0x19c] sm:$0xf]
      %v6453 = vld [vmem:[%s6 + $0x1a0] sm:$0xf]
      %v6454 = vld [vmem:[%s6 + $0x1a4] sm:$0xf]
      %v6455 = vld [vmem:[%s6 + $0x1a8] sm:$0xf]
      %v6456 = vld [vmem:[%s6 + $0x1ac] sm:$0xf]
      %v6457 = vld [vmem:[%s6 + $0x1b0] sm:$0xf]
      %v6458 = vld [vmem:[%s6 + $0x1b4] sm:$0xf]
      %v6459 = vld [vmem:[%s6 + $0x1b8] sm:$0xf]
      %v6460 = vld [vmem:[%s6 + $0x1bc] sm:$0xf]
      %v6461 = vld [vmem:[%s6 + $0x1c0] sm:$0xf]
      %v6462 = vld [vmem:[%s6 + $0x1c4] sm:$0xf]
      %v6463 = vld [vmem:[%s6 + $0x1c8] sm:$0xf]
      %v6464 = vld [vmem:[%s6 + $0x1cc] sm:$0xf]
      %v6465 = vld [vmem:[%s6 + $0x1d0] sm:$0xf]
      %v6466 = vld [vmem:[%s6 + $0x1d4] sm:$0xf]
      %v6467 = vld [vmem:[%s6 + $0x1d8] sm:$0xf]
      %v6468 = vld [vmem:[%s6 + $0x1dc] sm:$0xf]
      %v6469 = vld [vmem:[%s6 + $0x1e0] sm:$0xf]
      %v6470 = vld [vmem:[%s6 + $0x1e4] sm:$0xf]
      %v6471 = vld [vmem:[%s6 + $0x1e8] sm:$0xf]
      %v6472 = vld [vmem:[%s6 + $0x1ec] sm:$0xf]
      %v6473 = vld [vmem:[%s6 + $0x1f0] sm:$0xf]
      %v6474 = vld [vmem:[%s6 + $0x1f4] sm:$0xf]
      %v6475 = vld [vmem:[%s6 + $0x1f8] sm:$0xf]
      %v6476 = vld [vmem:[%s6 + $0x1fc] sm:$0xf]
      %v6477 = vld [vmem:[%s6 + $0x200] sm:$0xf]
      %v6478 = vld [vmem:[%s6 + $0x204] sm:$0xf]
      %v6479 = vld [vmem:[%s6 + $0x208] sm:$0xf]
      %v6480 = vld [vmem:[%s6 + $0x20c] sm:$0xf]
      %v6481 = vld [vmem:[%s6 + $0x210] sm:$0xf]
      %v6482 = vld [vmem:[%s6 + $0x214] sm:$0xf]
      %v6483 = vld [vmem:[%s6 + $0x218] sm:$0xf]
      %v6484 = vld [vmem:[%s6 + $0x21c] sm:$0xf]
      %v6485 = vld [vmem:[%s6 + $0x220] sm:$0xf]
      %v6486 = vld [vmem:[%s6 + $0x224] sm:$0xf]
      %v6487 = vld [vmem:[%s6 + $0x228] sm:$0xf]
      %v6488 = vld [vmem:[%s6 + $0x22c] sm:$0xf]
      %v6489 = vld [vmem:[%s6 + $0x230] sm:$0xf]
      %v6490 = vld [vmem:[%s6 + $0x234] sm:$0xf]
      %v6491 = vld [vmem:[%s6 + $0x238] sm:$0xf]
      %v6492 = vld [vmem:[%s6 + $0x23c] sm:$0xf]
      %v6493 = vld [vmem:[%s13] sm:$0x1]
      %v6495 = vlaneseq
      %v6496 = vshrl.u32 %v6495, 7
      %v6497 = vsub.s32 0, %v6496
      %v6498 = vrot.slane %v6493, %v6497
      %v6644 = vunpack.c.l.b16 %v6349
      %v6645 = vunpack.c.l.b16 %v6350
      %v6646 = vunpack.c.l.b16 %v6351
      %v6647 = vunpack.c.l.b16 %v6352
      %v6648 = vunpack.c.l.b16 %v6353
      %v6649 = vunpack.c.l.b16 %v6354
      %v6650 = vunpack.c.l.b16 %v6355
      %v6651 = vunpack.c.l.b16 %v6356
      %v6652 = vunpack.c.l.b16 %v6357
      %v6653 = vunpack.c.l.b16 %v6358
      %v6654 = vunpack.c.l.b16 %v6359
      %v6655 = vunpack.c.l.b16 %v6360
      %v6656 = vunpack.c.l.b16 %v6361
      %v6657 = vunpack.c.l.b16 %v6362
      %v6658 = vunpack.c.l.b16 %v6363
      %v6659 = vunpack.c.l.b16 %v6364
      %v6660 = vunpack.c.l.b16 %v6365
      %v6661 = vunpack.c.l.b16 %v6366
      %v6662 = vunpack.c.l.b16 %v6367
      %v6663 = vunpack.c.l.b16 %v6368
      %v6664 = vunpack.c.l.b16 %v6369
      %v6665 = vunpack.c.l.b16 %v6370
      %v6666 = vunpack.c.l.b16 %v6371
      %v6667 = vunpack.c.l.b16 %v6372
      %v6668 = vunpack.c.l.b16 %v6373
      %v6669 = vunpack.c.l.b16 %v6374
      %v6670 = vunpack.c.l.b16 %v6375
      %v6671 = vunpack.c.l.b16 %v6376
      %v6672 = vunpack.c.l.b16 %v6377
      %v6673 = vunpack.c.l.b16 %v6378
      %v6674 = vunpack.c.l.b16 %v6379
      %v6675 = vunpack.c.l.b16 %v6380
      %v6676 = vunpack.c.l.b16 %v6381
      %v6677 = vunpack.c.l.b16 %v6382
      %v6678 = vunpack.c.l.b16 %v6383
      %v6679 = vunpack.c.l.b16 %v6384
      %v6680 = vunpack.c.l.b16 %v6385
      %v6681 = vunpack.c.l.b16 %v6386
      %v6682 = vunpack.c.l.b16 %v6387
      %v6683 = vunpack.c.l.b16 %v6388
      %v6684 = vunpack.c.l.b16 %v6389
      %v6685 = vunpack.c.l.b16 %v6390
      %v6686 = vunpack.c.l.b16 %v6391
      %v6687 = vunpack.c.l.b16 %v6392
      %v6688 = vunpack.c.l.b16 %v6393
      %v6689 = vunpack.c.l.b16 %v6394
      %v6690 = vunpack.c.l.b16 %v6395
      %v6691 = vunpack.c.l.b16 %v6396
      %v6692 = vunpack.c.l.b16 %v6397
      %v6693 = vunpack.c.l.b16 %v6398
      %v6694 = vunpack.c.l.b16 %v6399
      %v6695 = vunpack.c.l.b16 %v6400
      %v6696 = vunpack.c.l.b16 %v6401
      %v6697 = vunpack.c.l.b16 %v6402
      %v6698 = vunpack.c.l.b16 %v6403
      %v6699 = vunpack.c.l.b16 %v6404
      %v6700 = vunpack.c.l.b16 %v6405
      %v6701 = vunpack.c.l.b16 %v6406
      %v6702 = vunpack.c.l.b16 %v6407
      %v6703 = vunpack.c.l.b16 %v6408
      %v6704 = vunpack.c.l.b16 %v6409
      %v6705 = vunpack.c.l.b16 %v6410
      %v6706 = vunpack.c.l.b16 %v6411
      %v6707 = vunpack.c.l.b16 %v6412
      %v6708 = vunpack.c.l.b16 %v6413
      %v6709 = vunpack.c.l.b16 %v6414
      %v6710 = vunpack.c.l.b16 %v6415
      %v6711 = vunpack.c.l.b16 %v6416
      %v6712 = vunpack.c.l.b16 %v6417
      %v6713 = vunpack.c.l.b16 %v6418
      %v6714 = vunpack.c.l.b16 %v6419
      %v6715 = vunpack.c.l.b16 %v6420
      %v6716 = vunpack.c.l.b16 %v6421
      %v6717 = vunpack.c.l.b16 %v6422
      %v6718 = vunpack.c.l.b16 %v6423
      %v6719 = vunpack.c.l.b16 %v6424
      %v6720 = vunpack.c.l.b16 %v6425
      %v6721 = vunpack.c.l.b16 %v6426
      %v6722 = vunpack.c.l.b16 %v6427
      %v6723 = vunpack.c.l.b16 %v6428
      %v6724 = vunpack.c.l.b16 %v6429
      %v6725 = vunpack.c.l.b16 %v6430
      %v6726 = vunpack.c.l.b16 %v6431
      %v6727 = vunpack.c.l.b16 %v6432
      %v6728 = vunpack.c.l.b16 %v6433
      %v6729 = vunpack.c.l.b16 %v6434
      %v6730 = vunpack.c.l.b16 %v6435
      %v6731 = vunpack.c.l.b16 %v6436
      %v6732 = vunpack.c.l.b16 %v6437
      %v6733 = vunpack.c.l.b16 %v6438
      %v6734 = vunpack.c.l.b16 %v6439
      %v6735 = vunpack.c.l.b16 %v6440
      %v6736 = vunpack.c.l.b16 %v6441
      %v6737 = vunpack.c.l.b16 %v6442
      %v6738 = vunpack.c.l.b16 %v6443
      %v6739 = vunpack.c.l.b16 %v6444
      %v6740 = vunpack.c.l.b16 %v6445
      %v6741 = vunpack.c.l.b16 %v6446
      %v6742 = vunpack.c.l.b16 %v6447
      %v6743 = vunpack.c.l.b16 %v6448
      %v6744 = vunpack.c.l.b16 %v6449
      %v6745 = vunpack.c.l.b16 %v6450
      %v6746 = vunpack.c.l.b16 %v6451
      %v6747 = vunpack.c.l.b16 %v6452
      %v6748 = vunpack.c.l.b16 %v6453
      %v6749 = vunpack.c.l.b16 %v6454
      %v6750 = vunpack.c.l.b16 %v6455
      %v6751 = vunpack.c.l.b16 %v6456
      %v6752 = vunpack.c.l.b16 %v6457
      %v6753 = vunpack.c.l.b16 %v6458
      %v6754 = vunpack.c.l.b16 %v6459
      %v6755 = vunpack.c.l.b16 %v6460
      %v6756 = vunpack.c.l.b16 %v6461
      %v6757 = vunpack.c.l.b16 %v6462
      %v6758 = vunpack.c.l.b16 %v6463
      %v6759 = vunpack.c.l.b16 %v6464
      %v6760 = vunpack.c.l.b16 %v6465
      %v6761 = vunpack.c.l.b16 %v6466
      %v6762 = vunpack.c.l.b16 %v6467
      %v6763 = vunpack.c.l.b16 %v6468
      %v6764 = vunpack.c.l.b16 %v6469
      %v6765 = vunpack.c.l.b16 %v6470
      %v6766 = vunpack.c.l.b16 %v6471
      %v6767 = vunpack.c.l.b16 %v6472
      %v6768 = vunpack.c.l.b16 %v6473
      %v6769 = vunpack.c.l.b16 %v6474
      %v6770 = vunpack.c.l.b16 %v6475
      %v6771 = vunpack.c.l.b16 %v6476
      %v6772 = vunpack.c.l.b16 %v6477
      %v6773 = vunpack.c.l.b16 %v6478
      %v6774 = vunpack.c.l.b16 %v6479
      %v6775 = vunpack.c.l.b16 %v6480
      %v6776 = vunpack.c.l.b16 %v6481
      %v6777 = vunpack.c.l.b16 %v6482
      %v6778 = vunpack.c.l.b16 %v6483
      %v6779 = vunpack.c.l.b16 %v6484
      %v6780 = vunpack.c.l.b16 %v6485
      %v6781 = vunpack.c.l.b16 %v6486
      %v6782 = vunpack.c.l.b16 %v6487
      %v6783 = vunpack.c.l.b16 %v6488
      %v6784 = vunpack.c.l.b16 %v6489
      %v6785 = vunpack.c.l.b16 %v6490
      %v6786 = vunpack.c.l.b16 %v6491
      %v6787 = vunpack.c.l.b16 %v6492
      %v6788 = vpack.c.b16 %v6645, %v6644
      %v6789 = vpack.c.b16 %v6647, %v6646
      %v6790 = vpack.c.b16 %v6649, %v6648
      %v6791 = vpack.c.b16 %v6651, %v6650
      %v6792 = vpack.c.b16 %v6653, %v6652
      %v6793 = vpack.c.b16 %v6655, %v6654
      %v6794 = vpack.c.b16 %v6657, %v6656
      %v6795 = vpack.c.b16 %v6659, %v6658
      %v6796 = vpack.c.b16 %v6661, %v6660
      %v6797 = vpack.c.b16 %v6663, %v6662
      %v6798 = vpack.c.b16 %v6665, %v6664
      %v6799 = vpack.c.b16 %v6667, %v6666
      %v6800 = vpack.c.b16 %v6669, %v6668
      %v6801 = vpack.c.b16 %v6671, %v6670
      %v6802 = vpack.c.b16 %v6673, %v6672
      %v6803 = vpack.c.b16 %v6675, %v6674
      %v6804 = vpack.c.b16 %v6677, %v6676
      %v6805 = vpack.c.b16 %v6679, %v6678
      %v6806 = vpack.c.b16 %v6681, %v6680
      %v6807 = vpack.c.b16 %v6683, %v6682
      %v6808 = vpack.c.b16 %v6685, %v6684
      %v6809 = vpack.c.b16 %v6687, %v6686
      %v6810 = vpack.c.b16 %v6689, %v6688
      %v6811 = vpack.c.b16 %v6691, %v6690
      %v6812 = vpack.c.b16 %v6693, %v6692
      %v6813 = vpack.c.b16 %v6695, %v6694
      %v6814 = vpack.c.b16 %v6697, %v6696
      %v6815 = vpack.c.b16 %v6699, %v6698
      %v6816 = vpack.c.b16 %v6701, %v6700
      %v6817 = vpack.c.b16 %v6703, %v6702
      %v6818 = vpack.c.b16 %v6705, %v6704
      %v6819 = vpack.c.b16 %v6707, %v6706
      %v6820 = vpack.c.b16 %v6709, %v6708
      %v6821 = vpack.c.b16 %v6711, %v6710
      %v6822 = vpack.c.b16 %v6713, %v6712
      %v6823 = vpack.c.b16 %v6715, %v6714
      %v6824 = vpack.c.b16 %v6717, %v6716
      %v6825 = vpack.c.b16 %v6719, %v6718
      %v6826 = vpack.c.b16 %v6721, %v6720
      %v6827 = vpack.c.b16 %v6723, %v6722
      %v6828 = vpack.c.b16 %v6725, %v6724
      %v6829 = vpack.c.b16 %v6727, %v6726
      %v6830 = vpack.c.b16 %v6729, %v6728
      %v6831 = vpack.c.b16 %v6731, %v6730
      %v6832 = vpack.c.b16 %v6733, %v6732
      %v6833 = vpack.c.b16 %v6735, %v6734
      %v6834 = vpack.c.b16 %v6737, %v6736
      %v6835 = vpack.c.b16 %v6739, %v6738
      %v6836 = vpack.c.b16 %v6741, %v6740
      %v6837 = vpack.c.b16 %v6743, %v6742
      %v6838 = vpack.c.b16 %v6745, %v6744
      %v6839 = vpack.c.b16 %v6747, %v6746
      %v6840 = vpack.c.b16 %v6749, %v6748
      %v6841 = vpack.c.b16 %v6751, %v6750
      %v6842 = vpack.c.b16 %v6753, %v6752
      %v6843 = vpack.c.b16 %v6755, %v6754
      %v6844 = vpack.c.b16 %v6757, %v6756
      %v6845 = vpack.c.b16 %v6759, %v6758
      %v6846 = vpack.c.b16 %v6761, %v6760
      %v6847 = vpack.c.b16 %v6763, %v6762
      %v6848 = vpack.c.b16 %v6765, %v6764
      %v6849 = vpack.c.b16 %v6767, %v6766
      %v6850 = vpack.c.b16 %v6769, %v6768
      %v6851 = vpack.c.b16 %v6771, %v6770
      %v6852 = vpack.c.b16 %v6773, %v6772
      %v6853 = vpack.c.b16 %v6775, %v6774
      %v6854 = vpack.c.b16 %v6777, %v6776
      %v6855 = vpack.c.b16 %v6779, %v6778
      %v6856 = vpack.c.b16 %v6781, %v6780
      %v6857 = vpack.c.b16 %v6783, %v6782
      %v6858 = vpack.c.b16 %v6785, %v6784
      %v6859 = vpack.c.b16 %v6787, %v6786
      %6932 = vmatprep.subr.bf16.mxu0 0
      %6933 = vmatpush1.bf16.msra.mxu0 %v6788
      %6934 = vmatprep.subr.bf16.mxu0 0
      %6935 = vmatpush1.bf16.msra.mxu0 %v6789
      %6936 = vmatprep.subr.bf16.mxu0 0
      %6937 = vmatpush1.bf16.msra.mxu0 %v6790
      %6938 = vmatprep.subr.bf16.mxu0 0
      %6939 = vmatpush1.bf16.msra.mxu0 %v6791
      %6940 = vmatprep.subr.bf16.mxu0 0
      %6941 = vmatpush1.bf16.msra.mxu0 %v6792
      %6942 = vmatprep.subr.bf16.mxu0 0
      %6943 = vmatpush1.bf16.msra.mxu0 %v6793
      %6944 = vmatprep.subr.bf16.mxu0 0
      %6945 = vmatpush1.bf16.msra.mxu0 %v6794
      %6946 = vmatprep.subr.bf16.mxu0 0
      %6947 = vmatpush1.bf16.msra.mxu0 %v6795
      %6948 = vmatprep.subr.bf16.mxu0 0
      %6949 = vmatpush1.bf16.msra.mxu0 %v6796
      %6950 = vmatprep.subr.bf16.mxu0 0
      %6951 = vmatpush1.bf16.msra.mxu0 %v6797
      %6952 = vmatprep.subr.bf16.mxu0 0
      %6953 = vmatpush1.bf16.msra.mxu0 %v6798
      %6954 = vmatprep.subr.bf16.mxu0 0
      %6955 = vmatpush1.bf16.msra.mxu0 %v6799
      %6956 = vmatprep.subr.bf16.mxu0 0
      %6957 = vmatpush1.bf16.msra.mxu0 %v6800
      %6958 = vmatprep.subr.bf16.mxu0 0
      %6959 = vmatpush1.bf16.msra.mxu0 %v6801
      %6960 = vmatprep.subr.bf16.mxu0 0
      %6961 = vmatpush1.bf16.msra.mxu0 %v6802
      %6962 = vmatprep.subr.bf16.mxu0 0
      %6963 = vmatpush1.bf16.msra.mxu0 %v6803
      %6964 = vmatprep.mubr.bf16.mxu0 %v6341
      %6965 = vmatmul.mubr.bf16.gmra.mrb[0].mxu0 %v6340
      %v6966 = vpop.f32.mrb[0].mxu0
      %v6967 = vadd.f32 %v6498, %v6966
      %v6968 = vpop.f32.mrb[0].mxu0
      %v6969 = vpop.f32.mrb[0].mxu0
      %v6970 = vadd.f32 %v6498, %v6969
      %v6971 = vpop.f32.mrb[0].mxu0
      %6972 = vdwg.mxu0
      %6973 = vmatprep.subr.bf16.mxu0 0
      %6974 = vmatpush1.bf16.msra.mxu0 %v6804
      %6975 = vmatprep.subr.bf16.mxu0 0
      %6976 = vmatpush1.bf16.msra.mxu0 %v6805
      %6977 = vmatprep.subr.bf16.mxu0 0
      %6978 = vmatpush1.bf16.msra.mxu0 %v6806
      %6979 = vmatprep.subr.bf16.mxu0 0
      %6980 = vmatpush1.bf16.msra.mxu0 %v6807
      %6981 = vmatprep.subr.bf16.mxu0 0
      %6982 = vmatpush1.bf16.msra.mxu0 %v6808
      %6983 = vmatprep.subr.bf16.mxu0 0
      %6984 = vmatpush1.bf16.msra.mxu0 %v6809
      %6985 = vmatprep.subr.bf16.mxu0 0
      %6986 = vmatpush1.bf16.msra.mxu0 %v6810
      %6987 = vmatprep.subr.bf16.mxu0 0
      %6988 = vmatpush1.bf16.msra.mxu0 %v6811
      %6989 = vmatprep.subr.bf16.mxu0 0
      %6990 = vmatpush1.bf16.msra.mxu0 %v6812
      %6991 = vmatprep.subr.bf16.mxu0 0
      %6992 = vmatpush1.bf16.msra.mxu0 %v6813
      %6993 = vmatprep.subr.bf16.mxu0 0
      %6994 = vmatpush1.bf16.msra.mxu0 %v6814
      %6995 = vmatprep.subr.bf16.mxu0 0
      %6996 = vmatpush1.bf16.msra.mxu0 %v6815
      %6997 = vmatprep.subr.bf16.mxu0 0
      %6998 = vmatpush1.bf16.msra.mxu0 %v6816
      %6999 = vmatprep.subr.bf16.mxu0 0
      %7000 = vmatpush1.bf16.msra.mxu0 %v6817
      %7001 = vmatprep.subr.bf16.mxu0 0
      %7002 = vmatpush1.bf16.msra.mxu0 %v6818
      %7003 = vmatprep.subr.bf16.mxu0 0
      %7004 = vmatpush1.bf16.msra.mxu0 %v6819
      %7005 = vmatprep.mubr.bf16.mxu0 %v6343
      %7006 = vmatmul.mubr.bf16.gmra.mrb[0].mxu0 %v6342
      %v7007 = vpop.f32.mrb[0].mxu0
      %v7008 = vadd.f32 %v6967, %v7007
      %v7009 = vpop.f32.mrb[0].mxu0
      %v7010 = vpop.f32.mrb[0].mxu0
      %v7011 = vadd.f32 %v6970, %v7010
      %v7012 = vpop.f32.mrb[0].mxu0
      %7013 = vdwg.mxu0
      %7014 = vmatprep.subr.bf16.mxu0 0
      %7015 = vmatpush1.bf16.msra.mxu0 %v6820
      %7016 = vmatprep.subr.bf16.mxu0 0
      %7017 = vmatpush1.bf16.msra.mxu0 %v6821
      %7018 = vmatprep.subr.bf16.mxu0 0
      %7019 = vmatpush1.bf16.msra.mxu0 %v6822
      %7020 = vmatprep.subr.bf16.mxu0 0
      %7021 = vmatpush1.bf16.msra.mxu0 %v6823
      %7022 = vmatprep.subr.bf16.mxu0 0
      %7023 = vmatpush1.bf16.msra.mxu0 %v6824
      %7024 = vmatprep.subr.bf16.mxu0 0
      %7025 = vmatpush1.bf16.msra.mxu0 %v6825
      %7026 = vmatprep.subr.bf16.mxu0 0
      %7027 = vmatpush1.bf16.msra.mxu0 %v6826
      %7028 = vmatprep.subr.bf16.mxu0 0
      %7029 = vmatpush1.bf16.msra.mxu0 %v6827
      %7030 = vmatprep.subr.bf16.mxu0 0
      %7031 = vmatpush1.bf16.msra.mxu0 %v6828
      %7032 = vmatprep.subr.bf16.mxu0 0
      %7033 = vmatpush1.bf16.msra.mxu0 %v6829
      %7034 = vmatprep.subr.bf16.mxu0 0
      %7035 = vmatpush1.bf16.msra.mxu0 %v6830
      %7036 = vmatprep.subr.bf16.mxu0 0
      %7037 = vmatpush1.bf16.msra.mxu0 %v6831
      %7038 = vmatprep.subr.bf16.mxu0 0
      %7039 = vmatpush1.bf16.msra.mxu0 %v6832
      %7040 = vmatprep.subr.bf16.mxu0 0
      %7041 = vmatpush1.bf16.msra.mxu0 %v6833
      %7042 = vmatprep.subr.bf16.mxu0 0
      %7043 = vmatpush1.bf16.msra.mxu0 %v6834
      %7044 = vmatprep.subr.bf16.mxu0 0
      %7045 = vmatpush1.bf16.msra.mxu0 %v6835
      %7046 = vmatprep.mubr.bf16.mxu0 %v6345
      %7047 = vmatmul.mubr.bf16.gmra.mrb[0].mxu0 %v6344
      %v7048 = vpop.f32.mrb[0].mxu0
      %v7049 = vadd.f32 %v7008, %v7048
      %v7050 = vpop.f32.mrb[0].mxu0
      %v7051 = vpop.f32.mrb[0].mxu0
      %v7052 = vadd.f32 %v7011, %v7051
      %v7053 = vpop.f32.mrb[0].mxu0
      %7054 = vdwg.mxu0
      %7055 = vmatprep.subr.bf16.mxu0 0
      %7056 = vmatpush1.bf16.msra.mxu0 %v6836
      %7057 = vmatprep.subr.bf16.mxu0 0
      %7058 = vmatpush1.bf16.msra.mxu0 %v6837
      %7059 = vmatprep.subr.bf16.mxu0 0
      %7060 = vmatpush1.bf16.msra.mxu0 %v6838
      %7061 = vmatprep.subr.bf16.mxu0 0
      %7062 = vmatpush1.bf16.msra.mxu0 %v6839
      %7063 = vmatprep.subr.bf16.mxu0 0
      %7064 = vmatpush1.bf16.msra.mxu0 %v6840
      %7065 = vmatprep.subr.bf16.mxu0 0
      %7066 = vmatpush1.bf16.msra.mxu0 %v6841
      %7067 = vmatprep.subr.bf16.mxu0 0
      %7068 = vmatpush1.bf16.msra.mxu0 %v6842
      %7069 = vmatprep.subr.bf16.mxu0 0
      %7070 = vmatpush1.bf16.msra.mxu0 %v6843
      %7071 = vmatprep.subr.bf16.mxu0 0
      %7072 = vmatpush1.bf16.msra.mxu0 %v6844
      %7073 = vmatprep.subr.bf16.mxu0 0
      %7074 = vmatpush1.bf16.msra.mxu0 %v6845
      %7075 = vmatprep.subr.bf16.mxu0 0
      %7076 = vmatpush1.bf16.msra.mxu0 %v6846
      %7077 = vmatprep.subr.bf16.mxu0 0
      %7078 = vmatpush1.bf16.msra.mxu0 %v6847
      %7079 = vmatprep.subr.bf16.mxu0 0
      %7080 = vmatpush1.bf16.msra.mxu0 %v6848
      %7081 = vmatprep.subr.bf16.mxu0 0
      %7082 = vmatpush1.bf16.msra.mxu0 %v6849
      %7083 = vmatprep.subr.bf16.mxu0 0
      %7084 = vmatpush1.bf16.msra.mxu0 %v6850
      %7085 = vmatprep.subr.bf16.mxu0 0
      %7086 = vmatpush1.bf16.msra.mxu0 %v6851
      %7087 = vmatprep.mubr.bf16.mxu0 %v6347
      %7088 = vmatmul.mubr.bf16.gmra.mrb[0].mxu0 %v6346
      %v7089 = vpop.f32.mrb[0].mxu0
      %v7090 = vadd.f32 %v7049, %v7089
      %v7091 = vpop.f32.mrb[0].mxu0
      %v7092 = vpop.f32.mrb[0].mxu0
      %v7093 = vadd.f32 %v7052, %v7092
      %v7094 = vpop.f32.mrb[0].mxu0
      %7095 = vdwg.mxu0
      %7096 = vmatprep.subr.bf16.mxu0 0
      %7097 = vmatpush1.bf16.msra.mxu0 %v6852
      %7098 = vmatprep.subr.bf16.mxu0 0
      %7099 = vmatpush1.bf16.msra.mxu0 %v6853
      %7100 = vmatprep.subr.bf16.mxu0 0
      %7101 = vmatpush1.bf16.msra.mxu0 %v6854
      %7102 = vmatprep.subr.bf16.mxu0 0
      %7103 = vmatpush1.bf16.msra.mxu0 %v6855
      %7104 = vmatprep.subr.bf16.mxu0 0
      %7105 = vmatpush1.bf16.msra.mxu0 %v6856
      %7106 = vmatprep.subr.bf16.mxu0 0
      %7107 = vmatpush1.bf16.msra.mxu0 %v6857
      %7108 = vmatprep.subr.bf16.mxu0 0
      %7109 = vmatpush1.bf16.msra.mxu0 %v6858
      %7110 = vmatprep.subr.bf16.mxu0 0
      %7111 = vmatpush1.bf16.msra.mxu0 %v6859
      %7112 = vmatprep.subr.bf16.mxu0 0
      %7113 = vmatpush1.bf16.msra.mxu0 0
      %7114 = vmatprep.subr.bf16.mxu0 0
      %7115 = vmatpush1.bf16.msra.mxu0 0
      %7116 = vmatprep.subr.bf16.mxu0 0
      %7117 = vmatpush1.bf16.msra.mxu0 0
      %7118 = vmatprep.subr.bf16.mxu0 0
      %7119 = vmatpush1.bf16.msra.mxu0 0
      %7120 = vmatprep.subr.bf16.mxu0 0
      %7121 = vmatpush1.bf16.msra.mxu0 0
      %7122 = vmatprep.subr.bf16.mxu0 0
      %7123 = vmatpush1.bf16.msra.mxu0 0
      %7124 = vmatprep.subr.bf16.mxu0 0
      %7125 = vmatpush1.bf16.msra.mxu0 0
      %7126 = vmatprep.subr.bf16.mxu0 0
      %7127 = vmatpush1.bf16.msra.mxu0 0
      %7128 = vmatprep.mubr.bf16.mxu0 0
      %7129 = vmatmul.mubr.bf16.gmra.mrb[0].mxu0 %v6348
      %v7130 = vpop.f32.mrb[0].mxu0
      %v7131 = vadd.f32 %v7090, %v7130
      %v7132 = vpop.f32.mrb[0].mxu0
      %v7133 = vpop.f32.mrb[0].mxu0
      %v7134 = vadd.f32 %v7093, %v7133
      %v7135 = vpop.f32.mrb[0].mxu0
      %7136 = vdwg.mxu0
      %v7137 = vmul.f32 %v7131, 0.251
      %v7138 = vmul.f32 %v7134, 0.251
      %v7139 = vadd.f32 %v7137, 1.4855
      %v7140 = vadd.f32 %v7138, 1.4855
      %v7141 = vmul.f32 %v7139, %v7131
      %v7142 = vmul.f32 %v7140, %v7134
      %v7143 = vadd.f32 %v7141, 3.052
      %v7144 = vadd.f32 %v7142, 3.052
      %v7145 = vmul.f32 %v7143, %v7131
      %v7146 = vmul.f32 %v7144, %v7134
      %v7147 = vadd.f32 %v7145, 2.3235
      %v7148 = vadd.f32 %v7146, 2.3235
      %v7149 = vmul.f32 %v7147, %v7131
      %v7150 = vmul.f32 %v7148, %v7134
      %v7151 = vadd.f32 %v7149, 0.6184
      %v7152 = vadd.f32 %v7150, 0.6184
      %v7153 = vmul.f32 %v7151, %v7131
      %v7154 = vmul.f32 %v7152, %v7134
      %v7155 = vadd.f32 %v7153, 0.0298
      %v7156 = vadd.f32 %v7154, 0.0298
      %v7157 = vand.u32 2147483647, %v7131
      %v7158 = vand.u32 2147483647, %v7134
      %v7159 = vmul.f32 %v7157, 0.0
      %v7160 = vmul.f32 %v7158, 0.0
      %v7161 = vadd.f32 %v7159, 3.0
      %v7162 = vadd.f32 %v7160, 3.0
      %v7163 = vmul.f32 %v7161, %v7157
      %v7164 = vmul.f32 %v7162, %v7158
      %v7165 = vadd.f32 %v7163, 0.0
      %v7166 = vadd.f32 %v7164, 0.0
      %v7167 = vmul.f32 %v7165, %v7157
      %v7168 = vmul.f32 %v7166, %v7158
      %v7169 = vadd.f32 %v7167, 2.3831
      %v7170 = vadd.f32 %v7168, 2.3831
      %v7171 = vmul.f32 %v7169, %v7157
      %v7172 = vmul.f32 %v7170, %v7158
      %v7173 = vadd.f32 %v7171, 1.0
      %v7174 = vadd.f32 %v7172, 1.0
      %v7175 = vrcp.pop %v7173
      %v7176 = vrcp.pop %v7174
      %v7177 = vmul.f32 %v7155, %v7175
      %v7178 = vmul.f32 %v7156, %v7176
      %v7179 = vpack.c.bf16 %v7178, %v7177
      %v7180 = vld [vmem:[%s7] sm:$0xf]
      %v7181 = vld [vmem:[%s7 + $0x4] sm:$0xf]
      %v7182 = vld [vmem:[%s7 + $0x8] sm:$0xf]
      %v7183 = vld [vmem:[%s7 + $0xc] sm:$0xf]
      %v7184 = vld [vmem:[%s7 + $0x10] sm:$0xf]
      %v7185 = vld [vmem:[%s7 + $0x14] sm:$0xf]
      %v7186 = vld [vmem:[%s7 + $0x18] sm:$0xf]
      %v7187 = vld [vmem:[%s7 + $0x1c] sm:$0xf]
      %v7188 = vld [vmem:[%s7 + $0x20] sm:$0xf]
      %v7189 = vld [vmem:[%s7 + $0x24] sm:$0xf]
      %v7190 = vld [vmem:[%s7 + $0x28] sm:$0xf]
      %v7191 = vld [vmem:[%s7 + $0x2c] sm:$0xf]
      %v7192 = vld [vmem:[%s7 + $0x30] sm:$0xf]
      %v7193 = vld [vmem:[%s7 + $0x34] sm:$0xf]
      %v7194 = vld [vmem:[%s7 + $0x38] sm:$0xf]
      %v7195 = vld [vmem:[%s7 + $0x3c] sm:$0xf]
      %v7196 = vld [vmem:[%s14] sm:$0x1]
      %v7198 = vlaneseq
      %v7199 = vshrl.u32 %v7198, 7
      %v7200 = vsub.s32 0, %v7199
      %v7201 = vrot.slane %v7196, %v7200
      %v7219 = vunpack.c.l.b16 %v7180
      %v7220 = vunpack.c.l.b16 %v7181
      %v7221 = vunpack.c.l.b16 %v7182
      %v7222 = vunpack.c.l.b16 %v7183
      %v7223 = vunpack.c.l.b16 %v7184
      %v7224 = vunpack.c.l.b16 %v7185
      %v7225 = vunpack.c.l.b16 %v7186
      %v7226 = vunpack.c.l.b16 %v7187
      %v7227 = vunpack.c.l.b16 %v7188
      %v7228 = vunpack.c.l.b16 %v7189
      %v7229 = vunpack.c.l.b16 %v7190
      %v7230 = vunpack.c.l.b16 %v7191
      %v7231 = vunpack.c.l.b16 %v7192
      %v7232 = vunpack.c.l.b16 %v7193
      %v7233 = vunpack.c.l.b16 %v7194
      %v7234 = vunpack.c.l.b16 %v7195
      %v7235 = vpack.c.b16 %v7220, %v7219
      %v7236 = vpack.c.b16 %v7222, %v7221
      %v7237 = vpack.c.b16 %v7224, %v7223
      %v7238 = vpack.c.b16 %v7226, %v7225
      %v7239 = vpack.c.b16 %v7228, %v7227
      %v7240 = vpack.c.b16 %v7230, %v7229
      %v7241 = vpack.c.b16 %v7232, %v7231
      %v7242 = vpack.c.b16 %v7234, %v7233
      %7251 = vmatprep.subr.bf16.mxu0 0
      %7252 = vmatpush1.bf16.msra.mxu0 %v7235
      %7253 = vmatprep.subr.bf16.mxu0 0
      %7254 = vmatpush1.bf16.msra.mxu0 %v7236
      %7255 = vmatprep.subr.bf16.mxu0 0
      %7256 = vmatpush1.bf16.msra.mxu0 %v7237
      %7257 = vmatprep.subr.bf16.mxu0 0
      %7258 = vmatpush1.bf16.msra.mxu0 %v7238
      %7259 = vmatprep.subr.bf16.mxu0 0
      %7260 = vmatpush1.bf16.msra.mxu0 %v7239
      %7261 = vmatprep.subr.bf16.mxu0 0
      %7262 = vmatpush1.bf16.msra.mxu0 %v7240
      %7263 = vmatprep.subr.bf16.mxu0 0
      %7264 = vmatpush1.bf16.msra.mxu0 %v7241
      %7265 = vmatprep.subr.bf16.mxu0 0
      %7266 = vmatpush1.bf16.msra.mxu0 %v7242
      %7267 = vmatprep.subr.bf16.mxu0 0
      %7268 = vmatpush1.bf16.msra.mxu0 0
      %7269 = vmatprep.subr.bf16.mxu0 0
      %7270 = vmatpush1.bf16.msra.mxu0 0
      %7271 = vmatprep.subr.bf16.mxu0 0
      %7272 = vmatpush1.bf16.msra.mxu0 0
      %7273 = vmatprep.subr.bf16.mxu0 0
      %7274 = vmatpush1.bf16.msra.mxu0 0
      %7275 = vmatprep.subr.bf16.mxu0 0
      %7276 = vmatpush1.bf16.msra.mxu0 0
      %7277 = vmatprep.subr.bf16.mxu0 0
      %7278 = vmatpush1.bf16.msra.mxu0 0
      %7279 = vmatprep.subr.bf16.mxu0 0
      %7280 = vmatpush1.bf16.msra.mxu0 0
      %7281 = vmatprep.subr.bf16.mxu0 0
      %7282 = vmatpush1.bf16.msra.mxu0 0
      %7283 = vmatprep.mubr.bf16.mxu0 0
      %7284 = vmatmul.mubr.bf16.gmra.mrb[0].mxu0 %v7179
      %v7285 = vpop.f32.mrb[0].mxu0
      %v7286 = vadd.f32 %v7201, %v7285
      %v7287 = vpop.f32.mrb[0].mxu0
      %v7288 = vpop.f32.mrb[0].mxu0
      %v7289 = vadd.f32 %v7201, %v7288
      %v7290 = vpop.f32.mrb[0].mxu0
      %7291 = vdwg.mxu0
      %7292 = vst [vmem:[%s575] sm:$0xff] %v7286
      %7293 = vst [vmem:[%s575 + $0x8] sm:$0xff] %v7289
      %p7294 = scmp.lt.s32.totalorder %s29, 1
      %s7295 = scalar_select %p7294, %s29, 1
      %s7296 = smul.addr %s7295, 2
      %s7297 = smul.addr %s7296, 8
      %s7298 = scalar_lea.vmem %s18, %s7297
      // Predicated region
      $region93: #{forward.1} parent=91 // pred_check
        %p7299 = pneg %p430
      $region94: #{forward.1} parent=91 // pred_check_branch
        %7301 = sbr.rel (%p7299) target = $region96
      $region95: #{forward.1} parent=91 // pred_region
        _
      $region96: #{forward.1} parent=91 // pred_fallthru
        _
    $region92: #{forward.1} parent=5 // pred_fallthru
      _
    %p7302 = scmp.le.s32.totalorder 2, %s24
    // Predicated region
    $region97: #{forward.1} parent=5 // pred_check
      %p7303 = pneg %p7302
    $region98: #{forward.1} parent=5 // pred_check_branch
      %7305 = sbr.rel (%p7303) target = $region100
    $region99: #{forward.1} parent=5 // pred_region
      %s7306 = ssub.s32 %s24, 2
      // Predicated region
      $region101: #{forward.1} parent=99 // pred_check
        %p7307 = pneg %p436
      $region102: #{forward.1} parent=99 // pred_check_branch
        %7309 = sbr.rel (%p7307) target = $region104
      $region103: #{forward.1} parent=99 // pred_region
        %p7310 = scmp.lt.s32.totalorder %s30, 1
        %s7311 = scalar_select %p7310, %s30, 1
        %s7312 = smul.addr %s7311, 2
        %s7313 = smul.addr %s7312, 8
        %s7314 = scalar_lea.vmem %s18, %s7313
      $region104: #{forward.1} parent=99 // pred_fallthru
        _
    $region100: #{forward.1} parent=5 // pred_fallthru
      _
  $region6: #{forward.1} parent=0 // loop_footer
    %s28 = sadd.s32 1, %s24
  $region7: #{forward.1} parent=0 // loop_footer_branch
    %23 = sbr.rel target = $region3
  $region8: #{forward.1} parent=0 // loop_exit
    _

</llo_original>
